<compile_context>
chip_gen: v6e
topology: v6e:2x2x1
jax: 0.10.0
libtpu: 0.0.40
codegen_flags: <defaults>
</compile_context>

<pallas_src>
import functools

import jax
import jax.numpy as jnp
from jax.experimental import pallas as pl
from jax.experimental.pallas import tpu as pltpu


def _fused_double_conv_kernel(x_ref, w1_ref, b1_ref, w2_ref, b2_ref, o_ref,
                              col1_ref, mid_ref, col2_ref, *, fast):
    """One (batch, row-tile) step of the fused double conv.

    x_ref:    (1, H+4, W+2, C_in)    whole padded image (bf16), resident per n
    w1_ref:   (9*C_in,  C_mid)       conv1 weights, BN1 scale folded in (bf16)
    b1_ref:   (1, C_mid)             folded conv1/BN1 bias (f32)
    w2_ref:   (9*C_mid, C_out)       conv2 weights, BN2 scale folded in (bf16)
    b2_ref:   (1, C_out)             folded conv2/BN2 bias (f32)
    o_ref:    (1, TH, W*C_out) if fast else (1, TH, W, C_out)
    col1_ref: (TH+2, W, 9*C_in)      im2col slab for conv1 (VMEM, bf16)
    mid_ref:  (TH+2, W+2, C_mid)     conv1 output + zero pad ring (VMEM, bf16)
    col2_ref: (TH,   W, 9*C_mid)     im2col slab for conv2 (VMEM, bf16)
    """
    TH, W = col2_ref.shape[0], col2_ref.shape[1]
    C_in = x_ref.shape[-1]
    C_mid = mid_ref.shape[-1]
    C_out = w2_ref.shape[-1]
    cdt = col1_ref.dtype                        # bf16 compute dtype

    r = pl.program_id(1)
    n_tiles = pl.num_programs(1)
    r0 = pl.multiple_of(r * TH, TH)             # padded-row offset of this tile

    def build_slab(col_ref, get_band, c):
        # Slab last-dim tap order is (dy, dx, channel), matching the (kh, kw, ci)
        # row order of the folded weights.  No per-tap reshape (3-D destination).
        for dy in range(3):
            band = get_band(dy)                 # (rows, W+2, c)
            if fast:
                # One wide store per dy (3 per stage) instead of 3 narrow ones.
                col_ref[:, :, dy * 3 * c:(dy + 1) * 3 * c] = jnp.concatenate(
                    [band[:, dx:dx + W, :] for dx in range(3)], axis=-1)
            else:
                for dx in range(3):
                    k = dy * 3 + dx
                    col_ref[:, :, k * c:(k + 1) * c] = band[:, dx:dx + W, :]

    # ------- stage 1: conv1 + folded BN1 bias + ReLU over TH+2 rows ---------
    # (1-row halo each side so conv2 has its halo locally)
    build_slab(col1_ref,
               lambda dy: x_ref[0, pl.ds(r0 + dy, TH + 2), :, :], C_in)
    # (rows, W) -> M merge: layout-preserving when W % 8 == 0 (one per matmul,
    # instead of one per tap as before).
    a1 = col1_ref[...].reshape((TH + 2) * W, 9 * C_in)
    y1 = jnp.dot(a1, w1_ref[...], preferred_element_type=jnp.float32)
    y1 = jnp.maximum(y1 + b1_ref[...], 0.0).astype(cdt)

    # Intermediate: interior written ONCE; only the pad ring is zeroed.
    mid_ref[:, 1:W + 1, :] = y1.reshape(TH + 2, W, C_mid)
    zero_col = jnp.zeros((TH + 2, 1, C_mid), cdt)
    mid_ref[:, 0:1, :] = zero_col               # conv2 left zero padding
    mid_ref[:, W + 1:W + 2, :] = zero_col       # conv2 right zero padding

    # Halo rows that fall OUTSIDE the image must be conv2's zero padding,
    # not conv1 evaluated on an extended (zero) input.
    @pl.when(r == 0)
    def _():
        mid_ref[0, :, :] = jnp.zeros((W + 2, C_mid), cdt)

    @pl.when(r == n_tiles - 1)
    def _():
        mid_ref[TH + 1, :, :] = jnp.zeros((W + 2, C_mid), cdt)

    # ------- stage 2: conv2 + folded BN2 bias + ReLU -------------------------
    build_slab(col2_ref, lambda dy: mid_ref[dy:dy + TH, :, :], C_mid)
    a2 = col2_ref[...].reshape(TH * W, 9 * C_mid)
    y2 = jnp.dot(a2, w2_ref[...], preferred_element_type=jnp.float32)
    y2 = jnp.maximum(y2 + b2_ref[...], 0.0)

    if fast:
        # Lane-dense epilogue: assemble (TH, W*C_out) so the output store is an
        # unmasked full-lane vst and the HBM writeback DMA is dense.
        y3 = y2.reshape(TH, W, C_out)           # split of the M dim (free)
        dense = jnp.concatenate([y3[:, w, :] for w in range(W)], axis=-1)
        o_ref[...] = dense[None].astype(o_ref.dtype)
    else:
        o_ref[...] = y2.reshape(1, TH, W, C_out).astype(o_ref.dtype)


def _pick_tile_rows(h):
    """Largest row tile in {128,64,32,16,8} dividing H (amortizes the 2-row
    conv1 halo recompute and per-grid-step overhead); falls back to whole H."""
    for th in (128, 64, 32, 16, 8):
        if th < h and h % th == 0:
            return th
    return h


def _vmem_limit_bytes(H, W, C_in, C_mid, C_out, TH, compute_dtype, out_dtype):
    """Scoped-VMEM request: double-buffered I/O counted once, f32 matmul
    temporaries included, capped per-generation via get_tpu_info()."""
    bpe = jnp.dtype(compute_dtype).itemsize
    obpe = jnp.dtype(out_dtype).itemsize
    in_block = (H + 4) * (W + 2) * C_in * bpe
    out_block = TH * W * C_out * obpe
    weights = (9 * C_in * C_mid + 9 * C_mid * C_out) * bpe + (C_mid + C_out) * 4
    scratch = ((TH + 2) * W * 9 * C_in + (TH + 2) * (W + 2) * C_mid
               + TH * W * 9 * C_mid) * bpe
    dot_tmp = ((TH + 2) * W * C_mid + TH * W * C_out) * 4   # f32 matmul outputs
    est = 2 * (in_block + out_block + weights) + scratch + dot_tmp
    try:
        cap = int(pltpu.get_tpu_info().vmem_capacity_bytes)  # 64MiB v7x, 128MiB v5e/v6e
    except Exception:
        cap = 64 * 1024 * 1024
    return int(min(int(0.85 * cap), max(32 * 1024 * 1024, int(1.5 * est))))


def fused_double_conv(x_nhwc, w1, b1, w2, b2, *, compute_dtype=jnp.bfloat16,
                      tile_rows=None):
    """x_nhwc: (N, H, W, C_in) -> (N, H, W, C_out), both convs fused."""
    N, H, W, C_in = x_nhwc.shape
    C_mid = w1.shape[-1]
    C_out = w2.shape[-1]
    TH = tile_rows if tile_rows is not None else _pick_tile_rows(H)
    assert H % TH == 0
    R = H // TH
    out_dtype = x_nhwc.dtype

    # Single halo pad (2 rows / 1 col per side) for the whole fused pipeline,
    # cast to bf16 first; XLA fuses this with the wrapper's NCHW->NHWC
    # transpose into one HBM pass of the small-C input.
    x_pad = jnp.pad(x_nhwc.astype(compute_dtype),
                    ((0, 0), (2, 2), (1, 1), (0, 0)))

    vmem_limit = _vmem_limit_bytes(H, W, C_in, C_mid, C_out, TH,
                                   compute_dtype, out_dtype)

    in_specs = [
        # whole padded image per batch; block index ignores r, so it is DMA'd
        # once per n and stays resident across the row tiles.
        pl.BlockSpec((1, H + 4, W + 2, C_in), lambda n, r: (n, 0, 0, 0)),
        pl.BlockSpec(w1.shape, lambda n, r: (0, 0)),
        pl.BlockSpec(b1.shape, lambda n, r: (0, 0)),
        pl.BlockSpec(w2.shape, lambda n, r: (0, 0)),
        pl.BlockSpec(b2.shape, lambda n, r: (0, 0)),
    ]
    scratch_shapes = [
        pltpu.VMEM((TH + 2, W, 9 * C_in), compute_dtype),     # im2col 1
        pltpu.VMEM((TH + 2, W + 2, C_mid), compute_dtype),    # intermediate
        pltpu.VMEM((TH, W, 9 * C_mid), compute_dtype),        # im2col 2
    ]
    cparams = pltpu.CompilerParams(
        dimension_semantics=("parallel", "parallel"),
        vmem_limit_bytes=vmem_limit)

    def run(fast):
        if fast:
            out_shape = jax.ShapeDtypeStruct((N, H, W * C_out), out_dtype)
            out_spec = pl.BlockSpec((1, TH, W * C_out), lambda n, r: (n, r, 0))
        else:
            out_shape = jax.ShapeDtypeStruct((N, H, W, C_out), out_dtype)
            out_spec = pl.BlockSpec((1, TH, W, C_out), lambda n, r: (n, r, 0, 0))
        return pl.pallas_call(
            functools.partial(_fused_double_conv_kernel, fast=fast),
            out_shape=out_shape,
            grid_spec=pltpu.PrefetchScalarGridSpec(
                num_scalar_prefetch=0,
                grid=(N, R),
                in_specs=in_specs,
                out_specs=out_spec,
                scratch_shapes=scratch_shapes,
            ),
            compiler_params=cparams,
        )(x_pad, w1, b1, w2, b2)

    # Lane-dense path only when the merged last dim is 128-aligned and the
    # per-row assembly stays small; otherwise (or if Mosaic rejects the
    # unaligned lane concats) fall back to the proven conservative kernel.
    fast_ok = (W * C_out) % 128 == 0 and W <= 64
    if fast_ok:
        try:
            y = jax.block_until_ready(run(True))
            return y.reshape(N, H, W, C_out)
        except Exception:
            pass
    return run(False)


def _fold_bn_into_conv(w_flat, conv_b, gamma, beta, mean, var, eps=1e-5):
    """Inference-mode BN folded into the conv: y = x (.) (W*s) + ((b-mean)*s+beta)."""
    s = gamma / jnp.sqrt(var + eps)
    return w_flat * s[None, :], (conv_b - mean) * s + beta


def init_double_conv_params(key, in_ch, out_ch, compute_dtype=jnp.bfloat16):
    """Deterministic synthetic parameters matching the PyTorch module shapes."""
    ks = jax.random.split(key, 10)

    def conv_w(k, ci, co):
        # PyTorch layout (co, ci, 3, 3) -> (kh, kw, ci, co) -> (9*ci, co)
        w = 0.1 * jax.random.normal(k, (co, ci, 3, 3), jnp.float32)
        return jnp.transpose(w, (2, 3, 1, 0)).reshape(9 * ci, co)

    w1 = conv_w(ks[0], in_ch, out_ch)
    b1 = 0.1 * jax.random.normal(ks[1], (out_ch,), jnp.float32)
    g1 = 1.0 + 0.1 * jax.random.normal(ks[2], (out_ch,), jnp.float32)
    be1 = 0.1 * jax.random.normal(ks[3], (out_ch,), jnp.float32)
    m1 = 0.1 * jax.random.normal(ks[4], (out_ch,), jnp.float32)
    v1 = jnp.abs(jax.random.normal(ks[5], (out_ch,), jnp.float32)) + 0.5

    w2 = conv_w(ks[6], out_ch, out_ch)
    b2 = 0.1 * jax.random.normal(ks[7], (out_ch,), jnp.float32)
    g2 = 1.0 + 0.1 * jax.random.normal(ks[8], (out_ch,), jnp.float32)
    be2 = 0.1 * jax.random.normal(ks[9], (out_ch,), jnp.float32)
    m2 = jnp.zeros((out_ch,), jnp.float32)
    v2 = jnp.ones((out_ch,), jnp.float32)

    w1f, b1f = _fold_bn_into_conv(w1, b1, g1, be1, m1, v1)
    w2f, b2f = _fold_bn_into_conv(w2, b2, g2, be2, m2, v2)
    return dict(
        w1=w1f.astype(compute_dtype), b1=b1f.reshape(1, -1).astype(jnp.float32),
        w2=w2f.astype(compute_dtype), b2=b2f.reshape(1, -1).astype(jnp.float32),
    )


def double_conv_forward(x_nchw, params):
    """Matches double_conv.forward (inference mode): input/output NCHW."""
    x = jnp.transpose(x_nchw, (0, 2, 3, 1))                       # NCHW -> NHWC
    y = fused_double_conv(x, params["w1"], params["b1"],
                          params["w2"], params["b2"])
    return jnp.transpose(y, (0, 3, 1, 2))                         # NHWC -> NCHW


def _reference(x_nchw, params, compute_dtype=jnp.bfloat16):
    """Plain-JAX reference with the same bf16-input / f32-accumulate math."""
    def stage(x_nhwc, w_flat, bias):
        n, h, wd, ci = x_nhwc.shape
        xp = jnp.pad(x_nhwc, ((0, 0), (1, 1), (1, 1), (0, 0)))
        acc = jnp.zeros((n, h, wd, w_flat.shape[-1]), jnp.float32)
        for k in range(9):
            dy, dx = divmod(k, 3)
            acc = acc + jnp.einsum(
                "nhwc,co->nhwo",
                xp[:, dy:dy + h, dx:dx + wd, :].astype(jnp.float32),
                w_flat[k * ci:(k + 1) * ci].astype(jnp.float32))
        return jnp.maximum(acc + bias.reshape(1, 1, 1, -1), 0.0)

    x = jnp.transpose(x_nchw, (0, 2, 3, 1)).astype(compute_dtype)
    y1 = stage(x, params["w1"], params["b1"]).astype(compute_dtype)
    y2 = stage(y1, params["w2"], params["b2"])
    return jnp.transpose(y2.astype(x_nchw.dtype), (0, 3, 1, 2))


if __name__ == "__main__":
    key = jax.random.PRNGKey(0)
    k_x, k_p = jax.random.split(key)

    N, IN_CH, OUT_CH, H, W = 2, 4, 8, 16, 16
    x = jax.random.normal(k_x, (N, IN_CH, H, W), jnp.float32)
    params = init_double_conv_params(k_p, IN_CH, OUT_CH)

    out = jax.block_until_ready(double_conv_forward(x, params))
    ref = jax.block_until_ready(_reference(x, params))

    assert out.shape == (N, OUT_CH, H, W)
    assert out.dtype == x.dtype
    max_err = float(jnp.max(jnp.abs(out - ref)))
    assert jnp.allclose(out, ref, atol=1e-3, rtol=1e-3), f"max abs err {max_err}"
    print("KERNEL_OK")
</pallas_src>

<mosaic_0001>
module attributes {stable_mosaic.version = 11 : i64} {
  func.func @_fused_double_conv_kernel(%arg0: i32, %arg1: i32, %arg2: memref<1x20x18x4xbf16, #tpu.memory_space<vmem>>, %arg3: memref<36x8xbf16, #tpu.memory_space<vmem>>, %arg4: memref<1x8xf32, #tpu.memory_space<vmem>>, %arg5: memref<72x8xbf16, #tpu.memory_space<vmem>>, %arg6: memref<1x8xf32, #tpu.memory_space<vmem>>, %arg7: memref<1x8x128xf32, #tpu.memory_space<vmem>>, %arg8: memref<10x16x36xbf16, #tpu.memory_space<vmem>>, %arg9: memref<10x18x8xbf16, #tpu.memory_space<vmem>>, %arg10: memref<8x16x72xbf16, #tpu.memory_space<vmem>>) attributes {dimension_semantics = [#tpu.dimension_semantics<parallel>, #tpu.dimension_semantics<parallel>], iteration_bounds = array<i64: 2, 2>, scalar_prefetch = 0 : i64, scratch_operands = 3 : i64, tpu.core_type = #tpu.core_type<tc>, window_params = [{transform_indices = @transform_0, window_bounds = array<i64: 1, 20, 18, 4>}, {pipeline_mode = #tpu.pipeline_mode<synchronous>, transform_indices = @transform_1, window_bounds = array<i64: 36, 8>}, {pipeline_mode = #tpu.pipeline_mode<synchronous>, transform_indices = @transform_2, window_bounds = array<i64: 1, 8>}, {pipeline_mode = #tpu.pipeline_mode<synchronous>, transform_indices = @transform_3, window_bounds = array<i64: 72, 8>}, {pipeline_mode = #tpu.pipeline_mode<synchronous>, transform_indices = @transform_4, window_bounds = array<i64: 1, 8>}, {transform_indices = @transform_5, window_bounds = array<i64: 1, 8, 128>}]} {
    %c8_i32 = arith.constant 8 : i32
    %0 = arith.muli %arg1, %c8_i32 : i32
    %1 = tpu.assume_multiple %0, 8 : i32
    %c0_i32 = arith.constant 0 : i32
    %2 = arith.addi %1, %c0_i32 : i32
    %c0 = arith.constant 0 : index
    %3 = arith.index_cast %2 : i32 to index
    %c0_0 = arith.constant 0 : index
    %c0_1 = arith.constant 0 : index
    %4 = vector.load %arg2[%c0, %3, %c0_0, %c0_1] : memref<1x20x18x4xbf16, #tpu.memory_space<vmem>>, vector<1x10x18x4xbf16>
    %5 = vector.shape_cast %4 : vector<1x10x18x4xbf16> to vector<10x18x4xbf16>
    %6 = vector.extract_strided_slice %5 {offsets = [0, 0, 0], sizes = [10, 16, 4], strides = [1, 1, 1]} : vector<10x18x4xbf16> to vector<10x16x4xbf16>
    %7 = vector.extract_strided_slice %5 {offsets = [0, 1, 0], sizes = [10, 16, 4], strides = [1, 1, 1]} : vector<10x18x4xbf16> to vector<10x16x4xbf16>
    %8 = vector.extract_strided_slice %5 {offsets = [0, 2, 0], sizes = [10, 16, 4], strides = [1, 1, 1]} : vector<10x18x4xbf16> to vector<10x16x4xbf16>
    %9 = tpu.concatenate %6, %7, %8 in 2 : vector<10x16x4xbf16>, vector<10x16x4xbf16>, vector<10x16x4xbf16> -> vector<10x16x12xbf16>
    %c0_2 = arith.constant 0 : index
    %c0_3 = arith.constant 0 : index
    %c0_4 = arith.constant 0 : index
    %10 = vector.load %arg8[%c0_2, %c0_3, %c0_4] : memref<10x16x36xbf16, #tpu.memory_space<vmem>>, vector<10x16x12xbf16>
    tpu.vector_store %arg8[%c0_2, %c0_3, %c0_4], %9 {strides = array<i32>} : memref<10x16x36xbf16, #tpu.memory_space<vmem>>, vector<10x16x12xbf16>,
    %c1_i32 = arith.constant 1 : i32
    %11 = arith.addi %1, %c1_i32 : i32
    %c0_5 = arith.constant 0 : index
    %12 = arith.index_cast %11 : i32 to index
    %c0_6 = arith.constant 0 : index
    %c0_7 = arith.constant 0 : index
    %13 = vector.load %arg2[%c0_5, %12, %c0_6, %c0_7] : memref<1x20x18x4xbf16, #tpu.memory_space<vmem>>, vector<1x10x18x4xbf16>
    %14 = vector.shape_cast %13 : vector<1x10x18x4xbf16> to vector<10x18x4xbf16>
    %15 = vector.extract_strided_slice %14 {offsets = [0, 0, 0], sizes = [10, 16, 4], strides = [1, 1, 1]} : vector<10x18x4xbf16> to vector<10x16x4xbf16>
    %16 = vector.extract_strided_slice %14 {offsets = [0, 1, 0], sizes = [10, 16, 4], strides = [1, 1, 1]} : vector<10x18x4xbf16> to vector<10x16x4xbf16>
    %17 = vector.extract_strided_slice %14 {offsets = [0, 2, 0], sizes = [10, 16, 4], strides = [1, 1, 1]} : vector<10x18x4xbf16> to vector<10x16x4xbf16>
    %18 = tpu.concatenate %15, %16, %17 in 2 : vector<10x16x4xbf16>, vector<10x16x4xbf16>, vector<10x16x4xbf16> -> vector<10x16x12xbf16>
    %c0_8 = arith.constant 0 : index
    %c0_9 = arith.constant 0 : index
    %c12 = arith.constant 12 : index
    %19 = vector.load %arg8[%c0_8, %c0_9, %c12] : memref<10x16x36xbf16, #tpu.memory_space<vmem>>, vector<10x16x12xbf16>
    tpu.vector_store %arg8[%c0_8, %c0_9, %c12], %18 {strides = array<i32>} : memref<10x16x36xbf16, #tpu.memory_space<vmem>>, vector<10x16x12xbf16>,
    %c2_i32 = arith.constant 2 : i32
    %20 = arith.addi %1, %c2_i32 : i32
    %c0_10 = arith.constant 0 : index
    %21 = arith.index_cast %20 : i32 to index
    %c0_11 = arith.constant 0 : index
    %c0_12 = arith.constant 0 : index
    %22 = vector.load %arg2[%c0_10, %21, %c0_11, %c0_12] : memref<1x20x18x4xbf16, #tpu.memory_space<vmem>>, vector<1x10x18x4xbf16>
    %23 = vector.shape_cast %22 : vector<1x10x18x4xbf16> to vector<10x18x4xbf16>
    %24 = vector.extract_strided_slice %23 {offsets = [0, 0, 0], sizes = [10, 16, 4], strides = [1, 1, 1]} : vector<10x18x4xbf16> to vector<10x16x4xbf16>
    %25 = vector.extract_strided_slice %23 {offsets = [0, 1, 0], sizes = [10, 16, 4], strides = [1, 1, 1]} : vector<10x18x4xbf16> to vector<10x16x4xbf16>
    %26 = vector.extract_strided_slice %23 {offsets = [0, 2, 0], sizes = [10, 16, 4], strides = [1, 1, 1]} : vector<10x18x4xbf16> to vector<10x16x4xbf16>
    %27 = tpu.concatenate %24, %25, %26 in 2 : vector<10x16x4xbf16>, vector<10x16x4xbf16>, vector<10x16x4xbf16> -> vector<10x16x12xbf16>
    %c0_13 = arith.constant 0 : index
    %c0_14 = arith.constant 0 : index
    %c24 = arith.constant 24 : index
    %28 = vector.load %arg8[%c0_13, %c0_14, %c24] : memref<10x16x36xbf16, #tpu.memory_space<vmem>>, vector<10x16x12xbf16>
    tpu.vector_store %arg8[%c0_13, %c0_14, %c24], %27 {strides = array<i32>} : memref<10x16x36xbf16, #tpu.memory_space<vmem>>, vector<10x16x12xbf16>,
    %c0_15 = arith.constant 0 : index
    %c0_16 = arith.constant 0 : index
    %c0_17 = arith.constant 0 : index
    %29 = vector.load %arg8[%c0_15, %c0_16, %c0_17] : memref<10x16x36xbf16, #tpu.memory_space<vmem>>, vector<10x16x36xbf16>
    %30 = vector.shape_cast %29 : vector<10x16x36xbf16> to vector<160x36xbf16>
    %c0_18 = arith.constant 0 : index
    %c0_19 = arith.constant 0 : index
    %31 = vector.load %arg3[%c0_18, %c0_19] : memref<36x8xbf16, #tpu.memory_space<vmem>>, vector<36x8xbf16>
    %cst = arith.constant dense<0.000000e+00> : vector<160x8xf32>
    %32 = tpu.matmul %30, %31, %cst {dimension_numbers = #tpu.dot_dimension_numbers<[1], [0], [0], [1], [0, 0, 1, 1], [], []>} : vector<160x36xbf16>, vector<36x8xbf16>, vector<160x8xf32> -> vector<160x8xf32>
    %c0_20 = arith.constant 0 : index
    %c0_21 = arith.constant 0 : index
    %33 = vector.load %arg4[%c0_20, %c0_21] : memref<1x8xf32, #tpu.memory_space<vmem>>, vector<1x8xf32>
    %34 = vector.broadcast %33 : vector<1x8xf32> to vector<160x8xf32>
    %35 = arith.addf %32, %34 : vector<160x8xf32>
    %cst_22 = arith.constant 0.000000e+00 : f32
    %36 = vector.broadcast %cst_22 : f32 to vector<160x8xf32>
    %37 = arith.maximumf %35, %36 : vector<160x8xf32>
    %38 = arith.truncf %37 : vector<160x8xf32> to vector<160x8xbf16>
    %39 = vector.shape_cast %38 : vector<160x8xbf16> to vector<10x16x8xbf16>
    %c0_23 = arith.constant 0 : index
    %c1 = arith.constant 1 : index
    %c0_24 = arith.constant 0 : index
    %40 = vector.load %arg9[%c0_23, %c1, %c0_24] : memref<10x18x8xbf16, #tpu.memory_space<vmem>>, vector<10x16x8xbf16>
    tpu.vector_store %arg9[%c0_23, %c1, %c0_24], %39 {strides = array<i32>} : memref<10x18x8xbf16, #tpu.memory_space<vmem>>, vector<10x16x8xbf16>,
    %cst_25 = arith.constant 0.000000e+00 : bf16
    %41 = vector.broadcast %cst_25 : bf16 to vector<10x1x8xbf16>
    %c0_26 = arith.constant 0 : index
    %c0_27 = arith.constant 0 : index
    %c0_28 = arith.constant 0 : index
    %42 = vector.load %arg9[%c0_26, %c0_27, %c0_28] : memref<10x18x8xbf16, #tpu.memory_space<vmem>>, vector<10x1x8xbf16>
    tpu.vector_store %arg9[%c0_26, %c0_27, %c0_28], %41 {strides = array<i32>} : memref<10x18x8xbf16, #tpu.memory_space<vmem>>, vector<10x1x8xbf16>,
    %c0_29 = arith.constant 0 : index
    %c17 = arith.constant 17 : index
    %c0_30 = arith.constant 0 : index
    %43 = vector.load %arg9[%c0_29, %c17, %c0_30] : memref<10x18x8xbf16, #tpu.memory_space<vmem>>, vector<10x1x8xbf16>
    tpu.vector_store %arg9[%c0_29, %c17, %c0_30], %41 {strides = array<i32>} : memref<10x18x8xbf16, #tpu.memory_space<vmem>>, vector<10x1x8xbf16>,
    %c0_i32_31 = arith.constant 0 : i32
    %44 = arith.cmpi eq, %arg1, %c0_i32_31 : i32
    %45 = arith.extui %44 : i1 to i32
    %c0_i32_32 = arith.constant 0 : i32
    %46 = arith.cmpi ne, %45, %c0_i32_32 : i32
    scf.if %46 {
      %cst_63 = arith.constant 0.000000e+00 : bf16
      %113 = vector.broadcast %cst_63 : bf16 to vector<18x8xbf16>
      %c0_64 = arith.constant 0 : index
      %c0_65 = arith.constant 0 : index
      %c0_66 = arith.constant 0 : index
      %114 = vector.load %arg9[%c0_64, %c0_65, %c0_66] : memref<10x18x8xbf16, #tpu.memory_space<vmem>>, vector<1x18x8xbf16>
      %115 = vector.shape_cast %114 : vector<1x18x8xbf16> to vector<18x8xbf16>
      %116 = vector.shape_cast %113 : vector<18x8xbf16> to vector<1x18x8xbf16>
      tpu.vector_store %arg9[%c0_64, %c0_65, %c0_66], %116 {strides = array<i32>} : memref<10x18x8xbf16, #tpu.memory_space<vmem>>, vector<1x18x8xbf16>,
    } else {
    }
    %c1_i32_33 = arith.constant 1 : i32
    %47 = arith.cmpi eq, %arg1, %c1_i32_33 : i32
    %48 = arith.extui %47 : i1 to i32
    %c0_i32_34 = arith.constant 0 : i32
    %49 = arith.cmpi ne, %48, %c0_i32_34 : i32
    scf.if %49 {
      %cst_63 = arith.constant 0.000000e+00 : bf16
      %113 = vector.broadcast %cst_63 : bf16 to vector<18x8xbf16>
      %c9 = arith.constant 9 : index
      %c0_64 = arith.constant 0 : index
      %c0_65 = arith.constant 0 : index
      %114 = vector.load %arg9[%c9, %c0_64, %c0_65] : memref<10x18x8xbf16, #tpu.memory_space<vmem>>, vector<1x18x8xbf16>
      %115 = vector.shape_cast %114 : vector<1x18x8xbf16> to vector<18x8xbf16>
      %116 = vector.shape_cast %113 : vector<18x8xbf16> to vector<1x18x8xbf16>
      tpu.vector_store %arg9[%c9, %c0_64, %c0_65], %116 {strides = array<i32>} : memref<10x18x8xbf16, #tpu.memory_space<vmem>>, vector<1x18x8xbf16>,
    } else {
    }
    %c0_35 = arith.constant 0 : index
    %c0_36 = arith.constant 0 : index
    %c0_37 = arith.constant 0 : index
    %50 = vector.load %arg9[%c0_35, %c0_36, %c0_37] : memref<10x18x8xbf16, #tpu.memory_space<vmem>>, vector<8x18x8xbf16>
    %51 = vector.extract_strided_slice %50 {offsets = [0, 0, 0], sizes = [8, 16, 8], strides = [1, 1, 1]} : vector<8x18x8xbf16> to vector<8x16x8xbf16>
    %52 = vector.extract_strided_slice %50 {offsets = [0, 1, 0], sizes = [8, 16, 8], strides = [1, 1, 1]} : vector<8x18x8xbf16> to vector<8x16x8xbf16>
    %53 = vector.extract_strided_slice %50 {offsets = [0, 2, 0], sizes = [8, 16, 8], strides = [1, 1, 1]} : vector<8x18x8xbf16> to vector<8x16x8xbf16>
    %54 = tpu.concatenate %51, %52, %53 in 2 : vector<8x16x8xbf16>, vector<8x16x8xbf16>, vector<8x16x8xbf16> -> vector<8x16x24xbf16>
    %c0_38 = arith.constant 0 : index
    %c0_39 = arith.constant 0 : index
    %c0_40 = arith.constant 0 : index
    %55 = vector.load %arg10[%c0_38, %c0_39, %c0_40] : memref<8x16x72xbf16, #tpu.memory_space<vmem>>, vector<8x16x24xbf16>
    tpu.vector_store %arg10[%c0_38, %c0_39, %c0_40], %54 {strides = array<i32>} : memref<8x16x72xbf16, #tpu.memory_space<vmem>>, vector<8x16x24xbf16>,
    %c1_41 = arith.constant 1 : index
    %c0_42 = arith.constant 0 : index
    %c0_43 = arith.constant 0 : index
    %56 = vector.load %arg9[%c1_41, %c0_42, %c0_43] : memref<10x18x8xbf16, #tpu.memory_space<vmem>>, vector<8x18x8xbf16>
    %57 = vector.extract_strided_slice %56 {offsets = [0, 0, 0], sizes = [8, 16, 8], strides = [1, 1, 1]} : vector<8x18x8xbf16> to vector<8x16x8xbf16>
    %58 = vector.extract_strided_slice %56 {offsets = [0, 1, 0], sizes = [8, 16, 8], strides = [1, 1, 1]} : vector<8x18x8xbf16> to vector<8x16x8xbf16>
    %59 = vector.extract_strided_slice %56 {offsets = [0, 2, 0], sizes = [8, 16, 8], strides = [1, 1, 1]} : vector<8x18x8xbf16> to vector<8x16x8xbf16>
    %60 = tpu.concatenate %57, %58, %59 in 2 : vector<8x16x8xbf16>, vector<8x16x8xbf16>, vector<8x16x8xbf16> -> vector<8x16x24xbf16>
    %c0_44 = arith.constant 0 : index
    %c0_45 = arith.constant 0 : index
    %c24_46 = arith.constant 24 : index
    %61 = vector.load %arg10[%c0_44, %c0_45, %c24_46] : memref<8x16x72xbf16, #tpu.memory_space<vmem>>, vector<8x16x24xbf16>
    tpu.vector_store %arg10[%c0_44, %c0_45, %c24_46], %60 {strides = array<i32>} : memref<8x16x72xbf16, #tpu.memory_space<vmem>>, vector<8x16x24xbf16>,
    %c2 = arith.constant 2 : index
    %c0_47 = arith.constant 0 : index
    %c0_48 = arith.constant 0 : index
    %62 = vector.load %arg9[%c2, %c0_47, %c0_48] : memref<10x18x8xbf16, #tpu.memory_space<vmem>>, vector<8x18x8xbf16>
    %63 = vector.extract_strided_slice %62 {offsets = [0, 0, 0], sizes = [8, 16, 8], strides = [1, 1, 1]} : vector<8x18x8xbf16> to vector<8x16x8xbf16>
    %64 = vector.extract_strided_slice %62 {offsets = [0, 1, 0], sizes = [8, 16, 8], strides = [1, 1, 1]} : vector<8x18x8xbf16> to vector<8x16x8xbf16>
    %65 = vector.extract_strided_slice %62 {offsets = [0, 2, 0], sizes = [8, 16, 8], strides = [1, 1, 1]} : vector<8x18x8xbf16> to vector<8x16x8xbf16>
    %66 = tpu.concatenate %63, %64, %65 in 2 : vector<8x16x8xbf16>, vector<8x16x8xbf16>, vector<8x16x8xbf16> -> vector<8x16x24xbf16>
    %c0_49 = arith.constant 0 : index
    %c0_50 = arith.constant 0 : index
    %c48 = arith.constant 48 : index
    %67 = vector.load %arg10[%c0_49, %c0_50, %c48] : memref<8x16x72xbf16, #tpu.memory_space<vmem>>, vector<8x16x24xbf16>
    tpu.vector_store %arg10[%c0_49, %c0_50, %c48], %66 {strides = array<i32>} : memref<8x16x72xbf16, #tpu.memory_space<vmem>>, vector<8x16x24xbf16>,
    %c0_51 = arith.constant 0 : index
    %c0_52 = arith.constant 0 : index
    %c0_53 = arith.constant 0 : index
    %68 = vector.load %arg10[%c0_51, %c0_52, %c0_53] : memref<8x16x72xbf16, #tpu.memory_space<vmem>>, vector<8x16x72xbf16>
    %69 = vector.shape_cast %68 : vector<8x16x72xbf16> to vector<128x72xbf16>
    %c0_54 = arith.constant 0 : index
    %c0_55 = arith.constant 0 : index
    %70 = vector.load %arg5[%c0_54, %c0_55] : memref<72x8xbf16, #tpu.memory_space<vmem>>, vector<72x8xbf16>
    %cst_56 = arith.constant dense<0.000000e+00> : vector<128x8xf32>
    %71 = tpu.matmul %69, %70, %cst_56 {dimension_numbers = #tpu.dot_dimension_numbers<[1], [0], [0], [1], [0, 0, 1, 1], [], []>} : vector<128x72xbf16>, vector<72x8xbf16>, vector<128x8xf32> -> vector<128x8xf32>
    %c0_57 = arith.constant 0 : index
    %c0_58 = arith.constant 0 : index
    %72 = vector.load %arg6[%c0_57, %c0_58] : memref<1x8xf32, #tpu.memory_space<vmem>>, vector<1x8xf32>
    %73 = vector.broadcast %72 : vector<1x8xf32> to vector<128x8xf32>
    %74 = arith.addf %71, %73 : vector<128x8xf32>
    %cst_59 = arith.constant 0.000000e+00 : f32
    %75 = vector.broadcast %cst_59 : f32 to vector<128x8xf32>
    %76 = arith.maximumf %74, %75 : vector<128x8xf32>
    %77 = vector.shape_cast %76 : vector<128x8xf32> to vector<8x16x8xf32>
    %78 = vector.extract_strided_slice %77 {offsets = [0, 0, 0], sizes = [8, 1, 8], strides = [1, 1, 1]} : vector<8x16x8xf32> to vector<8x1x8xf32>
    %79 = vector.shape_cast %78 : vector<8x1x8xf32> to vector<8x8xf32>
    %80 = vector.extract_strided_slice %77 {offsets = [0, 1, 0], sizes = [8, 1, 8], strides = [1, 1, 1]} : vector<8x16x8xf32> to vector<8x1x8xf32>
    %81 = vector.shape_cast %80 : vector<8x1x8xf32> to vector<8x8xf32>
    %82 = vector.extract_strided_slice %77 {offsets = [0, 2, 0], sizes = [8, 1, 8], strides = [1, 1, 1]} : vector<8x16x8xf32> to vector<8x1x8xf32>
    %83 = vector.shape_cast %82 : vector<8x1x8xf32> to vector<8x8xf32>
    %84 = vector.extract_strided_slice %77 {offsets = [0, 3, 0], sizes = [8, 1, 8], strides = [1, 1, 1]} : vector<8x16x8xf32> to vector<8x1x8xf32>
    %85 = vector.shape_cast %84 : vector<8x1x8xf32> to vector<8x8xf32>
    %86 = vector.extract_strided_slice %77 {offsets = [0, 4, 0], sizes = [8, 1, 8], strides = [1, 1, 1]} : vector<8x16x8xf32> to vector<8x1x8xf32>
    %87 = vector.shape_cast %86 : vector<8x1x8xf32> to vector<8x8xf32>
    %88 = vector.extract_strided_slice %77 {offsets = [0, 5, 0], sizes = [8, 1, 8], strides = [1, 1, 1]} : vector<8x16x8xf32> to vector<8x1x8xf32>
    %89 = vector.shape_cast %88 : vector<8x1x8xf32> to vector<8x8xf32>
    %90 = vector.extract_strided_slice %77 {offsets = [0, 6, 0], sizes = [8, 1, 8], strides = [1, 1, 1]} : vector<8x16x8xf32> to vector<8x1x8xf32>
    %91 = vector.shape_cast %90 : vector<8x1x8xf32> to vector<8x8xf32>
    %92 = vector.extract_strided_slice %77 {offsets = [0, 7, 0], sizes = [8, 1, 8], strides = [1, 1, 1]} : vector<8x16x8xf32> to vector<8x1x8xf32>
    %93 = vector.shape_cast %92 : vector<8x1x8xf32> to vector<8x8xf32>
    %94 = vector.extract_strided_slice %77 {offsets = [0, 8, 0], sizes = [8, 1, 8], strides = [1, 1, 1]} : vector<8x16x8xf32> to vector<8x1x8xf32>
    %95 = vector.shape_cast %94 : vector<8x1x8xf32> to vector<8x8xf32>
    %96 = vector.extract_strided_slice %77 {offsets = [0, 9, 0], sizes = [8, 1, 8], strides = [1, 1, 1]} : vector<8x16x8xf32> to vector<8x1x8xf32>
    %97 = vector.shape_cast %96 : vector<8x1x8xf32> to vector<8x8xf32>
    %98 = vector.extract_strided_slice %77 {offsets = [0, 10, 0], sizes = [8, 1, 8], strides = [1, 1, 1]} : vector<8x16x8xf32> to vector<8x1x8xf32>
    %99 = vector.shape_cast %98 : vector<8x1x8xf32> to vector<8x8xf32>
    %100 = vector.extract_strided_slice %77 {offsets = [0, 11, 0], sizes = [8, 1, 8], strides = [1, 1, 1]} : vector<8x16x8xf32> to vector<8x1x8xf32>
    %101 = vector.shape_cast %100 : vector<8x1x8xf32> to vector<8x8xf32>
    %102 = vector.extract_strided_slice %77 {offsets = [0, 12, 0], sizes = [8, 1, 8], strides = [1, 1, 1]} : vector<8x16x8xf32> to vector<8x1x8xf32>
    %103 = vector.shape_cast %102 : vector<8x1x8xf32> to vector<8x8xf32>
    %104 = vector.extract_strided_slice %77 {offsets = [0, 13, 0], sizes = [8, 1, 8], strides = [1, 1, 1]} : vector<8x16x8xf32> to vector<8x1x8xf32>
    %105 = vector.shape_cast %104 : vector<8x1x8xf32> to vector<8x8xf32>
    %106 = vector.extract_strided_slice %77 {offsets = [0, 14, 0], sizes = [8, 1, 8], strides = [1, 1, 1]} : vector<8x16x8xf32> to vector<8x1x8xf32>
    %107 = vector.shape_cast %106 : vector<8x1x8xf32> to vector<8x8xf32>
    %108 = vector.extract_strided_slice %77 {offsets = [0, 15, 0], sizes = [8, 1, 8], strides = [1, 1, 1]} : vector<8x16x8xf32> to vector<8x1x8xf32>
    %109 = vector.shape_cast %108 : vector<8x1x8xf32> to vector<8x8xf32>
    %110 = tpu.concatenate %79, %81, %83, %85, %87, %89, %91, %93, %95, %97, %99, %101, %103, %105, %107, %109 in 1 : vector<8x8xf32>, vector<8x8xf32>, vector<8x8xf32>, vector<8x8xf32>, vector<8x8xf32>, vector<8x8xf32>, vector<8x8xf32>, vector<8x8xf32>, vector<8x8xf32>, vector<8x8xf32>, vector<8x8xf32>, vector<8x8xf32>, vector<8x8xf32>, vector<8x8xf32>, vector<8x8xf32>, vector<8x8xf32> -> vector<8x128xf32>
    %111 = vector.shape_cast %110 : vector<8x128xf32> to vector<1x8x128xf32>
    %c0_60 = arith.constant 0 : index
    %c0_61 = arith.constant 0 : index
    %c0_62 = arith.constant 0 : index
    %112 = vector.load %arg7[%c0_60, %c0_61, %c0_62] : memref<1x8x128xf32, #tpu.memory_space<vmem>>, vector<1x8x128xf32>
    tpu.vector_store %arg7[%c0_60, %c0_61, %c0_62], %111 {strides = array<i32>} : memref<1x8x128xf32, #tpu.memory_space<vmem>>, vector<1x8x128xf32>,
    return
  }
  func.func @transform_0(%arg0: i32, %arg1: i32) -> (i32, i32, i32, i32) {
    %c0_i32 = arith.constant 0 : i32
    %c0_i32_0 = arith.constant 0 : i32
    %c0_i32_1 = arith.constant 0 : i32
    %c0_i32_2 = arith.constant 0 : i32
    return %arg0, %c0_i32, %c0_i32_0, %c0_i32_1 : i32, i32, i32, i32
  }
  func.func @transform_1(%arg0: i32, %arg1: i32) -> (i32, i32) {
    %c0_i32 = arith.constant 0 : i32
    %c0_i32_0 = arith.constant 0 : i32
    %c0_i32_1 = arith.constant 0 : i32
    return %c0_i32, %c0_i32_0 : i32, i32
  }
  func.func @transform_2(%arg0: i32, %arg1: i32) -> (i32, i32) {
    %c0_i32 = arith.constant 0 : i32
    %c0_i32_0 = arith.constant 0 : i32
    %c0_i32_1 = arith.constant 0 : i32
    return %c0_i32, %c0_i32_0 : i32, i32
  }
  func.func @transform_3(%arg0: i32, %arg1: i32) -> (i32, i32) {
    %c0_i32 = arith.constant 0 : i32
    %c0_i32_0 = arith.constant 0 : i32
    %c0_i32_1 = arith.constant 0 : i32
    return %c0_i32, %c0_i32_0 : i32, i32
  }
  func.func @transform_4(%arg0: i32, %arg1: i32) -> (i32, i32) {
    %c0_i32 = arith.constant 0 : i32
    %c0_i32_0 = arith.constant 0 : i32
    %c0_i32_1 = arith.constant 0 : i32
    return %c0_i32, %c0_i32_0 : i32, i32
  }
  func.func @transform_5(%arg0: i32, %arg1: i32) -> (i32, i32, i32) {
    %c0_i32 = arith.constant 0 : i32
    %c0_i32_0 = arith.constant 0 : i32
    return %arg0, %arg1, %c0_i32 : i32, i32, i32
  }
}

module attributes {stable_mosaic.version = 11 : i64} {
  func.func @_fused_double_conv_kernel(%arg0: i32, %arg1: i32, %arg2: memref<1x20x18x4xbf16, #tpu.memory_space<vmem>>, %arg3: memref<36x8xbf16, #tpu.memory_space<vmem>>, %arg4: memref<1x8xf32, #tpu.memory_space<vmem>>, %arg5: memref<72x8xbf16, #tpu.memory_space<vmem>>, %arg6: memref<1x8xf32, #tpu.memory_space<vmem>>, %arg7: memref<1x8x16x8xf32, #tpu.memory_space<vmem>>, %arg8: memref<10x16x36xbf16, #tpu.memory_space<vmem>>, %arg9: memref<10x18x8xbf16, #tpu.memory_space<vmem>>, %arg10: memref<8x16x72xbf16, #tpu.memory_space<vmem>>) attributes {dimension_semantics = [#tpu.dimension_semantics<parallel>, #tpu.dimension_semantics<parallel>], iteration_bounds = array<i64: 2, 2>, scalar_prefetch = 0 : i64, scratch_operands = 3 : i64, tpu.core_type = #tpu.core_type<tc>, window_params = [{transform_indices = @transform_0, window_bounds = array<i64: 1, 20, 18, 4>}, {pipeline_mode = #tpu.pipeline_mode<synchronous>, transform_indices = @transform_1, window_bounds = array<i64: 36, 8>}, {pipeline_mode = #tpu.pipeline_mode<synchronous>, transform_indices = @transform_2, window_bounds = array<i64: 1, 8>}, {pipeline_mode = #tpu.pipeline_mode<synchronous>, transform_indices = @transform_3, window_bounds = array<i64: 72, 8>}, {pipeline_mode = #tpu.pipeline_mode<synchronous>, transform_indices = @transform_4, window_bounds = array<i64: 1, 8>}, {transform_indices = @transform_5, window_bounds = array<i64: 1, 8, 16, 8>}]} {
    %c8_i32 = arith.constant 8 : i32
    %0 = arith.muli %arg1, %c8_i32 : i32
    %1 = tpu.assume_multiple %0, 8 : i32
    %c0_i32 = arith.constant 0 : i32
    %2 = arith.addi %1, %c0_i32 : i32
    %c0 = arith.constant 0 : index
    %3 = arith.index_cast %2 : i32 to index
    %c0_0 = arith.constant 0 : index
    %c0_1 = arith.constant 0 : index
    %4 = vector.load %arg2[%c0, %3, %c0_0, %c0_1] : memref<1x20x18x4xbf16, #tpu.memory_space<vmem>>, vector<1x10x18x4xbf16>
    %5 = vector.shape_cast %4 : vector<1x10x18x4xbf16> to vector<10x18x4xbf16>
    %6 = vector.extract_strided_slice %5 {offsets = [0, 0, 0], sizes = [10, 16, 4], strides = [1, 1, 1]} : vector<10x18x4xbf16> to vector<10x16x4xbf16>
    %c0_2 = arith.constant 0 : index
    %c0_3 = arith.constant 0 : index
    %c0_4 = arith.constant 0 : index
    %7 = vector.load %arg8[%c0_2, %c0_3, %c0_4] : memref<10x16x36xbf16, #tpu.memory_space<vmem>>, vector<10x16x4xbf16>
    tpu.vector_store %arg8[%c0_2, %c0_3, %c0_4], %6 {strides = array<i32>} : memref<10x16x36xbf16, #tpu.memory_space<vmem>>, vector<10x16x4xbf16>,
    %8 = vector.extract_strided_slice %5 {offsets = [0, 1, 0], sizes = [10, 16, 4], strides = [1, 1, 1]} : vector<10x18x4xbf16> to vector<10x16x4xbf16>
    %c0_5 = arith.constant 0 : index
    %c0_6 = arith.constant 0 : index
    %c4 = arith.constant 4 : index
    %9 = vector.load %arg8[%c0_5, %c0_6, %c4] : memref<10x16x36xbf16, #tpu.memory_space<vmem>>, vector<10x16x4xbf16>
    tpu.vector_store %arg8[%c0_5, %c0_6, %c4], %8 {strides = array<i32>} : memref<10x16x36xbf16, #tpu.memory_space<vmem>>, vector<10x16x4xbf16>,
    %10 = vector.extract_strided_slice %5 {offsets = [0, 2, 0], sizes = [10, 16, 4], strides = [1, 1, 1]} : vector<10x18x4xbf16> to vector<10x16x4xbf16>
    %c0_7 = arith.constant 0 : index
    %c0_8 = arith.constant 0 : index
    %c8 = arith.constant 8 : index
    %11 = vector.load %arg8[%c0_7, %c0_8, %c8] : memref<10x16x36xbf16, #tpu.memory_space<vmem>>, vector<10x16x4xbf16>
    tpu.vector_store %arg8[%c0_7, %c0_8, %c8], %10 {strides = array<i32>} : memref<10x16x36xbf16, #tpu.memory_space<vmem>>, vector<10x16x4xbf16>,
    %c1_i32 = arith.constant 1 : i32
    %12 = arith.addi %1, %c1_i32 : i32
    %c0_9 = arith.constant 0 : index
    %13 = arith.index_cast %12 : i32 to index
    %c0_10 = arith.constant 0 : index
    %c0_11 = arith.constant 0 : index
    %14 = vector.load %arg2[%c0_9, %13, %c0_10, %c0_11] : memref<1x20x18x4xbf16, #tpu.memory_space<vmem>>, vector<1x10x18x4xbf16>
    %15 = vector.shape_cast %14 : vector<1x10x18x4xbf16> to vector<10x18x4xbf16>
    %16 = vector.extract_strided_slice %15 {offsets = [0, 0, 0], sizes = [10, 16, 4], strides = [1, 1, 1]} : vector<10x18x4xbf16> to vector<10x16x4xbf16>
    %c0_12 = arith.constant 0 : index
    %c0_13 = arith.constant 0 : index
    %c12 = arith.constant 12 : index
    %17 = vector.load %arg8[%c0_12, %c0_13, %c12] : memref<10x16x36xbf16, #tpu.memory_space<vmem>>, vector<10x16x4xbf16>
    tpu.vector_store %arg8[%c0_12, %c0_13, %c12], %16 {strides = array<i32>} : memref<10x16x36xbf16, #tpu.memory_space<vmem>>, vector<10x16x4xbf16>,
    %18 = vector.extract_strided_slice %15 {offsets = [0, 1, 0], sizes = [10, 16, 4], strides = [1, 1, 1]} : vector<10x18x4xbf16> to vector<10x16x4xbf16>
    %c0_14 = arith.constant 0 : index
    %c0_15 = arith.constant 0 : index
    %c16 = arith.constant 16 : index
    %19 = vector.load %arg8[%c0_14, %c0_15, %c16] : memref<10x16x36xbf16, #tpu.memory_space<vmem>>, vector<10x16x4xbf16>
    tpu.vector_store %arg8[%c0_14, %c0_15, %c16], %18 {strides = array<i32>} : memref<10x16x36xbf16, #tpu.memory_space<vmem>>, vector<10x16x4xbf16>,
    %20 = vector.extract_strided_slice %15 {offsets = [0, 2, 0], sizes = [10, 16, 4], strides = [1, 1, 1]} : vector<10x18x4xbf16> to vector<10x16x4xbf16>
    %c0_16 = arith.constant 0 : index
    %c0_17 = arith.constant 0 : index
    %c20 = arith.constant 20 : index
    %21 = vector.load %arg8[%c0_16, %c0_17, %c20] : memref<10x16x36xbf16, #tpu.memory_space<vmem>>, vector<10x16x4xbf16>
    tpu.vector_store %arg8[%c0_16, %c0_17, %c20], %20 {strides = array<i32>} : memref<10x16x36xbf16, #tpu.memory_space<vmem>>, vector<10x16x4xbf16>,
    %c2_i32 = arith.constant 2 : i32
    %22 = arith.addi %1, %c2_i32 : i32
    %c0_18 = arith.constant 0 : index
    %23 = arith.index_cast %22 : i32 to index
    %c0_19 = arith.constant 0 : index
    %c0_20 = arith.constant 0 : index
    %24 = vector.load %arg2[%c0_18, %23, %c0_19, %c0_20] : memref<1x20x18x4xbf16, #tpu.memory_space<vmem>>, vector<1x10x18x4xbf16>
    %25 = vector.shape_cast %24 : vector<1x10x18x4xbf16> to vector<10x18x4xbf16>
    %26 = vector.extract_strided_slice %25 {offsets = [0, 0, 0], sizes = [10, 16, 4], strides = [1, 1, 1]} : vector<10x18x4xbf16> to vector<10x16x4xbf16>
    %c0_21 = arith.constant 0 : index
    %c0_22 = arith.constant 0 : index
    %c24 = arith.constant 24 : index
    %27 = vector.load %arg8[%c0_21, %c0_22, %c24] : memref<10x16x36xbf16, #tpu.memory_space<vmem>>, vector<10x16x4xbf16>
    tpu.vector_store %arg8[%c0_21, %c0_22, %c24], %26 {strides = array<i32>} : memref<10x16x36xbf16, #tpu.memory_space<vmem>>, vector<10x16x4xbf16>,
    %28 = vector.extract_strided_slice %25 {offsets = [0, 1, 0], sizes = [10, 16, 4], strides = [1, 1, 1]} : vector<10x18x4xbf16> to vector<10x16x4xbf16>
    %c0_23 = arith.constant 0 : index
    %c0_24 = arith.constant 0 : index
    %c28 = arith.constant 28 : index
    %29 = vector.load %arg8[%c0_23, %c0_24, %c28] : memref<10x16x36xbf16, #tpu.memory_space<vmem>>, vector<10x16x4xbf16>
    tpu.vector_store %arg8[%c0_23, %c0_24, %c28], %28 {strides = array<i32>} : memref<10x16x36xbf16, #tpu.memory_space<vmem>>, vector<10x16x4xbf16>,
    %30 = vector.extract_strided_slice %25 {offsets = [0, 2, 0], sizes = [10, 16, 4], strides = [1, 1, 1]} : vector<10x18x4xbf16> to vector<10x16x4xbf16>
    %c0_25 = arith.constant 0 : index
    %c0_26 = arith.constant 0 : index
    %c32 = arith.constant 32 : index
    %31 = vector.load %arg8[%c0_25, %c0_26, %c32] : memref<10x16x36xbf16, #tpu.memory_space<vmem>>, vector<10x16x4xbf16>
    tpu.vector_store %arg8[%c0_25, %c0_26, %c32], %30 {strides = array<i32>} : memref<10x16x36xbf16, #tpu.memory_space<vmem>>, vector<10x16x4xbf16>,
    %c0_27 = arith.constant 0 : index
    %c0_28 = arith.constant 0 : index
    %c0_29 = arith.constant 0 : index
    %32 = vector.load %arg8[%c0_27, %c0_28, %c0_29] : memref<10x16x36xbf16, #tpu.memory_space<vmem>>, vector<10x16x36xbf16>
    %33 = vector.shape_cast %32 : vector<10x16x36xbf16> to vector<160x36xbf16>
    %c0_30 = arith.constant 0 : index
    %c0_31 = arith.constant 0 : index
    %34 = vector.load %arg3[%c0_30, %c0_31] : memref<36x8xbf16, #tpu.memory_space<vmem>>, vector<36x8xbf16>
    %cst = arith.constant dense<0.000000e+00> : vector<160x8xf32>
    %35 = tpu.matmul %33, %34, %cst {dimension_numbers = #tpu.dot_dimension_numbers<[1], [0], [0], [1], [0, 0, 1, 1], [], []>} : vector<160x36xbf16>, vector<36x8xbf16>, vector<160x8xf32> -> vector<160x8xf32>
    %c0_32 = arith.constant 0 : index
    %c0_33 = arith.constant 0 : index
    %36 = vector.load %arg4[%c0_32, %c0_33] : memref<1x8xf32, #tpu.memory_space<vmem>>, vector<1x8xf32>
    %37 = vector.broadcast %36 : vector<1x8xf32> to vector<160x8xf32>
    %38 = arith.addf %35, %37 : vector<160x8xf32>
    %cst_34 = arith.constant 0.000000e+00 : f32
    %39 = vector.broadcast %cst_34 : f32 to vector<160x8xf32>
    %40 = arith.maximumf %38, %39 : vector<160x8xf32>
    %41 = arith.truncf %40 : vector<160x8xf32> to vector<160x8xbf16>
    %42 = vector.shape_cast %41 : vector<160x8xbf16> to vector<10x16x8xbf16>
    %c0_35 = arith.constant 0 : index
    %c1 = arith.constant 1 : index
    %c0_36 = arith.constant 0 : index
    %43 = vector.load %arg9[%c0_35, %c1, %c0_36] : memref<10x18x8xbf16, #tpu.memory_space<vmem>>, vector<10x16x8xbf16>
    tpu.vector_store %arg9[%c0_35, %c1, %c0_36], %42 {strides = array<i32>} : memref<10x18x8xbf16, #tpu.memory_space<vmem>>, vector<10x16x8xbf16>,
    %cst_37 = arith.constant 0.000000e+00 : bf16
    %44 = vector.broadcast %cst_37 : bf16 to vector<10x1x8xbf16>
    %c0_38 = arith.constant 0 : index
    %c0_39 = arith.constant 0 : index
    %c0_40 = arith.constant 0 : index
    %45 = vector.load %arg9[%c0_38, %c0_39, %c0_40] : memref<10x18x8xbf16, #tpu.memory_space<vmem>>, vector<10x1x8xbf16>
    tpu.vector_store %arg9[%c0_38, %c0_39, %c0_40], %44 {strides = array<i32>} : memref<10x18x8xbf16, #tpu.memory_space<vmem>>, vector<10x1x8xbf16>,
    %c0_41 = arith.constant 0 : index
    %c17 = arith.constant 17 : index
    %c0_42 = arith.constant 0 : index
    %46 = vector.load %arg9[%c0_41, %c17, %c0_42] : memref<10x18x8xbf16, #tpu.memory_space<vmem>>, vector<10x1x8xbf16>
    tpu.vector_store %arg9[%c0_41, %c17, %c0_42], %44 {strides = array<i32>} : memref<10x18x8xbf16, #tpu.memory_space<vmem>>, vector<10x1x8xbf16>,
    %c0_i32_43 = arith.constant 0 : i32
    %47 = arith.cmpi eq, %arg1, %c0_i32_43 : i32
    %48 = arith.extui %47 : i1 to i32
    %c0_i32_44 = arith.constant 0 : i32
    %49 = arith.cmpi ne, %48, %c0_i32_44 : i32
    scf.if %49 {
      %cst_91 = arith.constant 0.000000e+00 : bf16
      %85 = vector.broadcast %cst_91 : bf16 to vector<18x8xbf16>
      %c0_92 = arith.constant 0 : index
      %c0_93 = arith.constant 0 : index
      %c0_94 = arith.constant 0 : index
      %86 = vector.load %arg9[%c0_92, %c0_93, %c0_94] : memref<10x18x8xbf16, #tpu.memory_space<vmem>>, vector<1x18x8xbf16>
      %87 = vector.shape_cast %86 : vector<1x18x8xbf16> to vector<18x8xbf16>
      %88 = vector.shape_cast %85 : vector<18x8xbf16> to vector<1x18x8xbf16>
      tpu.vector_store %arg9[%c0_92, %c0_93, %c0_94], %88 {strides = array<i32>} : memref<10x18x8xbf16, #tpu.memory_space<vmem>>, vector<1x18x8xbf16>,
    } else {
    }
    %c1_i32_45 = arith.constant 1 : i32
    %50 = arith.cmpi eq, %arg1, %c1_i32_45 : i32
    %51 = arith.extui %50 : i1 to i32
    %c0_i32_46 = arith.constant 0 : i32
    %52 = arith.cmpi ne, %51, %c0_i32_46 : i32
    scf.if %52 {
      %cst_91 = arith.constant 0.000000e+00 : bf16
      %85 = vector.broadcast %cst_91 : bf16 to vector<18x8xbf16>
      %c9 = arith.constant 9 : index
      %c0_92 = arith.constant 0 : index
      %c0_93 = arith.constant 0 : index
      %86 = vector.load %arg9[%c9, %c0_92, %c0_93] : memref<10x18x8xbf16, #tpu.memory_space<vmem>>, vector<1x18x8xbf16>
      %87 = vector.shape_cast %86 : vector<1x18x8xbf16> to vector<18x8xbf16>
      %88 = vector.shape_cast %85 : vector<18x8xbf16> to vector<1x18x8xbf16>
      tpu.vector_store %arg9[%c9, %c0_92, %c0_93], %88 {strides = array<i32>} : memref<10x18x8xbf16, #tpu.memory_space<vmem>>, vector<1x18x8xbf16>,
    } else {
    }
    %c0_47 = arith.constant 0 : index
    %c0_48 = arith.constant 0 : index
    %c0_49 = arith.constant 0 : index
    %53 = vector.load %arg9[%c0_47, %c0_48, %c0_49] : memref<10x18x8xbf16, #tpu.memory_space<vmem>>, vector<8x18x8xbf16>
    %54 = vector.extract_strided_slice %53 {offsets = [0, 0, 0], sizes = [8, 16, 8], strides = [1, 1, 1]} : vector<8x18x8xbf16> to vector<8x16x8xbf16>
    %c0_50 = arith.constant 0 : index
    %c0_51 = arith.constant 0 : index
    %c0_52 = arith.constant 0 : index
    %55 = vector.load %arg10[%c0_50, %c0_51, %c0_52] : memref<8x16x72xbf16, #tpu.memory_space<vmem>>, vector<8x16x8xbf16>
    tpu.vector_store %arg10[%c0_50, %c0_51, %c0_52], %54 {strides = array<i32>} : memref<8x16x72xbf16, #tpu.memory_space<vmem>>, vector<8x16x8xbf16>,
    %56 = vector.extract_strided_slice %53 {offsets = [0, 1, 0], sizes = [8, 16, 8], strides = [1, 1, 1]} : vector<8x18x8xbf16> to vector<8x16x8xbf16>
    %c0_53 = arith.constant 0 : index
    %c0_54 = arith.constant 0 : index
    %c8_55 = arith.constant 8 : index
    %57 = vector.load %arg10[%c0_53, %c0_54, %c8_55] : memref<8x16x72xbf16, #tpu.memory_space<vmem>>, vector<8x16x8xbf16>
    tpu.vector_store %arg10[%c0_53, %c0_54, %c8_55], %56 {strides = array<i32>} : memref<8x16x72xbf16, #tpu.memory_space<vmem>>, vector<8x16x8xbf16>,
    %58 = vector.extract_strided_slice %53 {offsets = [0, 2, 0], sizes = [8, 16, 8], strides = [1, 1, 1]} : vector<8x18x8xbf16> to vector<8x16x8xbf16>
    %c0_56 = arith.constant 0 : index
    %c0_57 = arith.constant 0 : index
    %c16_58 = arith.constant 16 : index
    %59 = vector.load %arg10[%c0_56, %c0_57, %c16_58] : memref<8x16x72xbf16, #tpu.memory_space<vmem>>, vector<8x16x8xbf16>
    tpu.vector_store %arg10[%c0_56, %c0_57, %c16_58], %58 {strides = array<i32>} : memref<8x16x72xbf16, #tpu.memory_space<vmem>>, vector<8x16x8xbf16>,
    %c1_59 = arith.constant 1 : index
    %c0_60 = arith.constant 0 : index
    %c0_61 = arith.constant 0 : index
    %60 = vector.load %arg9[%c1_59, %c0_60, %c0_61] : memref<10x18x8xbf16, #tpu.memory_space<vmem>>, vector<8x18x8xbf16>
    %61 = vector.extract_strided_slice %60 {offsets = [0, 0, 0], sizes = [8, 16, 8], strides = [1, 1, 1]} : vector<8x18x8xbf16> to vector<8x16x8xbf16>
    %c0_62 = arith.constant 0 : index
    %c0_63 = arith.constant 0 : index
    %c24_64 = arith.constant 24 : index
    %62 = vector.load %arg10[%c0_62, %c0_63, %c24_64] : memref<8x16x72xbf16, #tpu.memory_space<vmem>>, vector<8x16x8xbf16>
    tpu.vector_store %arg10[%c0_62, %c0_63, %c24_64], %61 {strides = array<i32>} : memref<8x16x72xbf16, #tpu.memory_space<vmem>>, vector<8x16x8xbf16>,
    %63 = vector.extract_strided_slice %60 {offsets = [0, 1, 0], sizes = [8, 16, 8], strides = [1, 1, 1]} : vector<8x18x8xbf16> to vector<8x16x8xbf16>
    %c0_65 = arith.constant 0 : index
    %c0_66 = arith.constant 0 : index
    %c32_67 = arith.constant 32 : index
    %64 = vector.load %arg10[%c0_65, %c0_66, %c32_67] : memref<8x16x72xbf16, #tpu.memory_space<vmem>>, vector<8x16x8xbf16>
    tpu.vector_store %arg10[%c0_65, %c0_66, %c32_67], %63 {strides = array<i32>} : memref<8x16x72xbf16, #tpu.memory_space<vmem>>, vector<8x16x8xbf16>,
    %65 = vector.extract_strided_slice %60 {offsets = [0, 2, 0], sizes = [8, 16, 8], strides = [1, 1, 1]} : vector<8x18x8xbf16> to vector<8x16x8xbf16>
    %c0_68 = arith.constant 0 : index
    %c0_69 = arith.constant 0 : index
    %c40 = arith.constant 40 : index
    %66 = vector.load %arg10[%c0_68, %c0_69, %c40] : memref<8x16x72xbf16, #tpu.memory_space<vmem>>, vector<8x16x8xbf16>
    tpu.vector_store %arg10[%c0_68, %c0_69, %c40], %65 {strides = array<i32>} : memref<8x16x72xbf16, #tpu.memory_space<vmem>>, vector<8x16x8xbf16>,
    %c2 = arith.constant 2 : index
    %c0_70 = arith.constant 0 : index
    %c0_71 = arith.constant 0 : index
    %67 = vector.load %arg9[%c2, %c0_70, %c0_71] : memref<10x18x8xbf16, #tpu.memory_space<vmem>>, vector<8x18x8xbf16>
    %68 = vector.extract_strided_slice %67 {offsets = [0, 0, 0], sizes = [8, 16, 8], strides = [1, 1, 1]} : vector<8x18x8xbf16> to vector<8x16x8xbf16>
    %c0_72 = arith.constant 0 : index
    %c0_73 = arith.constant 0 : index
    %c48 = arith.constant 48 : index
    %69 = vector.load %arg10[%c0_72, %c0_73, %c48] : memref<8x16x72xbf16, #tpu.memory_space<vmem>>, vector<8x16x8xbf16>
    tpu.vector_store %arg10[%c0_72, %c0_73, %c48], %68 {strides = array<i32>} : memref<8x16x72xbf16, #tpu.memory_space<vmem>>, vector<8x16x8xbf16>,
    %70 = vector.extract_strided_slice %67 {offsets = [0, 1, 0], sizes = [8, 16, 8], strides = [1, 1, 1]} : vector<8x18x8xbf16> to vector<8x16x8xbf16>
    %c0_74 = arith.constant 0 : index
    %c0_75 = arith.constant 0 : index
    %c56 = arith.constant 56 : index
    %71 = vector.load %arg10[%c0_74, %c0_75, %c56] : memref<8x16x72xbf16, #tpu.memory_space<vmem>>, vector<8x16x8xbf16>
    tpu.vector_store %arg10[%c0_74, %c0_75, %c56], %70 {strides = array<i32>} : memref<8x16x72xbf16, #tpu.memory_space<vmem>>, vector<8x16x8xbf16>,
    %72 = vector.extract_strided_slice %67 {offsets = [0, 2, 0], sizes = [8, 16, 8], strides = [1, 1, 1]} : vector<8x18x8xbf16> to vector<8x16x8xbf16>
    %c0_76 = arith.constant 0 : index
    %c0_77 = arith.constant 0 : index
    %c64 = arith.constant 64 : index
    %73 = vector.load %arg10[%c0_76, %c0_77, %c64] : memref<8x16x72xbf16, #tpu.memory_space<vmem>>, vector<8x16x8xbf16>
    tpu.vector_store %arg10[%c0_76, %c0_77, %c64], %72 {strides = array<i32>} : memref<8x16x72xbf16, #tpu.memory_space<vmem>>, vector<8x16x8xbf16>,
    %c0_78 = arith.constant 0 : index
    %c0_79 = arith.constant 0 : index
    %c0_80 = arith.constant 0 : index
    %74 = vector.load %arg10[%c0_78, %c0_79, %c0_80] : memref<8x16x72xbf16, #tpu.memory_space<vmem>>, vector<8x16x72xbf16>
    %75 = vector.shape_cast %74 : vector<8x16x72xbf16> to vector<128x72xbf16>
    %c0_81 = arith.constant 0 : index
    %c0_82 = arith.constant 0 : index
    %76 = vector.load %arg5[%c0_81, %c0_82] : memref<72x8xbf16, #tpu.memory_space<vmem>>, vector<72x8xbf16>
    %cst_83 = arith.constant dense<0.000000e+00> : vector<128x8xf32>
    %77 = tpu.matmul %75, %76, %cst_83 {dimension_numbers = #tpu.dot_dimension_numbers<[1], [0], [0], [1], [0, 0, 1, 1], [], []>} : vector<128x72xbf16>, vector<72x8xbf16>, vector<128x8xf32> -> vector<128x8xf32>
    %c0_84 = arith.constant 0 : index
    %c0_85 = arith.constant 0 : index
    %78 = vector.load %arg6[%c0_84, %c0_85] : memref<1x8xf32, #tpu.memory_space<vmem>>, vector<1x8xf32>
    %79 = vector.broadcast %78 : vector<1x8xf32> to vector<128x8xf32>
    %80 = arith.addf %77, %79 : vector<128x8xf32>
    %cst_86 = arith.constant 0.000000e+00 : f32
    %81 = vector.broadcast %cst_86 : f32 to vector<128x8xf32>
    %82 = arith.maximumf %80, %81 : vector<128x8xf32>
    %83 = vector.shape_cast %82 : vector<128x8xf32> to vector<1x8x16x8xf32>
    %c0_87 = arith.constant 0 : index
    %c0_88 = arith.constant 0 : index
    %c0_89 = arith.constant 0 : index
    %c0_90 = arith.constant 0 : index
    %84 = vector.load %arg7[%c0_87, %c0_88, %c0_89, %c0_90] : memref<1x8x16x8xf32, #tpu.memory_space<vmem>>, vector<1x8x16x8xf32>
    tpu.vector_store %arg7[%c0_87, %c0_88, %c0_89, %c0_90], %83 {strides = array<i32>} : memref<1x8x16x8xf32, #tpu.memory_space<vmem>>, vector<1x8x16x8xf32>,
    return
  }
  func.func @transform_0(%arg0: i32, %arg1: i32) -> (i32, i32, i32, i32) {
    %c0_i32 = arith.constant 0 : i32
    %c0_i32_0 = arith.constant 0 : i32
    %c0_i32_1 = arith.constant 0 : i32
    %c0_i32_2 = arith.constant 0 : i32
    return %arg0, %c0_i32, %c0_i32_0, %c0_i32_1 : i32, i32, i32, i32
  }
  func.func @transform_1(%arg0: i32, %arg1: i32) -> (i32, i32) {
    %c0_i32 = arith.constant 0 : i32
    %c0_i32_0 = arith.constant 0 : i32
    %c0_i32_1 = arith.constant 0 : i32
    return %c0_i32, %c0_i32_0 : i32, i32
  }
  func.func @transform_2(%arg0: i32, %arg1: i32) -> (i32, i32) {
    %c0_i32 = arith.constant 0 : i32
    %c0_i32_0 = arith.constant 0 : i32
    %c0_i32_1 = arith.constant 0 : i32
    return %c0_i32, %c0_i32_0 : i32, i32
  }
  func.func @transform_3(%arg0: i32, %arg1: i32) -> (i32, i32) {
    %c0_i32 = arith.constant 0 : i32
    %c0_i32_0 = arith.constant 0 : i32
    %c0_i32_1 = arith.constant 0 : i32
    return %c0_i32, %c0_i32_0 : i32, i32
  }
  func.func @transform_4(%arg0: i32, %arg1: i32) -> (i32, i32) {
    %c0_i32 = arith.constant 0 : i32
    %c0_i32_0 = arith.constant 0 : i32
    %c0_i32_1 = arith.constant 0 : i32
    return %c0_i32, %c0_i32_0 : i32, i32
  }
  func.func @transform_5(%arg0: i32, %arg1: i32) -> (i32, i32, i32, i32) {
    %c0_i32 = arith.constant 0 : i32
    %c0_i32_0 = arith.constant 0 : i32
    %c0_i32_1 = arith.constant 0 : i32
    return %arg0, %arg1, %c0_i32, %c0_i32_0 : i32, i32, i32, i32
  }
}

</mosaic_0001>

<llo_original>
// kernel: tpu_custom_call.1
$region0: #{tpu_custom_call.1}
  #allocation0 [shape = 'u32[]', space=smem, size = 0x4, offset = 0x4, fixed_abs, tag = 'smem constant byte address 0x4 - core index']
  #allocation1 [shape = 'u32[144,128]{1,0:T(1,128)}', space=vmem, size = 0x12000, scoped, tag = 'internal scratch']
  #allocation2 [shape = 'bf16[10,16,36]{2,1,0:T(8,128)(2,1)}', space=vmem, size = 0xa000, scoped, tag = 'scratch operand']
  #allocation3 [shape = 'bf16[10,18,8]{2,1,0:T(8,128)(2,1)}', space=vmem, size = 0xf000, scoped, tag = 'scratch operand']
  #allocation4 [shape = 'bf16[8,16,72]{2,1,0:T(8,128)(2,1)}', space=vmem, size = 0x8000, scoped, tag = 'scratch operand']
  %s0 = inlined_call_operand.vmem [shape: bf16[2,20,18,4], index: 0, kind: input, shape index: {}]
  %s1 = inlined_call_operand.vmem [shape: bf16[36,8], index: 1, kind: input, shape index: {}]
  %s2 = inlined_call_operand.vmem [shape: f32[1,8], index: 2, kind: input, shape index: {}]
  %s3 = inlined_call_operand.vmem [shape: bf16[72,8], index: 3, kind: input, shape index: {}]
  %s4 = inlined_call_operand.vmem [shape: f32[1,8], index: 4, kind: input, shape index: {}]
  %s5 = inlined_call_operand.hbm [shape: f32[2,16,128], index: 5, kind: output, shape index: {}]
  %s6 = sld [smem:[#allocation0]]
  $region61: #{tpu_custom_call.1} parent=0
    _
  %s8 = ssub.s32 1, %s6
  %s9 = scalar_select 0, %s8, %s6
  $region1: #{tpu_custom_call.1} parent=0
    #allocation5 [shape = 'u8[8192]{0}', space=vmem, size = 0x2000, scoped, tag = 'output window, operand 0']
    #allocation6 [shape = 's32[2]{0}', space=sflag, size = 0x8, scoped, tag = 'scoped memory for tpu_custom_call.1']
    %10 = vsyncpa [#allocation6], 0
    %s11 = scalar_lea.sflag [#allocation6], 1
    %12 = vsyncpa %s11, 0
    loop: start=0, step=1, limit=6
    $region2: #{tpu_custom_call.1} parent=1 // loop_pre_header
      _
    $region3: #{tpu_custom_call.1} parent=1 // loop_header
      %s14 = sphi 0, %s18
      %p15 = scmp.ge.s32.totalorder %s14, 6
      %s21 = sphi 0, %s33
      %s22 = sphi 0, %s29
      %s23 = sphi 0, %s21
      %s24 = sphi 0, %s22
      %s25 = sphi 0, %s23
      %s26 = sphi 0, %s24
      %s36 = sphi 0, %s38
      %s39 = sphi 0, %s36
      %s40 = sphi 0, %s39
      %s56 = sphi 0, %s40
      %s60 = sphi 0, %s60
      %s62 = sphi 0, %s60
      %s63 = sphi 0, %s62
      %s77 = sphi 0, %s63
      %s81 = sphi 0, %s81
      %s83 = sphi 0, %s81
      %s84 = sphi 0, %s83
      %s98 = sphi 0, %s84
      %s102 = sphi 0, %s102
      %s104 = sphi 0, %s102
      %s105 = sphi 0, %s104
      %s119 = sphi 0, %s105
      %s123 = sphi 0, %s123
      %s125 = sphi 0, %s123
      %s126 = sphi 0, %s125
      %s140 = sphi 0, %s126
      %s148 = sphi 0, %s150
      %s151 = sphi 0, %s148
      %s152 = sphi 0, %s151
      %s168 = sphi 0, %s152
    $region4: #{tpu_custom_call.1} parent=1 // loop_header_branch
      %17 = sbr.rel (%p15) target = $region8
    $region5: #{tpu_custom_call.1} parent=1 // loop_body
      %s19 = ssub.s32 %s14, 1
      %s20 = ssub.s32 %s14, 2
      %s27 = sadd.s32 1, %s22
      %p28 = scmp.ge.s32.totalorder %s27, 2
      %s29 = scalar_select %p28, 0, %s27
      %s30 = sadd.s32 1, %s21
      %s31 = scalar_select %p28, %s30, %s21
      %p32 = scmp.ge.s32.totalorder %s31, 2
      %s33 = scalar_select %p32, 0, %s31
      %s34 = ssub.s32 %s21, %s33
      %p35 = scmp.eq.s32.totalorder %s34, 0
      %s37 = sadd.s32 %s36, 1
      %s38 = scalar_select %p35, %s36, %s37
      %p41 = pneg %p35
      %p42 = scmp.eq.s32.totalorder %s14, 3
      %p43 = por %p41, %p42
      %p44 = scmp.ne.s32.totalorder %s36, %s39
      %p45 = scmp.eq.s32.totalorder %s14, 0
      %p46 = por %p44, %p45
      %p47 = scmp.ne.s32.totalorder %s36, %s39
      %p48 = scmp.eq.s32.totalorder %s19, 3
      %p49 = por %p47, %p48
      %p50 = scmp.ne.s32.totalorder %s39, %s40
      %p51 = scmp.eq.s32.totalorder %s19, 0
      %p52 = por %p50, %p51
      %p53 = scmp.ne.s32.totalorder %s39, %s40
      %p54 = scmp.eq.s32.totalorder %s20, 3
      %p55 = por %p53, %p54
      %p57 = scmp.ne.s32.totalorder %s40, %s56
      %p58 = scmp.eq.s32.totalorder %s20, 0
      %p59 = por %p57, %p58
      %s61 = sadd.s32 %s60, 1
      %p64 = scmp.eq.s32.totalorder %s14, 3
      %p65 = scmp.ne.s32.totalorder %s60, %s62
      %p66 = scmp.eq.s32.totalorder %s14, 0
      %p67 = por %p65, %p66
      %p68 = scmp.ne.s32.totalorder %s60, %s62
      %p69 = scmp.eq.s32.totalorder %s19, 3
      %p70 = por %p68, %p69
      %p71 = scmp.ne.s32.totalorder %s62, %s63
      %p72 = scmp.eq.s32.totalorder %s19, 0
      %p73 = por %p71, %p72
      %p74 = scmp.ne.s32.totalorder %s62, %s63
      %p75 = scmp.eq.s32.totalorder %s20, 3
      %p76 = por %p74, %p75
      %p78 = scmp.ne.s32.totalorder %s63, %s77
      %p79 = scmp.eq.s32.totalorder %s20, 0
      %p80 = por %p78, %p79
      %s82 = sadd.s32 %s81, 1
      %p85 = scmp.eq.s32.totalorder %s14, 3
      %p86 = scmp.ne.s32.totalorder %s81, %s83
      %p87 = scmp.eq.s32.totalorder %s14, 0
      %p88 = por %p86, %p87
      %p89 = scmp.ne.s32.totalorder %s81, %s83
      %p90 = scmp.eq.s32.totalorder %s19, 3
      %p91 = por %p89, %p90
      %p92 = scmp.ne.s32.totalorder %s83, %s84
      %p93 = scmp.eq.s32.totalorder %s19, 0
      %p94 = por %p92, %p93
      %p95 = scmp.ne.s32.totalorder %s83, %s84
      %p96 = scmp.eq.s32.totalorder %s20, 3
      %p97 = por %p95, %p96
      %p99 = scmp.ne.s32.totalorder %s84, %s98
      %p100 = scmp.eq.s32.totalorder %s20, 0
      %p101 = por %p99, %p100
      %s103 = sadd.s32 %s102, 1
      %p106 = scmp.eq.s32.totalorder %s14, 3
      %p107 = scmp.ne.s32.totalorder %s102, %s104
      %p108 = scmp.eq.s32.totalorder %s14, 0
      %p109 = por %p107, %p108
      %p110 = scmp.ne.s32.totalorder %s102, %s104
      %p111 = scmp.eq.s32.totalorder %s19, 3
      %p112 = por %p110, %p111
      %p113 = scmp.ne.s32.totalorder %s104, %s105
      %p114 = scmp.eq.s32.totalorder %s19, 0
      %p115 = por %p113, %p114
      %p116 = scmp.ne.s32.totalorder %s104, %s105
      %p117 = scmp.eq.s32.totalorder %s20, 3
      %p118 = por %p116, %p117
      %p120 = scmp.ne.s32.totalorder %s105, %s119
      %p121 = scmp.eq.s32.totalorder %s20, 0
      %p122 = por %p120, %p121
      %s124 = sadd.s32 %s123, 1
      %p127 = scmp.eq.s32.totalorder %s14, 3
      %p128 = scmp.ne.s32.totalorder %s123, %s125
      %p129 = scmp.eq.s32.totalorder %s14, 0
      %p130 = por %p128, %p129
      %p131 = scmp.ne.s32.totalorder %s123, %s125
      %p132 = scmp.eq.s32.totalorder %s19, 3
      %p133 = por %p131, %p132
      %p134 = scmp.ne.s32.totalorder %s125, %s126
      %p135 = scmp.eq.s32.totalorder %s19, 0
      %p136 = por %p134, %p135
      %p137 = scmp.ne.s32.totalorder %s125, %s126
      %p138 = scmp.eq.s32.totalorder %s20, 3
      %p139 = por %p137, %p138
      %p141 = scmp.ne.s32.totalorder %s126, %s140
      %p142 = scmp.eq.s32.totalorder %s20, 0
      %p143 = por %p141, %p142
      %s144 = ssub.s32 %s21, %s33
      %s145 = ssub.s32 %s22, %s29
      %s146 = sor.u32 %s144, %s145
      %p147 = scmp.eq.s32.totalorder %s146, 0
      %s149 = sadd.s32 %s148, 1
      %s150 = scalar_select %p147, %s148, %s149
      %p153 = pneg %p147
      %p154 = scmp.eq.s32.totalorder %s14, 3
      %p155 = por %p153, %p154
      %p156 = scmp.ne.s32.totalorder %s148, %s151
      %p157 = scmp.eq.s32.totalorder %s14, 0
      %p158 = por %p156, %p157
      %p159 = scmp.ne.s32.totalorder %s148, %s151
      %p160 = scmp.eq.s32.totalorder %s19, 3
      %p161 = por %p159, %p160
      %p162 = scmp.ne.s32.totalorder %s151, %s152
      %p163 = scmp.eq.s32.totalorder %s19, 0
      %p164 = por %p162, %p163
      %p165 = scmp.ne.s32.totalorder %s151, %s152
      %p166 = scmp.eq.s32.totalorder %s20, 3
      %p167 = por %p165, %p166
      %p169 = scmp.ne.s32.totalorder %s152, %s168
      %p170 = scmp.eq.s32.totalorder %s20, 0
      %p171 = por %p169, %p170
      %p172 = scmp.le.s32.totalorder 1, %s14
      %p173 = scmp.lt.s32.totalorder %s14, 5
      %p174 = pnand %p172, %p173
      %p175 = pneg %p174
      // Predicated region
      $region9: #{tpu_custom_call.1} parent=5 // pred_check
        _
      $region10: #{tpu_custom_call.1} parent=5 // pred_check_branch
        %177 = sbr.rel (%p174) target = $region12
      $region11: #{tpu_custom_call.1} parent=5 // pred_region
        %s178 = ssub.s32 %s14, 1
        // Predicated region
        $region13: #{tpu_custom_call.1} parent=11 // pred_check
          %p179 = pneg %p73
        $region14: #{tpu_custom_call.1} parent=11 // pred_check_branch
          %181 = sbr.rel (%p179) target = $region16
        $region15: #{tpu_custom_call.1} parent=11 // pred_region
          _
        $region16: #{tpu_custom_call.1} parent=11 // pred_fallthru
          _
        // Predicated region
        $region17: #{tpu_custom_call.1} parent=11 // pred_check
          %p182 = pneg %p94
        $region18: #{tpu_custom_call.1} parent=11 // pred_check_branch
          %184 = sbr.rel (%p182) target = $region20
        $region19: #{tpu_custom_call.1} parent=11 // pred_region
          _
        $region20: #{tpu_custom_call.1} parent=11 // pred_fallthru
          _
        // Predicated region
        $region21: #{tpu_custom_call.1} parent=11 // pred_check
          %p185 = pneg %p115
        $region22: #{tpu_custom_call.1} parent=11 // pred_check_branch
          %187 = sbr.rel (%p185) target = $region24
        $region23: #{tpu_custom_call.1} parent=11 // pred_region
          _
        $region24: #{tpu_custom_call.1} parent=11 // pred_fallthru
          _
        // Predicated region
        $region25: #{tpu_custom_call.1} parent=11 // pred_check
          %p188 = pneg %p136
        $region26: #{tpu_custom_call.1} parent=11 // pred_check_branch
          %190 = sbr.rel (%p188) target = $region28
        $region27: #{tpu_custom_call.1} parent=11 // pred_region
          _
        $region28: #{tpu_custom_call.1} parent=11 // pred_fallthru
          _
      $region12: #{tpu_custom_call.1} parent=5 // pred_fallthru
        _
      %p191 = scmp.lt.s32.totalorder %s14, 4
      // Predicated region
      $region29: #{tpu_custom_call.1} parent=5 // pred_check
        %p192 = pneg %p191
      $region30: #{tpu_custom_call.1} parent=5 // pred_check_branch
        %194 = sbr.rel (%p192) target = $region32
      $region31: #{tpu_custom_call.1} parent=5 // pred_region
        // Predicated region
        $region33: #{tpu_custom_call.1} parent=31 // pred_check
          %p195 = pneg %p46
        $region34: #{tpu_custom_call.1} parent=31 // pred_check_branch
          %197 = sbr.rel (%p195) target = $region36
        $region35: #{tpu_custom_call.1} parent=31 // pred_region
          %p198 = scmp.lt.s32.totalorder %s21, 1
          %s199 = scalar_select %p198, %s21, 1
          %s200 = smul.addr %s199, 60
          %s201 = smul.addr %s200, 4
          %s202 = scalar_lea.vmem %s0, %s201
        $region36: #{tpu_custom_call.1} parent=31 // pred_fallthru
          _
      $region32: #{tpu_custom_call.1} parent=5 // pred_fallthru
        _
      %p203 = scmp.le.s32.totalorder 1, %s14
      %p204 = scmp.lt.s32.totalorder %s14, 5
      %p205 = pnand %p203, %p204
      %p206 = pneg %p205
      // Predicated region
      $region37: #{tpu_custom_call.1} parent=5 // pred_check
        _
      $region38: #{tpu_custom_call.1} parent=5 // pred_check_branch
        %208 = sbr.rel (%p205) target = $region40
      $region39: #{tpu_custom_call.1} parent=5 // pred_region
        %s209 = ssub.s32 %s14, 1
        %p210 = scmp.lt.s32.totalorder %s23, 1
        %s211 = scalar_select %p210, %s23, 1
        %s212 = smul.addr %s211, 60
        %s213 = smul.addr %s212, 4
        %s214 = scalar_lea.vmem %s0, %s213
        %p215 = pneg %p52
        %p216 = pneg %p49
        %p217 = pneg %p73
        %p218 = pneg %p70
        %p219 = pneg %p94
        %p220 = pneg %p91
        %p221 = pneg %p115
        %p222 = pneg %p112
        %p223 = pneg %p136
        %p224 = pneg %p133
        %p225 = pneg %p164
        %p226 = pneg %p161
        %s227 = sand.u32 %s151, 1
        %s228 = scalar_lea.sflag [#allocation6], %s227
        %s229 = sand.u32 %s151, 1
        %s230 = smul.addr %s229, 8
        %s231 = scalar_lea.vmem [#allocation5], %s230
        %p232 = scmp.lt.s32.totalorder %s23, 1
        %s233 = scalar_select %p232, %s23, 1
        %s234 = smul.addr %s233, 60
        %s235 = smul.addr %s234, 4
        %s236 = scalar_lea.vmem %s0, %s235
        %s238 = smul.u32 %s24, 8
        %s239 = smul.u32 %s238, 3
        %s240 = smul.addr %s239, 4
        %s241 = scalar_lea.vmem %s236, %s240
        %v242 = vld [vmem:[%s241] sm:$0xf]
        %v243 = vld [vmem:[%s241 + $0x4] sm:$0xf]
        %v244 = vld [vmem:[%s241 + $0x8] sm:$0x1]
        %v245 = vld [vmem:[%s241 + $0xc] sm:$0xf]
        %v246 = vld [vmem:[%s241 + $0x10] sm:$0xf]
        %v247 = vld [vmem:[%s241 + $0x14] sm:$0x1]
        %v248 = vld [vmem:[%s241 + $0x18] sm:$0xf]
        %v249 = vld [vmem:[%s241 + $0x1c] sm:$0xf]
        %v250 = vld [vmem:[%s241 + $0x20] sm:$0x1]
        %v251 = vld [vmem:[%s241 + $0x24] sm:$0xf]
        %v252 = vld [vmem:[%s241 + $0x28] sm:$0xf]
        %v253 = vld [vmem:[%s241 + $0x2c] sm:$0x1]
        %v254 = vld [vmem:[%s241 + $0x30] sm:$0xf]
        %v255 = vld [vmem:[%s241 + $0x34] sm:$0xf]
        %v256 = vld [vmem:[%s241 + $0x38] sm:$0x1]
        %v257 = vld [vmem:[%s241 + $0x3c] sm:$0xf]
        %v258 = vld [vmem:[%s241 + $0x40] sm:$0xf]
        %v259 = vld [vmem:[%s241 + $0x44] sm:$0x1]
        %v260 = vld [vmem:[%s241 + $0x48] sm:$0xf]
        %v261 = vld [vmem:[%s241 + $0x4c] sm:$0xf]
        %v262 = vld [vmem:[%s241 + $0x50] sm:$0x1]
        %v263 = vld [vmem:[%s241 + $0x54] sm:$0xf]
        %v264 = vld [vmem:[%s241 + $0x58] sm:$0xf]
        %v265 = vld [vmem:[%s241 + $0x5c] sm:$0x1]
        %v266 = vld [vmem:[%s241 + $0x60] sm:$0xf]
        %v267 = vld [vmem:[%s241 + $0x64] sm:$0xf]
        %v268 = vld [vmem:[%s241 + $0x68] sm:$0x1]
        %v269 = vld [vmem:[%s241 + $0x6c] sm:$0xf]
        %v270 = vld [vmem:[%s241 + $0x70] sm:$0xf]
        %v271 = vld [vmem:[%s241 + $0x74] sm:$0x1]
        %v292 = vunpack.c.l.b16 %v242
        %v293 = vunpack.c.l.b16 %v243
        %v294 = vunpack.c.l.b16 %v245
        %v295 = vunpack.c.l.b16 %v246
        %v296 = vunpack.c.l.b16 %v248
        %v297 = vunpack.c.l.b16 %v249
        %v298 = vunpack.c.l.b16 %v251
        %v299 = vunpack.c.l.b16 %v252
        %v300 = vunpack.c.l.b16 %v254
        %v301 = vunpack.c.l.b16 %v255
        %v302 = vunpack.c.l.b16 %v257
        %v303 = vunpack.c.l.b16 %v258
        %v304 = vunpack.c.l.b16 %v260
        %v305 = vunpack.c.l.b16 %v261
        %v306 = vunpack.c.l.b16 %v263
        %v307 = vunpack.c.l.b16 %v264
        %v308 = vunpack.c.l.b16 %v266
        %v309 = vunpack.c.l.b16 %v267
        %v310 = vunpack.c.l.b16 %v269
        %v311 = vunpack.c.l.b16 %v270
        %v312 = vpack.c.b16 %v293, %v292
        %v313 = vpack.c.b16 %v295, %v294
        %v314 = vpack.c.b16 %v297, %v296
        %v315 = vpack.c.b16 %v299, %v298
        %v316 = vpack.c.b16 %v301, %v300
        %v317 = vpack.c.b16 %v303, %v302
        %v318 = vpack.c.b16 %v305, %v304
        %v319 = vpack.c.b16 %v307, %v306
        %v320 = vpack.c.b16 %v309, %v308
        %v321 = vpack.c.b16 %v311, %v310
        %v332 = vunpack.c.l.b16 %v244
        %v333 = vunpack.c.l.b16 %v247
        %v334 = vunpack.c.l.b16 %v250
        %v335 = vunpack.c.l.b16 %v253
        %v336 = vunpack.c.l.b16 %v256
        %v337 = vunpack.c.l.b16 %v259
        %v338 = vunpack.c.l.b16 %v262
        %v339 = vunpack.c.l.b16 %v265
        %v340 = vunpack.c.l.b16 %v268
        %v341 = vunpack.c.l.b16 %v271
        %v342 = vpack.c.b16 %v332, %v332
        %v343 = vpack.c.b16 %v333, %v333
        %v344 = vpack.c.b16 %v334, %v334
        %v345 = vpack.c.b16 %v335, %v335
        %v346 = vpack.c.b16 %v336, %v336
        %v347 = vpack.c.b16 %v337, %v337
        %v348 = vpack.c.b16 %v338, %v338
        %v349 = vpack.c.b16 %v339, %v339
        %v350 = vpack.c.b16 %v340, %v340
        %v351 = vpack.c.b16 %v341, %v341
        %vm352 = vsmask.f32 7424
        %v354 = vshrl.u32 %v312, 16
        %v356 = vshll.u32 %v312, 16
        %v358 = vrot.slane %v356, 1
        %v359 = vor.u32 %v354, %v358
        %v361 = vshll.u32 %v342, 16
        %v363 = vrot.slane %v361, 1
        %v364 = vsel %vm352, %v359, %v363
        %v366 = vshrl.u32 %v313, 16
        %v368 = vshll.u32 %v313, 16
        %v370 = vrot.slane %v368, 1
        %v371 = vor.u32 %v366, %v370
        %v373 = vshll.u32 %v343, 16
        %v375 = vrot.slane %v373, 1
        %v376 = vsel %vm352, %v371, %v375
        %v378 = vshrl.u32 %v314, 16
        %v380 = vshll.u32 %v314, 16
        %v382 = vrot.slane %v380, 1
        %v383 = vor.u32 %v378, %v382
        %v385 = vshll.u32 %v344, 16
        %v387 = vrot.slane %v385, 1
        %v388 = vsel %vm352, %v383, %v387
        %v390 = vshrl.u32 %v315, 16
        %v392 = vshll.u32 %v315, 16
        %v394 = vrot.slane %v392, 1
        %v395 = vor.u32 %v390, %v394
        %v397 = vshll.u32 %v345, 16
        %v399 = vrot.slane %v397, 1
        %v400 = vsel %vm352, %v395, %v399
        %v402 = vshrl.u32 %v316, 16
        %v404 = vshll.u32 %v316, 16
        %v406 = vrot.slane %v404, 1
        %v407 = vor.u32 %v402, %v406
        %v409 = vshll.u32 %v346, 16
        %v411 = vrot.slane %v409, 1
        %v412 = vsel %vm352, %v407, %v411
        %v414 = vshrl.u32 %v317, 16
        %v416 = vshll.u32 %v317, 16
        %v418 = vrot.slane %v416, 1
        %v419 = vor.u32 %v414, %v418
        %v421 = vshll.u32 %v347, 16
        %v423 = vrot.slane %v421, 1
        %v424 = vsel %vm352, %v419, %v423
        %v426 = vshrl.u32 %v318, 16
        %v428 = vshll.u32 %v318, 16
        %v430 = vrot.slane %v428, 1
        %v431 = vor.u32 %v426, %v430
        %v433 = vshll.u32 %v348, 16
        %v435 = vrot.slane %v433, 1
        %v436 = vsel %vm352, %v431, %v435
        %v438 = vshrl.u32 %v319, 16
        %v440 = vshll.u32 %v319, 16
        %v442 = vrot.slane %v440, 1
        %v443 = vor.u32 %v438, %v442
        %v445 = vshll.u32 %v349, 16
        %v447 = vrot.slane %v445, 1
        %v448 = vsel %vm352, %v443, %v447
        %v450 = vshrl.u32 %v320, 16
        %v452 = vshll.u32 %v320, 16
        %v454 = vrot.slane %v452, 1
        %v455 = vor.u32 %v450, %v454
        %v457 = vshll.u32 %v350, 16
        %v459 = vrot.slane %v457, 1
        %v460 = vsel %vm352, %v455, %v459
        %v462 = vshrl.u32 %v321, 16
        %v464 = vshll.u32 %v321, 16
        %v466 = vrot.slane %v464, 1
        %v467 = vor.u32 %v462, %v466
        %v469 = vshll.u32 %v351, 16
        %v471 = vrot.slane %v469, 1
        %v472 = vsel %vm352, %v467, %v471
        %473 = vrot.lane.b32.xlu0 %v364, 4
        %v474 = vpop.permute.xlu0 %473
        %475 = vrot.lane.b32.xlu0 %v376, 4
        %v476 = vpop.permute.xlu0 %475
        %477 = vrot.lane.b32.xlu0 %v388, 4
        %v478 = vpop.permute.xlu0 %477
        %479 = vrot.lane.b32.xlu0 %v400, 4
        %v480 = vpop.permute.xlu0 %479
        %481 = vrot.lane.b32.xlu0 %v412, 4
        %v482 = vpop.permute.xlu0 %481
        %483 = vrot.lane.b32.xlu0 %v424, 4
        %v484 = vpop.permute.xlu0 %483
        %485 = vrot.lane.b32.xlu0 %v436, 4
        %v486 = vpop.permute.xlu0 %485
        %487 = vrot.lane.b32.xlu0 %v448, 4
        %v488 = vpop.permute.xlu0 %487
        %489 = vrot.lane.b32.xlu0 %v460, 4
        %v490 = vpop.permute.xlu0 %489
        %491 = vrot.lane.b32.xlu0 %v472, 4
        %v492 = vpop.permute.xlu0 %491
        %vm493 = vcmask 1046528
        %v494 = vrot.slane %v312, 1
        %v495 = vrot.slane %v342, 1
        %v496 = vsel %vm493, %v494, %v495
        %v497 = vrot.slane %v313, 1
        %v498 = vrot.slane %v343, 1
        %v499 = vsel %vm493, %v497, %v498
        %v500 = vrot.slane %v314, 1
        %v501 = vrot.slane %v344, 1
        %v502 = vsel %vm493, %v500, %v501
        %v503 = vrot.slane %v315, 1
        %v504 = vrot.slane %v345, 1
        %v505 = vsel %vm493, %v503, %v504
        %v506 = vrot.slane %v316, 1
        %v507 = vrot.slane %v346, 1
        %v508 = vsel %vm493, %v506, %v507
        %v509 = vrot.slane %v317, 1
        %v510 = vrot.slane %v347, 1
        %v511 = vsel %vm493, %v509, %v510
        %v512 = vrot.slane %v318, 1
        %v513 = vrot.slane %v348, 1
        %v514 = vsel %vm493, %v512, %v513
        %v515 = vrot.slane %v319, 1
        %v516 = vrot.slane %v349, 1
        %v517 = vsel %vm493, %v515, %v516
        %v518 = vrot.slane %v320, 1
        %v519 = vrot.slane %v350, 1
        %v520 = vsel %vm493, %v518, %v519
        %v521 = vrot.slane %v321, 1
        %v522 = vrot.slane %v351, 1
        %v523 = vsel %vm493, %v521, %v522
        %524 = vrot.lane.b32.xlu0 %v496, 8
        %v525 = vpop.permute.xlu0 %524
        %526 = vrot.lane.b32.xlu0 %v499, 8
        %v527 = vpop.permute.xlu0 %526
        %528 = vrot.lane.b32.xlu0 %v502, 8
        %v529 = vpop.permute.xlu0 %528
        %530 = vrot.lane.b32.xlu0 %v505, 8
        %v531 = vpop.permute.xlu0 %530
        %532 = vrot.lane.b32.xlu0 %v508, 8
        %v533 = vpop.permute.xlu0 %532
        %534 = vrot.lane.b32.xlu0 %v511, 8
        %v535 = vpop.permute.xlu0 %534
        %536 = vrot.lane.b32.xlu0 %v514, 8
        %v537 = vpop.permute.xlu0 %536
        %538 = vrot.lane.b32.xlu0 %v517, 8
        %v539 = vpop.permute.xlu0 %538
        %540 = vrot.lane.b32.xlu0 %v520, 8
        %v541 = vpop.permute.xlu0 %540
        %542 = vrot.lane.b32.xlu0 %v523, 8
        %v543 = vpop.permute.xlu0 %542
        %vm544 = vcmask 31744
        %v546 = vsel %vm544, %v312, %v474
        %v548 = vsel %vm544, %v313, %v476
        %v550 = vsel %vm544, %v314, %v478
        %v552 = vsel %vm544, %v315, %v480
        %v554 = vsel %vm544, %v316, %v482
        %v556 = vsel %vm544, %v317, %v484
        %v558 = vsel %vm544, %v318, %v486
        %v560 = vsel %vm544, %v319, %v488
        %v562 = vsel %vm544, %v320, %v490
        %v564 = vsel %vm544, %v321, %v492
        %vm565 = vcmask 64512
        %v567 = vsel %vm565, %v546, %v525
        %v569 = vsel %vm565, %v548, %v527
        %v571 = vsel %vm565, %v550, %v529
        %v573 = vsel %vm565, %v552, %v531
        %v575 = vsel %vm565, %v554, %v533
        %v577 = vsel %vm565, %v556, %v535
        %v579 = vsel %vm565, %v558, %v537
        %v581 = vsel %vm565, %v560, %v539
        %v583 = vsel %vm565, %v562, %v541
        %v585 = vsel %vm565, %v564, %v543
        %v596 = vunpack.c.l.b16 %v567
        %v597 = vunpack.c.h.b16 %v567
        %v598 = vunpack.c.l.b16 %v569
        %v599 = vunpack.c.h.b16 %v569
        %v600 = vunpack.c.l.b16 %v571
        %v601 = vunpack.c.h.b16 %v571
        %v602 = vunpack.c.l.b16 %v573
        %v603 = vunpack.c.h.b16 %v573
        %v604 = vunpack.c.l.b16 %v575
        %v605 = vunpack.c.h.b16 %v575
        %v606 = vunpack.c.l.b16 %v577
        %v607 = vunpack.c.h.b16 %v577
        %v608 = vunpack.c.l.b16 %v579
        %v609 = vunpack.c.h.b16 %v579
        %v610 = vunpack.c.l.b16 %v581
        %v611 = vunpack.c.h.b16 %v581
        %v612 = vunpack.c.l.b16 %v583
        %v613 = vunpack.c.h.b16 %v583
        %v614 = vunpack.c.l.b16 %v585
        %v615 = vunpack.c.h.b16 %v585
        %v616 = vpack.c.b16 %v596, %v596
        %v617 = vpack.c.b16 %v597, %v597
        %v618 = vpack.c.b16 %v598, %v598
        %v619 = vpack.c.b16 %v599, %v599
        %v620 = vpack.c.b16 %v600, %v600
        %v621 = vpack.c.b16 %v601, %v601
        %v622 = vpack.c.b16 %v602, %v602
        %v623 = vpack.c.b16 %v603, %v603
        %v624 = vpack.c.b16 %v604, %v604
        %v625 = vpack.c.b16 %v605, %v605
        %v626 = vpack.c.b16 %v606, %v606
        %v627 = vpack.c.b16 %v607, %v607
        %v628 = vpack.c.b16 %v608, %v608
        %v629 = vpack.c.b16 %v609, %v609
        %v630 = vpack.c.b16 %v610, %v610
        %v631 = vpack.c.b16 %v611, %v611
        %v632 = vpack.c.b16 %v612, %v612
        %v633 = vpack.c.b16 %v613, %v613
        %v634 = vpack.c.b16 %v614, %v614
        %v635 = vpack.c.b16 %v615, %v615
        %vm656 = vcmask 93184
        %657 = vst.msk [vmem:[#allocation2] sm:$0xf] %vm656, %v616
        %658 = vst.msk [vmem:[#allocation2 + $0x4] sm:$0xf] %vm656, %v617
        %659 = vst.msk [vmem:[#allocation2 + $0x8] sm:$0xf] %vm656, %v618
        %660 = vst.msk [vmem:[#allocation2 + $0xc] sm:$0xf] %vm656, %v619
        %661 = vst.msk [vmem:[#allocation2 + $0x10] sm:$0xf] %vm656, %v620
        %662 = vst.msk [vmem:[#allocation2 + $0x14] sm:$0xf] %vm656, %v621
        %663 = vst.msk [vmem:[#allocation2 + $0x18] sm:$0xf] %vm656, %v622
        %664 = vst.msk [vmem:[#allocation2 + $0x1c] sm:$0xf] %vm656, %v623
        %665 = vst.msk [vmem:[#allocation2 + $0x20] sm:$0xf] %vm656, %v624
        %666 = vst.msk [vmem:[#allocation2 + $0x24] sm:$0xf] %vm656, %v625
        %667 = vst.msk [vmem:[#allocation2 + $0x28] sm:$0xf] %vm656, %v626
        %668 = vst.msk [vmem:[#allocation2 + $0x2c] sm:$0xf] %vm656, %v627
        %669 = vst.msk [vmem:[#allocation2 + $0x30] sm:$0xf] %vm656, %v628
        %670 = vst.msk [vmem:[#allocation2 + $0x34] sm:$0xf] %vm656, %v629
        %671 = vst.msk [vmem:[#allocation2 + $0x38] sm:$0xf] %vm656, %v630
        %672 = vst.msk [vmem:[#allocation2 + $0x3c] sm:$0xf] %vm656, %v631
        %673 = vst.msk [vmem:[#allocation2 + $0x40] sm:$0xf] %vm656, %v632
        %674 = vst.msk [vmem:[#allocation2 + $0x44] sm:$0xf] %vm656, %v633
        %675 = vst.msk [vmem:[#allocation2 + $0x48] sm:$0xf] %vm656, %v634
        %676 = vst.msk [vmem:[#allocation2 + $0x4c] sm:$0xf] %vm656, %v635
        %s677 = sadd.s32 %s238, 1
        %s678 = smul.u32 %s677, 3
        %s679 = smul.addr %s678, 4
        %s680 = scalar_lea.vmem %s236, %s679
        %v681 = vld [vmem:[%s680] sm:$0xf]
        %v682 = vld [vmem:[%s680 + $0x4] sm:$0xf]
        %v683 = vld [vmem:[%s680 + $0x8] sm:$0x1]
        %v684 = vld [vmem:[%s680 + $0xc] sm:$0xf]
        %v685 = vld [vmem:[%s680 + $0x10] sm:$0xf]
        %v686 = vld [vmem:[%s680 + $0x14] sm:$0x1]
        %v687 = vld [vmem:[%s680 + $0x18] sm:$0xf]
        %v688 = vld [vmem:[%s680 + $0x1c] sm:$0xf]
        %v689 = vld [vmem:[%s680 + $0x20] sm:$0x1]
        %v690 = vld [vmem:[%s680 + $0x24] sm:$0xf]
        %v691 = vld [vmem:[%s680 + $0x28] sm:$0xf]
        %v692 = vld [vmem:[%s680 + $0x2c] sm:$0x1]
        %v693 = vld [vmem:[%s680 + $0x30] sm:$0xf]
        %v694 = vld [vmem:[%s680 + $0x34] sm:$0xf]
        %v695 = vld [vmem:[%s680 + $0x38] sm:$0x1]
        %v696 = vld [vmem:[%s680 + $0x3c] sm:$0xf]
        %v697 = vld [vmem:[%s680 + $0x40] sm:$0xf]
        %v698 = vld [vmem:[%s680 + $0x44] sm:$0x1]
        %v699 = vld [vmem:[%s680 + $0x48] sm:$0xf]
        %v700 = vld [vmem:[%s680 + $0x4c] sm:$0xf]
        %v701 = vld [vmem:[%s680 + $0x50] sm:$0x1]
        %v702 = vld [vmem:[%s680 + $0x54] sm:$0xf]
        %v703 = vld [vmem:[%s680 + $0x58] sm:$0xf]
        %v704 = vld [vmem:[%s680 + $0x5c] sm:$0x1]
        %v705 = vld [vmem:[%s680 + $0x60] sm:$0xf]
        %v706 = vld [vmem:[%s680 + $0x64] sm:$0xf]
        %v707 = vld [vmem:[%s680 + $0x68] sm:$0x1]
        %v708 = vld [vmem:[%s680 + $0x6c] sm:$0xf]
        %v709 = vld [vmem:[%s680 + $0x70] sm:$0xf]
        %v710 = vld [vmem:[%s680 + $0x74] sm:$0x1]
        %v731 = vunpack.c.l.b16 %v681
        %v732 = vunpack.c.l.b16 %v682
        %v733 = vunpack.c.l.b16 %v684
        %v734 = vunpack.c.l.b16 %v685
        %v735 = vunpack.c.l.b16 %v687
        %v736 = vunpack.c.l.b16 %v688
        %v737 = vunpack.c.l.b16 %v690
        %v738 = vunpack.c.l.b16 %v691
        %v739 = vunpack.c.l.b16 %v693
        %v740 = vunpack.c.l.b16 %v694
        %v741 = vunpack.c.l.b16 %v696
        %v742 = vunpack.c.l.b16 %v697
        %v743 = vunpack.c.l.b16 %v699
        %v744 = vunpack.c.l.b16 %v700
        %v745 = vunpack.c.l.b16 %v702
        %v746 = vunpack.c.l.b16 %v703
        %v747 = vunpack.c.l.b16 %v705
        %v748 = vunpack.c.l.b16 %v706
        %v749 = vunpack.c.l.b16 %v708
        %v750 = vunpack.c.l.b16 %v709
        %v751 = vpack.c.b16 %v732, %v731
        %v752 = vpack.c.b16 %v734, %v733
        %v753 = vpack.c.b16 %v736, %v735
        %v754 = vpack.c.b16 %v738, %v737
        %v755 = vpack.c.b16 %v740, %v739
        %v756 = vpack.c.b16 %v742, %v741
        %v757 = vpack.c.b16 %v744, %v743
        %v758 = vpack.c.b16 %v746, %v745
        %v759 = vpack.c.b16 %v748, %v747
        %v760 = vpack.c.b16 %v750, %v749
        %v771 = vunpack.c.l.b16 %v683
        %v772 = vunpack.c.l.b16 %v686
        %v773 = vunpack.c.l.b16 %v689
        %v774 = vunpack.c.l.b16 %v692
        %v775 = vunpack.c.l.b16 %v695
        %v776 = vunpack.c.l.b16 %v698
        %v777 = vunpack.c.l.b16 %v701
        %v778 = vunpack.c.l.b16 %v704
        %v779 = vunpack.c.l.b16 %v707
        %v780 = vunpack.c.l.b16 %v710
        %v781 = vpack.c.b16 %v771, %v771
        %v782 = vpack.c.b16 %v772, %v772
        %v783 = vpack.c.b16 %v773, %v773
        %v784 = vpack.c.b16 %v774, %v774
        %v785 = vpack.c.b16 %v775, %v775
        %v786 = vpack.c.b16 %v776, %v776
        %v787 = vpack.c.b16 %v777, %v777
        %v788 = vpack.c.b16 %v778, %v778
        %v789 = vpack.c.b16 %v779, %v779
        %v790 = vpack.c.b16 %v780, %v780
        %v792 = vshrl.u32 %v751, 16
        %v794 = vshll.u32 %v751, 16
        %v796 = vrot.slane %v794, 1
        %v797 = vor.u32 %v792, %v796
        %v799 = vshll.u32 %v781, 16
        %v801 = vrot.slane %v799, 1
        %v802 = vsel %vm352, %v797, %v801
        %v804 = vshrl.u32 %v752, 16
        %v806 = vshll.u32 %v752, 16
        %v808 = vrot.slane %v806, 1
        %v809 = vor.u32 %v804, %v808
        %v811 = vshll.u32 %v782, 16
        %v813 = vrot.slane %v811, 1
        %v814 = vsel %vm352, %v809, %v813
        %v816 = vshrl.u32 %v753, 16
        %v818 = vshll.u32 %v753, 16
        %v820 = vrot.slane %v818, 1
        %v821 = vor.u32 %v816, %v820
        %v823 = vshll.u32 %v783, 16
        %v825 = vrot.slane %v823, 1
        %v826 = vsel %vm352, %v821, %v825
        %v828 = vshrl.u32 %v754, 16
        %v830 = vshll.u32 %v754, 16
        %v832 = vrot.slane %v830, 1
        %v833 = vor.u32 %v828, %v832
        %v835 = vshll.u32 %v784, 16
        %v837 = vrot.slane %v835, 1
        %v838 = vsel %vm352, %v833, %v837
        %v840 = vshrl.u32 %v755, 16
        %v842 = vshll.u32 %v755, 16
        %v844 = vrot.slane %v842, 1
        %v845 = vor.u32 %v840, %v844
        %v847 = vshll.u32 %v785, 16
        %v849 = vrot.slane %v847, 1
        %v850 = vsel %vm352, %v845, %v849
        %v852 = vshrl.u32 %v756, 16
        %v854 = vshll.u32 %v756, 16
        %v856 = vrot.slane %v854, 1
        %v857 = vor.u32 %v852, %v856
        %v859 = vshll.u32 %v786, 16
        %v861 = vrot.slane %v859, 1
        %v862 = vsel %vm352, %v857, %v861
        %v864 = vshrl.u32 %v757, 16
        %v866 = vshll.u32 %v757, 16
        %v868 = vrot.slane %v866, 1
        %v869 = vor.u32 %v864, %v868
        %v871 = vshll.u32 %v787, 16
        %v873 = vrot.slane %v871, 1
        %v874 = vsel %vm352, %v869, %v873
        %v876 = vshrl.u32 %v758, 16
        %v878 = vshll.u32 %v758, 16
        %v880 = vrot.slane %v878, 1
        %v881 = vor.u32 %v876, %v880
        %v883 = vshll.u32 %v788, 16
        %v885 = vrot.slane %v883, 1
        %v886 = vsel %vm352, %v881, %v885
        %v888 = vshrl.u32 %v759, 16
        %v890 = vshll.u32 %v759, 16
        %v892 = vrot.slane %v890, 1
        %v893 = vor.u32 %v888, %v892
        %v895 = vshll.u32 %v789, 16
        %v897 = vrot.slane %v895, 1
        %v898 = vsel %vm352, %v893, %v897
        %v900 = vshrl.u32 %v760, 16
        %v902 = vshll.u32 %v760, 16
        %v904 = vrot.slane %v902, 1
        %v905 = vor.u32 %v900, %v904
        %v907 = vshll.u32 %v790, 16
        %v909 = vrot.slane %v907, 1
        %v910 = vsel %vm352, %v905, %v909
        %911 = vrot.lane.b32.xlu0 %v802, 4
        %v912 = vpop.permute.xlu0 %911
        %913 = vrot.lane.b32.xlu0 %v814, 4
        %v914 = vpop.permute.xlu0 %913
        %915 = vrot.lane.b32.xlu0 %v826, 4
        %v916 = vpop.permute.xlu0 %915
        %917 = vrot.lane.b32.xlu0 %v838, 4
        %v918 = vpop.permute.xlu0 %917
        %919 = vrot.lane.b32.xlu0 %v850, 4
        %v920 = vpop.permute.xlu0 %919
        %921 = vrot.lane.b32.xlu0 %v862, 4
        %v922 = vpop.permute.xlu0 %921
        %923 = vrot.lane.b32.xlu0 %v874, 4
        %v924 = vpop.permute.xlu0 %923
        %925 = vrot.lane.b32.xlu0 %v886, 4
        %v926 = vpop.permute.xlu0 %925
        %927 = vrot.lane.b32.xlu0 %v898, 4
        %v928 = vpop.permute.xlu0 %927
        %929 = vrot.lane.b32.xlu0 %v910, 4
        %v930 = vpop.permute.xlu0 %929
        %v931 = vrot.slane %v751, 1
        %v932 = vrot.slane %v781, 1
        %v933 = vsel %vm493, %v931, %v932
        %v934 = vrot.slane %v752, 1
        %v935 = vrot.slane %v782, 1
        %v936 = vsel %vm493, %v934, %v935
        %v937 = vrot.slane %v753, 1
        %v938 = vrot.slane %v783, 1
        %v939 = vsel %vm493, %v937, %v938
        %v940 = vrot.slane %v754, 1
        %v941 = vrot.slane %v784, 1
        %v942 = vsel %vm493, %v940, %v941
        %v943 = vrot.slane %v755, 1
        %v944 = vrot.slane %v785, 1
        %v945 = vsel %vm493, %v943, %v944
        %v946 = vrot.slane %v756, 1
        %v947 = vrot.slane %v786, 1
        %v948 = vsel %vm493, %v946, %v947
        %v949 = vrot.slane %v757, 1
        %v950 = vrot.slane %v787, 1
        %v951 = vsel %vm493, %v949, %v950
        %v952 = vrot.slane %v758, 1
        %v953 = vrot.slane %v788, 1
        %v954 = vsel %vm493, %v952, %v953
        %v955 = vrot.slane %v759, 1
        %v956 = vrot.slane %v789, 1
        %v957 = vsel %vm493, %v955, %v956
        %v958 = vrot.slane %v760, 1
        %v959 = vrot.slane %v790, 1
        %v960 = vsel %vm493, %v958, %v959
        %961 = vrot.lane.b32.xlu0 %v933, 8
        %v962 = vpop.permute.xlu0 %961
        %963 = vrot.lane.b32.xlu0 %v936, 8
        %v964 = vpop.permute.xlu0 %963
        %965 = vrot.lane.b32.xlu0 %v939, 8
        %v966 = vpop.permute.xlu0 %965
        %967 = vrot.lane.b32.xlu0 %v942, 8
        %v968 = vpop.permute.xlu0 %967
        %969 = vrot.lane.b32.xlu0 %v945, 8
        %v970 = vpop.permute.xlu0 %969
        %971 = vrot.lane.b32.xlu0 %v948, 8
        %v972 = vpop.permute.xlu0 %971
        %973 = vrot.lane.b32.xlu0 %v951, 8
        %v974 = vpop.permute.xlu0 %973
        %975 = vrot.lane.b32.xlu0 %v954, 8
        %v976 = vpop.permute.xlu0 %975
        %977 = vrot.lane.b32.xlu0 %v957, 8
        %v978 = vpop.permute.xlu0 %977
        %979 = vrot.lane.b32.xlu0 %v960, 8
        %v980 = vpop.permute.xlu0 %979
        %v982 = vsel %vm544, %v751, %v912
        %v984 = vsel %vm544, %v752, %v914
        %v986 = vsel %vm544, %v753, %v916
        %v988 = vsel %vm544, %v754, %v918
        %v990 = vsel %vm544, %v755, %v920
        %v992 = vsel %vm544, %v756, %v922
        %v994 = vsel %vm544, %v757, %v924
        %v996 = vsel %vm544, %v758, %v926
        %v998 = vsel %vm544, %v759, %v928
        %v1000 = vsel %vm544, %v760, %v930
        %v1002 = vsel %vm565, %v982, %v962
        %v1004 = vsel %vm565, %v984, %v964
        %v1006 = vsel %vm565, %v986, %v966
        %v1008 = vsel %vm565, %v988, %v968
        %v1010 = vsel %vm565, %v990, %v970
        %v1012 = vsel %vm565, %v992, %v972
        %v1014 = vsel %vm565, %v994, %v974
        %v1016 = vsel %vm565, %v996, %v976
        %v1018 = vsel %vm565, %v998, %v978
        %v1020 = vsel %vm565, %v1000, %v980
        %v1031 = vunpack.c.l.b16 %v1002
        %v1032 = vunpack.c.h.b16 %v1002
        %v1033 = vunpack.c.l.b16 %v1004
        %v1034 = vunpack.c.h.b16 %v1004
        %v1035 = vunpack.c.l.b16 %v1006
        %v1036 = vunpack.c.h.b16 %v1006
        %v1037 = vunpack.c.l.b16 %v1008
        %v1038 = vunpack.c.h.b16 %v1008
        %v1039 = vunpack.c.l.b16 %v1010
        %v1040 = vunpack.c.h.b16 %v1010
        %v1041 = vunpack.c.l.b16 %v1012
        %v1042 = vunpack.c.h.b16 %v1012
        %v1043 = vunpack.c.l.b16 %v1014
        %v1044 = vunpack.c.h.b16 %v1014
        %v1045 = vunpack.c.l.b16 %v1016
        %v1046 = vunpack.c.h.b16 %v1016
        %v1047 = vunpack.c.l.b16 %v1018
        %v1048 = vunpack.c.h.b16 %v1018
        %v1049 = vunpack.c.l.b16 %v1020
        %v1050 = vunpack.c.h.b16 %v1020
        %v1051 = vpack.c.b16 %v1031, %v1031
        %v1052 = vpack.c.b16 %v1032, %v1032
        %v1053 = vpack.c.b16 %v1033, %v1033
        %v1054 = vpack.c.b16 %v1034, %v1034
        %v1055 = vpack.c.b16 %v1035, %v1035
        %v1056 = vpack.c.b16 %v1036, %v1036
        %v1057 = vpack.c.b16 %v1037, %v1037
        %v1058 = vpack.c.b16 %v1038, %v1038
        %v1059 = vpack.c.b16 %v1039, %v1039
        %v1060 = vpack.c.b16 %v1040, %v1040
        %v1061 = vpack.c.b16 %v1041, %v1041
        %v1062 = vpack.c.b16 %v1042, %v1042
        %v1063 = vpack.c.b16 %v1043, %v1043
        %v1064 = vpack.c.b16 %v1044, %v1044
        %v1065 = vpack.c.b16 %v1045, %v1045
        %v1066 = vpack.c.b16 %v1046, %v1046
        %v1067 = vpack.c.b16 %v1047, %v1047
        %v1068 = vpack.c.b16 %v1048, %v1048
        %v1069 = vpack.c.b16 %v1049, %v1049
        %v1070 = vpack.c.b16 %v1050, %v1050
        %1071 = vrot.lane.b32.xlu0 %v1051, 12
        %v1072 = vpop.permute.xlu0 %1071
        %1073 = vrot.lane.b32.xlu0 %v1052, 12
        %v1074 = vpop.permute.xlu0 %1073
        %1075 = vrot.lane.b32.xlu0 %v1053, 12
        %v1076 = vpop.permute.xlu0 %1075
        %1077 = vrot.lane.b32.xlu0 %v1054, 12
        %v1078 = vpop.permute.xlu0 %1077
        %1079 = vrot.lane.b32.xlu0 %v1055, 12
        %v1080 = vpop.permute.xlu0 %1079
        %1081 = vrot.lane.b32.xlu0 %v1056, 12
        %v1082 = vpop.permute.xlu0 %1081
        %1083 = vrot.lane.b32.xlu0 %v1057, 12
        %v1084 = vpop.permute.xlu0 %1083
        %1085 = vrot.lane.b32.xlu0 %v1058, 12
        %v1086 = vpop.permute.xlu0 %1085
        %1087 = vrot.lane.b32.xlu0 %v1059, 12
        %v1088 = vpop.permute.xlu0 %1087
        %1089 = vrot.lane.b32.xlu0 %v1060, 12
        %v1090 = vpop.permute.xlu0 %1089
        %1091 = vrot.lane.b32.xlu0 %v1061, 12
        %v1092 = vpop.permute.xlu0 %1091
        %1093 = vrot.lane.b32.xlu0 %v1062, 12
        %v1094 = vpop.permute.xlu0 %1093
        %1095 = vrot.lane.b32.xlu0 %v1063, 12
        %v1096 = vpop.permute.xlu0 %1095
        %1097 = vrot.lane.b32.xlu0 %v1064, 12
        %v1098 = vpop.permute.xlu0 %1097
        %1099 = vrot.lane.b32.xlu0 %v1065, 12
        %v1100 = vpop.permute.xlu0 %1099
        %1101 = vrot.lane.b32.xlu0 %v1066, 12
        %v1102 = vpop.permute.xlu0 %1101
        %1103 = vrot.lane.b32.xlu0 %v1067, 12
        %v1104 = vpop.permute.xlu0 %1103
        %1105 = vrot.lane.b32.xlu0 %v1068, 12
        %v1106 = vpop.permute.xlu0 %1105
        %1107 = vrot.lane.b32.xlu0 %v1069, 12
        %v1108 = vpop.permute.xlu0 %1107
        %1109 = vrot.lane.b32.xlu0 %v1070, 12
        %v1110 = vpop.permute.xlu0 %1109
        %vm1131 = vcmask 191584
        %1132 = vst.msk [vmem:[#allocation2] sm:$0xf] %vm1131, %v1072
        %1133 = vst.msk [vmem:[#allocation2 + $0x4] sm:$0xf] %vm1131, %v1074
        %1134 = vst.msk [vmem:[#allocation2 + $0x8] sm:$0xf] %vm1131, %v1076
        %1135 = vst.msk [vmem:[#allocation2 + $0xc] sm:$0xf] %vm1131, %v1078
        %1136 = vst.msk [vmem:[#allocation2 + $0x10] sm:$0xf] %vm1131, %v1080
        %1137 = vst.msk [vmem:[#allocation2 + $0x14] sm:$0xf] %vm1131, %v1082
        %1138 = vst.msk [vmem:[#allocation2 + $0x18] sm:$0xf] %vm1131, %v1084
        %1139 = vst.msk [vmem:[#allocation2 + $0x1c] sm:$0xf] %vm1131, %v1086
        %1140 = vst.msk [vmem:[#allocation2 + $0x20] sm:$0xf] %vm1131, %v1088
        %1141 = vst.msk [vmem:[#allocation2 + $0x24] sm:$0xf] %vm1131, %v1090
        %1142 = vst.msk [vmem:[#allocation2 + $0x28] sm:$0xf] %vm1131, %v1092
        %1143 = vst.msk [vmem:[#allocation2 + $0x2c] sm:$0xf] %vm1131, %v1094
        %1144 = vst.msk [vmem:[#allocation2 + $0x30] sm:$0xf] %vm1131, %v1096
        %1145 = vst.msk [vmem:[#allocation2 + $0x34] sm:$0xf] %vm1131, %v1098
        %1146 = vst.msk [vmem:[#allocation2 + $0x38] sm:$0xf] %vm1131, %v1100
        %1147 = vst.msk [vmem:[#allocation2 + $0x3c] sm:$0xf] %vm1131, %v1102
        %1148 = vst.msk [vmem:[#allocation2 + $0x40] sm:$0xf] %vm1131, %v1104
        %1149 = vst.msk [vmem:[#allocation2 + $0x44] sm:$0xf] %vm1131, %v1106
        %1150 = vst.msk [vmem:[#allocation2 + $0x48] sm:$0xf] %vm1131, %v1108
        %1151 = vst.msk [vmem:[#allocation2 + $0x4c] sm:$0xf] %vm1131, %v1110
        %s1152 = sadd.s32 %s238, 2
        %s1153 = smul.u32 %s1152, 3
        %s1154 = smul.addr %s1153, 4
        %s1155 = scalar_lea.vmem %s236, %s1154
        %v1156 = vld [vmem:[%s1155] sm:$0xf]
        %v1157 = vld [vmem:[%s1155 + $0x4] sm:$0xf]
        %v1158 = vld [vmem:[%s1155 + $0x8] sm:$0x1]
        %v1159 = vld [vmem:[%s1155 + $0xc] sm:$0xf]
        %v1160 = vld [vmem:[%s1155 + $0x10] sm:$0xf]
        %v1161 = vld [vmem:[%s1155 + $0x14] sm:$0x1]
        %v1162 = vld [vmem:[%s1155 + $0x18] sm:$0xf]
        %v1163 = vld [vmem:[%s1155 + $0x1c] sm:$0xf]
        %v1164 = vld [vmem:[%s1155 + $0x20] sm:$0x1]
        %v1165 = vld [vmem:[%s1155 + $0x24] sm:$0xf]
        %v1166 = vld [vmem:[%s1155 + $0x28] sm:$0xf]
        %v1167 = vld [vmem:[%s1155 + $0x2c] sm:$0x1]
        %v1168 = vld [vmem:[%s1155 + $0x30] sm:$0xf]
        %v1169 = vld [vmem:[%s1155 + $0x34] sm:$0xf]
        %v1170 = vld [vmem:[%s1155 + $0x38] sm:$0x1]
        %v1171 = vld [vmem:[%s1155 + $0x3c] sm:$0xf]
        %v1172 = vld [vmem:[%s1155 + $0x40] sm:$0xf]
        %v1173 = vld [vmem:[%s1155 + $0x44] sm:$0x1]
        %v1174 = vld [vmem:[%s1155 + $0x48] sm:$0xf]
        %v1175 = vld [vmem:[%s1155 + $0x4c] sm:$0xf]
        %v1176 = vld [vmem:[%s1155 + $0x50] sm:$0x1]
        %v1177 = vld [vmem:[%s1155 + $0x54] sm:$0xf]
        %v1178 = vld [vmem:[%s1155 + $0x58] sm:$0xf]
        %v1179 = vld [vmem:[%s1155 + $0x5c] sm:$0x1]
        %v1180 = vld [vmem:[%s1155 + $0x60] sm:$0xf]
        %v1181 = vld [vmem:[%s1155 + $0x64] sm:$0xf]
        %v1182 = vld [vmem:[%s1155 + $0x68] sm:$0x1]
        %v1183 = vld [vmem:[%s1155 + $0x6c] sm:$0xf]
        %v1184 = vld [vmem:[%s1155 + $0x70] sm:$0xf]
        %v1185 = vld [vmem:[%s1155 + $0x74] sm:$0x1]
        %v1206 = vunpack.c.l.b16 %v1156
        %v1207 = vunpack.c.l.b16 %v1157
        %v1208 = vunpack.c.l.b16 %v1159
        %v1209 = vunpack.c.l.b16 %v1160
        %v1210 = vunpack.c.l.b16 %v1162
        %v1211 = vunpack.c.l.b16 %v1163
        %v1212 = vunpack.c.l.b16 %v1165
        %v1213 = vunpack.c.l.b16 %v1166
        %v1214 = vunpack.c.l.b16 %v1168
        %v1215 = vunpack.c.l.b16 %v1169
        %v1216 = vunpack.c.l.b16 %v1171
        %v1217 = vunpack.c.l.b16 %v1172
        %v1218 = vunpack.c.l.b16 %v1174
        %v1219 = vunpack.c.l.b16 %v1175
        %v1220 = vunpack.c.l.b16 %v1177
        %v1221 = vunpack.c.l.b16 %v1178
        %v1222 = vunpack.c.l.b16 %v1180
        %v1223 = vunpack.c.l.b16 %v1181
        %v1224 = vunpack.c.l.b16 %v1183
        %v1225 = vunpack.c.l.b16 %v1184
        %v1226 = vpack.c.b16 %v1207, %v1206
        %v1227 = vpack.c.b16 %v1209, %v1208
        %v1228 = vpack.c.b16 %v1211, %v1210
        %v1229 = vpack.c.b16 %v1213, %v1212
        %v1230 = vpack.c.b16 %v1215, %v1214
        %v1231 = vpack.c.b16 %v1217, %v1216
        %v1232 = vpack.c.b16 %v1219, %v1218
        %v1233 = vpack.c.b16 %v1221, %v1220
        %v1234 = vpack.c.b16 %v1223, %v1222
        %v1235 = vpack.c.b16 %v1225, %v1224
        %v1246 = vunpack.c.l.b16 %v1158
        %v1247 = vunpack.c.l.b16 %v1161
        %v1248 = vunpack.c.l.b16 %v1164
        %v1249 = vunpack.c.l.b16 %v1167
        %v1250 = vunpack.c.l.b16 %v1170
        %v1251 = vunpack.c.l.b16 %v1173
        %v1252 = vunpack.c.l.b16 %v1176
        %v1253 = vunpack.c.l.b16 %v1179
        %v1254 = vunpack.c.l.b16 %v1182
        %v1255 = vunpack.c.l.b16 %v1185
        %v1256 = vpack.c.b16 %v1246, %v1246
        %v1257 = vpack.c.b16 %v1247, %v1247
        %v1258 = vpack.c.b16 %v1248, %v1248
        %v1259 = vpack.c.b16 %v1249, %v1249
        %v1260 = vpack.c.b16 %v1250, %v1250
        %v1261 = vpack.c.b16 %v1251, %v1251
        %v1262 = vpack.c.b16 %v1252, %v1252
        %v1263 = vpack.c.b16 %v1253, %v1253
        %v1264 = vpack.c.b16 %v1254, %v1254
        %v1265 = vpack.c.b16 %v1255, %v1255
        %v1267 = vshrl.u32 %v1226, 16
        %v1269 = vshll.u32 %v1226, 16
        %v1271 = vrot.slane %v1269, 1
        %v1272 = vor.u32 %v1267, %v1271
        %v1274 = vshll.u32 %v1256, 16
        %v1276 = vrot.slane %v1274, 1
        %v1277 = vsel %vm352, %v1272, %v1276
        %v1279 = vshrl.u32 %v1227, 16
        %v1281 = vshll.u32 %v1227, 16
        %v1283 = vrot.slane %v1281, 1
        %v1284 = vor.u32 %v1279, %v1283
        %v1286 = vshll.u32 %v1257, 16
        %v1288 = vrot.slane %v1286, 1
        %v1289 = vsel %vm352, %v1284, %v1288
        %v1291 = vshrl.u32 %v1228, 16
        %v1293 = vshll.u32 %v1228, 16
        %v1295 = vrot.slane %v1293, 1
        %v1296 = vor.u32 %v1291, %v1295
        %v1298 = vshll.u32 %v1258, 16
        %v1300 = vrot.slane %v1298, 1
        %v1301 = vsel %vm352, %v1296, %v1300
        %v1303 = vshrl.u32 %v1229, 16
        %v1305 = vshll.u32 %v1229, 16
        %v1307 = vrot.slane %v1305, 1
        %v1308 = vor.u32 %v1303, %v1307
        %v1310 = vshll.u32 %v1259, 16
        %v1312 = vrot.slane %v1310, 1
        %v1313 = vsel %vm352, %v1308, %v1312
        %v1315 = vshrl.u32 %v1230, 16
        %v1317 = vshll.u32 %v1230, 16
        %v1319 = vrot.slane %v1317, 1
        %v1320 = vor.u32 %v1315, %v1319
        %v1322 = vshll.u32 %v1260, 16
        %v1324 = vrot.slane %v1322, 1
        %v1325 = vsel %vm352, %v1320, %v1324
        %v1327 = vshrl.u32 %v1231, 16
        %v1329 = vshll.u32 %v1231, 16
        %v1331 = vrot.slane %v1329, 1
        %v1332 = vor.u32 %v1327, %v1331
        %v1334 = vshll.u32 %v1261, 16
        %v1336 = vrot.slane %v1334, 1
        %v1337 = vsel %vm352, %v1332, %v1336
        %v1339 = vshrl.u32 %v1232, 16
        %v1341 = vshll.u32 %v1232, 16
        %v1343 = vrot.slane %v1341, 1
        %v1344 = vor.u32 %v1339, %v1343
        %v1346 = vshll.u32 %v1262, 16
        %v1348 = vrot.slane %v1346, 1
        %v1349 = vsel %vm352, %v1344, %v1348
        %v1351 = vshrl.u32 %v1233, 16
        %v1353 = vshll.u32 %v1233, 16
        %v1355 = vrot.slane %v1353, 1
        %v1356 = vor.u32 %v1351, %v1355
        %v1358 = vshll.u32 %v1263, 16
        %v1360 = vrot.slane %v1358, 1
        %v1361 = vsel %vm352, %v1356, %v1360
        %v1363 = vshrl.u32 %v1234, 16
        %v1365 = vshll.u32 %v1234, 16
        %v1367 = vrot.slane %v1365, 1
        %v1368 = vor.u32 %v1363, %v1367
        %v1370 = vshll.u32 %v1264, 16
        %v1372 = vrot.slane %v1370, 1
        %v1373 = vsel %vm352, %v1368, %v1372
        %v1375 = vshrl.u32 %v1235, 16
        %v1377 = vshll.u32 %v1235, 16
        %v1379 = vrot.slane %v1377, 1
        %v1380 = vor.u32 %v1375, %v1379
        %v1382 = vshll.u32 %v1265, 16
        %v1384 = vrot.slane %v1382, 1
        %v1385 = vsel %vm352, %v1380, %v1384
        %1386 = vrot.lane.b32.xlu0 %v1277, 4
        %v1387 = vpop.permute.xlu0 %1386
        %1388 = vrot.lane.b32.xlu0 %v1289, 4
        %v1389 = vpop.permute.xlu0 %1388
        %1390 = vrot.lane.b32.xlu0 %v1301, 4
        %v1391 = vpop.permute.xlu0 %1390
        %1392 = vrot.lane.b32.xlu0 %v1313, 4
        %v1393 = vpop.permute.xlu0 %1392
        %1394 = vrot.lane.b32.xlu0 %v1325, 4
        %v1395 = vpop.permute.xlu0 %1394
        %1396 = vrot.lane.b32.xlu0 %v1337, 4
        %v1397 = vpop.permute.xlu0 %1396
        %1398 = vrot.lane.b32.xlu0 %v1349, 4
        %v1399 = vpop.permute.xlu0 %1398
        %1400 = vrot.lane.b32.xlu0 %v1361, 4
        %v1401 = vpop.permute.xlu0 %1400
        %1402 = vrot.lane.b32.xlu0 %v1373, 4
        %v1403 = vpop.permute.xlu0 %1402
        %1404 = vrot.lane.b32.xlu0 %v1385, 4
        %v1405 = vpop.permute.xlu0 %1404
        %v1406 = vrot.slane %v1226, 1
        %v1407 = vrot.slane %v1256, 1
        %v1408 = vsel %vm493, %v1406, %v1407
        %v1409 = vrot.slane %v1227, 1
        %v1410 = vrot.slane %v1257, 1
        %v1411 = vsel %vm493, %v1409, %v1410
        %v1412 = vrot.slane %v1228, 1
        %v1413 = vrot.slane %v1258, 1
        %v1414 = vsel %vm493, %v1412, %v1413
        %v1415 = vrot.slane %v1229, 1
        %v1416 = vrot.slane %v1259, 1
        %v1417 = vsel %vm493, %v1415, %v1416
        %v1418 = vrot.slane %v1230, 1
        %v1419 = vrot.slane %v1260, 1
        %v1420 = vsel %vm493, %v1418, %v1419
        %v1421 = vrot.slane %v1231, 1
        %v1422 = vrot.slane %v1261, 1
        %v1423 = vsel %vm493, %v1421, %v1422
        %v1424 = vrot.slane %v1232, 1
        %v1425 = vrot.slane %v1262, 1
        %v1426 = vsel %vm493, %v1424, %v1425
        %v1427 = vrot.slane %v1233, 1
        %v1428 = vrot.slane %v1263, 1
        %v1429 = vsel %vm493, %v1427, %v1428
        %v1430 = vrot.slane %v1234, 1
        %v1431 = vrot.slane %v1264, 1
        %v1432 = vsel %vm493, %v1430, %v1431
        %v1433 = vrot.slane %v1235, 1
        %v1434 = vrot.slane %v1265, 1
        %v1435 = vsel %vm493, %v1433, %v1434
        %1436 = vrot.lane.b32.xlu0 %v1408, 8
        %v1437 = vpop.permute.xlu0 %1436
        %1438 = vrot.lane.b32.xlu0 %v1411, 8
        %v1439 = vpop.permute.xlu0 %1438
        %1440 = vrot.lane.b32.xlu0 %v1414, 8
        %v1441 = vpop.permute.xlu0 %1440
        %1442 = vrot.lane.b32.xlu0 %v1417, 8
        %v1443 = vpop.permute.xlu0 %1442
        %1444 = vrot.lane.b32.xlu0 %v1420, 8
        %v1445 = vpop.permute.xlu0 %1444
        %1446 = vrot.lane.b32.xlu0 %v1423, 8
        %v1447 = vpop.permute.xlu0 %1446
        %1448 = vrot.lane.b32.xlu0 %v1426, 8
        %v1449 = vpop.permute.xlu0 %1448
        %1450 = vrot.lane.b32.xlu0 %v1429, 8
        %v1451 = vpop.permute.xlu0 %1450
        %1452 = vrot.lane.b32.xlu0 %v1432, 8
        %v1453 = vpop.permute.xlu0 %1452
        %1454 = vrot.lane.b32.xlu0 %v1435, 8
        %v1455 = vpop.permute.xlu0 %1454
        %v1457 = vsel %vm544, %v1226, %v1387
        %v1459 = vsel %vm544, %v1227, %v1389
        %v1461 = vsel %vm544, %v1228, %v1391
        %v1463 = vsel %vm544, %v1229, %v1393
        %v1465 = vsel %vm544, %v1230, %v1395
        %v1467 = vsel %vm544, %v1231, %v1397
        %v1469 = vsel %vm544, %v1232, %v1399
        %v1471 = vsel %vm544, %v1233, %v1401
        %v1473 = vsel %vm544, %v1234, %v1403
        %v1475 = vsel %vm544, %v1235, %v1405
        %v1477 = vsel %vm565, %v1457, %v1437
        %v1479 = vsel %vm565, %v1459, %v1439
        %v1481 = vsel %vm565, %v1461, %v1441
        %v1483 = vsel %vm565, %v1463, %v1443
        %v1485 = vsel %vm565, %v1465, %v1445
        %v1487 = vsel %vm565, %v1467, %v1447
        %v1489 = vsel %vm565, %v1469, %v1449
        %v1491 = vsel %vm565, %v1471, %v1451
        %v1493 = vsel %vm565, %v1473, %v1453
        %v1495 = vsel %vm565, %v1475, %v1455
        %v1506 = vunpack.c.l.b16 %v1477
        %v1507 = vunpack.c.h.b16 %v1477
        %v1508 = vunpack.c.l.b16 %v1479
        %v1509 = vunpack.c.h.b16 %v1479
        %v1510 = vunpack.c.l.b16 %v1481
        %v1511 = vunpack.c.h.b16 %v1481
        %v1512 = vunpack.c.l.b16 %v1483
        %v1513 = vunpack.c.h.b16 %v1483
        %v1514 = vunpack.c.l.b16 %v1485
        %v1515 = vunpack.c.h.b16 %v1485
        %v1516 = vunpack.c.l.b16 %v1487
        %v1517 = vunpack.c.h.b16 %v1487
        %v1518 = vunpack.c.l.b16 %v1489
        %v1519 = vunpack.c.h.b16 %v1489
        %v1520 = vunpack.c.l.b16 %v1491
        %v1521 = vunpack.c.h.b16 %v1491
        %v1522 = vunpack.c.l.b16 %v1493
        %v1523 = vunpack.c.h.b16 %v1493
        %v1524 = vunpack.c.l.b16 %v1495
        %v1525 = vunpack.c.h.b16 %v1495
        %v1526 = vpack.c.b16 %v1506, %v1506
        %v1527 = vpack.c.b16 %v1507, %v1507
        %v1528 = vpack.c.b16 %v1508, %v1508
        %v1529 = vpack.c.b16 %v1509, %v1509
        %v1530 = vpack.c.b16 %v1510, %v1510
        %v1531 = vpack.c.b16 %v1511, %v1511
        %v1532 = vpack.c.b16 %v1512, %v1512
        %v1533 = vpack.c.b16 %v1513, %v1513
        %v1534 = vpack.c.b16 %v1514, %v1514
        %v1535 = vpack.c.b16 %v1515, %v1515
        %v1536 = vpack.c.b16 %v1516, %v1516
        %v1537 = vpack.c.b16 %v1517, %v1517
        %v1538 = vpack.c.b16 %v1518, %v1518
        %v1539 = vpack.c.b16 %v1519, %v1519
        %v1540 = vpack.c.b16 %v1520, %v1520
        %v1541 = vpack.c.b16 %v1521, %v1521
        %v1542 = vpack.c.b16 %v1522, %v1522
        %v1543 = vpack.c.b16 %v1523, %v1523
        %v1544 = vpack.c.b16 %v1524, %v1524
        %v1545 = vpack.c.b16 %v1525, %v1525
        %1546 = vrot.lane.b32.xlu0 %v1526, 24
        %v1547 = vpop.permute.xlu0 %1546
        %1548 = vrot.lane.b32.xlu0 %v1527, 24
        %v1549 = vpop.permute.xlu0 %1548
        %1550 = vrot.lane.b32.xlu0 %v1528, 24
        %v1551 = vpop.permute.xlu0 %1550
        %1552 = vrot.lane.b32.xlu0 %v1529, 24
        %v1553 = vpop.permute.xlu0 %1552
        %1554 = vrot.lane.b32.xlu0 %v1530, 24
        %v1555 = vpop.permute.xlu0 %1554
        %1556 = vrot.lane.b32.xlu0 %v1531, 24
        %v1557 = vpop.permute.xlu0 %1556
        %1558 = vrot.lane.b32.xlu0 %v1532, 24
        %v1559 = vpop.permute.xlu0 %1558
        %1560 = vrot.lane.b32.xlu0 %v1533, 24
        %v1561 = vpop.permute.xlu0 %1560
        %1562 = vrot.lane.b32.xlu0 %v1534, 24
        %v1563 = vpop.permute.xlu0 %1562
        %1564 = vrot.lane.b32.xlu0 %v1535, 24
        %v1565 = vpop.permute.xlu0 %1564
        %1566 = vrot.lane.b32.xlu0 %v1536, 24
        %v1567 = vpop.permute.xlu0 %1566
        %1568 = vrot.lane.b32.xlu0 %v1537, 24
        %v1569 = vpop.permute.xlu0 %1568
        %1570 = vrot.lane.b32.xlu0 %v1538, 24
        %v1571 = vpop.permute.xlu0 %1570
        %1572 = vrot.lane.b32.xlu0 %v1539, 24
        %v1573 = vpop.permute.xlu0 %1572
        %1574 = vrot.lane.b32.xlu0 %v1540, 24
        %v1575 = vpop.permute.xlu0 %1574
        %1576 = vrot.lane.b32.xlu0 %v1541, 24
        %v1577 = vpop.permute.xlu0 %1576
        %1578 = vrot.lane.b32.xlu0 %v1542, 24
        %v1579 = vpop.permute.xlu0 %1578
        %1580 = vrot.lane.b32.xlu0 %v1543, 24
        %v1581 = vpop.permute.xlu0 %1580
        %1582 = vrot.lane.b32.xlu0 %v1544, 24
        %v1583 = vpop.permute.xlu0 %1582
        %1584 = vrot.lane.b32.xlu0 %v1545, 24
        %v1585 = vpop.permute.xlu0 %1584
        %vm1606 = vcmask 289984
        %1607 = vst.msk [vmem:[#allocation2] sm:$0xf] %vm1606, %v1547
        %1608 = vst.msk [vmem:[#allocation2 + $0x4] sm:$0xf] %vm1606, %v1549
        %1609 = vst.msk [vmem:[#allocation2 + $0x8] sm:$0xf] %vm1606, %v1551
        %1610 = vst.msk [vmem:[#allocation2 + $0xc] sm:$0xf] %vm1606, %v1553
        %1611 = vst.msk [vmem:[#allocation2 + $0x10] sm:$0xf] %vm1606, %v1555
        %1612 = vst.msk [vmem:[#allocation2 + $0x14] sm:$0xf] %vm1606, %v1557
        %1613 = vst.msk [vmem:[#allocation2 + $0x18] sm:$0xf] %vm1606, %v1559
        %1614 = vst.msk [vmem:[#allocation2 + $0x1c] sm:$0xf] %vm1606, %v1561
        %1615 = vst.msk [vmem:[#allocation2 + $0x20] sm:$0xf] %vm1606, %v1563
        %1616 = vst.msk [vmem:[#allocation2 + $0x24] sm:$0xf] %vm1606, %v1565
        %1617 = vst.msk [vmem:[#allocation2 + $0x28] sm:$0xf] %vm1606, %v1567
        %1618 = vst.msk [vmem:[#allocation2 + $0x2c] sm:$0xf] %vm1606, %v1569
        %1619 = vst.msk [vmem:[#allocation2 + $0x30] sm:$0xf] %vm1606, %v1571
        %1620 = vst.msk [vmem:[#allocation2 + $0x34] sm:$0xf] %vm1606, %v1573
        %1621 = vst.msk [vmem:[#allocation2 + $0x38] sm:$0xf] %vm1606, %v1575
        %1622 = vst.msk [vmem:[#allocation2 + $0x3c] sm:$0xf] %vm1606, %v1577
        %1623 = vst.msk [vmem:[#allocation2 + $0x40] sm:$0xf] %vm1606, %v1579
        %1624 = vst.msk [vmem:[#allocation2 + $0x44] sm:$0xf] %vm1606, %v1581
        %1625 = vst.msk [vmem:[#allocation2 + $0x48] sm:$0xf] %vm1606, %v1583
        %1626 = vst.msk [vmem:[#allocation2 + $0x4c] sm:$0xf] %vm1606, %v1585
        %v1627 = vld [vmem:[#allocation2] sm:$0xf]
        %v1628 = vld [vmem:[#allocation2 + $0x4] sm:$0xf]
        %v1629 = vld [vmem:[#allocation2 + $0x8] sm:$0xf]
        %v1630 = vld [vmem:[#allocation2 + $0xc] sm:$0xf]
        %v1631 = vld [vmem:[#allocation2 + $0x10] sm:$0xf]
        %v1632 = vld [vmem:[#allocation2 + $0x14] sm:$0xf]
        %v1633 = vld [vmem:[#allocation2 + $0x18] sm:$0xf]
        %v1634 = vld [vmem:[#allocation2 + $0x1c] sm:$0xf]
        %v1635 = vld [vmem:[#allocation2 + $0x20] sm:$0xf]
        %v1636 = vld [vmem:[#allocation2 + $0x24] sm:$0xf]
        %v1637 = vld [vmem:[#allocation2 + $0x28] sm:$0xf]
        %v1638 = vld [vmem:[#allocation2 + $0x2c] sm:$0xf]
        %v1639 = vld [vmem:[#allocation2 + $0x30] sm:$0xf]
        %v1640 = vld [vmem:[#allocation2 + $0x34] sm:$0xf]
        %v1641 = vld [vmem:[#allocation2 + $0x38] sm:$0xf]
        %v1642 = vld [vmem:[#allocation2 + $0x3c] sm:$0xf]
        %v1643 = vld [vmem:[#allocation2 + $0x40] sm:$0xf]
        %v1644 = vld [vmem:[#allocation2 + $0x44] sm:$0xf]
        %v1645 = vld [vmem:[#allocation2 + $0x48] sm:$0xf]
        %v1646 = vld [vmem:[#allocation2 + $0x4c] sm:$0xf]
        %v1647 = vld [vmem:[%s1] sm:$0xf]
        %v1648 = vld [vmem:[%s1 + $0x4] sm:$0xf]
        %v1649 = vld [vmem:[%s1 + $0x8] sm:$0xf]
        %v1650 = vld [vmem:[%s1 + $0xc] sm:$0xf]
        %v1651 = vld [vmem:[%s1 + $0x10] sm:$0x3]
        %v1652 = vld [vmem:[%s2] sm:$0x1]
        %v1654 = vlaneseq
        %v1655 = vshrl.u32 %v1654, 7
        %v1656 = vsub.s32 0, %v1655
        %v1657 = vrot.slane %v1652, %v1656
        %v1679 = vunpack.c.l.b16 %v1627
        %v1680 = vunpack.c.l.b16 %v1628
        %v1681 = vunpack.c.l.b16 %v1629
        %v1682 = vunpack.c.l.b16 %v1630
        %v1683 = vunpack.c.l.b16 %v1631
        %v1684 = vunpack.c.l.b16 %v1632
        %v1685 = vunpack.c.l.b16 %v1633
        %v1686 = vunpack.c.l.b16 %v1634
        %v1687 = vunpack.c.l.b16 %v1635
        %v1688 = vunpack.c.l.b16 %v1636
        %v1689 = vunpack.c.l.b16 %v1637
        %v1690 = vunpack.c.l.b16 %v1638
        %v1691 = vunpack.c.l.b16 %v1639
        %v1692 = vunpack.c.l.b16 %v1640
        %v1693 = vunpack.c.l.b16 %v1641
        %v1694 = vunpack.c.l.b16 %v1642
        %v1695 = vunpack.c.l.b16 %v1643
        %v1696 = vunpack.c.l.b16 %v1644
        %v1697 = vunpack.c.l.b16 %v1645
        %v1698 = vunpack.c.l.b16 %v1646
        %v1699 = vpack.c.b16 %v1680, %v1679
        %v1700 = vpack.c.b16 %v1682, %v1681
        %v1701 = vpack.c.b16 %v1684, %v1683
        %v1702 = vpack.c.b16 %v1686, %v1685
        %v1703 = vpack.c.b16 %v1688, %v1687
        %v1704 = vpack.c.b16 %v1690, %v1689
        %v1705 = vpack.c.b16 %v1692, %v1691
        %v1706 = vpack.c.b16 %v1694, %v1693
        %v1707 = vpack.c.b16 %v1696, %v1695
        %v1708 = vpack.c.b16 %v1698, %v1697
        %v1714 = vunpack.c.l.b16 %v1647
        %v1715 = vunpack.c.l.b16 %v1648
        %v1716 = vunpack.c.l.b16 %v1649
        %v1717 = vunpack.c.l.b16 %v1650
        %v1718 = vunpack.c.l.b16 %v1651
        %v1719 = vpack.c.b16 %v1715, %v1714
        %v1720 = vpack.c.b16 %v1717, %v1716
        %v1721 = vpack.c.b16 %v1718, %v1718
        %vm1724 = vcmask 293888
        %v1726 = vsel %vm1724, %v1699, 0
        %v1729 = vsel %vm1724, %v1700, 0
        %v1732 = vsel %vm1724, %v1701, 0
        %v1735 = vsel %vm1724, %v1702, 0
        %v1738 = vsel %vm1724, %v1703, 0
        %v1741 = vsel %vm1724, %v1704, 0
        %v1744 = vsel %vm1724, %v1705, 0
        %v1747 = vsel %vm1724, %v1706, 0
        %v1750 = vsel %vm1724, %v1707, 0
        %v1753 = vsel %vm1724, %v1708, 0
        %vm1755 = vcmask 1041408
        %v1757 = vsel %vm1755, %v1721, 0
        %1759 = vmatprep.subr.bf16.mxu0 0
        %1760 = vmatpush1.bf16.msra.mxu0 0
        %1761 = vmatprep.subr.bf16.mxu0 0
        %1762 = vmatpush1.bf16.msra.mxu0 0
        %1763 = vmatprep.subr.bf16.mxu0 0
        %1764 = vmatpush1.bf16.msra.mxu0 0
        %1765 = vmatprep.subr.bf16.mxu0 0
        %1766 = vmatpush1.bf16.msra.mxu0 0
        %1767 = vmatprep.subr.bf16.mxu0 0
        %1768 = vmatpush1.bf16.msra.mxu0 0
        %1769 = vmatprep.subr.bf16.mxu0 0
        %1770 = vmatpush1.bf16.msra.mxu0 %v1757
        %1771 = vmatprep.subr.bf16.mxu0 0
        %1772 = vmatpush1.bf16.msra.mxu0 %v1720
        %1773 = vmatprep.subr.bf16.mxu0 0
        %1774 = vmatpush1.bf16.msra.mxu0 %v1719
        %1775 = vmatprep.subr.bf16.mxu0 0
        %1776 = vmatpush2.bf16.msra.mxu0 0
        %1777 = vmatprep.subr.bf16.mxu0 0
        %1778 = vmatpush2.bf16.msra.mxu0 0
        %1779 = vmatprep.subr.bf16.mxu0 0
        %1780 = vmatpush2.bf16.msra.mxu0 0
        %1781 = vmatprep.subr.bf16.mxu0 0
        %1782 = vmatpush2.bf16.msra.mxu0 0
        %1783 = vmatprep.subr.bf16.mxu0 0
        %1784 = vmatpush2.bf16.msra.mxu0 0
        %1785 = vmatprep.subr.bf16.mxu0 0
        %1786 = vmatpush2.bf16.msra.mxu0 0
        %1787 = vmatprep.subr.bf16.mxu0 0
        %1788 = vmatpush2.bf16.msra.mxu0 0
        %1789 = vmatprep.subr.bf16.mxu0 0
        %1790 = vmatpush2.bf16.msra.mxu0 0
        %1791 = vmatprep.mubr.bf16.mxu0 0
        %1792 = vmatmul.mubr.bf16.gmra.mxu0 %v1726
        %v1793 = vpop.f32.mrf.mxu0
        %v1794 = vadd.f32 %v1657, %v1793
        %v1795 = vpop.f32.mrf.mxu0
        %v1796 = vpop.f32.mrf.mxu0
        %v1797 = vadd.f32 %v1657, %v1796
        %v1798 = vpop.f32.mrf.mxu0
        %1799 = vmatprep.mubr.bf16.mxu0 0
        %1800 = vmatmul.mubr.bf16.gmra.mxu0 %v1729
        %v1801 = vpop.f32.mrf.mxu0
        %v1802 = vadd.f32 %v1657, %v1801
        %v1803 = vpop.f32.mrf.mxu0
        %v1804 = vpop.f32.mrf.mxu0
        %v1805 = vadd.f32 %v1657, %v1804
        %v1806 = vpop.f32.mrf.mxu0
        %1807 = vmatprep.mubr.bf16.mxu0 0
        %1808 = vmatmul.mubr.bf16.gmra.mxu0 %v1732
        %v1809 = vpop.f32.mrf.mxu0
        %v1810 = vadd.f32 %v1657, %v1809
        %v1811 = vpop.f32.mrf.mxu0
        %v1812 = vpop.f32.mrf.mxu0
        %v1813 = vadd.f32 %v1657, %v1812
        %v1814 = vpop.f32.mrf.mxu0
        %1815 = vmatprep.mubr.bf16.mxu0 0
        %1816 = vmatmul.mubr.bf16.gmra.mxu0 %v1735
        %v1817 = vpop.f32.mrf.mxu0
        %v1818 = vadd.f32 %v1657, %v1817
        %v1819 = vpop.f32.mrf.mxu0
        %v1820 = vpop.f32.mrf.mxu0
        %v1821 = vadd.f32 %v1657, %v1820
        %v1822 = vpop.f32.mrf.mxu0
        %1823 = vmatprep.mubr.bf16.mxu0 0
        %1824 = vmatmul.mubr.bf16.gmra.mxu0 %v1738
        %v1825 = vpop.f32.mrf.mxu0
        %v1826 = vadd.f32 %v1657, %v1825
        %v1827 = vpop.f32.mrf.mxu0
        %v1828 = vpop.f32.mrf.mxu0
        %v1829 = vadd.f32 %v1657, %v1828
        %v1830 = vpop.f32.mrf.mxu0
        %1831 = vmatprep.mubr.bf16.mxu0 0
        %1832 = vmatmul.mubr.bf16.gmra.mxu0 %v1741
        %v1833 = vpop.f32.mrf.mxu0
        %v1834 = vadd.f32 %v1657, %v1833
        %v1835 = vpop.f32.mrf.mxu0
        %v1836 = vpop.f32.mrf.mxu0
        %v1837 = vadd.f32 %v1657, %v1836
        %v1838 = vpop.f32.mrf.mxu0
        %1839 = vmatprep.mubr.bf16.mxu0 0
        %1840 = vmatmul.mubr.bf16.gmra.mxu0 %v1744
        %v1841 = vpop.f32.mrf.mxu0
        %v1842 = vadd.f32 %v1657, %v1841
        %v1843 = vpop.f32.mrf.mxu0
        %v1844 = vpop.f32.mrf.mxu0
        %v1845 = vadd.f32 %v1657, %v1844
        %v1846 = vpop.f32.mrf.mxu0
        %1847 = vmatprep.mubr.bf16.mxu0 0
        %1848 = vmatmul.mubr.bf16.gmra.mxu0 %v1747
        %v1849 = vpop.f32.mrf.mxu0
        %v1850 = vadd.f32 %v1657, %v1849
        %v1851 = vpop.f32.mrf.mxu0
        %v1852 = vpop.f32.mrf.mxu0
        %v1853 = vadd.f32 %v1657, %v1852
        %v1854 = vpop.f32.mrf.mxu0
        %1855 = vmatprep.mubr.bf16.mxu0 0
        %1856 = vmatmul.mubr.bf16.gmra.mxu0 %v1750
        %v1857 = vpop.f32.mrf.mxu0
        %v1858 = vadd.f32 %v1657, %v1857
        %v1859 = vpop.f32.mrf.mxu0
        %v1860 = vpop.f32.mrf.mxu0
        %v1861 = vadd.f32 %v1657, %v1860
        %v1862 = vpop.f32.mrf.mxu0
        %1863 = vmatprep.mubr.bf16.mxu0 0
        %1864 = vmatmul.mubr.bf16.gmra.mxu0 %v1753
        %v1865 = vpop.f32.mrf.mxu0
        %v1866 = vadd.f32 %v1657, %v1865
        %v1867 = vpop.f32.mrf.mxu0
        %v1868 = vpop.f32.mrf.mxu0
        %v1869 = vadd.f32 %v1657, %v1868
        %v1870 = vpop.f32.mrf.mxu0
        %1871 = vdwg.mxu0
        %v1872 = vmax.f32 %v1794, 0.0
        %v1873 = vmax.f32 %v1797, 0.0
        %v1874 = vmax.f32 %v1802, 0.0
        %v1875 = vmax.f32 %v1805, 0.0
        %v1876 = vmax.f32 %v1810, 0.0
        %v1877 = vmax.f32 %v1813, 0.0
        %v1878 = vmax.f32 %v1818, 0.0
        %v1879 = vmax.f32 %v1821, 0.0
        %v1880 = vmax.f32 %v1826, 0.0
        %v1881 = vmax.f32 %v1829, 0.0
        %v1882 = vmax.f32 %v1834, 0.0
        %v1883 = vmax.f32 %v1837, 0.0
        %v1884 = vmax.f32 %v1842, 0.0
        %v1885 = vmax.f32 %v1845, 0.0
        %v1886 = vmax.f32 %v1850, 0.0
        %v1887 = vmax.f32 %v1853, 0.0
        %v1888 = vmax.f32 %v1858, 0.0
        %v1889 = vmax.f32 %v1861, 0.0
        %v1890 = vmax.f32 %v1866, 0.0
        %v1891 = vmax.f32 %v1869, 0.0
        %v1892 = vpack.c.bf16 %v1873, %v1872
        %v1893 = vpack.c.bf16 %v1875, %v1874
        %v1894 = vpack.c.bf16 %v1877, %v1876
        %v1895 = vpack.c.bf16 %v1879, %v1878
        %v1896 = vpack.c.bf16 %v1881, %v1880
        %v1897 = vpack.c.bf16 %v1883, %v1882
        %v1898 = vpack.c.bf16 %v1885, %v1884
        %v1899 = vpack.c.bf16 %v1887, %v1886
        %v1900 = vpack.c.bf16 %v1889, %v1888
        %v1901 = vpack.c.bf16 %v1891, %v1890
        %v1912 = vunpack.c.l.b16 %v1892
        %v1913 = vunpack.c.h.b16 %v1892
        %v1914 = vunpack.c.l.b16 %v1893
        %v1915 = vunpack.c.h.b16 %v1893
        %v1916 = vunpack.c.l.b16 %v1894
        %v1917 = vunpack.c.h.b16 %v1894
        %v1918 = vunpack.c.l.b16 %v1895
        %v1919 = vunpack.c.h.b16 %v1895
        %v1920 = vunpack.c.l.b16 %v1896
        %v1921 = vunpack.c.h.b16 %v1896
        %v1922 = vunpack.c.l.b16 %v1897
        %v1923 = vunpack.c.h.b16 %v1897
        %v1924 = vunpack.c.l.b16 %v1898
        %v1925 = vunpack.c.h.b16 %v1898
        %v1926 = vunpack.c.l.b16 %v1899
        %v1927 = vunpack.c.h.b16 %v1899
        %v1928 = vunpack.c.l.b16 %v1900
        %v1929 = vunpack.c.h.b16 %v1900
        %v1930 = vunpack.c.l.b16 %v1901
        %v1931 = vunpack.c.h.b16 %v1901
        %v1932 = vpack.c.b16 %v1912, %v1912
        %v1933 = vpack.c.b16 %v1913, %v1913
        %v1934 = vpack.c.b16 %v1914, %v1914
        %v1935 = vpack.c.b16 %v1915, %v1915
        %v1936 = vpack.c.b16 %v1916, %v1916
        %v1937 = vpack.c.b16 %v1917, %v1917
        %v1938 = vpack.c.b16 %v1918, %v1918
        %v1939 = vpack.c.b16 %v1919, %v1919
        %v1940 = vpack.c.b16 %v1920, %v1920
        %v1941 = vpack.c.b16 %v1921, %v1921
        %v1942 = vpack.c.b16 %v1922, %v1922
        %v1943 = vpack.c.b16 %v1923, %v1923
        %v1944 = vpack.c.b16 %v1924, %v1924
        %v1945 = vpack.c.b16 %v1925, %v1925
        %v1946 = vpack.c.b16 %v1926, %v1926
        %v1947 = vpack.c.b16 %v1927, %v1927
        %v1948 = vpack.c.b16 %v1928, %v1928
        %v1949 = vpack.c.b16 %v1929, %v1929
        %v1950 = vpack.c.b16 %v1930, %v1930
        %v1951 = vpack.c.b16 %v1931, %v1931
        %vm1952 = vsmask.f32 256
        %vm1953 = vsmask.f32 4368
        %vm1954 = vmor %vm1952, %vm1953
        %v1956 = vshrl.u32 %v1932, 16
        %v1958 = vrot.slane %v1956, 7
        %v1959 = vshll.u32 %v1932, 16
        %v1961 = vor.u32 %v1958, %v1959
        %v1962 = vrot.slane %v1958, 4
        %v1964 = vshrl.u32 %v1933, 16
        %v1966 = vrot.slane %v1964, 7
        %v1967 = vshll.u32 %v1933, 16
        %v1969 = vor.u32 %v1966, %v1967
        %v1970 = vsel %vm1954, %v1962, %v1969
        %v1971 = vrot.slane %v1966, 4
        %v1973 = vshrl.u32 %v1934, 16
        %v1975 = vrot.slane %v1973, 7
        %v1976 = vshll.u32 %v1934, 16
        %v1978 = vor.u32 %v1975, %v1976
        %v1979 = vrot.slane %v1975, 4
        %v1981 = vshrl.u32 %v1935, 16
        %v1983 = vrot.slane %v1981, 7
        %v1984 = vshll.u32 %v1935, 16
        %v1986 = vor.u32 %v1983, %v1984
        %v1987 = vsel %vm1954, %v1979, %v1986
        %v1988 = vrot.slane %v1983, 4
        %v1990 = vshrl.u32 %v1936, 16
        %v1992 = vrot.slane %v1990, 7
        %v1993 = vshll.u32 %v1936, 16
        %v1995 = vor.u32 %v1992, %v1993
        %v1996 = vrot.slane %v1992, 4
        %v1998 = vshrl.u32 %v1937, 16
        %v2000 = vrot.slane %v1998, 7
        %v2001 = vshll.u32 %v1937, 16
        %v2003 = vor.u32 %v2000, %v2001
        %v2004 = vsel %vm1954, %v1996, %v2003
        %v2005 = vrot.slane %v2000, 4
        %v2007 = vshrl.u32 %v1938, 16
        %v2009 = vrot.slane %v2007, 7
        %v2010 = vshll.u32 %v1938, 16
        %v2012 = vor.u32 %v2009, %v2010
        %v2013 = vrot.slane %v2009, 4
        %v2015 = vshrl.u32 %v1939, 16
        %v2017 = vrot.slane %v2015, 7
        %v2018 = vshll.u32 %v1939, 16
        %v2020 = vor.u32 %v2017, %v2018
        %v2021 = vsel %vm1954, %v2013, %v2020
        %v2022 = vrot.slane %v2017, 4
        %v2024 = vshrl.u32 %v1940, 16
        %v2026 = vrot.slane %v2024, 7
        %v2027 = vshll.u32 %v1940, 16
        %v2029 = vor.u32 %v2026, %v2027
        %v2030 = vrot.slane %v2026, 4
        %v2032 = vshrl.u32 %v1941, 16
        %v2034 = vrot.slane %v2032, 7
        %v2035 = vshll.u32 %v1941, 16
        %v2037 = vor.u32 %v2034, %v2035
        %v2038 = vsel %vm1954, %v2030, %v2037
        %v2039 = vrot.slane %v2034, 4
        %v2041 = vshrl.u32 %v1942, 16
        %v2043 = vrot.slane %v2041, 7
        %v2044 = vshll.u32 %v1942, 16
        %v2046 = vor.u32 %v2043, %v2044
        %v2047 = vrot.slane %v2043, 4
        %v2049 = vshrl.u32 %v1943, 16
        %v2051 = vrot.slane %v2049, 7
        %v2052 = vshll.u32 %v1943, 16
        %v2054 = vor.u32 %v2051, %v2052
        %v2055 = vsel %vm1954, %v2047, %v2054
        %v2056 = vrot.slane %v2051, 4
        %v2058 = vshrl.u32 %v1944, 16
        %v2060 = vrot.slane %v2058, 7
        %v2061 = vshll.u32 %v1944, 16
        %v2063 = vor.u32 %v2060, %v2061
        %v2064 = vrot.slane %v2060, 4
        %v2066 = vshrl.u32 %v1945, 16
        %v2068 = vrot.slane %v2066, 7
        %v2069 = vshll.u32 %v1945, 16
        %v2071 = vor.u32 %v2068, %v2069
        %v2072 = vsel %vm1954, %v2064, %v2071
        %v2073 = vrot.slane %v2068, 4
        %v2075 = vshrl.u32 %v1946, 16
        %v2077 = vrot.slane %v2075, 7
        %v2078 = vshll.u32 %v1946, 16
        %v2080 = vor.u32 %v2077, %v2078
        %v2081 = vrot.slane %v2077, 4
        %v2083 = vshrl.u32 %v1947, 16
        %v2085 = vrot.slane %v2083, 7
        %v2086 = vshll.u32 %v1947, 16
        %v2088 = vor.u32 %v2085, %v2086
        %v2089 = vsel %vm1954, %v2081, %v2088
        %v2090 = vrot.slane %v2085, 4
        %v2092 = vshrl.u32 %v1948, 16
        %v2094 = vrot.slane %v2092, 7
        %v2095 = vshll.u32 %v1948, 16
        %v2097 = vor.u32 %v2094, %v2095
        %v2098 = vrot.slane %v2094, 4
        %v2100 = vshrl.u32 %v1949, 16
        %v2102 = vrot.slane %v2100, 7
        %v2103 = vshll.u32 %v1949, 16
        %v2105 = vor.u32 %v2102, %v2103
        %v2106 = vsel %vm1954, %v2098, %v2105
        %v2107 = vrot.slane %v2102, 4
        %v2109 = vshrl.u32 %v1950, 16
        %v2111 = vrot.slane %v2109, 7
        %v2112 = vshll.u32 %v1950, 16
        %v2114 = vor.u32 %v2111, %v2112
        %v2115 = vrot.slane %v2111, 4
        %v2117 = vshrl.u32 %v1951, 16
        %v2119 = vrot.slane %v2117, 7
        %v2120 = vshll.u32 %v1951, 16
        %v2122 = vor.u32 %v2119, %v2120
        %v2123 = vsel %vm1954, %v2115, %v2122
        %v2124 = vrot.slane %v2119, 4
        %vm2155 = vcmask 60416
        %vm2156 = vsmask.f32 7938
        %vm2157 = vmand %vm2155, %vm2156
        %v2158 = vld [vmem:[#allocation3] sm:$0xf]
        %v2159 = vsel %vm2157, %v1961, %v2158
        %2160 = vst [vmem:[#allocation3] sm:$0xf] %v2159
        %vm2161 = vcmask 60416
        %2162 = vst.msk [vmem:[#allocation3 + $0x4] sm:$0xf] %vm2161, %v1970
        %vm2163 = vcmask 57344
        %vm2164 = vmand %vm2163, %vm1952
        %v2165 = vld [vmem:[#allocation3 + $0x8] sm:$0x1]
        %v2166 = vsel %vm2164, %v1971, %v2165
        %2167 = vst [vmem:[#allocation3 + $0x8] sm:$0x1] %v2166
        %v2168 = vld [vmem:[#allocation3 + $0xc] sm:$0xf]
        %v2169 = vsel %vm2157, %v1978, %v2168
        %2170 = vst [vmem:[#allocation3 + $0xc] sm:$0xf] %v2169
        %2171 = vst.msk [vmem:[#allocation3 + $0x10] sm:$0xf] %vm2161, %v1987
        %v2172 = vld [vmem:[#allocation3 + $0x14] sm:$0x1]
        %v2173 = vsel %vm2164, %v1988, %v2172
        %2174 = vst [vmem:[#allocation3 + $0x14] sm:$0x1] %v2173
        %v2175 = vld [vmem:[#allocation3 + $0x18] sm:$0xf]
        %v2176 = vsel %vm2157, %v1995, %v2175
        %2177 = vst [vmem:[#allocation3 + $0x18] sm:$0xf] %v2176
        %2178 = vst.msk [vmem:[#allocation3 + $0x1c] sm:$0xf] %vm2161, %v2004
        %v2179 = vld [vmem:[#allocation3 + $0x20] sm:$0x1]
        %v2180 = vsel %vm2164, %v2005, %v2179
        %2181 = vst [vmem:[#allocation3 + $0x20] sm:$0x1] %v2180
        %v2182 = vld [vmem:[#allocation3 + $0x24] sm:$0xf]
        %v2183 = vsel %vm2157, %v2012, %v2182
        %2184 = vst [vmem:[#allocation3 + $0x24] sm:$0xf] %v2183
        %2185 = vst.msk [vmem:[#allocation3 + $0x28] sm:$0xf] %vm2161, %v2021
        %v2186 = vld [vmem:[#allocation3 + $0x2c] sm:$0x1]
        %v2187 = vsel %vm2164, %v2022, %v2186
        %2188 = vst [vmem:[#allocation3 + $0x2c] sm:$0x1] %v2187
        %v2189 = vld [vmem:[#allocation3 + $0x30] sm:$0xf]
        %v2190 = vsel %vm2157, %v2029, %v2189
        %2191 = vst [vmem:[#allocation3 + $0x30] sm:$0xf] %v2190
        %2192 = vst.msk [vmem:[#allocation3 + $0x34] sm:$0xf] %vm2161, %v2038
        %v2193 = vld [vmem:[#allocation3 + $0x38] sm:$0x1]
        %v2194 = vsel %vm2164, %v2039, %v2193
        %2195 = vst [vmem:[#allocation3 + $0x38] sm:$0x1] %v2194
        %v2196 = vld [vmem:[#allocation3 + $0x3c] sm:$0xf]
        %v2197 = vsel %vm2157, %v2046, %v2196
        %2198 = vst [vmem:[#allocation3 + $0x3c] sm:$0xf] %v2197
        %2199 = vst.msk [vmem:[#allocation3 + $0x40] sm:$0xf] %vm2161, %v2055
        %v2200 = vld [vmem:[#allocation3 + $0x44] sm:$0x1]
        %v2201 = vsel %vm2164, %v2056, %v2200
        %2202 = vst [vmem:[#allocation3 + $0x44] sm:$0x1] %v2201
        %v2203 = vld [vmem:[#allocation3 + $0x48] sm:$0xf]
        %v2204 = vsel %vm2157, %v2063, %v2203
        %2205 = vst [vmem:[#allocation3 + $0x48] sm:$0xf] %v2204
        %2206 = vst.msk [vmem:[#allocation3 + $0x4c] sm:$0xf] %vm2161, %v2072
        %v2207 = vld [vmem:[#allocation3 + $0x50] sm:$0x1]
        %v2208 = vsel %vm2164, %v2073, %v2207
        %2209 = vst [vmem:[#allocation3 + $0x50] sm:$0x1] %v2208
        %v2210 = vld [vmem:[#allocation3 + $0x54] sm:$0xf]
        %v2211 = vsel %vm2157, %v2080, %v2210
        %2212 = vst [vmem:[#allocation3 + $0x54] sm:$0xf] %v2211
        %2213 = vst.msk [vmem:[#allocation3 + $0x58] sm:$0xf] %vm2161, %v2089
        %v2214 = vld [vmem:[#allocation3 + $0x5c] sm:$0x1]
        %v2215 = vsel %vm2164, %v2090, %v2214
        %2216 = vst [vmem:[#allocation3 + $0x5c] sm:$0x1] %v2215
        %v2217 = vld [vmem:[#allocation3 + $0x60] sm:$0xf]
        %v2218 = vsel %vm2157, %v2097, %v2217
        %2219 = vst [vmem:[#allocation3 + $0x60] sm:$0xf] %v2218
        %2220 = vst.msk [vmem:[#allocation3 + $0x64] sm:$0xf] %vm2161, %v2106
        %v2221 = vld [vmem:[#allocation3 + $0x68] sm:$0x1]
        %v2222 = vsel %vm2164, %v2107, %v2221
        %2223 = vst [vmem:[#allocation3 + $0x68] sm:$0x1] %v2222
        %v2224 = vld [vmem:[#allocation3 + $0x6c] sm:$0xf]
        %v2225 = vsel %vm2157, %v2114, %v2224
        %2226 = vst [vmem:[#allocation3 + $0x6c] sm:$0xf] %v2225
        %2227 = vst.msk [vmem:[#allocation3 + $0x70] sm:$0xf] %vm2161, %v2123
        %v2228 = vld [vmem:[#allocation3 + $0x74] sm:$0x1]
        %v2229 = vsel %vm2164, %v2124, %v2228
        %2230 = vst [vmem:[#allocation3 + $0x74] sm:$0x1] %v2229
        %v2231 = vld [vmem:[#allocation3] sm:$0x1]
        %v2232 = vsel %vm2164, 0, %v2231
        %2233 = vst [vmem:[#allocation3] sm:$0x1] %v2232
        %v2234 = vld [vmem:[#allocation3 + $0xc] sm:$0x1]
        %v2235 = vsel %vm2164, 0, %v2234
        %2236 = vst [vmem:[#allocation3 + $0xc] sm:$0x1] %v2235
        %v2237 = vld [vmem:[#allocation3 + $0x18] sm:$0x1]
        %v2238 = vsel %vm2164, 0, %v2237
        %2239 = vst [vmem:[#allocation3 + $0x18] sm:$0x1] %v2238
        %v2240 = vld [vmem:[#allocation3 + $0x24] sm:$0x1]
        %v2241 = vsel %vm2164, 0, %v2240
        %2242 = vst [vmem:[#allocation3 + $0x24] sm:$0x1] %v2241
        %v2243 = vld [vmem:[#allocation3 + $0x30] sm:$0x1]
        %v2244 = vsel %vm2164, 0, %v2243
        %2245 = vst [vmem:[#allocation3 + $0x30] sm:$0x1] %v2244
        %v2246 = vld [vmem:[#allocation3 + $0x3c] sm:$0x1]
        %v2247 = vsel %vm2164, 0, %v2246
        %2248 = vst [vmem:[#allocation3 + $0x3c] sm:$0x1] %v2247
        %v2249 = vld [vmem:[#allocation3 + $0x48] sm:$0x1]
        %v2250 = vsel %vm2164, 0, %v2249
        %2251 = vst [vmem:[#allocation3 + $0x48] sm:$0x1] %v2250
        %v2252 = vld [vmem:[#allocation3 + $0x54] sm:$0x1]
        %v2253 = vsel %vm2164, 0, %v2252
        %2254 = vst [vmem:[#allocation3 + $0x54] sm:$0x1] %v2253
        %v2255 = vld [vmem:[#allocation3 + $0x60] sm:$0x1]
        %v2256 = vsel %vm2164, 0, %v2255
        %2257 = vst [vmem:[#allocation3 + $0x60] sm:$0x1] %v2256
        %v2258 = vld [vmem:[#allocation3 + $0x6c] sm:$0x1]
        %v2259 = vsel %vm2164, 0, %v2258
        %2260 = vst [vmem:[#allocation3 + $0x6c] sm:$0x1] %v2259
        %vm2261 = vmand %vm2163, %vm2156
        %v2262 = vld [vmem:[#allocation3 + $0x8] sm:$0x1]
        %v2263 = vsel %vm2261, 0, %v2262
        %2264 = vst [vmem:[#allocation3 + $0x8] sm:$0x1] %v2263
        %v2265 = vld [vmem:[#allocation3 + $0x14] sm:$0x1]
        %v2266 = vsel %vm2261, 0, %v2265
        %2267 = vst [vmem:[#allocation3 + $0x14] sm:$0x1] %v2266
        %v2268 = vld [vmem:[#allocation3 + $0x20] sm:$0x1]
        %v2269 = vsel %vm2261, 0, %v2268
        %2270 = vst [vmem:[#allocation3 + $0x20] sm:$0x1] %v2269
        %v2271 = vld [vmem:[#allocation3 + $0x2c] sm:$0x1]
        %v2272 = vsel %vm2261, 0, %v2271
        %2273 = vst [vmem:[#allocation3 + $0x2c] sm:$0x1] %v2272
        %v2274 = vld [vmem:[#allocation3 + $0x38] sm:$0x1]
        %v2275 = vsel %vm2261, 0, %v2274
        %2276 = vst [vmem:[#allocation3 + $0x38] sm:$0x1] %v2275
        %v2277 = vld [vmem:[#allocation3 + $0x44] sm:$0x1]
        %v2278 = vsel %vm2261, 0, %v2277
        %2279 = vst [vmem:[#allocation3 + $0x44] sm:$0x1] %v2278
        %v2280 = vld [vmem:[#allocation3 + $0x50] sm:$0x1]
        %v2281 = vsel %vm2261, 0, %v2280
        %2282 = vst [vmem:[#allocation3 + $0x50] sm:$0x1] %v2281
        %v2283 = vld [vmem:[#allocation3 + $0x5c] sm:$0x1]
        %v2284 = vsel %vm2261, 0, %v2283
        %2285 = vst [vmem:[#allocation3 + $0x5c] sm:$0x1] %v2284
        %v2286 = vld [vmem:[#allocation3 + $0x68] sm:$0x1]
        %v2287 = vsel %vm2261, 0, %v2286
        %2288 = vst [vmem:[#allocation3 + $0x68] sm:$0x1] %v2287
        %v2289 = vld [vmem:[#allocation3 + $0x74] sm:$0x1]
        %v2290 = vsel %vm2261, 0, %v2289
        %2291 = vst [vmem:[#allocation3 + $0x74] sm:$0x1] %v2290
        %p2292 = scmp.eq.s32.totalorder %s24, 0
        // Predicated region
        $region41: #{tpu_custom_call.1} parent=39 // pred_check
          %p2293 = pneg %p2292
        $region42: #{tpu_custom_call.1} parent=39 // pred_check_branch
          %2295 = sbr.rel (%p2293) target = $region44
        $region43: #{tpu_custom_call.1} parent=39 // pred_region
          %2296 = vst.msk [vmem:[#allocation3] sm:$0xf] %vm2161, 0
          %2297 = vst.msk [vmem:[#allocation3 + $0x4] sm:$0xf] %vm2161, 0
          %vm2298 = vcmask 57344
          %2299 = vst.msk [vmem:[#allocation3 + $0x8] sm:$0x1] %vm2298, 0
        $region44: #{tpu_custom_call.1} parent=39 // pred_fallthru
          _
        %p2300 = scmp.eq.s32.totalorder %s24, 1
        // Predicated region
        $region45: #{tpu_custom_call.1} parent=39 // pred_check
          %p2301 = pneg %p2300
        $region46: #{tpu_custom_call.1} parent=39 // pred_check_branch
          %2303 = sbr.rel (%p2301) target = $region48
        $region47: #{tpu_custom_call.1} parent=39 // pred_region
          %s2304 = scalar_lea.vmem [#allocation3], 108
          %2305 = vst.msk [vmem:[%s2304] sm:$0xf] %vm2161, 0
          %2306 = vst.msk [vmem:[%s2304 + $0x4] sm:$0xf] %vm2161, 0
          %vm2307 = vcmask 57344
          %2308 = vst.msk [vmem:[%s2304 + $0x8] sm:$0x1] %vm2307, 0
        $region48: #{tpu_custom_call.1} parent=39 // pred_fallthru
          _
        %v2309 = vld [vmem:[#allocation3] sm:$0xf]
        %v2310 = vld [vmem:[#allocation3 + $0x4] sm:$0xf]
        %v2311 = vld [vmem:[#allocation3 + $0x8] sm:$0x1]
        %v2312 = vld [vmem:[#allocation3 + $0xc] sm:$0xf]
        %v2313 = vld [vmem:[#allocation3 + $0x10] sm:$0xf]
        %v2314 = vld [vmem:[#allocation3 + $0x14] sm:$0x1]
        %v2315 = vld [vmem:[#allocation3 + $0x18] sm:$0xf]
        %v2316 = vld [vmem:[#allocation3 + $0x1c] sm:$0xf]
        %v2317 = vld [vmem:[#allocation3 + $0x20] sm:$0x1]
        %v2318 = vld [vmem:[#allocation3 + $0x24] sm:$0xf]
        %v2319 = vld [vmem:[#allocation3 + $0x28] sm:$0xf]
        %v2320 = vld [vmem:[#allocation3 + $0x2c] sm:$0x1]
        %v2321 = vld [vmem:[#allocation3 + $0x30] sm:$0xf]
        %v2322 = vld [vmem:[#allocation3 + $0x34] sm:$0xf]
        %v2323 = vld [vmem:[#allocation3 + $0x38] sm:$0x1]
        %v2324 = vld [vmem:[#allocation3 + $0x3c] sm:$0xf]
        %v2325 = vld [vmem:[#allocation3 + $0x40] sm:$0xf]
        %v2326 = vld [vmem:[#allocation3 + $0x44] sm:$0x1]
        %v2327 = vld [vmem:[#allocation3 + $0x48] sm:$0xf]
        %v2328 = vld [vmem:[#allocation3 + $0x4c] sm:$0xf]
        %v2329 = vld [vmem:[#allocation3 + $0x50] sm:$0x1]
        %v2330 = vld [vmem:[#allocation3 + $0x54] sm:$0xf]
        %v2331 = vld [vmem:[#allocation3 + $0x58] sm:$0xf]
        %v2332 = vld [vmem:[#allocation3 + $0x5c] sm:$0x1]
        %v2349 = vunpack.c.l.b16 %v2309
        %v2350 = vunpack.c.l.b16 %v2310
        %v2351 = vunpack.c.l.b16 %v2312
        %v2352 = vunpack.c.l.b16 %v2313
        %v2353 = vunpack.c.l.b16 %v2315
        %v2354 = vunpack.c.l.b16 %v2316
        %v2355 = vunpack.c.l.b16 %v2318
        %v2356 = vunpack.c.l.b16 %v2319
        %v2357 = vunpack.c.l.b16 %v2321
        %v2358 = vunpack.c.l.b16 %v2322
        %v2359 = vunpack.c.l.b16 %v2324
        %v2360 = vunpack.c.l.b16 %v2325
        %v2361 = vunpack.c.l.b16 %v2327
        %v2362 = vunpack.c.l.b16 %v2328
        %v2363 = vunpack.c.l.b16 %v2330
        %v2364 = vunpack.c.l.b16 %v2331
        %v2365 = vpack.c.b16 %v2350, %v2349
        %v2366 = vpack.c.b16 %v2352, %v2351
        %v2367 = vpack.c.b16 %v2354, %v2353
        %v2368 = vpack.c.b16 %v2356, %v2355
        %v2369 = vpack.c.b16 %v2358, %v2357
        %v2370 = vpack.c.b16 %v2360, %v2359
        %v2371 = vpack.c.b16 %v2362, %v2361
        %v2372 = vpack.c.b16 %v2364, %v2363
        %v2381 = vunpack.c.l.b16 %v2311
        %v2382 = vunpack.c.l.b16 %v2314
        %v2383 = vunpack.c.l.b16 %v2317
        %v2384 = vunpack.c.l.b16 %v2320
        %v2385 = vunpack.c.l.b16 %v2323
        %v2386 = vunpack.c.l.b16 %v2326
        %v2387 = vunpack.c.l.b16 %v2329
        %v2388 = vunpack.c.l.b16 %v2332
        %v2389 = vpack.c.b16 %v2381, %v2381
        %v2390 = vpack.c.b16 %v2382, %v2382
        %v2391 = vpack.c.b16 %v2383, %v2383
        %v2392 = vpack.c.b16 %v2384, %v2384
        %v2393 = vpack.c.b16 %v2385, %v2385
        %v2394 = vpack.c.b16 %v2386, %v2386
        %v2395 = vpack.c.b16 %v2387, %v2387
        %v2396 = vpack.c.b16 %v2388, %v2388
        %v2398 = vshrl.u32 %v2365, 16
        %v2400 = vshll.u32 %v2365, 16
        %v2402 = vrot.slane %v2400, 1
        %v2403 = vor.u32 %v2398, %v2402
        %v2405 = vshll.u32 %v2389, 16
        %v2407 = vrot.slane %v2405, 1
        %v2408 = vsel %vm352, %v2403, %v2407
        %v2410 = vshrl.u32 %v2366, 16
        %v2412 = vshll.u32 %v2366, 16
        %v2414 = vrot.slane %v2412, 1
        %v2415 = vor.u32 %v2410, %v2414
        %v2417 = vshll.u32 %v2390, 16
        %v2419 = vrot.slane %v2417, 1
        %v2420 = vsel %vm352, %v2415, %v2419
        %v2422 = vshrl.u32 %v2367, 16
        %v2424 = vshll.u32 %v2367, 16
        %v2426 = vrot.slane %v2424, 1
        %v2427 = vor.u32 %v2422, %v2426
        %v2429 = vshll.u32 %v2391, 16
        %v2431 = vrot.slane %v2429, 1
        %v2432 = vsel %vm352, %v2427, %v2431
        %v2434 = vshrl.u32 %v2368, 16
        %v2436 = vshll.u32 %v2368, 16
        %v2438 = vrot.slane %v2436, 1
        %v2439 = vor.u32 %v2434, %v2438
        %v2441 = vshll.u32 %v2392, 16
        %v2443 = vrot.slane %v2441, 1
        %v2444 = vsel %vm352, %v2439, %v2443
        %v2446 = vshrl.u32 %v2369, 16
        %v2448 = vshll.u32 %v2369, 16
        %v2450 = vrot.slane %v2448, 1
        %v2451 = vor.u32 %v2446, %v2450
        %v2453 = vshll.u32 %v2393, 16
        %v2455 = vrot.slane %v2453, 1
        %v2456 = vsel %vm352, %v2451, %v2455
        %v2458 = vshrl.u32 %v2370, 16
        %v2460 = vshll.u32 %v2370, 16
        %v2462 = vrot.slane %v2460, 1
        %v2463 = vor.u32 %v2458, %v2462
        %v2465 = vshll.u32 %v2394, 16
        %v2467 = vrot.slane %v2465, 1
        %v2468 = vsel %vm352, %v2463, %v2467
        %v2470 = vshrl.u32 %v2371, 16
        %v2472 = vshll.u32 %v2371, 16
        %v2474 = vrot.slane %v2472, 1
        %v2475 = vor.u32 %v2470, %v2474
        %v2477 = vshll.u32 %v2395, 16
        %v2479 = vrot.slane %v2477, 1
        %v2480 = vsel %vm352, %v2475, %v2479
        %v2482 = vshrl.u32 %v2372, 16
        %v2484 = vshll.u32 %v2372, 16
        %v2486 = vrot.slane %v2484, 1
        %v2487 = vor.u32 %v2482, %v2486
        %v2489 = vshll.u32 %v2396, 16
        %v2491 = vrot.slane %v2489, 1
        %v2492 = vsel %vm352, %v2487, %v2491
        %2493 = vrot.lane.b32.xlu0 %v2408, 8
        %v2494 = vpop.permute.xlu0 %2493
        %2495 = vrot.lane.b32.xlu0 %v2420, 8
        %v2496 = vpop.permute.xlu0 %2495
        %2497 = vrot.lane.b32.xlu0 %v2432, 8
        %v2498 = vpop.permute.xlu0 %2497
        %2499 = vrot.lane.b32.xlu0 %v2444, 8
        %v2500 = vpop.permute.xlu0 %2499
        %2501 = vrot.lane.b32.xlu0 %v2456, 8
        %v2502 = vpop.permute.xlu0 %2501
        %2503 = vrot.lane.b32.xlu0 %v2468, 8
        %v2504 = vpop.permute.xlu0 %2503
        %2505 = vrot.lane.b32.xlu0 %v2480, 8
        %v2506 = vpop.permute.xlu0 %2505
        %2507 = vrot.lane.b32.xlu0 %v2492, 8
        %v2508 = vpop.permute.xlu0 %2507
        %v2509 = vrot.slane %v2365, 1
        %v2510 = vrot.slane %v2389, 1
        %v2511 = vsel %vm493, %v2509, %v2510
        %v2512 = vrot.slane %v2366, 1
        %v2513 = vrot.slane %v2390, 1
        %v2514 = vsel %vm493, %v2512, %v2513
        %v2515 = vrot.slane %v2367, 1
        %v2516 = vrot.slane %v2391, 1
        %v2517 = vsel %vm493, %v2515, %v2516
        %v2518 = vrot.slane %v2368, 1
        %v2519 = vrot.slane %v2392, 1
        %v2520 = vsel %vm493, %v2518, %v2519
        %v2521 = vrot.slane %v2369, 1
        %v2522 = vrot.slane %v2393, 1
        %v2523 = vsel %vm493, %v2521, %v2522
        %v2524 = vrot.slane %v2370, 1
        %v2525 = vrot.slane %v2394, 1
        %v2526 = vsel %vm493, %v2524, %v2525
        %v2527 = vrot.slane %v2371, 1
        %v2528 = vrot.slane %v2395, 1
        %v2529 = vsel %vm493, %v2527, %v2528
        %v2530 = vrot.slane %v2372, 1
        %v2531 = vrot.slane %v2396, 1
        %v2532 = vsel %vm493, %v2530, %v2531
        %2533 = vrot.lane.b32.xlu0 %v2511, 16
        %v2534 = vpop.permute.xlu0 %2533
        %2535 = vrot.lane.b32.xlu0 %v2514, 16
        %v2536 = vpop.permute.xlu0 %2535
        %2537 = vrot.lane.b32.xlu0 %v2517, 16
        %v2538 = vpop.permute.xlu0 %2537
        %2539 = vrot.lane.b32.xlu0 %v2520, 16
        %v2540 = vpop.permute.xlu0 %2539
        %2541 = vrot.lane.b32.xlu0 %v2523, 16
        %v2542 = vpop.permute.xlu0 %2541
        %2543 = vrot.lane.b32.xlu0 %v2526, 16
        %v2544 = vpop.permute.xlu0 %2543
        %2545 = vrot.lane.b32.xlu0 %v2529, 16
        %v2546 = vpop.permute.xlu0 %2545
        %2547 = vrot.lane.b32.xlu0 %v2532, 16
        %v2548 = vpop.permute.xlu0 %2547
        %v2550 = vsel %vm565, %v2365, %v2494
        %v2552 = vsel %vm565, %v2366, %v2496
        %v2554 = vsel %vm565, %v2367, %v2498
        %v2556 = vsel %vm565, %v2368, %v2500
        %v2558 = vsel %vm565, %v2369, %v2502
        %v2560 = vsel %vm565, %v2370, %v2504
        %v2562 = vsel %vm565, %v2371, %v2506
        %v2564 = vsel %vm565, %v2372, %v2508
        %vm2565 = vcmask 130048
        %v2567 = vsel %vm2565, %v2550, %v2534
        %v2569 = vsel %vm2565, %v2552, %v2536
        %v2571 = vsel %vm2565, %v2554, %v2538
        %v2573 = vsel %vm2565, %v2556, %v2540
        %v2575 = vsel %vm2565, %v2558, %v2542
        %v2577 = vsel %vm2565, %v2560, %v2544
        %v2579 = vsel %vm2565, %v2562, %v2546
        %v2581 = vsel %vm2565, %v2564, %v2548
        %v2590 = vunpack.c.l.b16 %v2567
        %v2591 = vunpack.c.h.b16 %v2567
        %v2592 = vunpack.c.l.b16 %v2569
        %v2593 = vunpack.c.h.b16 %v2569
        %v2594 = vunpack.c.l.b16 %v2571
        %v2595 = vunpack.c.h.b16 %v2571
        %v2596 = vunpack.c.l.b16 %v2573
        %v2597 = vunpack.c.h.b16 %v2573
        %v2598 = vunpack.c.l.b16 %v2575
        %v2599 = vunpack.c.h.b16 %v2575
        %v2600 = vunpack.c.l.b16 %v2577
        %v2601 = vunpack.c.h.b16 %v2577
        %v2602 = vunpack.c.l.b16 %v2579
        %v2603 = vunpack.c.h.b16 %v2579
        %v2604 = vunpack.c.l.b16 %v2581
        %v2605 = vunpack.c.h.b16 %v2581
        %v2606 = vpack.c.b16 %v2590, %v2590
        %v2607 = vpack.c.b16 %v2591, %v2591
        %v2608 = vpack.c.b16 %v2592, %v2592
        %v2609 = vpack.c.b16 %v2593, %v2593
        %v2610 = vpack.c.b16 %v2594, %v2594
        %v2611 = vpack.c.b16 %v2595, %v2595
        %v2612 = vpack.c.b16 %v2596, %v2596
        %v2613 = vpack.c.b16 %v2597, %v2597
        %v2614 = vpack.c.b16 %v2598, %v2598
        %v2615 = vpack.c.b16 %v2599, %v2599
        %v2616 = vpack.c.b16 %v2600, %v2600
        %v2617 = vpack.c.b16 %v2601, %v2601
        %v2618 = vpack.c.b16 %v2602, %v2602
        %v2619 = vpack.c.b16 %v2603, %v2603
        %v2620 = vpack.c.b16 %v2604, %v2604
        %v2621 = vpack.c.b16 %v2605, %v2605
        %vm2638 = vcmask 191488
        %2639 = vst.msk [vmem:[#allocation4] sm:$0xf] %vm2638, %v2606
        %2640 = vst.msk [vmem:[#allocation4 + $0x4] sm:$0xf] %vm2638, %v2607
        %2641 = vst.msk [vmem:[#allocation4 + $0x8] sm:$0xf] %vm2638, %v2608
        %2642 = vst.msk [vmem:[#allocation4 + $0xc] sm:$0xf] %vm2638, %v2609
        %2643 = vst.msk [vmem:[#allocation4 + $0x10] sm:$0xf] %vm2638, %v2610
        %2644 = vst.msk [vmem:[#allocation4 + $0x14] sm:$0xf] %vm2638, %v2611
        %2645 = vst.msk [vmem:[#allocation4 + $0x18] sm:$0xf] %vm2638, %v2612
        %2646 = vst.msk [vmem:[#allocation4 + $0x1c] sm:$0xf] %vm2638, %v2613
        %2647 = vst.msk [vmem:[#allocation4 + $0x20] sm:$0xf] %vm2638, %v2614
        %2648 = vst.msk [vmem:[#allocation4 + $0x24] sm:$0xf] %vm2638, %v2615
        %2649 = vst.msk [vmem:[#allocation4 + $0x28] sm:$0xf] %vm2638, %v2616
        %2650 = vst.msk [vmem:[#allocation4 + $0x2c] sm:$0xf] %vm2638, %v2617
        %2651 = vst.msk [vmem:[#allocation4 + $0x30] sm:$0xf] %vm2638, %v2618
        %2652 = vst.msk [vmem:[#allocation4 + $0x34] sm:$0xf] %vm2638, %v2619
        %2653 = vst.msk [vmem:[#allocation4 + $0x38] sm:$0xf] %vm2638, %v2620
        %2654 = vst.msk [vmem:[#allocation4 + $0x3c] sm:$0xf] %vm2638, %v2621
        %s2655 = scalar_lea.vmem [#allocation3], 12
        %v2656 = vld [vmem:[%s2655] sm:$0xf]
        %v2657 = vld [vmem:[%s2655 + $0x4] sm:$0xf]
        %v2658 = vld [vmem:[%s2655 + $0x8] sm:$0x1]
        %v2659 = vld [vmem:[%s2655 + $0xc] sm:$0xf]
        %v2660 = vld [vmem:[%s2655 + $0x10] sm:$0xf]
        %v2661 = vld [vmem:[%s2655 + $0x14] sm:$0x1]
        %v2662 = vld [vmem:[%s2655 + $0x18] sm:$0xf]
        %v2663 = vld [vmem:[%s2655 + $0x1c] sm:$0xf]
        %v2664 = vld [vmem:[%s2655 + $0x20] sm:$0x1]
        %v2665 = vld [vmem:[%s2655 + $0x24] sm:$0xf]
        %v2666 = vld [vmem:[%s2655 + $0x28] sm:$0xf]
        %v2667 = vld [vmem:[%s2655 + $0x2c] sm:$0x1]
        %v2668 = vld [vmem:[%s2655 + $0x30] sm:$0xf]
        %v2669 = vld [vmem:[%s2655 + $0x34] sm:$0xf]
        %v2670 = vld [vmem:[%s2655 + $0x38] sm:$0x1]
        %v2671 = vld [vmem:[%s2655 + $0x3c] sm:$0xf]
        %v2672 = vld [vmem:[%s2655 + $0x40] sm:$0xf]
        %v2673 = vld [vmem:[%s2655 + $0x44] sm:$0x1]
        %v2674 = vld [vmem:[%s2655 + $0x48] sm:$0xf]
        %v2675 = vld [vmem:[%s2655 + $0x4c] sm:$0xf]
        %v2676 = vld [vmem:[%s2655 + $0x50] sm:$0x1]
        %v2677 = vld [vmem:[%s2655 + $0x54] sm:$0xf]
        %v2678 = vld [vmem:[%s2655 + $0x58] sm:$0xf]
        %v2679 = vld [vmem:[%s2655 + $0x5c] sm:$0x1]
        %v2696 = vunpack.c.l.b16 %v2656
        %v2697 = vunpack.c.l.b16 %v2657
        %v2698 = vunpack.c.l.b16 %v2659
        %v2699 = vunpack.c.l.b16 %v2660
        %v2700 = vunpack.c.l.b16 %v2662
        %v2701 = vunpack.c.l.b16 %v2663
        %v2702 = vunpack.c.l.b16 %v2665
        %v2703 = vunpack.c.l.b16 %v2666
        %v2704 = vunpack.c.l.b16 %v2668
        %v2705 = vunpack.c.l.b16 %v2669
        %v2706 = vunpack.c.l.b16 %v2671
        %v2707 = vunpack.c.l.b16 %v2672
        %v2708 = vunpack.c.l.b16 %v2674
        %v2709 = vunpack.c.l.b16 %v2675
        %v2710 = vunpack.c.l.b16 %v2677
        %v2711 = vunpack.c.l.b16 %v2678
        %v2712 = vpack.c.b16 %v2697, %v2696
        %v2713 = vpack.c.b16 %v2699, %v2698
        %v2714 = vpack.c.b16 %v2701, %v2700
        %v2715 = vpack.c.b16 %v2703, %v2702
        %v2716 = vpack.c.b16 %v2705, %v2704
        %v2717 = vpack.c.b16 %v2707, %v2706
        %v2718 = vpack.c.b16 %v2709, %v2708
        %v2719 = vpack.c.b16 %v2711, %v2710
        %v2728 = vunpack.c.l.b16 %v2658
        %v2729 = vunpack.c.l.b16 %v2661
        %v2730 = vunpack.c.l.b16 %v2664
        %v2731 = vunpack.c.l.b16 %v2667
        %v2732 = vunpack.c.l.b16 %v2670
        %v2733 = vunpack.c.l.b16 %v2673
        %v2734 = vunpack.c.l.b16 %v2676
        %v2735 = vunpack.c.l.b16 %v2679
        %v2736 = vpack.c.b16 %v2728, %v2728
        %v2737 = vpack.c.b16 %v2729, %v2729
        %v2738 = vpack.c.b16 %v2730, %v2730
        %v2739 = vpack.c.b16 %v2731, %v2731
        %v2740 = vpack.c.b16 %v2732, %v2732
        %v2741 = vpack.c.b16 %v2733, %v2733
        %v2742 = vpack.c.b16 %v2734, %v2734
        %v2743 = vpack.c.b16 %v2735, %v2735
        %v2745 = vshrl.u32 %v2712, 16
        %v2747 = vshll.u32 %v2712, 16
        %v2749 = vrot.slane %v2747, 1
        %v2750 = vor.u32 %v2745, %v2749
        %v2752 = vshll.u32 %v2736, 16
        %v2754 = vrot.slane %v2752, 1
        %v2755 = vsel %vm352, %v2750, %v2754
        %v2757 = vshrl.u32 %v2713, 16
        %v2759 = vshll.u32 %v2713, 16
        %v2761 = vrot.slane %v2759, 1
        %v2762 = vor.u32 %v2757, %v2761
        %v2764 = vshll.u32 %v2737, 16
        %v2766 = vrot.slane %v2764, 1
        %v2767 = vsel %vm352, %v2762, %v2766
        %v2769 = vshrl.u32 %v2714, 16
        %v2771 = vshll.u32 %v2714, 16
        %v2773 = vrot.slane %v2771, 1
        %v2774 = vor.u32 %v2769, %v2773
        %v2776 = vshll.u32 %v2738, 16
        %v2778 = vrot.slane %v2776, 1
        %v2779 = vsel %vm352, %v2774, %v2778
        %v2781 = vshrl.u32 %v2715, 16
        %v2783 = vshll.u32 %v2715, 16
        %v2785 = vrot.slane %v2783, 1
        %v2786 = vor.u32 %v2781, %v2785
        %v2788 = vshll.u32 %v2739, 16
        %v2790 = vrot.slane %v2788, 1
        %v2791 = vsel %vm352, %v2786, %v2790
        %v2793 = vshrl.u32 %v2716, 16
        %v2795 = vshll.u32 %v2716, 16
        %v2797 = vrot.slane %v2795, 1
        %v2798 = vor.u32 %v2793, %v2797
        %v2800 = vshll.u32 %v2740, 16
        %v2802 = vrot.slane %v2800, 1
        %v2803 = vsel %vm352, %v2798, %v2802
        %v2805 = vshrl.u32 %v2717, 16
        %v2807 = vshll.u32 %v2717, 16
        %v2809 = vrot.slane %v2807, 1
        %v2810 = vor.u32 %v2805, %v2809
        %v2812 = vshll.u32 %v2741, 16
        %v2814 = vrot.slane %v2812, 1
        %v2815 = vsel %vm352, %v2810, %v2814
        %v2817 = vshrl.u32 %v2718, 16
        %v2819 = vshll.u32 %v2718, 16
        %v2821 = vrot.slane %v2819, 1
        %v2822 = vor.u32 %v2817, %v2821
        %v2824 = vshll.u32 %v2742, 16
        %v2826 = vrot.slane %v2824, 1
        %v2827 = vsel %vm352, %v2822, %v2826
        %v2829 = vshrl.u32 %v2719, 16
        %v2831 = vshll.u32 %v2719, 16
        %v2833 = vrot.slane %v2831, 1
        %v2834 = vor.u32 %v2829, %v2833
        %v2836 = vshll.u32 %v2743, 16
        %v2838 = vrot.slane %v2836, 1
        %v2839 = vsel %vm352, %v2834, %v2838
        %2840 = vrot.lane.b32.xlu0 %v2755, 8
        %v2841 = vpop.permute.xlu0 %2840
        %2842 = vrot.lane.b32.xlu0 %v2767, 8
        %v2843 = vpop.permute.xlu0 %2842
        %2844 = vrot.lane.b32.xlu0 %v2779, 8
        %v2845 = vpop.permute.xlu0 %2844
        %2846 = vrot.lane.b32.xlu0 %v2791, 8
        %v2847 = vpop.permute.xlu0 %2846
        %2848 = vrot.lane.b32.xlu0 %v2803, 8
        %v2849 = vpop.permute.xlu0 %2848
        %2850 = vrot.lane.b32.xlu0 %v2815, 8
        %v2851 = vpop.permute.xlu0 %2850
        %2852 = vrot.lane.b32.xlu0 %v2827, 8
        %v2853 = vpop.permute.xlu0 %2852
        %2854 = vrot.lane.b32.xlu0 %v2839, 8
        %v2855 = vpop.permute.xlu0 %2854
        %v2856 = vrot.slane %v2712, 1
        %v2857 = vrot.slane %v2736, 1
        %v2858 = vsel %vm493, %v2856, %v2857
        %v2859 = vrot.slane %v2713, 1
        %v2860 = vrot.slane %v2737, 1
        %v2861 = vsel %vm493, %v2859, %v2860
        %v2862 = vrot.slane %v2714, 1
        %v2863 = vrot.slane %v2738, 1
        %v2864 = vsel %vm493, %v2862, %v2863
        %v2865 = vrot.slane %v2715, 1
        %v2866 = vrot.slane %v2739, 1
        %v2867 = vsel %vm493, %v2865, %v2866
        %v2868 = vrot.slane %v2716, 1
        %v2869 = vrot.slane %v2740, 1
        %v2870 = vsel %vm493, %v2868, %v2869
        %v2871 = vrot.slane %v2717, 1
        %v2872 = vrot.slane %v2741, 1
        %v2873 = vsel %vm493, %v2871, %v2872
        %v2874 = vrot.slane %v2718, 1
        %v2875 = vrot.slane %v2742, 1
        %v2876 = vsel %vm493, %v2874, %v2875
        %v2877 = vrot.slane %v2719, 1
        %v2878 = vrot.slane %v2743, 1
        %v2879 = vsel %vm493, %v2877, %v2878
        %2880 = vrot.lane.b32.xlu0 %v2858, 16
        %v2881 = vpop.permute.xlu0 %2880
        %2882 = vrot.lane.b32.xlu0 %v2861, 16
        %v2883 = vpop.permute.xlu0 %2882
        %2884 = vrot.lane.b32.xlu0 %v2864, 16
        %v2885 = vpop.permute.xlu0 %2884
        %2886 = vrot.lane.b32.xlu0 %v2867, 16
        %v2887 = vpop.permute.xlu0 %2886
        %2888 = vrot.lane.b32.xlu0 %v2870, 16
        %v2889 = vpop.permute.xlu0 %2888
        %2890 = vrot.lane.b32.xlu0 %v2873, 16
        %v2891 = vpop.permute.xlu0 %2890
        %2892 = vrot.lane.b32.xlu0 %v2876, 16
        %v2893 = vpop.permute.xlu0 %2892
        %2894 = vrot.lane.b32.xlu0 %v2879, 16
        %v2895 = vpop.permute.xlu0 %2894
        %v2897 = vsel %vm565, %v2712, %v2841
        %v2899 = vsel %vm565, %v2713, %v2843
        %v2901 = vsel %vm565, %v2714, %v2845
        %v2903 = vsel %vm565, %v2715, %v2847
        %v2905 = vsel %vm565, %v2716, %v2849
        %v2907 = vsel %vm565, %v2717, %v2851
        %v2909 = vsel %vm565, %v2718, %v2853
        %v2911 = vsel %vm565, %v2719, %v2855
        %v2913 = vsel %vm2565, %v2897, %v2881
        %v2915 = vsel %vm2565, %v2899, %v2883
        %v2917 = vsel %vm2565, %v2901, %v2885
        %v2919 = vsel %vm2565, %v2903, %v2887
        %v2921 = vsel %vm2565, %v2905, %v2889
        %v2923 = vsel %vm2565, %v2907, %v2891
        %v2925 = vsel %vm2565, %v2909, %v2893
        %v2927 = vsel %vm2565, %v2911, %v2895
        %v2936 = vunpack.c.l.b16 %v2913
        %v2937 = vunpack.c.h.b16 %v2913
        %v2938 = vunpack.c.l.b16 %v2915
        %v2939 = vunpack.c.h.b16 %v2915
        %v2940 = vunpack.c.l.b16 %v2917
        %v2941 = vunpack.c.h.b16 %v2917
        %v2942 = vunpack.c.l.b16 %v2919
        %v2943 = vunpack.c.h.b16 %v2919
        %v2944 = vunpack.c.l.b16 %v2921
        %v2945 = vunpack.c.h.b16 %v2921
        %v2946 = vunpack.c.l.b16 %v2923
        %v2947 = vunpack.c.h.b16 %v2923
        %v2948 = vunpack.c.l.b16 %v2925
        %v2949 = vunpack.c.h.b16 %v2925
        %v2950 = vunpack.c.l.b16 %v2927
        %v2951 = vunpack.c.h.b16 %v2927
        %v2952 = vpack.c.b16 %v2936, %v2936
        %v2953 = vpack.c.b16 %v2937, %v2937
        %v2954 = vpack.c.b16 %v2938, %v2938
        %v2955 = vpack.c.b16 %v2939, %v2939
        %v2956 = vpack.c.b16 %v2940, %v2940
        %v2957 = vpack.c.b16 %v2941, %v2941
        %v2958 = vpack.c.b16 %v2942, %v2942
        %v2959 = vpack.c.b16 %v2943, %v2943
        %v2960 = vpack.c.b16 %v2944, %v2944
        %v2961 = vpack.c.b16 %v2945, %v2945
        %v2962 = vpack.c.b16 %v2946, %v2946
        %v2963 = vpack.c.b16 %v2947, %v2947
        %v2964 = vpack.c.b16 %v2948, %v2948
        %v2965 = vpack.c.b16 %v2949, %v2949
        %v2966 = vpack.c.b16 %v2950, %v2950
        %v2967 = vpack.c.b16 %v2951, %v2951
        %2968 = vrot.lane.b32.xlu0 %v2952, 24
        %v2969 = vpop.permute.xlu0 %2968
        %2970 = vrot.lane.b32.xlu0 %v2953, 24
        %v2971 = vpop.permute.xlu0 %2970
        %2972 = vrot.lane.b32.xlu0 %v2954, 24
        %v2973 = vpop.permute.xlu0 %2972
        %2974 = vrot.lane.b32.xlu0 %v2955, 24
        %v2975 = vpop.permute.xlu0 %2974
        %2976 = vrot.lane.b32.xlu0 %v2956, 24
        %v2977 = vpop.permute.xlu0 %2976
        %2978 = vrot.lane.b32.xlu0 %v2957, 24
        %v2979 = vpop.permute.xlu0 %2978
        %2980 = vrot.lane.b32.xlu0 %v2958, 24
        %v2981 = vpop.permute.xlu0 %2980
        %2982 = vrot.lane.b32.xlu0 %v2959, 24
        %v2983 = vpop.permute.xlu0 %2982
        %2984 = vrot.lane.b32.xlu0 %v2960, 24
        %v2985 = vpop.permute.xlu0 %2984
        %2986 = vrot.lane.b32.xlu0 %v2961, 24
        %v2987 = vpop.permute.xlu0 %2986
        %2988 = vrot.lane.b32.xlu0 %v2962, 24
        %v2989 = vpop.permute.xlu0 %2988
        %2990 = vrot.lane.b32.xlu0 %v2963, 24
        %v2991 = vpop.permute.xlu0 %2990
        %2992 = vrot.lane.b32.xlu0 %v2964, 24
        %v2993 = vpop.permute.xlu0 %2992
        %2994 = vrot.lane.b32.xlu0 %v2965, 24
        %v2995 = vpop.permute.xlu0 %2994
        %2996 = vrot.lane.b32.xlu0 %v2966, 24
        %v2997 = vpop.permute.xlu0 %2996
        %2998 = vrot.lane.b32.xlu0 %v2967, 24
        %v2999 = vpop.permute.xlu0 %2998
        %vm3016 = vcmask 388288
        %3017 = vst.msk [vmem:[#allocation4] sm:$0xf] %vm3016, %v2969
        %3018 = vst.msk [vmem:[#allocation4 + $0x4] sm:$0xf] %vm3016, %v2971
        %3019 = vst.msk [vmem:[#allocation4 + $0x8] sm:$0xf] %vm3016, %v2973
        %3020 = vst.msk [vmem:[#allocation4 + $0xc] sm:$0xf] %vm3016, %v2975
        %3021 = vst.msk [vmem:[#allocation4 + $0x10] sm:$0xf] %vm3016, %v2977
        %3022 = vst.msk [vmem:[#allocation4 + $0x14] sm:$0xf] %vm3016, %v2979
        %3023 = vst.msk [vmem:[#allocation4 + $0x18] sm:$0xf] %vm3016, %v2981
        %3024 = vst.msk [vmem:[#allocation4 + $0x1c] sm:$0xf] %vm3016, %v2983
        %3025 = vst.msk [vmem:[#allocation4 + $0x20] sm:$0xf] %vm3016, %v2985
        %3026 = vst.msk [vmem:[#allocation4 + $0x24] sm:$0xf] %vm3016, %v2987
        %3027 = vst.msk [vmem:[#allocation4 + $0x28] sm:$0xf] %vm3016, %v2989
        %3028 = vst.msk [vmem:[#allocation4 + $0x2c] sm:$0xf] %vm3016, %v2991
        %3029 = vst.msk [vmem:[#allocation4 + $0x30] sm:$0xf] %vm3016, %v2993
        %3030 = vst.msk [vmem:[#allocation4 + $0x34] sm:$0xf] %vm3016, %v2995
        %3031 = vst.msk [vmem:[#allocation4 + $0x38] sm:$0xf] %vm3016, %v2997
        %3032 = vst.msk [vmem:[#allocation4 + $0x3c] sm:$0xf] %vm3016, %v2999
        %s3033 = scalar_lea.vmem [#allocation3], 24
        %v3034 = vld [vmem:[%s3033] sm:$0xf]
        %v3035 = vld [vmem:[%s3033 + $0x4] sm:$0xf]
        %v3036 = vld [vmem:[%s3033 + $0x8] sm:$0x1]
        %v3037 = vld [vmem:[%s3033 + $0xc] sm:$0xf]
        %v3038 = vld [vmem:[%s3033 + $0x10] sm:$0xf]
        %v3039 = vld [vmem:[%s3033 + $0x14] sm:$0x1]
        %v3040 = vld [vmem:[%s3033 + $0x18] sm:$0xf]
        %v3041 = vld [vmem:[%s3033 + $0x1c] sm:$0xf]
        %v3042 = vld [vmem:[%s3033 + $0x20] sm:$0x1]
        %v3043 = vld [vmem:[%s3033 + $0x24] sm:$0xf]
        %v3044 = vld [vmem:[%s3033 + $0x28] sm:$0xf]
        %v3045 = vld [vmem:[%s3033 + $0x2c] sm:$0x1]
        %v3046 = vld [vmem:[%s3033 + $0x30] sm:$0xf]
        %v3047 = vld [vmem:[%s3033 + $0x34] sm:$0xf]
        %v3048 = vld [vmem:[%s3033 + $0x38] sm:$0x1]
        %v3049 = vld [vmem:[%s3033 + $0x3c] sm:$0xf]
        %v3050 = vld [vmem:[%s3033 + $0x40] sm:$0xf]
        %v3051 = vld [vmem:[%s3033 + $0x44] sm:$0x1]
        %v3052 = vld [vmem:[%s3033 + $0x48] sm:$0xf]
        %v3053 = vld [vmem:[%s3033 + $0x4c] sm:$0xf]
        %v3054 = vld [vmem:[%s3033 + $0x50] sm:$0x1]
        %v3055 = vld [vmem:[%s3033 + $0x54] sm:$0xf]
        %v3056 = vld [vmem:[%s3033 + $0x58] sm:$0xf]
        %v3057 = vld [vmem:[%s3033 + $0x5c] sm:$0x1]
        %v3074 = vunpack.c.l.b16 %v3034
        %v3075 = vunpack.c.l.b16 %v3035
        %v3076 = vunpack.c.l.b16 %v3037
        %v3077 = vunpack.c.l.b16 %v3038
        %v3078 = vunpack.c.l.b16 %v3040
        %v3079 = vunpack.c.l.b16 %v3041
        %v3080 = vunpack.c.l.b16 %v3043
        %v3081 = vunpack.c.l.b16 %v3044
        %v3082 = vunpack.c.l.b16 %v3046
        %v3083 = vunpack.c.l.b16 %v3047
        %v3084 = vunpack.c.l.b16 %v3049
        %v3085 = vunpack.c.l.b16 %v3050
        %v3086 = vunpack.c.l.b16 %v3052
        %v3087 = vunpack.c.l.b16 %v3053
        %v3088 = vunpack.c.l.b16 %v3055
        %v3089 = vunpack.c.l.b16 %v3056
        %v3090 = vpack.c.b16 %v3075, %v3074
        %v3091 = vpack.c.b16 %v3077, %v3076
        %v3092 = vpack.c.b16 %v3079, %v3078
        %v3093 = vpack.c.b16 %v3081, %v3080
        %v3094 = vpack.c.b16 %v3083, %v3082
        %v3095 = vpack.c.b16 %v3085, %v3084
        %v3096 = vpack.c.b16 %v3087, %v3086
        %v3097 = vpack.c.b16 %v3089, %v3088
        %v3106 = vunpack.c.l.b16 %v3036
        %v3107 = vunpack.c.l.b16 %v3039
        %v3108 = vunpack.c.l.b16 %v3042
        %v3109 = vunpack.c.l.b16 %v3045
        %v3110 = vunpack.c.l.b16 %v3048
        %v3111 = vunpack.c.l.b16 %v3051
        %v3112 = vunpack.c.l.b16 %v3054
        %v3113 = vunpack.c.l.b16 %v3057
        %v3114 = vpack.c.b16 %v3106, %v3106
        %v3115 = vpack.c.b16 %v3107, %v3107
        %v3116 = vpack.c.b16 %v3108, %v3108
        %v3117 = vpack.c.b16 %v3109, %v3109
        %v3118 = vpack.c.b16 %v3110, %v3110
        %v3119 = vpack.c.b16 %v3111, %v3111
        %v3120 = vpack.c.b16 %v3112, %v3112
        %v3121 = vpack.c.b16 %v3113, %v3113
        %v3123 = vshrl.u32 %v3090, 16
        %v3125 = vshll.u32 %v3090, 16
        %v3127 = vrot.slane %v3125, 1
        %v3128 = vor.u32 %v3123, %v3127
        %v3130 = vshll.u32 %v3114, 16
        %v3132 = vrot.slane %v3130, 1
        %v3133 = vsel %vm352, %v3128, %v3132
        %v3135 = vshrl.u32 %v3091, 16
        %v3137 = vshll.u32 %v3091, 16
        %v3139 = vrot.slane %v3137, 1
        %v3140 = vor.u32 %v3135, %v3139
        %v3142 = vshll.u32 %v3115, 16
        %v3144 = vrot.slane %v3142, 1
        %v3145 = vsel %vm352, %v3140, %v3144
        %v3147 = vshrl.u32 %v3092, 16
        %v3149 = vshll.u32 %v3092, 16
        %v3151 = vrot.slane %v3149, 1
        %v3152 = vor.u32 %v3147, %v3151
        %v3154 = vshll.u32 %v3116, 16
        %v3156 = vrot.slane %v3154, 1
        %v3157 = vsel %vm352, %v3152, %v3156
        %v3159 = vshrl.u32 %v3093, 16
        %v3161 = vshll.u32 %v3093, 16
        %v3163 = vrot.slane %v3161, 1
        %v3164 = vor.u32 %v3159, %v3163
        %v3166 = vshll.u32 %v3117, 16
        %v3168 = vrot.slane %v3166, 1
        %v3169 = vsel %vm352, %v3164, %v3168
        %v3171 = vshrl.u32 %v3094, 16
        %v3173 = vshll.u32 %v3094, 16
        %v3175 = vrot.slane %v3173, 1
        %v3176 = vor.u32 %v3171, %v3175
        %v3178 = vshll.u32 %v3118, 16
        %v3180 = vrot.slane %v3178, 1
        %v3181 = vsel %vm352, %v3176, %v3180
        %v3183 = vshrl.u32 %v3095, 16
        %v3185 = vshll.u32 %v3095, 16
        %v3187 = vrot.slane %v3185, 1
        %v3188 = vor.u32 %v3183, %v3187
        %v3190 = vshll.u32 %v3119, 16
        %v3192 = vrot.slane %v3190, 1
        %v3193 = vsel %vm352, %v3188, %v3192
        %v3195 = vshrl.u32 %v3096, 16
        %v3197 = vshll.u32 %v3096, 16
        %v3199 = vrot.slane %v3197, 1
        %v3200 = vor.u32 %v3195, %v3199
        %v3202 = vshll.u32 %v3120, 16
        %v3204 = vrot.slane %v3202, 1
        %v3205 = vsel %vm352, %v3200, %v3204
        %v3207 = vshrl.u32 %v3097, 16
        %v3209 = vshll.u32 %v3097, 16
        %v3211 = vrot.slane %v3209, 1
        %v3212 = vor.u32 %v3207, %v3211
        %v3214 = vshll.u32 %v3121, 16
        %v3216 = vrot.slane %v3214, 1
        %v3217 = vsel %vm352, %v3212, %v3216
        %3218 = vrot.lane.b32.xlu0 %v3133, 8
        %v3219 = vpop.permute.xlu0 %3218
        %3220 = vrot.lane.b32.xlu0 %v3145, 8
        %v3221 = vpop.permute.xlu0 %3220
        %3222 = vrot.lane.b32.xlu0 %v3157, 8
        %v3223 = vpop.permute.xlu0 %3222
        %3224 = vrot.lane.b32.xlu0 %v3169, 8
        %v3225 = vpop.permute.xlu0 %3224
        %3226 = vrot.lane.b32.xlu0 %v3181, 8
        %v3227 = vpop.permute.xlu0 %3226
        %3228 = vrot.lane.b32.xlu0 %v3193, 8
        %v3229 = vpop.permute.xlu0 %3228
        %3230 = vrot.lane.b32.xlu0 %v3205, 8
        %v3231 = vpop.permute.xlu0 %3230
        %3232 = vrot.lane.b32.xlu0 %v3217, 8
        %v3233 = vpop.permute.xlu0 %3232
        %v3234 = vrot.slane %v3090, 1
        %v3235 = vrot.slane %v3114, 1
        %v3236 = vsel %vm493, %v3234, %v3235
        %v3237 = vrot.slane %v3091, 1
        %v3238 = vrot.slane %v3115, 1
        %v3239 = vsel %vm493, %v3237, %v3238
        %v3240 = vrot.slane %v3092, 1
        %v3241 = vrot.slane %v3116, 1
        %v3242 = vsel %vm493, %v3240, %v3241
        %v3243 = vrot.slane %v3093, 1
        %v3244 = vrot.slane %v3117, 1
        %v3245 = vsel %vm493, %v3243, %v3244
        %v3246 = vrot.slane %v3094, 1
        %v3247 = vrot.slane %v3118, 1
        %v3248 = vsel %vm493, %v3246, %v3247
        %v3249 = vrot.slane %v3095, 1
        %v3250 = vrot.slane %v3119, 1
        %v3251 = vsel %vm493, %v3249, %v3250
        %v3252 = vrot.slane %v3096, 1
        %v3253 = vrot.slane %v3120, 1
        %v3254 = vsel %vm493, %v3252, %v3253
        %v3255 = vrot.slane %v3097, 1
        %v3256 = vrot.slane %v3121, 1
        %v3257 = vsel %vm493, %v3255, %v3256
        %3258 = vrot.lane.b32.xlu0 %v3236, 16
        %v3259 = vpop.permute.xlu0 %3258
        %3260 = vrot.lane.b32.xlu0 %v3239, 16
        %v3261 = vpop.permute.xlu0 %3260
        %3262 = vrot.lane.b32.xlu0 %v3242, 16
        %v3263 = vpop.permute.xlu0 %3262
        %3264 = vrot.lane.b32.xlu0 %v3245, 16
        %v3265 = vpop.permute.xlu0 %3264
        %3266 = vrot.lane.b32.xlu0 %v3248, 16
        %v3267 = vpop.permute.xlu0 %3266
        %3268 = vrot.lane.b32.xlu0 %v3251, 16
        %v3269 = vpop.permute.xlu0 %3268
        %3270 = vrot.lane.b32.xlu0 %v3254, 16
        %v3271 = vpop.permute.xlu0 %3270
        %3272 = vrot.lane.b32.xlu0 %v3257, 16
        %v3273 = vpop.permute.xlu0 %3272
        %v3275 = vsel %vm565, %v3090, %v3219
        %v3277 = vsel %vm565, %v3091, %v3221
        %v3279 = vsel %vm565, %v3092, %v3223
        %v3281 = vsel %vm565, %v3093, %v3225
        %v3283 = vsel %vm565, %v3094, %v3227
        %v3285 = vsel %vm565, %v3095, %v3229
        %v3287 = vsel %vm565, %v3096, %v3231
        %v3289 = vsel %vm565, %v3097, %v3233
        %v3291 = vsel %vm2565, %v3275, %v3259
        %v3293 = vsel %vm2565, %v3277, %v3261
        %v3295 = vsel %vm2565, %v3279, %v3263
        %v3297 = vsel %vm2565, %v3281, %v3265
        %v3299 = vsel %vm2565, %v3283, %v3267
        %v3301 = vsel %vm2565, %v3285, %v3269
        %v3303 = vsel %vm2565, %v3287, %v3271
        %v3305 = vsel %vm2565, %v3289, %v3273
        %v3314 = vunpack.c.l.b16 %v3291
        %v3315 = vunpack.c.h.b16 %v3291
        %v3316 = vunpack.c.l.b16 %v3293
        %v3317 = vunpack.c.h.b16 %v3293
        %v3318 = vunpack.c.l.b16 %v3295
        %v3319 = vunpack.c.h.b16 %v3295
        %v3320 = vunpack.c.l.b16 %v3297
        %v3321 = vunpack.c.h.b16 %v3297
        %v3322 = vunpack.c.l.b16 %v3299
        %v3323 = vunpack.c.h.b16 %v3299
        %v3324 = vunpack.c.l.b16 %v3301
        %v3325 = vunpack.c.h.b16 %v3301
        %v3326 = vunpack.c.l.b16 %v3303
        %v3327 = vunpack.c.h.b16 %v3303
        %v3328 = vunpack.c.l.b16 %v3305
        %v3329 = vunpack.c.h.b16 %v3305
        %v3330 = vpack.c.b16 %v3314, %v3314
        %v3331 = vpack.c.b16 %v3315, %v3315
        %v3332 = vpack.c.b16 %v3316, %v3316
        %v3333 = vpack.c.b16 %v3317, %v3317
        %v3334 = vpack.c.b16 %v3318, %v3318
        %v3335 = vpack.c.b16 %v3319, %v3319
        %v3336 = vpack.c.b16 %v3320, %v3320
        %v3337 = vpack.c.b16 %v3321, %v3321
        %v3338 = vpack.c.b16 %v3322, %v3322
        %v3339 = vpack.c.b16 %v3323, %v3323
        %v3340 = vpack.c.b16 %v3324, %v3324
        %v3341 = vpack.c.b16 %v3325, %v3325
        %v3342 = vpack.c.b16 %v3326, %v3326
        %v3343 = vpack.c.b16 %v3327, %v3327
        %v3344 = vpack.c.b16 %v3328, %v3328
        %v3345 = vpack.c.b16 %v3329, %v3329
        %3346 = vrot.lane.b32.xlu0 %v3330, 48
        %v3347 = vpop.permute.xlu0 %3346
        %3348 = vrot.lane.b32.xlu0 %v3331, 48
        %v3349 = vpop.permute.xlu0 %3348
        %3350 = vrot.lane.b32.xlu0 %v3332, 48
        %v3351 = vpop.permute.xlu0 %3350
        %3352 = vrot.lane.b32.xlu0 %v3333, 48
        %v3353 = vpop.permute.xlu0 %3352
        %3354 = vrot.lane.b32.xlu0 %v3334, 48
        %v3355 = vpop.permute.xlu0 %3354
        %3356 = vrot.lane.b32.xlu0 %v3335, 48
        %v3357 = vpop.permute.xlu0 %3356
        %3358 = vrot.lane.b32.xlu0 %v3336, 48
        %v3359 = vpop.permute.xlu0 %3358
        %3360 = vrot.lane.b32.xlu0 %v3337, 48
        %v3361 = vpop.permute.xlu0 %3360
        %3362 = vrot.lane.b32.xlu0 %v3338, 48
        %v3363 = vpop.permute.xlu0 %3362
        %3364 = vrot.lane.b32.xlu0 %v3339, 48
        %v3365 = vpop.permute.xlu0 %3364
        %3366 = vrot.lane.b32.xlu0 %v3340, 48
        %v3367 = vpop.permute.xlu0 %3366
        %3368 = vrot.lane.b32.xlu0 %v3341, 48
        %v3369 = vpop.permute.xlu0 %3368
        %3370 = vrot.lane.b32.xlu0 %v3342, 48
        %v3371 = vpop.permute.xlu0 %3370
        %3372 = vrot.lane.b32.xlu0 %v3343, 48
        %v3373 = vpop.permute.xlu0 %3372
        %3374 = vrot.lane.b32.xlu0 %v3344, 48
        %v3375 = vpop.permute.xlu0 %3374
        %3376 = vrot.lane.b32.xlu0 %v3345, 48
        %v3377 = vpop.permute.xlu0 %3376
        %vm3394 = vcmask 585088
        %3395 = vst.msk [vmem:[#allocation4] sm:$0xf] %vm3394, %v3347
        %3396 = vst.msk [vmem:[#allocation4 + $0x4] sm:$0xf] %vm3394, %v3349
        %3397 = vst.msk [vmem:[#allocation4 + $0x8] sm:$0xf] %vm3394, %v3351
        %3398 = vst.msk [vmem:[#allocation4 + $0xc] sm:$0xf] %vm3394, %v3353
        %3399 = vst.msk [vmem:[#allocation4 + $0x10] sm:$0xf] %vm3394, %v3355
        %3400 = vst.msk [vmem:[#allocation4 + $0x14] sm:$0xf] %vm3394, %v3357
        %3401 = vst.msk [vmem:[#allocation4 + $0x18] sm:$0xf] %vm3394, %v3359
        %3402 = vst.msk [vmem:[#allocation4 + $0x1c] sm:$0xf] %vm3394, %v3361
        %3403 = vst.msk [vmem:[#allocation4 + $0x20] sm:$0xf] %vm3394, %v3363
        %3404 = vst.msk [vmem:[#allocation4 + $0x24] sm:$0xf] %vm3394, %v3365
        %3405 = vst.msk [vmem:[#allocation4 + $0x28] sm:$0xf] %vm3394, %v3367
        %3406 = vst.msk [vmem:[#allocation4 + $0x2c] sm:$0xf] %vm3394, %v3369
        %3407 = vst.msk [vmem:[#allocation4 + $0x30] sm:$0xf] %vm3394, %v3371
        %3408 = vst.msk [vmem:[#allocation4 + $0x34] sm:$0xf] %vm3394, %v3373
        %3409 = vst.msk [vmem:[#allocation4 + $0x38] sm:$0xf] %vm3394, %v3375
        %3410 = vst.msk [vmem:[#allocation4 + $0x3c] sm:$0xf] %vm3394, %v3377
        %v3411 = vld [vmem:[#allocation4] sm:$0xf]
        %v3412 = vld [vmem:[#allocation4 + $0x4] sm:$0xf]
        %v3413 = vld [vmem:[#allocation4 + $0x8] sm:$0xf]
        %v3414 = vld [vmem:[#allocation4 + $0xc] sm:$0xf]
        %v3415 = vld [vmem:[#allocation4 + $0x10] sm:$0xf]
        %v3416 = vld [vmem:[#allocation4 + $0x14] sm:$0xf]
        %v3417 = vld [vmem:[#allocation4 + $0x18] sm:$0xf]
        %v3418 = vld [vmem:[#allocation4 + $0x1c] sm:$0xf]
        %v3419 = vld [vmem:[#allocation4 + $0x20] sm:$0xf]
        %v3420 = vld [vmem:[#allocation4 + $0x24] sm:$0xf]
        %v3421 = vld [vmem:[#allocation4 + $0x28] sm:$0xf]
        %v3422 = vld [vmem:[#allocation4 + $0x2c] sm:$0xf]
        %v3423 = vld [vmem:[#allocation4 + $0x30] sm:$0xf]
        %v3424 = vld [vmem:[#allocation4 + $0x34] sm:$0xf]
        %v3425 = vld [vmem:[#allocation4 + $0x38] sm:$0xf]
        %v3426 = vld [vmem:[#allocation4 + $0x3c] sm:$0xf]
        %v3427 = vld [vmem:[%s3] sm:$0xf]
        %v3428 = vld [vmem:[%s3 + $0x4] sm:$0xf]
        %v3429 = vld [vmem:[%s3 + $0x8] sm:$0xf]
        %v3430 = vld [vmem:[%s3 + $0xc] sm:$0xf]
        %v3431 = vld [vmem:[%s3 + $0x10] sm:$0xf]
        %v3432 = vld [vmem:[%s3 + $0x14] sm:$0xf]
        %v3433 = vld [vmem:[%s3 + $0x18] sm:$0xf]
        %v3434 = vld [vmem:[%s3 + $0x1c] sm:$0xf]
        %v3435 = vld [vmem:[%s3 + $0x20] sm:$0xf]
        %v3436 = vld [vmem:[%s4] sm:$0x1]
        %v3438 = vlaneseq
        %v3439 = vshrl.u32 %v3438, 7
        %v3440 = vsub.s32 0, %v3439
        %v3441 = vrot.slane %v3436, %v3440
        %v3459 = vunpack.c.l.b16 %v3411
        %v3460 = vunpack.c.l.b16 %v3412
        %v3461 = vunpack.c.l.b16 %v3413
        %v3462 = vunpack.c.l.b16 %v3414
        %v3463 = vunpack.c.l.b16 %v3415
        %v3464 = vunpack.c.l.b16 %v3416
        %v3465 = vunpack.c.l.b16 %v3417
        %v3466 = vunpack.c.l.b16 %v3418
        %v3467 = vunpack.c.l.b16 %v3419
        %v3468 = vunpack.c.l.b16 %v3420
        %v3469 = vunpack.c.l.b16 %v3421
        %v3470 = vunpack.c.l.b16 %v3422
        %v3471 = vunpack.c.l.b16 %v3423
        %v3472 = vunpack.c.l.b16 %v3424
        %v3473 = vunpack.c.l.b16 %v3425
        %v3474 = vunpack.c.l.b16 %v3426
        %v3475 = vpack.c.b16 %v3460, %v3459
        %v3476 = vpack.c.b16 %v3462, %v3461
        %v3477 = vpack.c.b16 %v3464, %v3463
        %v3478 = vpack.c.b16 %v3466, %v3465
        %v3479 = vpack.c.b16 %v3468, %v3467
        %v3480 = vpack.c.b16 %v3470, %v3469
        %v3481 = vpack.c.b16 %v3472, %v3471
        %v3482 = vpack.c.b16 %v3474, %v3473
        %v3492 = vunpack.c.l.b16 %v3427
        %v3493 = vunpack.c.l.b16 %v3428
        %v3494 = vunpack.c.l.b16 %v3429
        %v3495 = vunpack.c.l.b16 %v3430
        %v3496 = vunpack.c.l.b16 %v3431
        %v3497 = vunpack.c.l.b16 %v3432
        %v3498 = vunpack.c.l.b16 %v3433
        %v3499 = vunpack.c.l.b16 %v3434
        %v3500 = vunpack.c.l.b16 %v3435
        %v3501 = vpack.c.b16 %v3493, %v3492
        %v3502 = vpack.c.b16 %v3495, %v3494
        %v3503 = vpack.c.b16 %v3497, %v3496
        %v3504 = vpack.c.b16 %v3499, %v3498
        %v3505 = vpack.c.b16 %v3500, %v3500
        %vm3510 = vcmask 588800
        %v3512 = vsel %vm3510, %v3475, 0
        %v3515 = vsel %vm3510, %v3476, 0
        %v3518 = vsel %vm3510, %v3477, 0
        %v3521 = vsel %vm3510, %v3478, 0
        %v3524 = vsel %vm3510, %v3479, 0
        %v3527 = vsel %vm3510, %v3480, 0
        %v3530 = vsel %vm3510, %v3481, 0
        %v3533 = vsel %vm3510, %v3482, 0
        %vm3535 = vcmask 1043456
        %v3537 = vsel %vm3535, %v3505, 0
        %3539 = vmatprep.subr.bf16.mxu0 0
        %3540 = vmatpush1.bf16.msra.mxu0 0
        %3541 = vmatprep.subr.bf16.mxu0 0
        %3542 = vmatpush1.bf16.msra.mxu0 0
        %3543 = vmatprep.subr.bf16.mxu0 0
        %3544 = vmatpush1.bf16.msra.mxu0 0
        %3545 = vmatprep.subr.bf16.mxu0 0
        %3546 = vmatpush1.bf16.msra.mxu0 %v3537
        %3547 = vmatprep.subr.bf16.mxu0 0
        %3548 = vmatpush1.bf16.msra.mxu0 %v3504
        %3549 = vmatprep.subr.bf16.mxu0 0
        %3550 = vmatpush1.bf16.msra.mxu0 %v3503
        %3551 = vmatprep.subr.bf16.mxu0 0
        %3552 = vmatpush1.bf16.msra.mxu0 %v3502
        %3553 = vmatprep.subr.bf16.mxu0 0
        %3554 = vmatpush1.bf16.msra.mxu0 %v3501
        %3555 = vmatprep.subr.bf16.mxu0 0
        %3556 = vmatpush2.bf16.msra.mxu0 0
        %3557 = vmatprep.subr.bf16.mxu0 0
        %3558 = vmatpush2.bf16.msra.mxu0 0
        %3559 = vmatprep.subr.bf16.mxu0 0
        %3560 = vmatpush2.bf16.msra.mxu0 0
        %3561 = vmatprep.subr.bf16.mxu0 0
        %3562 = vmatpush2.bf16.msra.mxu0 0
        %3563 = vmatprep.subr.bf16.mxu0 0
        %3564 = vmatpush2.bf16.msra.mxu0 0
        %3565 = vmatprep.subr.bf16.mxu0 0
        %3566 = vmatpush2.bf16.msra.mxu0 0
        %3567 = vmatprep.subr.bf16.mxu0 0
        %3568 = vmatpush2.bf16.msra.mxu0 0
        %3569 = vmatprep.subr.bf16.mxu0 0
        %3570 = vmatpush2.bf16.msra.mxu0 0
        %3571 = vmatprep.mubr.bf16.mxu0 0
        %3572 = vmatmul.mubr.bf16.gmra.mxu0 %v3512
        %v3573 = vpop.f32.mrf.mxu0
        %v3574 = vadd.f32 %v3441, %v3573
        %v3575 = vpop.f32.mrf.mxu0
        %v3576 = vpop.f32.mrf.mxu0
        %v3577 = vadd.f32 %v3441, %v3576
        %v3578 = vpop.f32.mrf.mxu0
        %3579 = vmatprep.mubr.bf16.mxu0 0
        %3580 = vmatmul.mubr.bf16.gmra.mxu0 %v3515
        %v3581 = vpop.f32.mrf.mxu0
        %v3582 = vadd.f32 %v3441, %v3581
        %v3583 = vpop.f32.mrf.mxu0
        %v3584 = vpop.f32.mrf.mxu0
        %v3585 = vadd.f32 %v3441, %v3584
        %v3586 = vpop.f32.mrf.mxu0
        %3587 = vmatprep.mubr.bf16.mxu0 0
        %3588 = vmatmul.mubr.bf16.gmra.mxu0 %v3518
        %v3589 = vpop.f32.mrf.mxu0
        %v3590 = vadd.f32 %v3441, %v3589
        %v3591 = vpop.f32.mrf.mxu0
        %v3592 = vpop.f32.mrf.mxu0
        %v3593 = vadd.f32 %v3441, %v3592
        %v3594 = vpop.f32.mrf.mxu0
        %3595 = vmatprep.mubr.bf16.mxu0 0
        %3596 = vmatmul.mubr.bf16.gmra.mxu0 %v3521
        %v3597 = vpop.f32.mrf.mxu0
        %v3598 = vadd.f32 %v3441, %v3597
        %v3599 = vpop.f32.mrf.mxu0
        %v3600 = vpop.f32.mrf.mxu0
        %v3601 = vadd.f32 %v3441, %v3600
        %v3602 = vpop.f32.mrf.mxu0
        %3603 = vmatprep.mubr.bf16.mxu0 0
        %3604 = vmatmul.mubr.bf16.gmra.mxu0 %v3524
        %v3605 = vpop.f32.mrf.mxu0
        %v3606 = vadd.f32 %v3441, %v3605
        %v3607 = vpop.f32.mrf.mxu0
        %v3608 = vpop.f32.mrf.mxu0
        %v3609 = vadd.f32 %v3441, %v3608
        %v3610 = vpop.f32.mrf.mxu0
        %3611 = vmatprep.mubr.bf16.mxu0 0
        %3612 = vmatmul.mubr.bf16.gmra.mxu0 %v3527
        %v3613 = vpop.f32.mrf.mxu0
        %v3614 = vadd.f32 %v3441, %v3613
        %v3615 = vpop.f32.mrf.mxu0
        %v3616 = vpop.f32.mrf.mxu0
        %v3617 = vadd.f32 %v3441, %v3616
        %v3618 = vpop.f32.mrf.mxu0
        %3619 = vmatprep.mubr.bf16.mxu0 0
        %3620 = vmatmul.mubr.bf16.gmra.mxu0 %v3530
        %v3621 = vpop.f32.mrf.mxu0
        %v3622 = vadd.f32 %v3441, %v3621
        %v3623 = vpop.f32.mrf.mxu0
        %v3624 = vpop.f32.mrf.mxu0
        %v3625 = vadd.f32 %v3441, %v3624
        %v3626 = vpop.f32.mrf.mxu0
        %3627 = vmatprep.mubr.bf16.mxu0 0
        %3628 = vmatmul.mubr.bf16.gmra.mxu0 %v3533
        %v3629 = vpop.f32.mrf.mxu0
        %v3630 = vadd.f32 %v3441, %v3629
        %v3631 = vpop.f32.mrf.mxu0
        %v3632 = vpop.f32.mrf.mxu0
        %v3633 = vadd.f32 %v3441, %v3632
        %v3634 = vpop.f32.mrf.mxu0
        %3635 = vdwg.mxu0
        %v3636 = vmax.f32 %v3574, 0.0
        %v3637 = vmax.f32 %v3577, 0.0
        %v3638 = vmax.f32 %v3582, 0.0
        %v3639 = vmax.f32 %v3585, 0.0
        %v3640 = vmax.f32 %v3590, 0.0
        %v3641 = vmax.f32 %v3593, 0.0
        %v3642 = vmax.f32 %v3598, 0.0
        %v3643 = vmax.f32 %v3601, 0.0
        %v3644 = vmax.f32 %v3606, 0.0
        %v3645 = vmax.f32 %v3609, 0.0
        %v3646 = vmax.f32 %v3614, 0.0
        %v3647 = vmax.f32 %v3617, 0.0
        %v3648 = vmax.f32 %v3622, 0.0
        %v3649 = vmax.f32 %v3625, 0.0
        %v3650 = vmax.f32 %v3630, 0.0
        %v3651 = vmax.f32 %v3633, 0.0
        %v3660 = vrot.slane %v3638, 7
        %vm3661 = vcmask 1041409
        %v3662 = vsel %vm3661, %v3660, %v3636
        %v3663 = vrot.slane %v3640, 6
        %vm3664 = vcmask 1042434
        %v3665 = vsel %vm3664, %v3663, %v3662
        %v3666 = vrot.slane %v3642, 5
        %vm3667 = vcmask 1043459
        %v3668 = vsel %vm3667, %v3666, %v3665
        %v3669 = vrot.slane %v3644, 4
        %vm3670 = vcmask 1044484
        %v3671 = vsel %vm3670, %v3669, %v3668
        %v3672 = vrot.slane %v3646, 3
        %vm3673 = vcmask 1045509
        %v3674 = vsel %vm3673, %v3672, %v3671
        %v3675 = vrot.slane %v3648, 2
        %vm3676 = vcmask 1046534
        %v3677 = vsel %vm3676, %v3675, %v3674
        %v3678 = vrot.slane %v3650, 1
        %vm3679 = vcmask 1047559
        %v3680 = vsel %vm3679, %v3678, %v3677
        %v3682 = vrot.slane %v3636, 1
        %v3683 = vsel %vm3661, %v3638, %v3682
        %v3684 = vrot.slane %v3640, 7
        %v3685 = vsel %vm3664, %v3684, %v3683
        %v3686 = vrot.slane %v3642, 6
        %v3687 = vsel %vm3667, %v3686, %v3685
        %v3688 = vrot.slane %v3644, 5
        %v3689 = vsel %vm3670, %v3688, %v3687
        %v3690 = vrot.slane %v3646, 4
        %v3691 = vsel %vm3673, %v3690, %v3689
        %v3692 = vrot.slane %v3648, 3
        %v3693 = vsel %vm3676, %v3692, %v3691
        %v3694 = vrot.slane %v3650, 2
        %v3695 = vsel %vm3679, %v3694, %v3693
        %3696 = vrot.lane.b32.xlu0 %v3695, 8
        %v3697 = vpop.permute.xlu0 %3696
        %v3699 = vrot.slane %v3636, 2
        %v3700 = vrot.slane %v3638, 1
        %v3701 = vsel %vm3661, %v3700, %v3699
        %v3702 = vsel %vm3664, %v3640, %v3701
        %v3703 = vrot.slane %v3642, 7
        %v3704 = vsel %vm3667, %v3703, %v3702
        %v3705 = vrot.slane %v3644, 6
        %v3706 = vsel %vm3670, %v3705, %v3704
        %v3707 = vrot.slane %v3646, 5
        %v3708 = vsel %vm3673, %v3707, %v3706
        %v3709 = vrot.slane %v3648, 4
        %v3710 = vsel %vm3676, %v3709, %v3708
        %v3711 = vrot.slane %v3650, 3
        %v3712 = vsel %vm3679, %v3711, %v3710
        %3713 = vrot.lane.b32.xlu0 %v3712, 16
        %v3714 = vpop.permute.xlu0 %3713
        %v3716 = vrot.slane %v3636, 3
        %v3717 = vrot.slane %v3638, 2
        %v3718 = vsel %vm3661, %v3717, %v3716
        %v3719 = vrot.slane %v3640, 1
        %v3720 = vsel %vm3664, %v3719, %v3718
        %v3721 = vsel %vm3667, %v3642, %v3720
        %v3722 = vrot.slane %v3644, 7
        %v3723 = vsel %vm3670, %v3722, %v3721
        %v3724 = vrot.slane %v3646, 6
        %v3725 = vsel %vm3673, %v3724, %v3723
        %v3726 = vrot.slane %v3648, 5
        %v3727 = vsel %vm3676, %v3726, %v3725
        %v3728 = vrot.slane %v3650, 4
        %v3729 = vsel %vm3679, %v3728, %v3727
        %3730 = vrot.lane.b32.xlu0 %v3729, 24
        %v3731 = vpop.permute.xlu0 %3730
        %v3733 = vrot.slane %v3636, 4
        %v3734 = vrot.slane %v3638, 3
        %v3735 = vsel %vm3661, %v3734, %v3733
        %v3736 = vrot.slane %v3640, 2
        %v3737 = vsel %vm3664, %v3736, %v3735
        %v3738 = vrot.slane %v3642, 1
        %v3739 = vsel %vm3667, %v3738, %v3737
        %v3740 = vsel %vm3670, %v3644, %v3739
        %v3741 = vrot.slane %v3646, 7
        %v3742 = vsel %vm3673, %v3741, %v3740
        %v3743 = vrot.slane %v3648, 6
        %v3744 = vsel %vm3676, %v3743, %v3742
        %v3745 = vrot.slane %v3650, 5
        %v3746 = vsel %vm3679, %v3745, %v3744
        %3747 = vrot.lane.b32.xlu0 %v3746, 32
        %v3748 = vpop.permute.xlu0 %3747
        %v3750 = vrot.slane %v3636, 5
        %v3751 = vrot.slane %v3638, 4
        %v3752 = vsel %vm3661, %v3751, %v3750
        %v3753 = vrot.slane %v3640, 3
        %v3754 = vsel %vm3664, %v3753, %v3752
        %v3755 = vrot.slane %v3642, 2
        %v3756 = vsel %vm3667, %v3755, %v3754
        %v3757 = vrot.slane %v3644, 1
        %v3758 = vsel %vm3670, %v3757, %v3756
        %v3759 = vsel %vm3673, %v3646, %v3758
        %v3760 = vrot.slane %v3648, 7
        %v3761 = vsel %vm3676, %v3760, %v3759
        %v3762 = vrot.slane %v3650, 6
        %v3763 = vsel %vm3679, %v3762, %v3761
        %3764 = vrot.lane.b32.xlu0 %v3763, 40
        %v3765 = vpop.permute.xlu0 %3764
        %v3767 = vrot.slane %v3636, 6
        %v3768 = vrot.slane %v3638, 5
        %v3769 = vsel %vm3661, %v3768, %v3767
        %v3770 = vrot.slane %v3640, 4
        %v3771 = vsel %vm3664, %v3770, %v3769
        %v3772 = vrot.slane %v3642, 3
        %v3773 = vsel %vm3667, %v3772, %v3771
        %v3774 = vrot.slane %v3644, 2
        %v3775 = vsel %vm3670, %v3774, %v3773
        %v3776 = vrot.slane %v3646, 1
        %v3777 = vsel %vm3673, %v3776, %v3775
        %v3778 = vsel %vm3676, %v3648, %v3777
        %v3779 = vrot.slane %v3650, 7
        %v3780 = vsel %vm3679, %v3779, %v3778
        %3781 = vrot.lane.b32.xlu0 %v3780, 48
        %v3782 = vpop.permute.xlu0 %3781
        %v3784 = vrot.slane %v3636, 7
        %v3785 = vrot.slane %v3638, 6
        %v3786 = vsel %vm3661, %v3785, %v3784
        %v3787 = vrot.slane %v3640, 5
        %v3788 = vsel %vm3664, %v3787, %v3786
        %v3789 = vrot.slane %v3642, 4
        %v3790 = vsel %vm3667, %v3789, %v3788
        %v3791 = vrot.slane %v3644, 3
        %v3792 = vsel %vm3670, %v3791, %v3790
        %v3793 = vrot.slane %v3646, 2
        %v3794 = vsel %vm3673, %v3793, %v3792
        %v3795 = vrot.slane %v3648, 1
        %v3796 = vsel %vm3676, %v3795, %v3794
        %v3797 = vsel %vm3679, %v3650, %v3796
        %3798 = vrot.lane.b32.xlu0 %v3797, 56
        %v3799 = vpop.permute.xlu0 %3798
        %v3809 = vrot.slane %v3639, 7
        %v3810 = vsel %vm3661, %v3809, %v3637
        %v3811 = vrot.slane %v3641, 6
        %v3812 = vsel %vm3664, %v3811, %v3810
        %v3813 = vrot.slane %v3643, 5
        %v3814 = vsel %vm3667, %v3813, %v3812
        %v3815 = vrot.slane %v3645, 4
        %v3816 = vsel %vm3670, %v3815, %v3814
        %v3817 = vrot.slane %v3647, 3
        %v3818 = vsel %vm3673, %v3817, %v3816
        %v3819 = vrot.slane %v3649, 2
        %v3820 = vsel %vm3676, %v3819, %v3818
        %v3821 = vrot.slane %v3651, 1
        %v3822 = vsel %vm3679, %v3821, %v3820
        %3823 = vrot.lane.b32.xlu0 %v3822, 64
        %v3824 = vpop.permute.xlu0 %3823
        %v3826 = vrot.slane %v3637, 1
        %v3827 = vsel %vm3661, %v3639, %v3826
        %v3828 = vrot.slane %v3641, 7
        %v3829 = vsel %vm3664, %v3828, %v3827
        %v3830 = vrot.slane %v3643, 6
        %v3831 = vsel %vm3667, %v3830, %v3829
        %v3832 = vrot.slane %v3645, 5
        %v3833 = vsel %vm3670, %v3832, %v3831
        %v3834 = vrot.slane %v3647, 4
        %v3835 = vsel %vm3673, %v3834, %v3833
        %v3836 = vrot.slane %v3649, 3
        %v3837 = vsel %vm3676, %v3836, %v3835
        %v3838 = vrot.slane %v3651, 2
        %v3839 = vsel %vm3679, %v3838, %v3837
        %3840 = vrot.lane.b32.xlu0 %v3839, 72
        %v3841 = vpop.permute.xlu0 %3840
        %v3843 = vrot.slane %v3637, 2
        %v3844 = vrot.slane %v3639, 1
        %v3845 = vsel %vm3661, %v3844, %v3843
        %v3846 = vsel %vm3664, %v3641, %v3845
        %v3847 = vrot.slane %v3643, 7
        %v3848 = vsel %vm3667, %v3847, %v3846
        %v3849 = vrot.slane %v3645, 6
        %v3850 = vsel %vm3670, %v3849, %v3848
        %v3851 = vrot.slane %v3647, 5
        %v3852 = vsel %vm3673, %v3851, %v3850
        %v3853 = vrot.slane %v3649, 4
        %v3854 = vsel %vm3676, %v3853, %v3852
        %v3855 = vrot.slane %v3651, 3
        %v3856 = vsel %vm3679, %v3855, %v3854
        %3857 = vrot.lane.b32.xlu0 %v3856, 80
        %v3858 = vpop.permute.xlu0 %3857
        %v3860 = vrot.slane %v3637, 3
        %v3861 = vrot.slane %v3639, 2
        %v3862 = vsel %vm3661, %v3861, %v3860
        %v3863 = vrot.slane %v3641, 1
        %v3864 = vsel %vm3664, %v3863, %v3862
        %v3865 = vsel %vm3667, %v3643, %v3864
        %v3866 = vrot.slane %v3645, 7
        %v3867 = vsel %vm3670, %v3866, %v3865
        %v3868 = vrot.slane %v3647, 6
        %v3869 = vsel %vm3673, %v3868, %v3867
        %v3870 = vrot.slane %v3649, 5
        %v3871 = vsel %vm3676, %v3870, %v3869
        %v3872 = vrot.slane %v3651, 4
        %v3873 = vsel %vm3679, %v3872, %v3871
        %3874 = vrot.lane.b32.xlu0 %v3873, 88
        %v3875 = vpop.permute.xlu0 %3874
        %v3877 = vrot.slane %v3637, 4
        %v3878 = vrot.slane %v3639, 3
        %v3879 = vsel %vm3661, %v3878, %v3877
        %v3880 = vrot.slane %v3641, 2
        %v3881 = vsel %vm3664, %v3880, %v3879
        %v3882 = vrot.slane %v3643, 1
        %v3883 = vsel %vm3667, %v3882, %v3881
        %v3884 = vsel %vm3670, %v3645, %v3883
        %v3885 = vrot.slane %v3647, 7
        %v3886 = vsel %vm3673, %v3885, %v3884
        %v3887 = vrot.slane %v3649, 6
        %v3888 = vsel %vm3676, %v3887, %v3886
        %v3889 = vrot.slane %v3651, 5
        %v3890 = vsel %vm3679, %v3889, %v3888
        %3891 = vrot.lane.b32.xlu0 %v3890, 96
        %v3892 = vpop.permute.xlu0 %3891
        %v3894 = vrot.slane %v3637, 5
        %v3895 = vrot.slane %v3639, 4
        %v3896 = vsel %vm3661, %v3895, %v3894
        %v3897 = vrot.slane %v3641, 3
        %v3898 = vsel %vm3664, %v3897, %v3896
        %v3899 = vrot.slane %v3643, 2
        %v3900 = vsel %vm3667, %v3899, %v3898
        %v3901 = vrot.slane %v3645, 1
        %v3902 = vsel %vm3670, %v3901, %v3900
        %v3903 = vsel %vm3673, %v3647, %v3902
        %v3904 = vrot.slane %v3649, 7
        %v3905 = vsel %vm3676, %v3904, %v3903
        %v3906 = vrot.slane %v3651, 6
        %v3907 = vsel %vm3679, %v3906, %v3905
        %3908 = vrot.lane.b32.xlu0 %v3907, 104
        %v3909 = vpop.permute.xlu0 %3908
        %v3911 = vrot.slane %v3637, 6
        %v3912 = vrot.slane %v3639, 5
        %v3913 = vsel %vm3661, %v3912, %v3911
        %v3914 = vrot.slane %v3641, 4
        %v3915 = vsel %vm3664, %v3914, %v3913
        %v3916 = vrot.slane %v3643, 3
        %v3917 = vsel %vm3667, %v3916, %v3915
        %v3918 = vrot.slane %v3645, 2
        %v3919 = vsel %vm3670, %v3918, %v3917
        %v3920 = vrot.slane %v3647, 1
        %v3921 = vsel %vm3673, %v3920, %v3919
        %v3922 = vsel %vm3676, %v3649, %v3921
        %v3923 = vrot.slane %v3651, 7
        %v3924 = vsel %vm3679, %v3923, %v3922
        %3925 = vrot.lane.b32.xlu0 %v3924, 112
        %v3926 = vpop.permute.xlu0 %3925
        %v3928 = vrot.slane %v3637, 7
        %v3929 = vrot.slane %v3639, 6
        %v3930 = vsel %vm3661, %v3929, %v3928
        %v3931 = vrot.slane %v3641, 5
        %v3932 = vsel %vm3664, %v3931, %v3930
        %v3933 = vrot.slane %v3643, 4
        %v3934 = vsel %vm3667, %v3933, %v3932
        %v3935 = vrot.slane %v3645, 3
        %v3936 = vsel %vm3670, %v3935, %v3934
        %v3937 = vrot.slane %v3647, 2
        %v3938 = vsel %vm3673, %v3937, %v3936
        %v3939 = vrot.slane %v3649, 1
        %v3940 = vsel %vm3676, %v3939, %v3938
        %v3941 = vsel %vm3679, %v3651, %v3940
        %3942 = vrot.lane.b32.xlu0 %v3941, 120
        %v3943 = vpop.permute.xlu0 %3942
        %v3945 = vsel %vm565, %v3680, %v3697
        %v3946 = vsel %vm2565, %v3945, %v3714
        %vm3947 = vcmask 195584
        %v3948 = vsel %vm3947, %v3946, %v3731
        %vm3949 = vcmask 261120
        %v3950 = vsel %vm3949, %v3948, %v3748
        %vm3951 = vcmask 326656
        %v3952 = vsel %vm3951, %v3950, %v3765
        %vm3953 = vcmask 392192
        %v3954 = vsel %vm3953, %v3952, %v3782
        %vm3955 = vcmask 457728
        %v3956 = vsel %vm3955, %v3954, %v3799
        %vm3957 = vcmask 523264
        %v3958 = vsel %vm3957, %v3956, %v3824
        %v3959 = vsel %vm3510, %v3958, %v3841
        %vm3960 = vcmask 654336
        %v3961 = vsel %vm3960, %v3959, %v3858
        %vm3962 = vcmask 719872
        %v3963 = vsel %vm3962, %v3961, %v3875
        %vm3964 = vcmask 785408
        %v3965 = vsel %vm3964, %v3963, %v3892
        %vm3966 = vcmask 850944
        %v3967 = vsel %vm3966, %v3965, %v3909
        %vm3968 = vcmask 916480
        %v3969 = vsel %vm3968, %v3967, %v3926
        %vm3970 = vcmask 982016
        %v3971 = vsel %vm3970, %v3969, %v3943
        %3972 = vst [vmem:[%s231] sm:$0xff] %v3971
        %s3973 = sand.u32 %s151, 1
        %s3974 = scalar_lea.sflag [#allocation6], %s3973
        %s3975 = sand.u32 %s151, 1
        %s3976 = smul.addr %s3975, 8
        %s3977 = scalar_lea.vmem [#allocation5], %s3976
        // Predicated region
        $region49: #{tpu_custom_call.1} parent=39 // pred_check
          %p3978 = pneg %p161
        $region50: #{tpu_custom_call.1} parent=39 // pred_check_branch
          %3980 = sbr.rel (%p3978) target = $region52
        $region51: #{tpu_custom_call.1} parent=39 // pred_region
          %s3982 = ssub.s32 128, 128
          %3983 = vsyncadd %s3974, %s3982
          %s3984 = smul.addr %s23, 2
          %s3985 = sadd.s32 %s24, %s3984
          %s3986 = smul.addr %s3985, 128
          %s3987 = scalar_lea.hbm %s5, %s3986
          %s3989 = sshll.u32 %s3977, 4
          %s3990 = int_to_ptr.vmem [resolvable:$true] %s3989
          %3992 = dma.vmem_to_hbm [thread:$0]  %s3990, 128, %s3987, %s3974
        $region52: #{tpu_custom_call.1} parent=39 // pred_fallthru
          _
      $region40: #{tpu_custom_call.1} parent=5 // pred_fallthru
        _
      %p3993 = scmp.le.s32.totalorder 2, %s14
      // Predicated region
      $region53: #{tpu_custom_call.1} parent=5 // pred_check
        %p3994 = pneg %p3993
      $region54: #{tpu_custom_call.1} parent=5 // pred_check_branch
        %3996 = sbr.rel (%p3994) target = $region56
      $region55: #{tpu_custom_call.1} parent=5 // pred_region
        %s3997 = ssub.s32 %s14, 2
        // Predicated region
        $region57: #{tpu_custom_call.1} parent=55 // pred_check
          %p3998 = pneg %p167
        $region58: #{tpu_custom_call.1} parent=55 // pred_check_branch
          %4000 = sbr.rel (%p3998) target = $region60
        $region59: #{tpu_custom_call.1} parent=55 // pred_region
          %s4001 = sand.u32 %s152, 1
          %s4002 = scalar_lea.sflag [#allocation6], %s4001
          %s4003 = sand.u32 %s152, 1
          %s4004 = smul.addr %s4003, 8
          %s4005 = scalar_lea.vmem [#allocation5], %s4004
          %4006 = dma.done %s4002, 128
        $region60: #{tpu_custom_call.1} parent=55 // pred_fallthru
          _
      $region56: #{tpu_custom_call.1} parent=5 // pred_fallthru
        _
    $region6: #{tpu_custom_call.1} parent=1 // loop_footer
      %s18 = sadd.s32 1, %s14
    $region7: #{tpu_custom_call.1} parent=1 // loop_footer_branch
      %13 = sbr.rel target = $region3
    $region8: #{tpu_custom_call.1} parent=1 // loop_exit
      _
    %4007 = vsyncpa [#allocation6], 1
    %s4008 = scalar_lea.sflag [#allocation6], 1
    %4009 = vsyncpa %s4008, 1

// kernel: tpu_custom_call.1
$region0: #{tpu_custom_call.1}
  #allocation0 [shape = 'u32[]', space=smem, size = 0x4, offset = 0x4, fixed_abs, tag = 'smem constant byte address 0x4 - core index']
  #allocation1 [shape = 'u32[144,128]{1,0:T(1,128)}', space=vmem, size = 0x12000, scoped, tag = 'internal scratch']
  #allocation2 [shape = 'bf16[10,16,36]{2,1,0:T(8,128)(2,1)}', space=vmem, size = 0xa000, scoped, tag = 'scratch operand']
  #allocation3 [shape = 'bf16[10,18,8]{2,1,0:T(8,128)(2,1)}', space=vmem, size = 0xf000, scoped, tag = 'scratch operand']
  #allocation4 [shape = 'bf16[8,16,72]{2,1,0:T(8,128)(2,1)}', space=vmem, size = 0x8000, scoped, tag = 'scratch operand']
  %s0 = inlined_call_operand.vmem [shape: bf16[2,20,18,4], index: 0, kind: input, shape index: {}]
  %s1 = inlined_call_operand.vmem [shape: bf16[36,8], index: 1, kind: input, shape index: {}]
  %s2 = inlined_call_operand.vmem [shape: f32[1,8], index: 2, kind: input, shape index: {}]
  %s3 = inlined_call_operand.vmem [shape: bf16[72,8], index: 3, kind: input, shape index: {}]
  %s4 = inlined_call_operand.vmem [shape: f32[1,8], index: 4, kind: input, shape index: {}]
  %s5 = inlined_call_operand.vmem [shape: f32[2,16,16,8], index: 5, kind: output, shape index: {}]
  %s6 = sld [smem:[#allocation0]]
  $region61: #{tpu_custom_call.1} parent=0
    _
  %s8 = ssub.s32 1, %s6
  %s9 = scalar_select 0, %s8, %s6
  loop: start=0, step=1, limit=6
  $region2: #{tpu_custom_call.1} parent=0 // loop_pre_header
    _
  $region3: #{tpu_custom_call.1} parent=0 // loop_header
    %s11 = sphi 0, %s15
    %p12 = scmp.ge.s32.totalorder %s11, 6
    %s18 = sphi 0, %s30
    %s19 = sphi 0, %s26
    %s20 = sphi 0, %s18
    %s21 = sphi 0, %s19
    %s22 = sphi 0, %s20
    %s23 = sphi 0, %s21
    %s33 = sphi 0, %s35
    %s36 = sphi 0, %s33
    %s37 = sphi 0, %s36
    %s53 = sphi 0, %s37
    %s57 = sphi 0, %s57
    %s59 = sphi 0, %s57
    %s60 = sphi 0, %s59
    %s74 = sphi 0, %s60
    %s78 = sphi 0, %s78
    %s80 = sphi 0, %s78
    %s81 = sphi 0, %s80
    %s95 = sphi 0, %s81
    %s99 = sphi 0, %s99
    %s101 = sphi 0, %s99
    %s102 = sphi 0, %s101
    %s116 = sphi 0, %s102
    %s120 = sphi 0, %s120
    %s122 = sphi 0, %s120
    %s123 = sphi 0, %s122
    %s137 = sphi 0, %s123
    %s145 = sphi 0, %s147
    %s148 = sphi 0, %s145
    %s149 = sphi 0, %s148
    %s165 = sphi 0, %s149
  $region4: #{tpu_custom_call.1} parent=0 // loop_header_branch
    %14 = sbr.rel (%p12) target = $region8
  $region5: #{tpu_custom_call.1} parent=0 // loop_body
    %s16 = ssub.s32 %s11, 1
    %s17 = ssub.s32 %s11, 2
    %s24 = sadd.s32 1, %s19
    %p25 = scmp.ge.s32.totalorder %s24, 2
    %s26 = scalar_select %p25, 0, %s24
    %s27 = sadd.s32 1, %s18
    %s28 = scalar_select %p25, %s27, %s18
    %p29 = scmp.ge.s32.totalorder %s28, 2
    %s30 = scalar_select %p29, 0, %s28
    %s31 = ssub.s32 %s18, %s30
    %p32 = scmp.eq.s32.totalorder %s31, 0
    %s34 = sadd.s32 %s33, 1
    %s35 = scalar_select %p32, %s33, %s34
    %p38 = pneg %p32
    %p39 = scmp.eq.s32.totalorder %s11, 3
    %p40 = por %p38, %p39
    %p41 = scmp.ne.s32.totalorder %s33, %s36
    %p42 = scmp.eq.s32.totalorder %s11, 0
    %p43 = por %p41, %p42
    %p44 = scmp.ne.s32.totalorder %s33, %s36
    %p45 = scmp.eq.s32.totalorder %s16, 3
    %p46 = por %p44, %p45
    %p47 = scmp.ne.s32.totalorder %s36, %s37
    %p48 = scmp.eq.s32.totalorder %s16, 0
    %p49 = por %p47, %p48
    %p50 = scmp.ne.s32.totalorder %s36, %s37
    %p51 = scmp.eq.s32.totalorder %s17, 3
    %p52 = por %p50, %p51
    %p54 = scmp.ne.s32.totalorder %s37, %s53
    %p55 = scmp.eq.s32.totalorder %s17, 0
    %p56 = por %p54, %p55
    %s58 = sadd.s32 %s57, 1
    %p61 = scmp.eq.s32.totalorder %s11, 3
    %p62 = scmp.ne.s32.totalorder %s57, %s59
    %p63 = scmp.eq.s32.totalorder %s11, 0
    %p64 = por %p62, %p63
    %p65 = scmp.ne.s32.totalorder %s57, %s59
    %p66 = scmp.eq.s32.totalorder %s16, 3
    %p67 = por %p65, %p66
    %p68 = scmp.ne.s32.totalorder %s59, %s60
    %p69 = scmp.eq.s32.totalorder %s16, 0
    %p70 = por %p68, %p69
    %p71 = scmp.ne.s32.totalorder %s59, %s60
    %p72 = scmp.eq.s32.totalorder %s17, 3
    %p73 = por %p71, %p72
    %p75 = scmp.ne.s32.totalorder %s60, %s74
    %p76 = scmp.eq.s32.totalorder %s17, 0
    %p77 = por %p75, %p76
    %s79 = sadd.s32 %s78, 1
    %p82 = scmp.eq.s32.totalorder %s11, 3
    %p83 = scmp.ne.s32.totalorder %s78, %s80
    %p84 = scmp.eq.s32.totalorder %s11, 0
    %p85 = por %p83, %p84
    %p86 = scmp.ne.s32.totalorder %s78, %s80
    %p87 = scmp.eq.s32.totalorder %s16, 3
    %p88 = por %p86, %p87
    %p89 = scmp.ne.s32.totalorder %s80, %s81
    %p90 = scmp.eq.s32.totalorder %s16, 0
    %p91 = por %p89, %p90
    %p92 = scmp.ne.s32.totalorder %s80, %s81
    %p93 = scmp.eq.s32.totalorder %s17, 3
    %p94 = por %p92, %p93
    %p96 = scmp.ne.s32.totalorder %s81, %s95
    %p97 = scmp.eq.s32.totalorder %s17, 0
    %p98 = por %p96, %p97
    %s100 = sadd.s32 %s99, 1
    %p103 = scmp.eq.s32.totalorder %s11, 3
    %p104 = scmp.ne.s32.totalorder %s99, %s101
    %p105 = scmp.eq.s32.totalorder %s11, 0
    %p106 = por %p104, %p105
    %p107 = scmp.ne.s32.totalorder %s99, %s101
    %p108 = scmp.eq.s32.totalorder %s16, 3
    %p109 = por %p107, %p108
    %p110 = scmp.ne.s32.totalorder %s101, %s102
    %p111 = scmp.eq.s32.totalorder %s16, 0
    %p112 = por %p110, %p111
    %p113 = scmp.ne.s32.totalorder %s101, %s102
    %p114 = scmp.eq.s32.totalorder %s17, 3
    %p115 = por %p113, %p114
    %p117 = scmp.ne.s32.totalorder %s102, %s116
    %p118 = scmp.eq.s32.totalorder %s17, 0
    %p119 = por %p117, %p118
    %s121 = sadd.s32 %s120, 1
    %p124 = scmp.eq.s32.totalorder %s11, 3
    %p125 = scmp.ne.s32.totalorder %s120, %s122
    %p126 = scmp.eq.s32.totalorder %s11, 0
    %p127 = por %p125, %p126
    %p128 = scmp.ne.s32.totalorder %s120, %s122
    %p129 = scmp.eq.s32.totalorder %s16, 3
    %p130 = por %p128, %p129
    %p131 = scmp.ne.s32.totalorder %s122, %s123
    %p132 = scmp.eq.s32.totalorder %s16, 0
    %p133 = por %p131, %p132
    %p134 = scmp.ne.s32.totalorder %s122, %s123
    %p135 = scmp.eq.s32.totalorder %s17, 3
    %p136 = por %p134, %p135
    %p138 = scmp.ne.s32.totalorder %s123, %s137
    %p139 = scmp.eq.s32.totalorder %s17, 0
    %p140 = por %p138, %p139
    %s141 = ssub.s32 %s18, %s30
    %s142 = ssub.s32 %s19, %s26
    %s143 = sor.u32 %s141, %s142
    %p144 = scmp.eq.s32.totalorder %s143, 0
    %s146 = sadd.s32 %s145, 1
    %s147 = scalar_select %p144, %s145, %s146
    %p150 = pneg %p144
    %p151 = scmp.eq.s32.totalorder %s11, 3
    %p152 = por %p150, %p151
    %p153 = scmp.ne.s32.totalorder %s145, %s148
    %p154 = scmp.eq.s32.totalorder %s11, 0
    %p155 = por %p153, %p154
    %p156 = scmp.ne.s32.totalorder %s145, %s148
    %p157 = scmp.eq.s32.totalorder %s16, 3
    %p158 = por %p156, %p157
    %p159 = scmp.ne.s32.totalorder %s148, %s149
    %p160 = scmp.eq.s32.totalorder %s16, 0
    %p161 = por %p159, %p160
    %p162 = scmp.ne.s32.totalorder %s148, %s149
    %p163 = scmp.eq.s32.totalorder %s17, 3
    %p164 = por %p162, %p163
    %p166 = scmp.ne.s32.totalorder %s149, %s165
    %p167 = scmp.eq.s32.totalorder %s17, 0
    %p168 = por %p166, %p167
    %p169 = scmp.le.s32.totalorder 1, %s11
    %p170 = scmp.lt.s32.totalorder %s11, 5
    %p171 = pnand %p169, %p170
    %p172 = pneg %p171
    // Predicated region
    $region9: #{tpu_custom_call.1} parent=5 // pred_check
      _
    $region10: #{tpu_custom_call.1} parent=5 // pred_check_branch
      %174 = sbr.rel (%p171) target = $region12
    $region11: #{tpu_custom_call.1} parent=5 // pred_region
      %s175 = ssub.s32 %s11, 1
      // Predicated region
      $region13: #{tpu_custom_call.1} parent=11 // pred_check
        %p176 = pneg %p70
      $region14: #{tpu_custom_call.1} parent=11 // pred_check_branch
        %178 = sbr.rel (%p176) target = $region16
      $region15: #{tpu_custom_call.1} parent=11 // pred_region
        _
      $region16: #{tpu_custom_call.1} parent=11 // pred_fallthru
        _
      // Predicated region
      $region17: #{tpu_custom_call.1} parent=11 // pred_check
        %p179 = pneg %p91
      $region18: #{tpu_custom_call.1} parent=11 // pred_check_branch
        %181 = sbr.rel (%p179) target = $region20
      $region19: #{tpu_custom_call.1} parent=11 // pred_region
        _
      $region20: #{tpu_custom_call.1} parent=11 // pred_fallthru
        _
      // Predicated region
      $region21: #{tpu_custom_call.1} parent=11 // pred_check
        %p182 = pneg %p112
      $region22: #{tpu_custom_call.1} parent=11 // pred_check_branch
        %184 = sbr.rel (%p182) target = $region24
      $region23: #{tpu_custom_call.1} parent=11 // pred_region
        _
      $region24: #{tpu_custom_call.1} parent=11 // pred_fallthru
        _
      // Predicated region
      $region25: #{tpu_custom_call.1} parent=11 // pred_check
        %p185 = pneg %p133
      $region26: #{tpu_custom_call.1} parent=11 // pred_check_branch
        %187 = sbr.rel (%p185) target = $region28
      $region27: #{tpu_custom_call.1} parent=11 // pred_region
        _
      $region28: #{tpu_custom_call.1} parent=11 // pred_fallthru
        _
    $region12: #{tpu_custom_call.1} parent=5 // pred_fallthru
      _
    %p188 = scmp.lt.s32.totalorder %s11, 4
    // Predicated region
    $region29: #{tpu_custom_call.1} parent=5 // pred_check
      %p189 = pneg %p188
    $region30: #{tpu_custom_call.1} parent=5 // pred_check_branch
      %191 = sbr.rel (%p189) target = $region32
    $region31: #{tpu_custom_call.1} parent=5 // pred_region
      // Predicated region
      $region33: #{tpu_custom_call.1} parent=31 // pred_check
        %p192 = pneg %p43
      $region34: #{tpu_custom_call.1} parent=31 // pred_check_branch
        %194 = sbr.rel (%p192) target = $region36
      $region35: #{tpu_custom_call.1} parent=31 // pred_region
        %p195 = scmp.lt.s32.totalorder %s18, 1
        %s196 = scalar_select %p195, %s18, 1
        %s197 = smul.addr %s196, 60
        %s198 = smul.addr %s197, 4
        %s199 = scalar_lea.vmem %s0, %s198
      $region36: #{tpu_custom_call.1} parent=31 // pred_fallthru
        _
    $region32: #{tpu_custom_call.1} parent=5 // pred_fallthru
      _
    %p200 = scmp.le.s32.totalorder 1, %s11
    %p201 = scmp.lt.s32.totalorder %s11, 5
    %p202 = pnand %p200, %p201
    %p203 = pneg %p202
    // Predicated region
    $region37: #{tpu_custom_call.1} parent=5 // pred_check
      _
    $region38: #{tpu_custom_call.1} parent=5 // pred_check_branch
      %205 = sbr.rel (%p202) target = $region40
    $region39: #{tpu_custom_call.1} parent=5 // pred_region
      %s206 = ssub.s32 %s11, 1
      %p207 = scmp.lt.s32.totalorder %s20, 1
      %s208 = scalar_select %p207, %s20, 1
      %s209 = smul.addr %s208, 60
      %s210 = smul.addr %s209, 4
      %s211 = scalar_lea.vmem %s0, %s210
      %p212 = pneg %p49
      %p213 = pneg %p46
      %p214 = pneg %p70
      %p215 = pneg %p67
      %p216 = pneg %p91
      %p217 = pneg %p88
      %p218 = pneg %p112
      %p219 = pneg %p109
      %p220 = pneg %p133
      %p221 = pneg %p130
      %p222 = pneg %p161
      %p223 = pneg %p158
      %s224 = smul.u32 8, %s21
      %p225 = scmp.lt.s32.totalorder %s20, 1
      %s226 = scalar_select %p225, %s20, 1
      %p227 = scmp.lt.s32.totalorder %s224, 15
      %s228 = scalar_select %p227, %s224, 15
      %s229 = smul.addr %s228, 2
      %s230 = smul.addr %s226, 32
      %s231 = sadd.s32 %s229, %s230
      %s232 = smul.addr %s231, 8
      %s233 = scalar_lea.vmem %s5, %s232
      %p234 = scmp.lt.s32.totalorder %s20, 1
      %s235 = scalar_select %p234, %s20, 1
      %s236 = smul.addr %s235, 60
      %s237 = smul.addr %s236, 4
      %s238 = scalar_lea.vmem %s0, %s237
      %s239 = smul.u32 8, %s21
      %p240 = scmp.lt.s32.totalorder %s20, 1
      %s241 = scalar_select %p240, %s20, 1
      %p242 = scmp.lt.s32.totalorder %s239, 15
      %s243 = scalar_select %p242, %s239, 15
      %s244 = smul.addr %s243, 2
      %s245 = smul.addr %s241, 32
      %s246 = sadd.s32 %s244, %s245
      %s247 = smul.addr %s246, 8
      %s248 = scalar_lea.vmem %s5, %s247
      %s249 = smul.u32 8, %s21
      %s251 = smul.u32 %s21, 8
      %s252 = smul.u32 %s251, 3
      %s253 = smul.addr %s252, 4
      %s254 = scalar_lea.vmem %s238, %s253
      %v255 = vld [vmem:[%s254] sm:$0xf]
      %v256 = vld [vmem:[%s254 + $0x4] sm:$0xf]
      %v257 = vld [vmem:[%s254 + $0x8] sm:$0x1]
      %v258 = vld [vmem:[%s254 + $0xc] sm:$0xf]
      %v259 = vld [vmem:[%s254 + $0x10] sm:$0xf]
      %v260 = vld [vmem:[%s254 + $0x14] sm:$0x1]
      %v261 = vld [vmem:[%s254 + $0x18] sm:$0xf]
      %v262 = vld [vmem:[%s254 + $0x1c] sm:$0xf]
      %v263 = vld [vmem:[%s254 + $0x20] sm:$0x1]
      %v264 = vld [vmem:[%s254 + $0x24] sm:$0xf]
      %v265 = vld [vmem:[%s254 + $0x28] sm:$0xf]
      %v266 = vld [vmem:[%s254 + $0x2c] sm:$0x1]
      %v267 = vld [vmem:[%s254 + $0x30] sm:$0xf]
      %v268 = vld [vmem:[%s254 + $0x34] sm:$0xf]
      %v269 = vld [vmem:[%s254 + $0x38] sm:$0x1]
      %v270 = vld [vmem:[%s254 + $0x3c] sm:$0xf]
      %v271 = vld [vmem:[%s254 + $0x40] sm:$0xf]
      %v272 = vld [vmem:[%s254 + $0x44] sm:$0x1]
      %v273 = vld [vmem:[%s254 + $0x48] sm:$0xf]
      %v274 = vld [vmem:[%s254 + $0x4c] sm:$0xf]
      %v275 = vld [vmem:[%s254 + $0x50] sm:$0x1]
      %v276 = vld [vmem:[%s254 + $0x54] sm:$0xf]
      %v277 = vld [vmem:[%s254 + $0x58] sm:$0xf]
      %v278 = vld [vmem:[%s254 + $0x5c] sm:$0x1]
      %v279 = vld [vmem:[%s254 + $0x60] sm:$0xf]
      %v280 = vld [vmem:[%s254 + $0x64] sm:$0xf]
      %v281 = vld [vmem:[%s254 + $0x68] sm:$0x1]
      %v282 = vld [vmem:[%s254 + $0x6c] sm:$0xf]
      %v283 = vld [vmem:[%s254 + $0x70] sm:$0xf]
      %v284 = vld [vmem:[%s254 + $0x74] sm:$0x1]
      %vm285 = vcmask 27648
      %286 = vst.msk [vmem:[#allocation2] sm:$0xf] %vm285, %v255
      %287 = vst.msk [vmem:[#allocation2 + $0x4] sm:$0xf] %vm285, %v256
      %288 = vst.msk [vmem:[#allocation2 + $0x8] sm:$0xf] %vm285, %v258
      %289 = vst.msk [vmem:[#allocation2 + $0xc] sm:$0xf] %vm285, %v259
      %290 = vst.msk [vmem:[#allocation2 + $0x10] sm:$0xf] %vm285, %v261
      %291 = vst.msk [vmem:[#allocation2 + $0x14] sm:$0xf] %vm285, %v262
      %292 = vst.msk [vmem:[#allocation2 + $0x18] sm:$0xf] %vm285, %v264
      %293 = vst.msk [vmem:[#allocation2 + $0x1c] sm:$0xf] %vm285, %v265
      %294 = vst.msk [vmem:[#allocation2 + $0x20] sm:$0xf] %vm285, %v267
      %295 = vst.msk [vmem:[#allocation2 + $0x24] sm:$0xf] %vm285, %v268
      %296 = vst.msk [vmem:[#allocation2 + $0x28] sm:$0xf] %vm285, %v270
      %297 = vst.msk [vmem:[#allocation2 + $0x2c] sm:$0xf] %vm285, %v271
      %298 = vst.msk [vmem:[#allocation2 + $0x30] sm:$0xf] %vm285, %v273
      %299 = vst.msk [vmem:[#allocation2 + $0x34] sm:$0xf] %vm285, %v274
      %300 = vst.msk [vmem:[#allocation2 + $0x38] sm:$0xf] %vm285, %v276
      %301 = vst.msk [vmem:[#allocation2 + $0x3c] sm:$0xf] %vm285, %v277
      %302 = vst.msk [vmem:[#allocation2 + $0x40] sm:$0xf] %vm285, %v279
      %303 = vst.msk [vmem:[#allocation2 + $0x44] sm:$0xf] %vm285, %v280
      %304 = vst.msk [vmem:[#allocation2 + $0x48] sm:$0xf] %vm285, %v282
      %305 = vst.msk [vmem:[#allocation2 + $0x4c] sm:$0xf] %vm285, %v283
      %vm306 = vsmask.f32 3328
      %vm307 = vsmask.f32 7440
      %vm308 = vmor %vm306, %vm307
      %v310 = vshrl.u32 %v255, 16
      %v312 = vrot.slane %v310, 4
      %v313 = vshll.u32 %v255, 16
      %v315 = vrot.slane %v313, 5
      %v316 = vor.u32 %v312, %v315
      %v317 = vrot.slane %v316, 4
      %v319 = vshll.u32 %v256, 16
      %v321 = vrot.slane %v319, 5
      %v322 = vsel %vm308, %v317, %v321
      %v323 = vshrl.u32 %v256, 16
      %v325 = vrot.slane %v323, 4
      %v326 = vor.u32 %v325, %v321
      %v327 = vrot.slane %v326, 4
      %v329 = vshll.u32 %v257, 16
      %v331 = vrot.slane %v329, 5
      %v332 = vsel %vm308, %v327, %v331
      %v334 = vshrl.u32 %v258, 16
      %v336 = vrot.slane %v334, 4
      %v337 = vshll.u32 %v258, 16
      %v339 = vrot.slane %v337, 5
      %v340 = vor.u32 %v336, %v339
      %v341 = vrot.slane %v340, 4
      %v343 = vshll.u32 %v259, 16
      %v345 = vrot.slane %v343, 5
      %v346 = vsel %vm308, %v341, %v345
      %v347 = vshrl.u32 %v259, 16
      %v349 = vrot.slane %v347, 4
      %v350 = vor.u32 %v349, %v345
      %v351 = vrot.slane %v350, 4
      %v353 = vshll.u32 %v260, 16
      %v355 = vrot.slane %v353, 5
      %v356 = vsel %vm308, %v351, %v355
      %v358 = vshrl.u32 %v261, 16
      %v360 = vrot.slane %v358, 4
      %v361 = vshll.u32 %v261, 16
      %v363 = vrot.slane %v361, 5
      %v364 = vor.u32 %v360, %v363
      %v365 = vrot.slane %v364, 4
      %v367 = vshll.u32 %v262, 16
      %v369 = vrot.slane %v367, 5
      %v370 = vsel %vm308, %v365, %v369
      %v371 = vshrl.u32 %v262, 16
      %v373 = vrot.slane %v371, 4
      %v374 = vor.u32 %v373, %v369
      %v375 = vrot.slane %v374, 4
      %v377 = vshll.u32 %v263, 16
      %v379 = vrot.slane %v377, 5
      %v380 = vsel %vm308, %v375, %v379
      %v382 = vshrl.u32 %v264, 16
      %v384 = vrot.slane %v382, 4
      %v385 = vshll.u32 %v264, 16
      %v387 = vrot.slane %v385, 5
      %v388 = vor.u32 %v384, %v387
      %v389 = vrot.slane %v388, 4
      %v391 = vshll.u32 %v265, 16
      %v393 = vrot.slane %v391, 5
      %v394 = vsel %vm308, %v389, %v393
      %v395 = vshrl.u32 %v265, 16
      %v397 = vrot.slane %v395, 4
      %v398 = vor.u32 %v397, %v393
      %v399 = vrot.slane %v398, 4
      %v401 = vshll.u32 %v266, 16
      %v403 = vrot.slane %v401, 5
      %v404 = vsel %vm308, %v399, %v403
      %v406 = vshrl.u32 %v267, 16
      %v408 = vrot.slane %v406, 4
      %v409 = vshll.u32 %v267, 16
      %v411 = vrot.slane %v409, 5
      %v412 = vor.u32 %v408, %v411
      %v413 = vrot.slane %v412, 4
      %v415 = vshll.u32 %v268, 16
      %v417 = vrot.slane %v415, 5
      %v418 = vsel %vm308, %v413, %v417
      %v419 = vshrl.u32 %v268, 16
      %v421 = vrot.slane %v419, 4
      %v422 = vor.u32 %v421, %v417
      %v423 = vrot.slane %v422, 4
      %v425 = vshll.u32 %v269, 16
      %v427 = vrot.slane %v425, 5
      %v428 = vsel %vm308, %v423, %v427
      %v430 = vshrl.u32 %v270, 16
      %v432 = vrot.slane %v430, 4
      %v433 = vshll.u32 %v270, 16
      %v435 = vrot.slane %v433, 5
      %v436 = vor.u32 %v432, %v435
      %v437 = vrot.slane %v436, 4
      %v439 = vshll.u32 %v271, 16
      %v441 = vrot.slane %v439, 5
      %v442 = vsel %vm308, %v437, %v441
      %v443 = vshrl.u32 %v271, 16
      %v445 = vrot.slane %v443, 4
      %v446 = vor.u32 %v445, %v441
      %v447 = vrot.slane %v446, 4
      %v449 = vshll.u32 %v272, 16
      %v451 = vrot.slane %v449, 5
      %v452 = vsel %vm308, %v447, %v451
      %v454 = vshrl.u32 %v273, 16
      %v456 = vrot.slane %v454, 4
      %v457 = vshll.u32 %v273, 16
      %v459 = vrot.slane %v457, 5
      %v460 = vor.u32 %v456, %v459
      %v461 = vrot.slane %v460, 4
      %v463 = vshll.u32 %v274, 16
      %v465 = vrot.slane %v463, 5
      %v466 = vsel %vm308, %v461, %v465
      %v467 = vshrl.u32 %v274, 16
      %v469 = vrot.slane %v467, 4
      %v470 = vor.u32 %v469, %v465
      %v471 = vrot.slane %v470, 4
      %v473 = vshll.u32 %v275, 16
      %v475 = vrot.slane %v473, 5
      %v476 = vsel %vm308, %v471, %v475
      %v478 = vshrl.u32 %v276, 16
      %v480 = vrot.slane %v478, 4
      %v481 = vshll.u32 %v276, 16
      %v483 = vrot.slane %v481, 5
      %v484 = vor.u32 %v480, %v483
      %v485 = vrot.slane %v484, 4
      %v487 = vshll.u32 %v277, 16
      %v489 = vrot.slane %v487, 5
      %v490 = vsel %vm308, %v485, %v489
      %v491 = vshrl.u32 %v277, 16
      %v493 = vrot.slane %v491, 4
      %v494 = vor.u32 %v493, %v489
      %v495 = vrot.slane %v494, 4
      %v497 = vshll.u32 %v278, 16
      %v499 = vrot.slane %v497, 5
      %v500 = vsel %vm308, %v495, %v499
      %v502 = vshrl.u32 %v279, 16
      %v504 = vrot.slane %v502, 4
      %v505 = vshll.u32 %v279, 16
      %v507 = vrot.slane %v505, 5
      %v508 = vor.u32 %v504, %v507
      %v509 = vrot.slane %v508, 4
      %v511 = vshll.u32 %v280, 16
      %v513 = vrot.slane %v511, 5
      %v514 = vsel %vm308, %v509, %v513
      %v515 = vshrl.u32 %v280, 16
      %v517 = vrot.slane %v515, 4
      %v518 = vor.u32 %v517, %v513
      %v519 = vrot.slane %v518, 4
      %v521 = vshll.u32 %v281, 16
      %v523 = vrot.slane %v521, 5
      %v524 = vsel %vm308, %v519, %v523
      %v526 = vshrl.u32 %v282, 16
      %v528 = vrot.slane %v526, 4
      %v529 = vshll.u32 %v282, 16
      %v531 = vrot.slane %v529, 5
      %v532 = vor.u32 %v528, %v531
      %v533 = vrot.slane %v532, 4
      %v535 = vshll.u32 %v283, 16
      %v537 = vrot.slane %v535, 5
      %v538 = vsel %vm308, %v533, %v537
      %v539 = vshrl.u32 %v283, 16
      %v541 = vrot.slane %v539, 4
      %v542 = vor.u32 %v541, %v537
      %v543 = vrot.slane %v542, 4
      %v545 = vshll.u32 %v284, 16
      %v547 = vrot.slane %v545, 5
      %v548 = vsel %vm308, %v543, %v547
      %549 = vrot.lane.b32.xlu0 %v322, 4
      %v550 = vpop.permute.xlu0 %549
      %551 = vrot.lane.b32.xlu0 %v332, 4
      %v552 = vpop.permute.xlu0 %551
      %553 = vrot.lane.b32.xlu0 %v346, 4
      %v554 = vpop.permute.xlu0 %553
      %555 = vrot.lane.b32.xlu0 %v356, 4
      %v556 = vpop.permute.xlu0 %555
      %557 = vrot.lane.b32.xlu0 %v370, 4
      %v558 = vpop.permute.xlu0 %557
      %559 = vrot.lane.b32.xlu0 %v380, 4
      %v560 = vpop.permute.xlu0 %559
      %561 = vrot.lane.b32.xlu0 %v394, 4
      %v562 = vpop.permute.xlu0 %561
      %563 = vrot.lane.b32.xlu0 %v404, 4
      %v564 = vpop.permute.xlu0 %563
      %565 = vrot.lane.b32.xlu0 %v418, 4
      %v566 = vpop.permute.xlu0 %565
      %567 = vrot.lane.b32.xlu0 %v428, 4
      %v568 = vpop.permute.xlu0 %567
      %569 = vrot.lane.b32.xlu0 %v442, 4
      %v570 = vpop.permute.xlu0 %569
      %571 = vrot.lane.b32.xlu0 %v452, 4
      %v572 = vpop.permute.xlu0 %571
      %573 = vrot.lane.b32.xlu0 %v466, 4
      %v574 = vpop.permute.xlu0 %573
      %575 = vrot.lane.b32.xlu0 %v476, 4
      %v576 = vpop.permute.xlu0 %575
      %577 = vrot.lane.b32.xlu0 %v490, 4
      %v578 = vpop.permute.xlu0 %577
      %579 = vrot.lane.b32.xlu0 %v500, 4
      %v580 = vpop.permute.xlu0 %579
      %581 = vrot.lane.b32.xlu0 %v514, 4
      %v582 = vpop.permute.xlu0 %581
      %583 = vrot.lane.b32.xlu0 %v524, 4
      %v584 = vpop.permute.xlu0 %583
      %585 = vrot.lane.b32.xlu0 %v538, 4
      %v586 = vpop.permute.xlu0 %585
      %587 = vrot.lane.b32.xlu0 %v548, 4
      %v588 = vpop.permute.xlu0 %587
      %vm609 = vcmask 60448
      %610 = vst.msk [vmem:[#allocation2] sm:$0xf] %vm609, %v550
      %611 = vst.msk [vmem:[#allocation2 + $0x4] sm:$0xf] %vm609, %v552
      %612 = vst.msk [vmem:[#allocation2 + $0x8] sm:$0xf] %vm609, %v554
      %613 = vst.msk [vmem:[#allocation2 + $0xc] sm:$0xf] %vm609, %v556
      %614 = vst.msk [vmem:[#allocation2 + $0x10] sm:$0xf] %vm609, %v558
      %615 = vst.msk [vmem:[#allocation2 + $0x14] sm:$0xf] %vm609, %v560
      %616 = vst.msk [vmem:[#allocation2 + $0x18] sm:$0xf] %vm609, %v562
      %617 = vst.msk [vmem:[#allocation2 + $0x1c] sm:$0xf] %vm609, %v564
      %618 = vst.msk [vmem:[#allocation2 + $0x20] sm:$0xf] %vm609, %v566
      %619 = vst.msk [vmem:[#allocation2 + $0x24] sm:$0xf] %vm609, %v568
      %620 = vst.msk [vmem:[#allocation2 + $0x28] sm:$0xf] %vm609, %v570
      %621 = vst.msk [vmem:[#allocation2 + $0x2c] sm:$0xf] %vm609, %v572
      %622 = vst.msk [vmem:[#allocation2 + $0x30] sm:$0xf] %vm609, %v574
      %623 = vst.msk [vmem:[#allocation2 + $0x34] sm:$0xf] %vm609, %v576
      %624 = vst.msk [vmem:[#allocation2 + $0x38] sm:$0xf] %vm609, %v578
      %625 = vst.msk [vmem:[#allocation2 + $0x3c] sm:$0xf] %vm609, %v580
      %626 = vst.msk [vmem:[#allocation2 + $0x40] sm:$0xf] %vm609, %v582
      %627 = vst.msk [vmem:[#allocation2 + $0x44] sm:$0xf] %vm609, %v584
      %628 = vst.msk [vmem:[#allocation2 + $0x48] sm:$0xf] %vm609, %v586
      %629 = vst.msk [vmem:[#allocation2 + $0x4c] sm:$0xf] %vm609, %v588
      %vm660 = vcmask 1042432
      %vm661 = vcmask 1046532
      %vm662 = vmor %vm660, %vm661
      %v663 = vrot.slane %v255, 5
      %v664 = vrot.slane %v663, 4
      %v665 = vrot.slane %v256, 5
      %v666 = vsel %vm662, %v664, %v665
      %v667 = vrot.slane %v665, 4
      %v668 = vrot.slane %v257, 5
      %v669 = vsel %vm662, %v667, %v668
      %v670 = vrot.slane %v258, 5
      %v671 = vrot.slane %v670, 4
      %v672 = vrot.slane %v259, 5
      %v673 = vsel %vm662, %v671, %v672
      %v674 = vrot.slane %v672, 4
      %v675 = vrot.slane %v260, 5
      %v676 = vsel %vm662, %v674, %v675
      %v677 = vrot.slane %v261, 5
      %v678 = vrot.slane %v677, 4
      %v679 = vrot.slane %v262, 5
      %v680 = vsel %vm662, %v678, %v679
      %v681 = vrot.slane %v679, 4
      %v682 = vrot.slane %v263, 5
      %v683 = vsel %vm662, %v681, %v682
      %v684 = vrot.slane %v264, 5
      %v685 = vrot.slane %v684, 4
      %v686 = vrot.slane %v265, 5
      %v687 = vsel %vm662, %v685, %v686
      %v688 = vrot.slane %v686, 4
      %v689 = vrot.slane %v266, 5
      %v690 = vsel %vm662, %v688, %v689
      %v691 = vrot.slane %v267, 5
      %v692 = vrot.slane %v691, 4
      %v693 = vrot.slane %v268, 5
      %v694 = vsel %vm662, %v692, %v693
      %v695 = vrot.slane %v693, 4
      %v696 = vrot.slane %v269, 5
      %v697 = vsel %vm662, %v695, %v696
      %v698 = vrot.slane %v270, 5
      %v699 = vrot.slane %v698, 4
      %v700 = vrot.slane %v271, 5
      %v701 = vsel %vm662, %v699, %v700
      %v702 = vrot.slane %v700, 4
      %v703 = vrot.slane %v272, 5
      %v704 = vsel %vm662, %v702, %v703
      %v705 = vrot.slane %v273, 5
      %v706 = vrot.slane %v705, 4
      %v707 = vrot.slane %v274, 5
      %v708 = vsel %vm662, %v706, %v707
      %v709 = vrot.slane %v707, 4
      %v710 = vrot.slane %v275, 5
      %v711 = vsel %vm662, %v709, %v710
      %v712 = vrot.slane %v276, 5
      %v713 = vrot.slane %v712, 4
      %v714 = vrot.slane %v277, 5
      %v715 = vsel %vm662, %v713, %v714
      %v716 = vrot.slane %v714, 4
      %v717 = vrot.slane %v278, 5
      %v718 = vsel %vm662, %v716, %v717
      %v719 = vrot.slane %v279, 5
      %v720 = vrot.slane %v719, 4
      %v721 = vrot.slane %v280, 5
      %v722 = vsel %vm662, %v720, %v721
      %v723 = vrot.slane %v721, 4
      %v724 = vrot.slane %v281, 5
      %v725 = vsel %vm662, %v723, %v724
      %v726 = vrot.slane %v282, 5
      %v727 = vrot.slane %v726, 4
      %v728 = vrot.slane %v283, 5
      %v729 = vsel %vm662, %v727, %v728
      %v730 = vrot.slane %v728, 4
      %v731 = vrot.slane %v284, 5
      %v732 = vsel %vm662, %v730, %v731
      %733 = vrot.lane.b32.xlu0 %v666, 8
      %v734 = vpop.permute.xlu0 %733
      %735 = vrot.lane.b32.xlu0 %v669, 8
      %v736 = vpop.permute.xlu0 %735
      %737 = vrot.lane.b32.xlu0 %v673, 8
      %v738 = vpop.permute.xlu0 %737
      %739 = vrot.lane.b32.xlu0 %v676, 8
      %v740 = vpop.permute.xlu0 %739
      %741 = vrot.lane.b32.xlu0 %v680, 8
      %v742 = vpop.permute.xlu0 %741
      %743 = vrot.lane.b32.xlu0 %v683, 8
      %v744 = vpop.permute.xlu0 %743
      %745 = vrot.lane.b32.xlu0 %v687, 8
      %v746 = vpop.permute.xlu0 %745
      %747 = vrot.lane.b32.xlu0 %v690, 8
      %v748 = vpop.permute.xlu0 %747
      %749 = vrot.lane.b32.xlu0 %v694, 8
      %v750 = vpop.permute.xlu0 %749
      %751 = vrot.lane.b32.xlu0 %v697, 8
      %v752 = vpop.permute.xlu0 %751
      %753 = vrot.lane.b32.xlu0 %v701, 8
      %v754 = vpop.permute.xlu0 %753
      %755 = vrot.lane.b32.xlu0 %v704, 8
      %v756 = vpop.permute.xlu0 %755
      %757 = vrot.lane.b32.xlu0 %v708, 8
      %v758 = vpop.permute.xlu0 %757
      %759 = vrot.lane.b32.xlu0 %v711, 8
      %v760 = vpop.permute.xlu0 %759
      %761 = vrot.lane.b32.xlu0 %v715, 8
      %v762 = vpop.permute.xlu0 %761
      %763 = vrot.lane.b32.xlu0 %v718, 8
      %v764 = vpop.permute.xlu0 %763
      %765 = vrot.lane.b32.xlu0 %v722, 8
      %v766 = vpop.permute.xlu0 %765
      %767 = vrot.lane.b32.xlu0 %v725, 8
      %v768 = vpop.permute.xlu0 %767
      %769 = vrot.lane.b32.xlu0 %v729, 8
      %v770 = vpop.permute.xlu0 %769
      %771 = vrot.lane.b32.xlu0 %v732, 8
      %v772 = vpop.permute.xlu0 %771
      %vm793 = vcmask 93248
      %794 = vst.msk [vmem:[#allocation2] sm:$0xf] %vm793, %v734
      %795 = vst.msk [vmem:[#allocation2 + $0x4] sm:$0xf] %vm793, %v736
      %796 = vst.msk [vmem:[#allocation2 + $0x8] sm:$0xf] %vm793, %v738
      %797 = vst.msk [vmem:[#allocation2 + $0xc] sm:$0xf] %vm793, %v740
      %798 = vst.msk [vmem:[#allocation2 + $0x10] sm:$0xf] %vm793, %v742
      %799 = vst.msk [vmem:[#allocation2 + $0x14] sm:$0xf] %vm793, %v744
      %800 = vst.msk [vmem:[#allocation2 + $0x18] sm:$0xf] %vm793, %v746
      %801 = vst.msk [vmem:[#allocation2 + $0x1c] sm:$0xf] %vm793, %v748
      %802 = vst.msk [vmem:[#allocation2 + $0x20] sm:$0xf] %vm793, %v750
      %803 = vst.msk [vmem:[#allocation2 + $0x24] sm:$0xf] %vm793, %v752
      %804 = vst.msk [vmem:[#allocation2 + $0x28] sm:$0xf] %vm793, %v754
      %805 = vst.msk [vmem:[#allocation2 + $0x2c] sm:$0xf] %vm793, %v756
      %806 = vst.msk [vmem:[#allocation2 + $0x30] sm:$0xf] %vm793, %v758
      %807 = vst.msk [vmem:[#allocation2 + $0x34] sm:$0xf] %vm793, %v760
      %808 = vst.msk [vmem:[#allocation2 + $0x38] sm:$0xf] %vm793, %v762
      %809 = vst.msk [vmem:[#allocation2 + $0x3c] sm:$0xf] %vm793, %v764
      %810 = vst.msk [vmem:[#allocation2 + $0x40] sm:$0xf] %vm793, %v766
      %811 = vst.msk [vmem:[#allocation2 + $0x44] sm:$0xf] %vm793, %v768
      %812 = vst.msk [vmem:[#allocation2 + $0x48] sm:$0xf] %vm793, %v770
      %813 = vst.msk [vmem:[#allocation2 + $0x4c] sm:$0xf] %vm793, %v772
      %s814 = sadd.s32 %s251, 1
      %s815 = smul.u32 %s814, 3
      %s816 = smul.addr %s815, 4
      %s817 = scalar_lea.vmem %s238, %s816
      %v818 = vld [vmem:[%s817] sm:$0xf]
      %v819 = vld [vmem:[%s817 + $0x4] sm:$0xf]
      %v820 = vld [vmem:[%s817 + $0x8] sm:$0x1]
      %v821 = vld [vmem:[%s817 + $0xc] sm:$0xf]
      %v822 = vld [vmem:[%s817 + $0x10] sm:$0xf]
      %v823 = vld [vmem:[%s817 + $0x14] sm:$0x1]
      %v824 = vld [vmem:[%s817 + $0x18] sm:$0xf]
      %v825 = vld [vmem:[%s817 + $0x1c] sm:$0xf]
      %v826 = vld [vmem:[%s817 + $0x20] sm:$0x1]
      %v827 = vld [vmem:[%s817 + $0x24] sm:$0xf]
      %v828 = vld [vmem:[%s817 + $0x28] sm:$0xf]
      %v829 = vld [vmem:[%s817 + $0x2c] sm:$0x1]
      %v830 = vld [vmem:[%s817 + $0x30] sm:$0xf]
      %v831 = vld [vmem:[%s817 + $0x34] sm:$0xf]
      %v832 = vld [vmem:[%s817 + $0x38] sm:$0x1]
      %v833 = vld [vmem:[%s817 + $0x3c] sm:$0xf]
      %v834 = vld [vmem:[%s817 + $0x40] sm:$0xf]
      %v835 = vld [vmem:[%s817 + $0x44] sm:$0x1]
      %v836 = vld [vmem:[%s817 + $0x48] sm:$0xf]
      %v837 = vld [vmem:[%s817 + $0x4c] sm:$0xf]
      %v838 = vld [vmem:[%s817 + $0x50] sm:$0x1]
      %v839 = vld [vmem:[%s817 + $0x54] sm:$0xf]
      %v840 = vld [vmem:[%s817 + $0x58] sm:$0xf]
      %v841 = vld [vmem:[%s817 + $0x5c] sm:$0x1]
      %v842 = vld [vmem:[%s817 + $0x60] sm:$0xf]
      %v843 = vld [vmem:[%s817 + $0x64] sm:$0xf]
      %v844 = vld [vmem:[%s817 + $0x68] sm:$0x1]
      %v845 = vld [vmem:[%s817 + $0x6c] sm:$0xf]
      %v846 = vld [vmem:[%s817 + $0x70] sm:$0xf]
      %v847 = vld [vmem:[%s817 + $0x74] sm:$0x1]
      %868 = vrot.lane.b32.xlu0 %v818, 12
      %v869 = vpop.permute.xlu0 %868
      %870 = vrot.lane.b32.xlu0 %v819, 12
      %v871 = vpop.permute.xlu0 %870
      %872 = vrot.lane.b32.xlu0 %v821, 12
      %v873 = vpop.permute.xlu0 %872
      %874 = vrot.lane.b32.xlu0 %v822, 12
      %v875 = vpop.permute.xlu0 %874
      %876 = vrot.lane.b32.xlu0 %v824, 12
      %v877 = vpop.permute.xlu0 %876
      %878 = vrot.lane.b32.xlu0 %v825, 12
      %v879 = vpop.permute.xlu0 %878
      %880 = vrot.lane.b32.xlu0 %v827, 12
      %v881 = vpop.permute.xlu0 %880
      %882 = vrot.lane.b32.xlu0 %v828, 12
      %v883 = vpop.permute.xlu0 %882
      %884 = vrot.lane.b32.xlu0 %v830, 12
      %v885 = vpop.permute.xlu0 %884
      %886 = vrot.lane.b32.xlu0 %v831, 12
      %v887 = vpop.permute.xlu0 %886
      %888 = vrot.lane.b32.xlu0 %v833, 12
      %v889 = vpop.permute.xlu0 %888
      %890 = vrot.lane.b32.xlu0 %v834, 12
      %v891 = vpop.permute.xlu0 %890
      %892 = vrot.lane.b32.xlu0 %v836, 12
      %v893 = vpop.permute.xlu0 %892
      %894 = vrot.lane.b32.xlu0 %v837, 12
      %v895 = vpop.permute.xlu0 %894
      %896 = vrot.lane.b32.xlu0 %v839, 12
      %v897 = vpop.permute.xlu0 %896
      %898 = vrot.lane.b32.xlu0 %v840, 12
      %v899 = vpop.permute.xlu0 %898
      %900 = vrot.lane.b32.xlu0 %v842, 12
      %v901 = vpop.permute.xlu0 %900
      %902 = vrot.lane.b32.xlu0 %v843, 12
      %v903 = vpop.permute.xlu0 %902
      %904 = vrot.lane.b32.xlu0 %v845, 12
      %v905 = vpop.permute.xlu0 %904
      %906 = vrot.lane.b32.xlu0 %v846, 12
      %v907 = vpop.permute.xlu0 %906
      %vm928 = vcmask 126048
      %929 = vst.msk [vmem:[#allocation2] sm:$0xf] %vm928, %v869
      %930 = vst.msk [vmem:[#allocation2 + $0x4] sm:$0xf] %vm928, %v871
      %931 = vst.msk [vmem:[#allocation2 + $0x8] sm:$0xf] %vm928, %v873
      %932 = vst.msk [vmem:[#allocation2 + $0xc] sm:$0xf] %vm928, %v875
      %933 = vst.msk [vmem:[#allocation2 + $0x10] sm:$0xf] %vm928, %v877
      %934 = vst.msk [vmem:[#allocation2 + $0x14] sm:$0xf] %vm928, %v879
      %935 = vst.msk [vmem:[#allocation2 + $0x18] sm:$0xf] %vm928, %v881
      %936 = vst.msk [vmem:[#allocation2 + $0x1c] sm:$0xf] %vm928, %v883
      %937 = vst.msk [vmem:[#allocation2 + $0x20] sm:$0xf] %vm928, %v885
      %938 = vst.msk [vmem:[#allocation2 + $0x24] sm:$0xf] %vm928, %v887
      %939 = vst.msk [vmem:[#allocation2 + $0x28] sm:$0xf] %vm928, %v889
      %940 = vst.msk [vmem:[#allocation2 + $0x2c] sm:$0xf] %vm928, %v891
      %941 = vst.msk [vmem:[#allocation2 + $0x30] sm:$0xf] %vm928, %v893
      %942 = vst.msk [vmem:[#allocation2 + $0x34] sm:$0xf] %vm928, %v895
      %943 = vst.msk [vmem:[#allocation2 + $0x38] sm:$0xf] %vm928, %v897
      %944 = vst.msk [vmem:[#allocation2 + $0x3c] sm:$0xf] %vm928, %v899
      %945 = vst.msk [vmem:[#allocation2 + $0x40] sm:$0xf] %vm928, %v901
      %946 = vst.msk [vmem:[#allocation2 + $0x44] sm:$0xf] %vm928, %v903
      %947 = vst.msk [vmem:[#allocation2 + $0x48] sm:$0xf] %vm928, %v905
      %948 = vst.msk [vmem:[#allocation2 + $0x4c] sm:$0xf] %vm928, %v907
      %v950 = vshrl.u32 %v818, 16
      %v952 = vrot.slane %v950, 4
      %v953 = vshll.u32 %v818, 16
      %v955 = vrot.slane %v953, 5
      %v956 = vor.u32 %v952, %v955
      %v957 = vrot.slane %v956, 4
      %v959 = vshll.u32 %v819, 16
      %v961 = vrot.slane %v959, 5
      %v962 = vsel %vm308, %v957, %v961
      %v963 = vshrl.u32 %v819, 16
      %v965 = vrot.slane %v963, 4
      %v966 = vor.u32 %v965, %v961
      %v967 = vrot.slane %v966, 4
      %v969 = vshll.u32 %v820, 16
      %v971 = vrot.slane %v969, 5
      %v972 = vsel %vm308, %v967, %v971
      %v974 = vshrl.u32 %v821, 16
      %v976 = vrot.slane %v974, 4
      %v977 = vshll.u32 %v821, 16
      %v979 = vrot.slane %v977, 5
      %v980 = vor.u32 %v976, %v979
      %v981 = vrot.slane %v980, 4
      %v983 = vshll.u32 %v822, 16
      %v985 = vrot.slane %v983, 5
      %v986 = vsel %vm308, %v981, %v985
      %v987 = vshrl.u32 %v822, 16
      %v989 = vrot.slane %v987, 4
      %v990 = vor.u32 %v989, %v985
      %v991 = vrot.slane %v990, 4
      %v993 = vshll.u32 %v823, 16
      %v995 = vrot.slane %v993, 5
      %v996 = vsel %vm308, %v991, %v995
      %v998 = vshrl.u32 %v824, 16
      %v1000 = vrot.slane %v998, 4
      %v1001 = vshll.u32 %v824, 16
      %v1003 = vrot.slane %v1001, 5
      %v1004 = vor.u32 %v1000, %v1003
      %v1005 = vrot.slane %v1004, 4
      %v1007 = vshll.u32 %v825, 16
      %v1009 = vrot.slane %v1007, 5
      %v1010 = vsel %vm308, %v1005, %v1009
      %v1011 = vshrl.u32 %v825, 16
      %v1013 = vrot.slane %v1011, 4
      %v1014 = vor.u32 %v1013, %v1009
      %v1015 = vrot.slane %v1014, 4
      %v1017 = vshll.u32 %v826, 16
      %v1019 = vrot.slane %v1017, 5
      %v1020 = vsel %vm308, %v1015, %v1019
      %v1022 = vshrl.u32 %v827, 16
      %v1024 = vrot.slane %v1022, 4
      %v1025 = vshll.u32 %v827, 16
      %v1027 = vrot.slane %v1025, 5
      %v1028 = vor.u32 %v1024, %v1027
      %v1029 = vrot.slane %v1028, 4
      %v1031 = vshll.u32 %v828, 16
      %v1033 = vrot.slane %v1031, 5
      %v1034 = vsel %vm308, %v1029, %v1033
      %v1035 = vshrl.u32 %v828, 16
      %v1037 = vrot.slane %v1035, 4
      %v1038 = vor.u32 %v1037, %v1033
      %v1039 = vrot.slane %v1038, 4
      %v1041 = vshll.u32 %v829, 16
      %v1043 = vrot.slane %v1041, 5
      %v1044 = vsel %vm308, %v1039, %v1043
      %v1046 = vshrl.u32 %v830, 16
      %v1048 = vrot.slane %v1046, 4
      %v1049 = vshll.u32 %v830, 16
      %v1051 = vrot.slane %v1049, 5
      %v1052 = vor.u32 %v1048, %v1051
      %v1053 = vrot.slane %v1052, 4
      %v1055 = vshll.u32 %v831, 16
      %v1057 = vrot.slane %v1055, 5
      %v1058 = vsel %vm308, %v1053, %v1057
      %v1059 = vshrl.u32 %v831, 16
      %v1061 = vrot.slane %v1059, 4
      %v1062 = vor.u32 %v1061, %v1057
      %v1063 = vrot.slane %v1062, 4
      %v1065 = vshll.u32 %v832, 16
      %v1067 = vrot.slane %v1065, 5
      %v1068 = vsel %vm308, %v1063, %v1067
      %v1070 = vshrl.u32 %v833, 16
      %v1072 = vrot.slane %v1070, 4
      %v1073 = vshll.u32 %v833, 16
      %v1075 = vrot.slane %v1073, 5
      %v1076 = vor.u32 %v1072, %v1075
      %v1077 = vrot.slane %v1076, 4
      %v1079 = vshll.u32 %v834, 16
      %v1081 = vrot.slane %v1079, 5
      %v1082 = vsel %vm308, %v1077, %v1081
      %v1083 = vshrl.u32 %v834, 16
      %v1085 = vrot.slane %v1083, 4
      %v1086 = vor.u32 %v1085, %v1081
      %v1087 = vrot.slane %v1086, 4
      %v1089 = vshll.u32 %v835, 16
      %v1091 = vrot.slane %v1089, 5
      %v1092 = vsel %vm308, %v1087, %v1091
      %v1094 = vshrl.u32 %v836, 16
      %v1096 = vrot.slane %v1094, 4
      %v1097 = vshll.u32 %v836, 16
      %v1099 = vrot.slane %v1097, 5
      %v1100 = vor.u32 %v1096, %v1099
      %v1101 = vrot.slane %v1100, 4
      %v1103 = vshll.u32 %v837, 16
      %v1105 = vrot.slane %v1103, 5
      %v1106 = vsel %vm308, %v1101, %v1105
      %v1107 = vshrl.u32 %v837, 16
      %v1109 = vrot.slane %v1107, 4
      %v1110 = vor.u32 %v1109, %v1105
      %v1111 = vrot.slane %v1110, 4
      %v1113 = vshll.u32 %v838, 16
      %v1115 = vrot.slane %v1113, 5
      %v1116 = vsel %vm308, %v1111, %v1115
      %v1118 = vshrl.u32 %v839, 16
      %v1120 = vrot.slane %v1118, 4
      %v1121 = vshll.u32 %v839, 16
      %v1123 = vrot.slane %v1121, 5
      %v1124 = vor.u32 %v1120, %v1123
      %v1125 = vrot.slane %v1124, 4
      %v1127 = vshll.u32 %v840, 16
      %v1129 = vrot.slane %v1127, 5
      %v1130 = vsel %vm308, %v1125, %v1129
      %v1131 = vshrl.u32 %v840, 16
      %v1133 = vrot.slane %v1131, 4
      %v1134 = vor.u32 %v1133, %v1129
      %v1135 = vrot.slane %v1134, 4
      %v1137 = vshll.u32 %v841, 16
      %v1139 = vrot.slane %v1137, 5
      %v1140 = vsel %vm308, %v1135, %v1139
      %v1142 = vshrl.u32 %v842, 16
      %v1144 = vrot.slane %v1142, 4
      %v1145 = vshll.u32 %v842, 16
      %v1147 = vrot.slane %v1145, 5
      %v1148 = vor.u32 %v1144, %v1147
      %v1149 = vrot.slane %v1148, 4
      %v1151 = vshll.u32 %v843, 16
      %v1153 = vrot.slane %v1151, 5
      %v1154 = vsel %vm308, %v1149, %v1153
      %v1155 = vshrl.u32 %v843, 16
      %v1157 = vrot.slane %v1155, 4
      %v1158 = vor.u32 %v1157, %v1153
      %v1159 = vrot.slane %v1158, 4
      %v1161 = vshll.u32 %v844, 16
      %v1163 = vrot.slane %v1161, 5
      %v1164 = vsel %vm308, %v1159, %v1163
      %v1166 = vshrl.u32 %v845, 16
      %v1168 = vrot.slane %v1166, 4
      %v1169 = vshll.u32 %v845, 16
      %v1171 = vrot.slane %v1169, 5
      %v1172 = vor.u32 %v1168, %v1171
      %v1173 = vrot.slane %v1172, 4
      %v1175 = vshll.u32 %v846, 16
      %v1177 = vrot.slane %v1175, 5
      %v1178 = vsel %vm308, %v1173, %v1177
      %v1179 = vshrl.u32 %v846, 16
      %v1181 = vrot.slane %v1179, 4
      %v1182 = vor.u32 %v1181, %v1177
      %v1183 = vrot.slane %v1182, 4
      %v1185 = vshll.u32 %v847, 16
      %v1187 = vrot.slane %v1185, 5
      %v1188 = vsel %vm308, %v1183, %v1187
      %1189 = vrot.lane.b32.xlu0 %v962, 16
      %v1190 = vpop.permute.xlu0 %1189
      %1191 = vrot.lane.b32.xlu0 %v972, 16
      %v1192 = vpop.permute.xlu0 %1191
      %1193 = vrot.lane.b32.xlu0 %v986, 16
      %v1194 = vpop.permute.xlu0 %1193
      %1195 = vrot.lane.b32.xlu0 %v996, 16
      %v1196 = vpop.permute.xlu0 %1195
      %1197 = vrot.lane.b32.xlu0 %v1010, 16
      %v1198 = vpop.permute.xlu0 %1197
      %1199 = vrot.lane.b32.xlu0 %v1020, 16
      %v1200 = vpop.permute.xlu0 %1199
      %1201 = vrot.lane.b32.xlu0 %v1034, 16
      %v1202 = vpop.permute.xlu0 %1201
      %1203 = vrot.lane.b32.xlu0 %v1044, 16
      %v1204 = vpop.permute.xlu0 %1203
      %1205 = vrot.lane.b32.xlu0 %v1058, 16
      %v1206 = vpop.permute.xlu0 %1205
      %1207 = vrot.lane.b32.xlu0 %v1068, 16
      %v1208 = vpop.permute.xlu0 %1207
      %1209 = vrot.lane.b32.xlu0 %v1082, 16
      %v1210 = vpop.permute.xlu0 %1209
      %1211 = vrot.lane.b32.xlu0 %v1092, 16
      %v1212 = vpop.permute.xlu0 %1211
      %1213 = vrot.lane.b32.xlu0 %v1106, 16
      %v1214 = vpop.permute.xlu0 %1213
      %1215 = vrot.lane.b32.xlu0 %v1116, 16
      %v1216 = vpop.permute.xlu0 %1215
      %1217 = vrot.lane.b32.xlu0 %v1130, 16
      %v1218 = vpop.permute.xlu0 %1217
      %1219 = vrot.lane.b32.xlu0 %v1140, 16
      %v1220 = vpop.permute.xlu0 %1219
      %1221 = vrot.lane.b32.xlu0 %v1154, 16
      %v1222 = vpop.permute.xlu0 %1221
      %1223 = vrot.lane.b32.xlu0 %v1164, 16
      %v1224 = vpop.permute.xlu0 %1223
      %1225 = vrot.lane.b32.xlu0 %v1178, 16
      %v1226 = vpop.permute.xlu0 %1225
      %1227 = vrot.lane.b32.xlu0 %v1188, 16
      %v1228 = vpop.permute.xlu0 %1227
      %vm1249 = vcmask 158848
      %1250 = vst.msk [vmem:[#allocation2] sm:$0xf] %vm1249, %v1190
      %1251 = vst.msk [vmem:[#allocation2 + $0x4] sm:$0xf] %vm1249, %v1192
      %1252 = vst.msk [vmem:[#allocation2 + $0x8] sm:$0xf] %vm1249, %v1194
      %1253 = vst.msk [vmem:[#allocation2 + $0xc] sm:$0xf] %vm1249, %v1196
      %1254 = vst.msk [vmem:[#allocation2 + $0x10] sm:$0xf] %vm1249, %v1198
      %1255 = vst.msk [vmem:[#allocation2 + $0x14] sm:$0xf] %vm1249, %v1200
      %1256 = vst.msk [vmem:[#allocation2 + $0x18] sm:$0xf] %vm1249, %v1202
      %1257 = vst.msk [vmem:[#allocation2 + $0x1c] sm:$0xf] %vm1249, %v1204
      %1258 = vst.msk [vmem:[#allocation2 + $0x20] sm:$0xf] %vm1249, %v1206
      %1259 = vst.msk [vmem:[#allocation2 + $0x24] sm:$0xf] %vm1249, %v1208
      %1260 = vst.msk [vmem:[#allocation2 + $0x28] sm:$0xf] %vm1249, %v1210
      %1261 = vst.msk [vmem:[#allocation2 + $0x2c] sm:$0xf] %vm1249, %v1212
      %1262 = vst.msk [vmem:[#allocation2 + $0x30] sm:$0xf] %vm1249, %v1214
      %1263 = vst.msk [vmem:[#allocation2 + $0x34] sm:$0xf] %vm1249, %v1216
      %1264 = vst.msk [vmem:[#allocation2 + $0x38] sm:$0xf] %vm1249, %v1218
      %1265 = vst.msk [vmem:[#allocation2 + $0x3c] sm:$0xf] %vm1249, %v1220
      %1266 = vst.msk [vmem:[#allocation2 + $0x40] sm:$0xf] %vm1249, %v1222
      %1267 = vst.msk [vmem:[#allocation2 + $0x44] sm:$0xf] %vm1249, %v1224
      %1268 = vst.msk [vmem:[#allocation2 + $0x48] sm:$0xf] %vm1249, %v1226
      %1269 = vst.msk [vmem:[#allocation2 + $0x4c] sm:$0xf] %vm1249, %v1228
      %v1280 = vrot.slane %v818, 5
      %v1281 = vrot.slane %v1280, 4
      %v1282 = vrot.slane %v819, 5
      %v1283 = vsel %vm662, %v1281, %v1282
      %v1284 = vrot.slane %v1282, 4
      %v1285 = vrot.slane %v820, 5
      %v1286 = vsel %vm662, %v1284, %v1285
      %v1287 = vrot.slane %v821, 5
      %v1288 = vrot.slane %v1287, 4
      %v1289 = vrot.slane %v822, 5
      %v1290 = vsel %vm662, %v1288, %v1289
      %v1291 = vrot.slane %v1289, 4
      %v1292 = vrot.slane %v823, 5
      %v1293 = vsel %vm662, %v1291, %v1292
      %v1294 = vrot.slane %v824, 5
      %v1295 = vrot.slane %v1294, 4
      %v1296 = vrot.slane %v825, 5
      %v1297 = vsel %vm662, %v1295, %v1296
      %v1298 = vrot.slane %v1296, 4
      %v1299 = vrot.slane %v826, 5
      %v1300 = vsel %vm662, %v1298, %v1299
      %v1301 = vrot.slane %v827, 5
      %v1302 = vrot.slane %v1301, 4
      %v1303 = vrot.slane %v828, 5
      %v1304 = vsel %vm662, %v1302, %v1303
      %v1305 = vrot.slane %v1303, 4
      %v1306 = vrot.slane %v829, 5
      %v1307 = vsel %vm662, %v1305, %v1306
      %v1308 = vrot.slane %v830, 5
      %v1309 = vrot.slane %v1308, 4
      %v1310 = vrot.slane %v831, 5
      %v1311 = vsel %vm662, %v1309, %v1310
      %v1312 = vrot.slane %v1310, 4
      %v1313 = vrot.slane %v832, 5
      %v1314 = vsel %vm662, %v1312, %v1313
      %v1315 = vrot.slane %v833, 5
      %v1316 = vrot.slane %v1315, 4
      %v1317 = vrot.slane %v834, 5
      %v1318 = vsel %vm662, %v1316, %v1317
      %v1319 = vrot.slane %v1317, 4
      %v1320 = vrot.slane %v835, 5
      %v1321 = vsel %vm662, %v1319, %v1320
      %v1322 = vrot.slane %v836, 5
      %v1323 = vrot.slane %v1322, 4
      %v1324 = vrot.slane %v837, 5
      %v1325 = vsel %vm662, %v1323, %v1324
      %v1326 = vrot.slane %v1324, 4
      %v1327 = vrot.slane %v838, 5
      %v1328 = vsel %vm662, %v1326, %v1327
      %v1329 = vrot.slane %v839, 5
      %v1330 = vrot.slane %v1329, 4
      %v1331 = vrot.slane %v840, 5
      %v1332 = vsel %vm662, %v1330, %v1331
      %v1333 = vrot.slane %v1331, 4
      %v1334 = vrot.slane %v841, 5
      %v1335 = vsel %vm662, %v1333, %v1334
      %v1336 = vrot.slane %v842, 5
      %v1337 = vrot.slane %v1336, 4
      %v1338 = vrot.slane %v843, 5
      %v1339 = vsel %vm662, %v1337, %v1338
      %v1340 = vrot.slane %v1338, 4
      %v1341 = vrot.slane %v844, 5
      %v1342 = vsel %vm662, %v1340, %v1341
      %v1343 = vrot.slane %v845, 5
      %v1344 = vrot.slane %v1343, 4
      %v1345 = vrot.slane %v846, 5
      %v1346 = vsel %vm662, %v1344, %v1345
      %v1347 = vrot.slane %v1345, 4
      %v1348 = vrot.slane %v847, 5
      %v1349 = vsel %vm662, %v1347, %v1348
      %1350 = vrot.lane.b32.xlu0 %v1283, 20
      %v1351 = vpop.permute.xlu0 %1350
      %1352 = vrot.lane.b32.xlu0 %v1286, 20
      %v1353 = vpop.permute.xlu0 %1352
      %1354 = vrot.lane.b32.xlu0 %v1290, 20
      %v1355 = vpop.permute.xlu0 %1354
      %1356 = vrot.lane.b32.xlu0 %v1293, 20
      %v1357 = vpop.permute.xlu0 %1356
      %1358 = vrot.lane.b32.xlu0 %v1297, 20
      %v1359 = vpop.permute.xlu0 %1358
      %1360 = vrot.lane.b32.xlu0 %v1300, 20
      %v1361 = vpop.permute.xlu0 %1360
      %1362 = vrot.lane.b32.xlu0 %v1304, 20
      %v1363 = vpop.permute.xlu0 %1362
      %1364 = vrot.lane.b32.xlu0 %v1307, 20
      %v1365 = vpop.permute.xlu0 %1364
      %1366 = vrot.lane.b32.xlu0 %v1311, 20
      %v1367 = vpop.permute.xlu0 %1366
      %1368 = vrot.lane.b32.xlu0 %v1314, 20
      %v1369 = vpop.permute.xlu0 %1368
      %1370 = vrot.lane.b32.xlu0 %v1318, 20
      %v1371 = vpop.permute.xlu0 %1370
      %1372 = vrot.lane.b32.xlu0 %v1321, 20
      %v1373 = vpop.permute.xlu0 %1372
      %1374 = vrot.lane.b32.xlu0 %v1325, 20
      %v1375 = vpop.permute.xlu0 %1374
      %1376 = vrot.lane.b32.xlu0 %v1328, 20
      %v1377 = vpop.permute.xlu0 %1376
      %1378 = vrot.lane.b32.xlu0 %v1332, 20
      %v1379 = vpop.permute.xlu0 %1378
      %1380 = vrot.lane.b32.xlu0 %v1335, 20
      %v1381 = vpop.permute.xlu0 %1380
      %1382 = vrot.lane.b32.xlu0 %v1339, 20
      %v1383 = vpop.permute.xlu0 %1382
      %1384 = vrot.lane.b32.xlu0 %v1342, 20
      %v1385 = vpop.permute.xlu0 %1384
      %1386 = vrot.lane.b32.xlu0 %v1346, 20
      %v1387 = vpop.permute.xlu0 %1386
      %1388 = vrot.lane.b32.xlu0 %v1349, 20
      %v1389 = vpop.permute.xlu0 %1388
      %vm1410 = vcmask 191648
      %1411 = vst.msk [vmem:[#allocation2] sm:$0xf] %vm1410, %v1351
      %1412 = vst.msk [vmem:[#allocation2 + $0x4] sm:$0xf] %vm1410, %v1353
      %1413 = vst.msk [vmem:[#allocation2 + $0x8] sm:$0xf] %vm1410, %v1355
      %1414 = vst.msk [vmem:[#allocation2 + $0xc] sm:$0xf] %vm1410, %v1357
      %1415 = vst.msk [vmem:[#allocation2 + $0x10] sm:$0xf] %vm1410, %v1359
      %1416 = vst.msk [vmem:[#allocation2 + $0x14] sm:$0xf] %vm1410, %v1361
      %1417 = vst.msk [vmem:[#allocation2 + $0x18] sm:$0xf] %vm1410, %v1363
      %1418 = vst.msk [vmem:[#allocation2 + $0x1c] sm:$0xf] %vm1410, %v1365
      %1419 = vst.msk [vmem:[#allocation2 + $0x20] sm:$0xf] %vm1410, %v1367
      %1420 = vst.msk [vmem:[#allocation2 + $0x24] sm:$0xf] %vm1410, %v1369
      %1421 = vst.msk [vmem:[#allocation2 + $0x28] sm:$0xf] %vm1410, %v1371
      %1422 = vst.msk [vmem:[#allocation2 + $0x2c] sm:$0xf] %vm1410, %v1373
      %1423 = vst.msk [vmem:[#allocation2 + $0x30] sm:$0xf] %vm1410, %v1375
      %1424 = vst.msk [vmem:[#allocation2 + $0x34] sm:$0xf] %vm1410, %v1377
      %1425 = vst.msk [vmem:[#allocation2 + $0x38] sm:$0xf] %vm1410, %v1379
      %1426 = vst.msk [vmem:[#allocation2 + $0x3c] sm:$0xf] %vm1410, %v1381
      %1427 = vst.msk [vmem:[#allocation2 + $0x40] sm:$0xf] %vm1410, %v1383
      %1428 = vst.msk [vmem:[#allocation2 + $0x44] sm:$0xf] %vm1410, %v1385
      %1429 = vst.msk [vmem:[#allocation2 + $0x48] sm:$0xf] %vm1410, %v1387
      %1430 = vst.msk [vmem:[#allocation2 + $0x4c] sm:$0xf] %vm1410, %v1389
      %s1431 = sadd.s32 %s251, 2
      %s1432 = smul.u32 %s1431, 3
      %s1433 = smul.addr %s1432, 4
      %s1434 = scalar_lea.vmem %s238, %s1433
      %v1435 = vld [vmem:[%s1434] sm:$0xf]
      %v1436 = vld [vmem:[%s1434 + $0x4] sm:$0xf]
      %v1437 = vld [vmem:[%s1434 + $0x8] sm:$0x1]
      %v1438 = vld [vmem:[%s1434 + $0xc] sm:$0xf]
      %v1439 = vld [vmem:[%s1434 + $0x10] sm:$0xf]
      %v1440 = vld [vmem:[%s1434 + $0x14] sm:$0x1]
      %v1441 = vld [vmem:[%s1434 + $0x18] sm:$0xf]
      %v1442 = vld [vmem:[%s1434 + $0x1c] sm:$0xf]
      %v1443 = vld [vmem:[%s1434 + $0x20] sm:$0x1]
      %v1444 = vld [vmem:[%s1434 + $0x24] sm:$0xf]
      %v1445 = vld [vmem:[%s1434 + $0x28] sm:$0xf]
      %v1446 = vld [vmem:[%s1434 + $0x2c] sm:$0x1]
      %v1447 = vld [vmem:[%s1434 + $0x30] sm:$0xf]
      %v1448 = vld [vmem:[%s1434 + $0x34] sm:$0xf]
      %v1449 = vld [vmem:[%s1434 + $0x38] sm:$0x1]
      %v1450 = vld [vmem:[%s1434 + $0x3c] sm:$0xf]
      %v1451 = vld [vmem:[%s1434 + $0x40] sm:$0xf]
      %v1452 = vld [vmem:[%s1434 + $0x44] sm:$0x1]
      %v1453 = vld [vmem:[%s1434 + $0x48] sm:$0xf]
      %v1454 = vld [vmem:[%s1434 + $0x4c] sm:$0xf]
      %v1455 = vld [vmem:[%s1434 + $0x50] sm:$0x1]
      %v1456 = vld [vmem:[%s1434 + $0x54] sm:$0xf]
      %v1457 = vld [vmem:[%s1434 + $0x58] sm:$0xf]
      %v1458 = vld [vmem:[%s1434 + $0x5c] sm:$0x1]
      %v1459 = vld [vmem:[%s1434 + $0x60] sm:$0xf]
      %v1460 = vld [vmem:[%s1434 + $0x64] sm:$0xf]
      %v1461 = vld [vmem:[%s1434 + $0x68] sm:$0x1]
      %v1462 = vld [vmem:[%s1434 + $0x6c] sm:$0xf]
      %v1463 = vld [vmem:[%s1434 + $0x70] sm:$0xf]
      %v1464 = vld [vmem:[%s1434 + $0x74] sm:$0x1]
      %1485 = vrot.lane.b32.xlu0 %v1435, 24
      %v1486 = vpop.permute.xlu0 %1485
      %1487 = vrot.lane.b32.xlu0 %v1436, 24
      %v1488 = vpop.permute.xlu0 %1487
      %1489 = vrot.lane.b32.xlu0 %v1438, 24
      %v1490 = vpop.permute.xlu0 %1489
      %1491 = vrot.lane.b32.xlu0 %v1439, 24
      %v1492 = vpop.permute.xlu0 %1491
      %1493 = vrot.lane.b32.xlu0 %v1441, 24
      %v1494 = vpop.permute.xlu0 %1493
      %1495 = vrot.lane.b32.xlu0 %v1442, 24
      %v1496 = vpop.permute.xlu0 %1495
      %1497 = vrot.lane.b32.xlu0 %v1444, 24
      %v1498 = vpop.permute.xlu0 %1497
      %1499 = vrot.lane.b32.xlu0 %v1445, 24
      %v1500 = vpop.permute.xlu0 %1499
      %1501 = vrot.lane.b32.xlu0 %v1447, 24
      %v1502 = vpop.permute.xlu0 %1501
      %1503 = vrot.lane.b32.xlu0 %v1448, 24
      %v1504 = vpop.permute.xlu0 %1503
      %1505 = vrot.lane.b32.xlu0 %v1450, 24
      %v1506 = vpop.permute.xlu0 %1505
      %1507 = vrot.lane.b32.xlu0 %v1451, 24
      %v1508 = vpop.permute.xlu0 %1507
      %1509 = vrot.lane.b32.xlu0 %v1453, 24
      %v1510 = vpop.permute.xlu0 %1509
      %1511 = vrot.lane.b32.xlu0 %v1454, 24
      %v1512 = vpop.permute.xlu0 %1511
      %1513 = vrot.lane.b32.xlu0 %v1456, 24
      %v1514 = vpop.permute.xlu0 %1513
      %1515 = vrot.lane.b32.xlu0 %v1457, 24
      %v1516 = vpop.permute.xlu0 %1515
      %1517 = vrot.lane.b32.xlu0 %v1459, 24
      %v1518 = vpop.permute.xlu0 %1517
      %1519 = vrot.lane.b32.xlu0 %v1460, 24
      %v1520 = vpop.permute.xlu0 %1519
      %1521 = vrot.lane.b32.xlu0 %v1462, 24
      %v1522 = vpop.permute.xlu0 %1521
      %1523 = vrot.lane.b32.xlu0 %v1463, 24
      %v1524 = vpop.permute.xlu0 %1523
      %vm1545 = vcmask 224448
      %1546 = vst.msk [vmem:[#allocation2] sm:$0xf] %vm1545, %v1486
      %1547 = vst.msk [vmem:[#allocation2 + $0x4] sm:$0xf] %vm1545, %v1488
      %1548 = vst.msk [vmem:[#allocation2 + $0x8] sm:$0xf] %vm1545, %v1490
      %1549 = vst.msk [vmem:[#allocation2 + $0xc] sm:$0xf] %vm1545, %v1492
      %1550 = vst.msk [vmem:[#allocation2 + $0x10] sm:$0xf] %vm1545, %v1494
      %1551 = vst.msk [vmem:[#allocation2 + $0x14] sm:$0xf] %vm1545, %v1496
      %1552 = vst.msk [vmem:[#allocation2 + $0x18] sm:$0xf] %vm1545, %v1498
      %1553 = vst.msk [vmem:[#allocation2 + $0x1c] sm:$0xf] %vm1545, %v1500
      %1554 = vst.msk [vmem:[#allocation2 + $0x20] sm:$0xf] %vm1545, %v1502
      %1555 = vst.msk [vmem:[#allocation2 + $0x24] sm:$0xf] %vm1545, %v1504
      %1556 = vst.msk [vmem:[#allocation2 + $0x28] sm:$0xf] %vm1545, %v1506
      %1557 = vst.msk [vmem:[#allocation2 + $0x2c] sm:$0xf] %vm1545, %v1508
      %1558 = vst.msk [vmem:[#allocation2 + $0x30] sm:$0xf] %vm1545, %v1510
      %1559 = vst.msk [vmem:[#allocation2 + $0x34] sm:$0xf] %vm1545, %v1512
      %1560 = vst.msk [vmem:[#allocation2 + $0x38] sm:$0xf] %vm1545, %v1514
      %1561 = vst.msk [vmem:[#allocation2 + $0x3c] sm:$0xf] %vm1545, %v1516
      %1562 = vst.msk [vmem:[#allocation2 + $0x40] sm:$0xf] %vm1545, %v1518
      %1563 = vst.msk [vmem:[#allocation2 + $0x44] sm:$0xf] %vm1545, %v1520
      %1564 = vst.msk [vmem:[#allocation2 + $0x48] sm:$0xf] %vm1545, %v1522
      %1565 = vst.msk [vmem:[#allocation2 + $0x4c] sm:$0xf] %vm1545, %v1524
      %v1567 = vshrl.u32 %v1435, 16
      %v1569 = vrot.slane %v1567, 4
      %v1570 = vshll.u32 %v1435, 16
      %v1572 = vrot.slane %v1570, 5
      %v1573 = vor.u32 %v1569, %v1572
      %v1574 = vrot.slane %v1573, 4
      %v1576 = vshll.u32 %v1436, 16
      %v1578 = vrot.slane %v1576, 5
      %v1579 = vsel %vm308, %v1574, %v1578
      %v1580 = vshrl.u32 %v1436, 16
      %v1582 = vrot.slane %v1580, 4
      %v1583 = vor.u32 %v1582, %v1578
      %v1584 = vrot.slane %v1583, 4
      %v1586 = vshll.u32 %v1437, 16
      %v1588 = vrot.slane %v1586, 5
      %v1589 = vsel %vm308, %v1584, %v1588
      %v1591 = vshrl.u32 %v1438, 16
      %v1593 = vrot.slane %v1591, 4
      %v1594 = vshll.u32 %v1438, 16
      %v1596 = vrot.slane %v1594, 5
      %v1597 = vor.u32 %v1593, %v1596
      %v1598 = vrot.slane %v1597, 4
      %v1600 = vshll.u32 %v1439, 16
      %v1602 = vrot.slane %v1600, 5
      %v1603 = vsel %vm308, %v1598, %v1602
      %v1604 = vshrl.u32 %v1439, 16
      %v1606 = vrot.slane %v1604, 4
      %v1607 = vor.u32 %v1606, %v1602
      %v1608 = vrot.slane %v1607, 4
      %v1610 = vshll.u32 %v1440, 16
      %v1612 = vrot.slane %v1610, 5
      %v1613 = vsel %vm308, %v1608, %v1612
      %v1615 = vshrl.u32 %v1441, 16
      %v1617 = vrot.slane %v1615, 4
      %v1618 = vshll.u32 %v1441, 16
      %v1620 = vrot.slane %v1618, 5
      %v1621 = vor.u32 %v1617, %v1620
      %v1622 = vrot.slane %v1621, 4
      %v1624 = vshll.u32 %v1442, 16
      %v1626 = vrot.slane %v1624, 5
      %v1627 = vsel %vm308, %v1622, %v1626
      %v1628 = vshrl.u32 %v1442, 16
      %v1630 = vrot.slane %v1628, 4
      %v1631 = vor.u32 %v1630, %v1626
      %v1632 = vrot.slane %v1631, 4
      %v1634 = vshll.u32 %v1443, 16
      %v1636 = vrot.slane %v1634, 5
      %v1637 = vsel %vm308, %v1632, %v1636
      %v1639 = vshrl.u32 %v1444, 16
      %v1641 = vrot.slane %v1639, 4
      %v1642 = vshll.u32 %v1444, 16
      %v1644 = vrot.slane %v1642, 5
      %v1645 = vor.u32 %v1641, %v1644
      %v1646 = vrot.slane %v1645, 4
      %v1648 = vshll.u32 %v1445, 16
      %v1650 = vrot.slane %v1648, 5
      %v1651 = vsel %vm308, %v1646, %v1650
      %v1652 = vshrl.u32 %v1445, 16
      %v1654 = vrot.slane %v1652, 4
      %v1655 = vor.u32 %v1654, %v1650
      %v1656 = vrot.slane %v1655, 4
      %v1658 = vshll.u32 %v1446, 16
      %v1660 = vrot.slane %v1658, 5
      %v1661 = vsel %vm308, %v1656, %v1660
      %v1663 = vshrl.u32 %v1447, 16
      %v1665 = vrot.slane %v1663, 4
      %v1666 = vshll.u32 %v1447, 16
      %v1668 = vrot.slane %v1666, 5
      %v1669 = vor.u32 %v1665, %v1668
      %v1670 = vrot.slane %v1669, 4
      %v1672 = vshll.u32 %v1448, 16
      %v1674 = vrot.slane %v1672, 5
      %v1675 = vsel %vm308, %v1670, %v1674
      %v1676 = vshrl.u32 %v1448, 16
      %v1678 = vrot.slane %v1676, 4
      %v1679 = vor.u32 %v1678, %v1674
      %v1680 = vrot.slane %v1679, 4
      %v1682 = vshll.u32 %v1449, 16
      %v1684 = vrot.slane %v1682, 5
      %v1685 = vsel %vm308, %v1680, %v1684
      %v1687 = vshrl.u32 %v1450, 16
      %v1689 = vrot.slane %v1687, 4
      %v1690 = vshll.u32 %v1450, 16
      %v1692 = vrot.slane %v1690, 5
      %v1693 = vor.u32 %v1689, %v1692
      %v1694 = vrot.slane %v1693, 4
      %v1696 = vshll.u32 %v1451, 16
      %v1698 = vrot.slane %v1696, 5
      %v1699 = vsel %vm308, %v1694, %v1698
      %v1700 = vshrl.u32 %v1451, 16
      %v1702 = vrot.slane %v1700, 4
      %v1703 = vor.u32 %v1702, %v1698
      %v1704 = vrot.slane %v1703, 4
      %v1706 = vshll.u32 %v1452, 16
      %v1708 = vrot.slane %v1706, 5
      %v1709 = vsel %vm308, %v1704, %v1708
      %v1711 = vshrl.u32 %v1453, 16
      %v1713 = vrot.slane %v1711, 4
      %v1714 = vshll.u32 %v1453, 16
      %v1716 = vrot.slane %v1714, 5
      %v1717 = vor.u32 %v1713, %v1716
      %v1718 = vrot.slane %v1717, 4
      %v1720 = vshll.u32 %v1454, 16
      %v1722 = vrot.slane %v1720, 5
      %v1723 = vsel %vm308, %v1718, %v1722
      %v1724 = vshrl.u32 %v1454, 16
      %v1726 = vrot.slane %v1724, 4
      %v1727 = vor.u32 %v1726, %v1722
      %v1728 = vrot.slane %v1727, 4
      %v1730 = vshll.u32 %v1455, 16
      %v1732 = vrot.slane %v1730, 5
      %v1733 = vsel %vm308, %v1728, %v1732
      %v1735 = vshrl.u32 %v1456, 16
      %v1737 = vrot.slane %v1735, 4
      %v1738 = vshll.u32 %v1456, 16
      %v1740 = vrot.slane %v1738, 5
      %v1741 = vor.u32 %v1737, %v1740
      %v1742 = vrot.slane %v1741, 4
      %v1744 = vshll.u32 %v1457, 16
      %v1746 = vrot.slane %v1744, 5
      %v1747 = vsel %vm308, %v1742, %v1746
      %v1748 = vshrl.u32 %v1457, 16
      %v1750 = vrot.slane %v1748, 4
      %v1751 = vor.u32 %v1750, %v1746
      %v1752 = vrot.slane %v1751, 4
      %v1754 = vshll.u32 %v1458, 16
      %v1756 = vrot.slane %v1754, 5
      %v1757 = vsel %vm308, %v1752, %v1756
      %v1759 = vshrl.u32 %v1459, 16
      %v1761 = vrot.slane %v1759, 4
      %v1762 = vshll.u32 %v1459, 16
      %v1764 = vrot.slane %v1762, 5
      %v1765 = vor.u32 %v1761, %v1764
      %v1766 = vrot.slane %v1765, 4
      %v1768 = vshll.u32 %v1460, 16
      %v1770 = vrot.slane %v1768, 5
      %v1771 = vsel %vm308, %v1766, %v1770
      %v1772 = vshrl.u32 %v1460, 16
      %v1774 = vrot.slane %v1772, 4
      %v1775 = vor.u32 %v1774, %v1770
      %v1776 = vrot.slane %v1775, 4
      %v1778 = vshll.u32 %v1461, 16
      %v1780 = vrot.slane %v1778, 5
      %v1781 = vsel %vm308, %v1776, %v1780
      %v1783 = vshrl.u32 %v1462, 16
      %v1785 = vrot.slane %v1783, 4
      %v1786 = vshll.u32 %v1462, 16
      %v1788 = vrot.slane %v1786, 5
      %v1789 = vor.u32 %v1785, %v1788
      %v1790 = vrot.slane %v1789, 4
      %v1792 = vshll.u32 %v1463, 16
      %v1794 = vrot.slane %v1792, 5
      %v1795 = vsel %vm308, %v1790, %v1794
      %v1796 = vshrl.u32 %v1463, 16
      %v1798 = vrot.slane %v1796, 4
      %v1799 = vor.u32 %v1798, %v1794
      %v1800 = vrot.slane %v1799, 4
      %v1802 = vshll.u32 %v1464, 16
      %v1804 = vrot.slane %v1802, 5
      %v1805 = vsel %vm308, %v1800, %v1804
      %1806 = vrot.lane.b32.xlu0 %v1579, 28
      %v1807 = vpop.permute.xlu0 %1806
      %1808 = vrot.lane.b32.xlu0 %v1589, 28
      %v1809 = vpop.permute.xlu0 %1808
      %1810 = vrot.lane.b32.xlu0 %v1603, 28
      %v1811 = vpop.permute.xlu0 %1810
      %1812 = vrot.lane.b32.xlu0 %v1613, 28
      %v1813 = vpop.permute.xlu0 %1812
      %1814 = vrot.lane.b32.xlu0 %v1627, 28
      %v1815 = vpop.permute.xlu0 %1814
      %1816 = vrot.lane.b32.xlu0 %v1637, 28
      %v1817 = vpop.permute.xlu0 %1816
      %1818 = vrot.lane.b32.xlu0 %v1651, 28
      %v1819 = vpop.permute.xlu0 %1818
      %1820 = vrot.lane.b32.xlu0 %v1661, 28
      %v1821 = vpop.permute.xlu0 %1820
      %1822 = vrot.lane.b32.xlu0 %v1675, 28
      %v1823 = vpop.permute.xlu0 %1822
      %1824 = vrot.lane.b32.xlu0 %v1685, 28
      %v1825 = vpop.permute.xlu0 %1824
      %1826 = vrot.lane.b32.xlu0 %v1699, 28
      %v1827 = vpop.permute.xlu0 %1826
      %1828 = vrot.lane.b32.xlu0 %v1709, 28
      %v1829 = vpop.permute.xlu0 %1828
      %1830 = vrot.lane.b32.xlu0 %v1723, 28
      %v1831 = vpop.permute.xlu0 %1830
      %1832 = vrot.lane.b32.xlu0 %v1733, 28
      %v1833 = vpop.permute.xlu0 %1832
      %1834 = vrot.lane.b32.xlu0 %v1747, 28
      %v1835 = vpop.permute.xlu0 %1834
      %1836 = vrot.lane.b32.xlu0 %v1757, 28
      %v1837 = vpop.permute.xlu0 %1836
      %1838 = vrot.lane.b32.xlu0 %v1771, 28
      %v1839 = vpop.permute.xlu0 %1838
      %1840 = vrot.lane.b32.xlu0 %v1781, 28
      %v1841 = vpop.permute.xlu0 %1840
      %1842 = vrot.lane.b32.xlu0 %v1795, 28
      %v1843 = vpop.permute.xlu0 %1842
      %1844 = vrot.lane.b32.xlu0 %v1805, 28
      %v1845 = vpop.permute.xlu0 %1844
      %vm1866 = vcmask 257248
      %1867 = vst.msk [vmem:[#allocation2] sm:$0xf] %vm1866, %v1807
      %1868 = vst.msk [vmem:[#allocation2 + $0x4] sm:$0xf] %vm1866, %v1809
      %1869 = vst.msk [vmem:[#allocation2 + $0x8] sm:$0xf] %vm1866, %v1811
      %1870 = vst.msk [vmem:[#allocation2 + $0xc] sm:$0xf] %vm1866, %v1813
      %1871 = vst.msk [vmem:[#allocation2 + $0x10] sm:$0xf] %vm1866, %v1815
      %1872 = vst.msk [vmem:[#allocation2 + $0x14] sm:$0xf] %vm1866, %v1817
      %1873 = vst.msk [vmem:[#allocation2 + $0x18] sm:$0xf] %vm1866, %v1819
      %1874 = vst.msk [vmem:[#allocation2 + $0x1c] sm:$0xf] %vm1866, %v1821
      %1875 = vst.msk [vmem:[#allocation2 + $0x20] sm:$0xf] %vm1866, %v1823
      %1876 = vst.msk [vmem:[#allocation2 + $0x24] sm:$0xf] %vm1866, %v1825
      %1877 = vst.msk [vmem:[#allocation2 + $0x28] sm:$0xf] %vm1866, %v1827
      %1878 = vst.msk [vmem:[#allocation2 + $0x2c] sm:$0xf] %vm1866, %v1829
      %1879 = vst.msk [vmem:[#allocation2 + $0x30] sm:$0xf] %vm1866, %v1831
      %1880 = vst.msk [vmem:[#allocation2 + $0x34] sm:$0xf] %vm1866, %v1833
      %1881 = vst.msk [vmem:[#allocation2 + $0x38] sm:$0xf] %vm1866, %v1835
      %1882 = vst.msk [vmem:[#allocation2 + $0x3c] sm:$0xf] %vm1866, %v1837
      %1883 = vst.msk [vmem:[#allocation2 + $0x40] sm:$0xf] %vm1866, %v1839
      %1884 = vst.msk [vmem:[#allocation2 + $0x44] sm:$0xf] %vm1866, %v1841
      %1885 = vst.msk [vmem:[#allocation2 + $0x48] sm:$0xf] %vm1866, %v1843
      %1886 = vst.msk [vmem:[#allocation2 + $0x4c] sm:$0xf] %vm1866, %v1845
      %v1897 = vrot.slane %v1435, 5
      %v1898 = vrot.slane %v1897, 4
      %v1899 = vrot.slane %v1436, 5
      %v1900 = vsel %vm662, %v1898, %v1899
      %v1901 = vrot.slane %v1899, 4
      %v1902 = vrot.slane %v1437, 5
      %v1903 = vsel %vm662, %v1901, %v1902
      %v1904 = vrot.slane %v1438, 5
      %v1905 = vrot.slane %v1904, 4
      %v1906 = vrot.slane %v1439, 5
      %v1907 = vsel %vm662, %v1905, %v1906
      %v1908 = vrot.slane %v1906, 4
      %v1909 = vrot.slane %v1440, 5
      %v1910 = vsel %vm662, %v1908, %v1909
      %v1911 = vrot.slane %v1441, 5
      %v1912 = vrot.slane %v1911, 4
      %v1913 = vrot.slane %v1442, 5
      %v1914 = vsel %vm662, %v1912, %v1913
      %v1915 = vrot.slane %v1913, 4
      %v1916 = vrot.slane %v1443, 5
      %v1917 = vsel %vm662, %v1915, %v1916
      %v1918 = vrot.slane %v1444, 5
      %v1919 = vrot.slane %v1918, 4
      %v1920 = vrot.slane %v1445, 5
      %v1921 = vsel %vm662, %v1919, %v1920
      %v1922 = vrot.slane %v1920, 4
      %v1923 = vrot.slane %v1446, 5
      %v1924 = vsel %vm662, %v1922, %v1923
      %v1925 = vrot.slane %v1447, 5
      %v1926 = vrot.slane %v1925, 4
      %v1927 = vrot.slane %v1448, 5
      %v1928 = vsel %vm662, %v1926, %v1927
      %v1929 = vrot.slane %v1927, 4
      %v1930 = vrot.slane %v1449, 5
      %v1931 = vsel %vm662, %v1929, %v1930
      %v1932 = vrot.slane %v1450, 5
      %v1933 = vrot.slane %v1932, 4
      %v1934 = vrot.slane %v1451, 5
      %v1935 = vsel %vm662, %v1933, %v1934
      %v1936 = vrot.slane %v1934, 4
      %v1937 = vrot.slane %v1452, 5
      %v1938 = vsel %vm662, %v1936, %v1937
      %v1939 = vrot.slane %v1453, 5
      %v1940 = vrot.slane %v1939, 4
      %v1941 = vrot.slane %v1454, 5
      %v1942 = vsel %vm662, %v1940, %v1941
      %v1943 = vrot.slane %v1941, 4
      %v1944 = vrot.slane %v1455, 5
      %v1945 = vsel %vm662, %v1943, %v1944
      %v1946 = vrot.slane %v1456, 5
      %v1947 = vrot.slane %v1946, 4
      %v1948 = vrot.slane %v1457, 5
      %v1949 = vsel %vm662, %v1947, %v1948
      %v1950 = vrot.slane %v1948, 4
      %v1951 = vrot.slane %v1458, 5
      %v1952 = vsel %vm662, %v1950, %v1951
      %v1953 = vrot.slane %v1459, 5
      %v1954 = vrot.slane %v1953, 4
      %v1955 = vrot.slane %v1460, 5
      %v1956 = vsel %vm662, %v1954, %v1955
      %v1957 = vrot.slane %v1955, 4
      %v1958 = vrot.slane %v1461, 5
      %v1959 = vsel %vm662, %v1957, %v1958
      %v1960 = vrot.slane %v1462, 5
      %v1961 = vrot.slane %v1960, 4
      %v1962 = vrot.slane %v1463, 5
      %v1963 = vsel %vm662, %v1961, %v1962
      %v1964 = vrot.slane %v1962, 4
      %v1965 = vrot.slane %v1464, 5
      %v1966 = vsel %vm662, %v1964, %v1965
      %1967 = vrot.lane.b32.xlu0 %v1900, 32
      %v1968 = vpop.permute.xlu0 %1967
      %1969 = vrot.lane.b32.xlu0 %v1903, 32
      %v1970 = vpop.permute.xlu0 %1969
      %1971 = vrot.lane.b32.xlu0 %v1907, 32
      %v1972 = vpop.permute.xlu0 %1971
      %1973 = vrot.lane.b32.xlu0 %v1910, 32
      %v1974 = vpop.permute.xlu0 %1973
      %1975 = vrot.lane.b32.xlu0 %v1914, 32
      %v1976 = vpop.permute.xlu0 %1975
      %1977 = vrot.lane.b32.xlu0 %v1917, 32
      %v1978 = vpop.permute.xlu0 %1977
      %1979 = vrot.lane.b32.xlu0 %v1921, 32
      %v1980 = vpop.permute.xlu0 %1979
      %1981 = vrot.lane.b32.xlu0 %v1924, 32
      %v1982 = vpop.permute.xlu0 %1981
      %1983 = vrot.lane.b32.xlu0 %v1928, 32
      %v1984 = vpop.permute.xlu0 %1983
      %1985 = vrot.lane.b32.xlu0 %v1931, 32
      %v1986 = vpop.permute.xlu0 %1985
      %1987 = vrot.lane.b32.xlu0 %v1935, 32
      %v1988 = vpop.permute.xlu0 %1987
      %1989 = vrot.lane.b32.xlu0 %v1938, 32
      %v1990 = vpop.permute.xlu0 %1989
      %1991 = vrot.lane.b32.xlu0 %v1942, 32
      %v1992 = vpop.permute.xlu0 %1991
      %1993 = vrot.lane.b32.xlu0 %v1945, 32
      %v1994 = vpop.permute.xlu0 %1993
      %1995 = vrot.lane.b32.xlu0 %v1949, 32
      %v1996 = vpop.permute.xlu0 %1995
      %1997 = vrot.lane.b32.xlu0 %v1952, 32
      %v1998 = vpop.permute.xlu0 %1997
      %1999 = vrot.lane.b32.xlu0 %v1956, 32
      %v2000 = vpop.permute.xlu0 %1999
      %2001 = vrot.lane.b32.xlu0 %v1959, 32
      %v2002 = vpop.permute.xlu0 %2001
      %2003 = vrot.lane.b32.xlu0 %v1963, 32
      %v2004 = vpop.permute.xlu0 %2003
      %2005 = vrot.lane.b32.xlu0 %v1966, 32
      %v2006 = vpop.permute.xlu0 %2005
      %vm2027 = vcmask 290048
      %2028 = vst.msk [vmem:[#allocation2] sm:$0xf] %vm2027, %v1968
      %2029 = vst.msk [vmem:[#allocation2 + $0x4] sm:$0xf] %vm2027, %v1970
      %2030 = vst.msk [vmem:[#allocation2 + $0x8] sm:$0xf] %vm2027, %v1972
      %2031 = vst.msk [vmem:[#allocation2 + $0xc] sm:$0xf] %vm2027, %v1974
      %2032 = vst.msk [vmem:[#allocation2 + $0x10] sm:$0xf] %vm2027, %v1976
      %2033 = vst.msk [vmem:[#allocation2 + $0x14] sm:$0xf] %vm2027, %v1978
      %2034 = vst.msk [vmem:[#allocation2 + $0x18] sm:$0xf] %vm2027, %v1980
      %2035 = vst.msk [vmem:[#allocation2 + $0x1c] sm:$0xf] %vm2027, %v1982
      %2036 = vst.msk [vmem:[#allocation2 + $0x20] sm:$0xf] %vm2027, %v1984
      %2037 = vst.msk [vmem:[#allocation2 + $0x24] sm:$0xf] %vm2027, %v1986
      %2038 = vst.msk [vmem:[#allocation2 + $0x28] sm:$0xf] %vm2027, %v1988
      %2039 = vst.msk [vmem:[#allocation2 + $0x2c] sm:$0xf] %vm2027, %v1990
      %2040 = vst.msk [vmem:[#allocation2 + $0x30] sm:$0xf] %vm2027, %v1992
      %2041 = vst.msk [vmem:[#allocation2 + $0x34] sm:$0xf] %vm2027, %v1994
      %2042 = vst.msk [vmem:[#allocation2 + $0x38] sm:$0xf] %vm2027, %v1996
      %2043 = vst.msk [vmem:[#allocation2 + $0x3c] sm:$0xf] %vm2027, %v1998
      %2044 = vst.msk [vmem:[#allocation2 + $0x40] sm:$0xf] %vm2027, %v2000
      %2045 = vst.msk [vmem:[#allocation2 + $0x44] sm:$0xf] %vm2027, %v2002
      %2046 = vst.msk [vmem:[#allocation2 + $0x48] sm:$0xf] %vm2027, %v2004
      %2047 = vst.msk [vmem:[#allocation2 + $0x4c] sm:$0xf] %vm2027, %v2006
      %v2048 = vld [vmem:[#allocation2] sm:$0xf]
      %v2049 = vld [vmem:[#allocation2 + $0x4] sm:$0xf]
      %v2050 = vld [vmem:[#allocation2 + $0x8] sm:$0xf]
      %v2051 = vld [vmem:[#allocation2 + $0xc] sm:$0xf]
      %v2052 = vld [vmem:[#allocation2 + $0x10] sm:$0xf]
      %v2053 = vld [vmem:[#allocation2 + $0x14] sm:$0xf]
      %v2054 = vld [vmem:[#allocation2 + $0x18] sm:$0xf]
      %v2055 = vld [vmem:[#allocation2 + $0x1c] sm:$0xf]
      %v2056 = vld [vmem:[#allocation2 + $0x20] sm:$0xf]
      %v2057 = vld [vmem:[#allocation2 + $0x24] sm:$0xf]
      %v2058 = vld [vmem:[#allocation2 + $0x28] sm:$0xf]
      %v2059 = vld [vmem:[#allocation2 + $0x2c] sm:$0xf]
      %v2060 = vld [vmem:[#allocation2 + $0x30] sm:$0xf]
      %v2061 = vld [vmem:[#allocation2 + $0x34] sm:$0xf]
      %v2062 = vld [vmem:[#allocation2 + $0x38] sm:$0xf]
      %v2063 = vld [vmem:[#allocation2 + $0x3c] sm:$0xf]
      %v2064 = vld [vmem:[#allocation2 + $0x40] sm:$0xf]
      %v2065 = vld [vmem:[#allocation2 + $0x44] sm:$0xf]
      %v2066 = vld [vmem:[#allocation2 + $0x48] sm:$0xf]
      %v2067 = vld [vmem:[#allocation2 + $0x4c] sm:$0xf]
      %v2068 = vld [vmem:[%s1] sm:$0xf]
      %v2069 = vld [vmem:[%s1 + $0x4] sm:$0xf]
      %v2070 = vld [vmem:[%s1 + $0x8] sm:$0xf]
      %v2071 = vld [vmem:[%s1 + $0xc] sm:$0xf]
      %v2072 = vld [vmem:[%s1 + $0x10] sm:$0x3]
      %v2073 = vld [vmem:[%s2] sm:$0x1]
      %v2075 = vlaneseq
      %v2076 = vshrl.u32 %v2075, 7
      %v2077 = vsub.s32 0, %v2076
      %v2078 = vrot.slane %v2073, %v2077
      %v2100 = vunpack.c.l.b16 %v2048
      %v2101 = vunpack.c.l.b16 %v2049
      %v2102 = vunpack.c.l.b16 %v2050
      %v2103 = vunpack.c.l.b16 %v2051
      %v2104 = vunpack.c.l.b16 %v2052
      %v2105 = vunpack.c.l.b16 %v2053
      %v2106 = vunpack.c.l.b16 %v2054
      %v2107 = vunpack.c.l.b16 %v2055
      %v2108 = vunpack.c.l.b16 %v2056
      %v2109 = vunpack.c.l.b16 %v2057
      %v2110 = vunpack.c.l.b16 %v2058
      %v2111 = vunpack.c.l.b16 %v2059
      %v2112 = vunpack.c.l.b16 %v2060
      %v2113 = vunpack.c.l.b16 %v2061
      %v2114 = vunpack.c.l.b16 %v2062
      %v2115 = vunpack.c.l.b16 %v2063
      %v2116 = vunpack.c.l.b16 %v2064
      %v2117 = vunpack.c.l.b16 %v2065
      %v2118 = vunpack.c.l.b16 %v2066
      %v2119 = vunpack.c.l.b16 %v2067
      %v2120 = vpack.c.b16 %v2101, %v2100
      %v2121 = vpack.c.b16 %v2103, %v2102
      %v2122 = vpack.c.b16 %v2105, %v2104
      %v2123 = vpack.c.b16 %v2107, %v2106
      %v2124 = vpack.c.b16 %v2109, %v2108
      %v2125 = vpack.c.b16 %v2111, %v2110
      %v2126 = vpack.c.b16 %v2113, %v2112
      %v2127 = vpack.c.b16 %v2115, %v2114
      %v2128 = vpack.c.b16 %v2117, %v2116
      %v2129 = vpack.c.b16 %v2119, %v2118
      %v2135 = vunpack.c.l.b16 %v2068
      %v2136 = vunpack.c.l.b16 %v2069
      %v2137 = vunpack.c.l.b16 %v2070
      %v2138 = vunpack.c.l.b16 %v2071
      %v2139 = vunpack.c.l.b16 %v2072
      %v2140 = vpack.c.b16 %v2136, %v2135
      %v2141 = vpack.c.b16 %v2138, %v2137
      %v2142 = vpack.c.b16 %v2139, %v2139
      %vm2145 = vcmask 293888
      %v2147 = vsel %vm2145, %v2120, 0
      %v2150 = vsel %vm2145, %v2121, 0
      %v2153 = vsel %vm2145, %v2122, 0
      %v2156 = vsel %vm2145, %v2123, 0
      %v2159 = vsel %vm2145, %v2124, 0
      %v2162 = vsel %vm2145, %v2125, 0
      %v2165 = vsel %vm2145, %v2126, 0
      %v2168 = vsel %vm2145, %v2127, 0
      %v2171 = vsel %vm2145, %v2128, 0
      %v2174 = vsel %vm2145, %v2129, 0
      %vm2176 = vcmask 1041408
      %v2178 = vsel %vm2176, %v2142, 0
      %2180 = vmatprep.subr.bf16.mxu0 0
      %2181 = vmatpush1.bf16.msra.mxu0 0
      %2182 = vmatprep.subr.bf16.mxu0 0
      %2183 = vmatpush1.bf16.msra.mxu0 0
      %2184 = vmatprep.subr.bf16.mxu0 0
      %2185 = vmatpush1.bf16.msra.mxu0 0
      %2186 = vmatprep.subr.bf16.mxu0 0
      %2187 = vmatpush1.bf16.msra.mxu0 0
      %2188 = vmatprep.subr.bf16.mxu0 0
      %2189 = vmatpush1.bf16.msra.mxu0 0
      %2190 = vmatprep.subr.bf16.mxu0 0
      %2191 = vmatpush1.bf16.msra.mxu0 %v2178
      %2192 = vmatprep.subr.bf16.mxu0 0
      %2193 = vmatpush1.bf16.msra.mxu0 %v2141
      %2194 = vmatprep.subr.bf16.mxu0 0
      %2195 = vmatpush1.bf16.msra.mxu0 %v2140
      %2196 = vmatprep.subr.bf16.mxu0 0
      %2197 = vmatpush2.bf16.msra.mxu0 0
      %2198 = vmatprep.subr.bf16.mxu0 0
      %2199 = vmatpush2.bf16.msra.mxu0 0
      %2200 = vmatprep.subr.bf16.mxu0 0
      %2201 = vmatpush2.bf16.msra.mxu0 0
      %2202 = vmatprep.subr.bf16.mxu0 0
      %2203 = vmatpush2.bf16.msra.mxu0 0
      %2204 = vmatprep.subr.bf16.mxu0 0
      %2205 = vmatpush2.bf16.msra.mxu0 0
      %2206 = vmatprep.subr.bf16.mxu0 0
      %2207 = vmatpush2.bf16.msra.mxu0 0
      %2208 = vmatprep.subr.bf16.mxu0 0
      %2209 = vmatpush2.bf16.msra.mxu0 0
      %2210 = vmatprep.subr.bf16.mxu0 0
      %2211 = vmatpush2.bf16.msra.mxu0 0
      %2212 = vmatprep.mubr.bf16.mxu0 0
      %2213 = vmatmul.mubr.bf16.gmra.mxu0 %v2147
      %v2214 = vpop.f32.mrf.mxu0
      %v2215 = vadd.f32 %v2078, %v2214
      %v2216 = vpop.f32.mrf.mxu0
      %v2217 = vpop.f32.mrf.mxu0
      %v2218 = vadd.f32 %v2078, %v2217
      %v2219 = vpop.f32.mrf.mxu0
      %2220 = vmatprep.mubr.bf16.mxu0 0
      %2221 = vmatmul.mubr.bf16.gmra.mxu0 %v2150
      %v2222 = vpop.f32.mrf.mxu0
      %v2223 = vadd.f32 %v2078, %v2222
      %v2224 = vpop.f32.mrf.mxu0
      %v2225 = vpop.f32.mrf.mxu0
      %v2226 = vadd.f32 %v2078, %v2225
      %v2227 = vpop.f32.mrf.mxu0
      %2228 = vmatprep.mubr.bf16.mxu0 0
      %2229 = vmatmul.mubr.bf16.gmra.mxu0 %v2153
      %v2230 = vpop.f32.mrf.mxu0
      %v2231 = vadd.f32 %v2078, %v2230
      %v2232 = vpop.f32.mrf.mxu0
      %v2233 = vpop.f32.mrf.mxu0
      %v2234 = vadd.f32 %v2078, %v2233
      %v2235 = vpop.f32.mrf.mxu0
      %2236 = vmatprep.mubr.bf16.mxu0 0
      %2237 = vmatmul.mubr.bf16.gmra.mxu0 %v2156
      %v2238 = vpop.f32.mrf.mxu0
      %v2239 = vadd.f32 %v2078, %v2238
      %v2240 = vpop.f32.mrf.mxu0
      %v2241 = vpop.f32.mrf.mxu0
      %v2242 = vadd.f32 %v2078, %v2241
      %v2243 = vpop.f32.mrf.mxu0
      %2244 = vmatprep.mubr.bf16.mxu0 0
      %2245 = vmatmul.mubr.bf16.gmra.mxu0 %v2159
      %v2246 = vpop.f32.mrf.mxu0
      %v2247 = vadd.f32 %v2078, %v2246
      %v2248 = vpop.f32.mrf.mxu0
      %v2249 = vpop.f32.mrf.mxu0
      %v2250 = vadd.f32 %v2078, %v2249
      %v2251 = vpop.f32.mrf.mxu0
      %2252 = vmatprep.mubr.bf16.mxu0 0
      %2253 = vmatmul.mubr.bf16.gmra.mxu0 %v2162
      %v2254 = vpop.f32.mrf.mxu0
      %v2255 = vadd.f32 %v2078, %v2254
      %v2256 = vpop.f32.mrf.mxu0
      %v2257 = vpop.f32.mrf.mxu0
      %v2258 = vadd.f32 %v2078, %v2257
      %v2259 = vpop.f32.mrf.mxu0
      %2260 = vmatprep.mubr.bf16.mxu0 0
      %2261 = vmatmul.mubr.bf16.gmra.mxu0 %v2165
      %v2262 = vpop.f32.mrf.mxu0
      %v2263 = vadd.f32 %v2078, %v2262
      %v2264 = vpop.f32.mrf.mxu0
      %v2265 = vpop.f32.mrf.mxu0
      %v2266 = vadd.f32 %v2078, %v2265
      %v2267 = vpop.f32.mrf.mxu0
      %2268 = vmatprep.mubr.bf16.mxu0 0
      %2269 = vmatmul.mubr.bf16.gmra.mxu0 %v2168
      %v2270 = vpop.f32.mrf.mxu0
      %v2271 = vadd.f32 %v2078, %v2270
      %v2272 = vpop.f32.mrf.mxu0
      %v2273 = vpop.f32.mrf.mxu0
      %v2274 = vadd.f32 %v2078, %v2273
      %v2275 = vpop.f32.mrf.mxu0
      %2276 = vmatprep.mubr.bf16.mxu0 0
      %2277 = vmatmul.mubr.bf16.gmra.mxu0 %v2171
      %v2278 = vpop.f32.mrf.mxu0
      %v2279 = vadd.f32 %v2078, %v2278
      %v2280 = vpop.f32.mrf.mxu0
      %v2281 = vpop.f32.mrf.mxu0
      %v2282 = vadd.f32 %v2078, %v2281
      %v2283 = vpop.f32.mrf.mxu0
      %2284 = vmatprep.mubr.bf16.mxu0 0
      %2285 = vmatmul.mubr.bf16.gmra.mxu0 %v2174
      %v2286 = vpop.f32.mrf.mxu0
      %v2287 = vadd.f32 %v2078, %v2286
      %v2288 = vpop.f32.mrf.mxu0
      %v2289 = vpop.f32.mrf.mxu0
      %v2290 = vadd.f32 %v2078, %v2289
      %v2291 = vpop.f32.mrf.mxu0
      %2292 = vdwg.mxu0
      %v2293 = vmax.f32 %v2215, 0.0
      %v2294 = vmax.f32 %v2218, 0.0
      %v2295 = vmax.f32 %v2223, 0.0
      %v2296 = vmax.f32 %v2226, 0.0
      %v2297 = vmax.f32 %v2231, 0.0
      %v2298 = vmax.f32 %v2234, 0.0
      %v2299 = vmax.f32 %v2239, 0.0
      %v2300 = vmax.f32 %v2242, 0.0
      %v2301 = vmax.f32 %v2247, 0.0
      %v2302 = vmax.f32 %v2250, 0.0
      %v2303 = vmax.f32 %v2255, 0.0
      %v2304 = vmax.f32 %v2258, 0.0
      %v2305 = vmax.f32 %v2263, 0.0
      %v2306 = vmax.f32 %v2266, 0.0
      %v2307 = vmax.f32 %v2271, 0.0
      %v2308 = vmax.f32 %v2274, 0.0
      %v2309 = vmax.f32 %v2279, 0.0
      %v2310 = vmax.f32 %v2282, 0.0
      %v2311 = vmax.f32 %v2287, 0.0
      %v2312 = vmax.f32 %v2290, 0.0
      %v2313 = vpack.c.bf16 %v2294, %v2293
      %v2314 = vpack.c.bf16 %v2296, %v2295
      %v2315 = vpack.c.bf16 %v2298, %v2297
      %v2316 = vpack.c.bf16 %v2300, %v2299
      %v2317 = vpack.c.bf16 %v2302, %v2301
      %v2318 = vpack.c.bf16 %v2304, %v2303
      %v2319 = vpack.c.bf16 %v2306, %v2305
      %v2320 = vpack.c.bf16 %v2308, %v2307
      %v2321 = vpack.c.bf16 %v2310, %v2309
      %v2322 = vpack.c.bf16 %v2312, %v2311
      %v2333 = vunpack.c.l.b16 %v2313
      %v2334 = vunpack.c.h.b16 %v2313
      %v2335 = vunpack.c.l.b16 %v2314
      %v2336 = vunpack.c.h.b16 %v2314
      %v2337 = vunpack.c.l.b16 %v2315
      %v2338 = vunpack.c.h.b16 %v2315
      %v2339 = vunpack.c.l.b16 %v2316
      %v2340 = vunpack.c.h.b16 %v2316
      %v2341 = vunpack.c.l.b16 %v2317
      %v2342 = vunpack.c.h.b16 %v2317
      %v2343 = vunpack.c.l.b16 %v2318
      %v2344 = vunpack.c.h.b16 %v2318
      %v2345 = vunpack.c.l.b16 %v2319
      %v2346 = vunpack.c.h.b16 %v2319
      %v2347 = vunpack.c.l.b16 %v2320
      %v2348 = vunpack.c.h.b16 %v2320
      %v2349 = vunpack.c.l.b16 %v2321
      %v2350 = vunpack.c.h.b16 %v2321
      %v2351 = vunpack.c.l.b16 %v2322
      %v2352 = vunpack.c.h.b16 %v2322
      %v2353 = vpack.c.b16 %v2333, %v2333
      %v2354 = vpack.c.b16 %v2334, %v2334
      %v2355 = vpack.c.b16 %v2335, %v2335
      %v2356 = vpack.c.b16 %v2336, %v2336
      %v2357 = vpack.c.b16 %v2337, %v2337
      %v2358 = vpack.c.b16 %v2338, %v2338
      %v2359 = vpack.c.b16 %v2339, %v2339
      %v2360 = vpack.c.b16 %v2340, %v2340
      %v2361 = vpack.c.b16 %v2341, %v2341
      %v2362 = vpack.c.b16 %v2342, %v2342
      %v2363 = vpack.c.b16 %v2343, %v2343
      %v2364 = vpack.c.b16 %v2344, %v2344
      %v2365 = vpack.c.b16 %v2345, %v2345
      %v2366 = vpack.c.b16 %v2346, %v2346
      %v2367 = vpack.c.b16 %v2347, %v2347
      %v2368 = vpack.c.b16 %v2348, %v2348
      %v2369 = vpack.c.b16 %v2349, %v2349
      %v2370 = vpack.c.b16 %v2350, %v2350
      %v2371 = vpack.c.b16 %v2351, %v2351
      %v2372 = vpack.c.b16 %v2352, %v2352
      %vm2373 = vsmask.f32 256
      %vm2374 = vsmask.f32 4368
      %vm2375 = vmor %vm2373, %vm2374
      %v2377 = vshrl.u32 %v2353, 16
      %v2379 = vrot.slane %v2377, 7
      %v2380 = vshll.u32 %v2353, 16
      %v2382 = vor.u32 %v2379, %v2380
      %v2383 = vrot.slane %v2379, 4
      %v2385 = vshrl.u32 %v2354, 16
      %v2387 = vrot.slane %v2385, 7
      %v2388 = vshll.u32 %v2354, 16
      %v2390 = vor.u32 %v2387, %v2388
      %v2391 = vsel %vm2375, %v2383, %v2390
      %v2392 = vrot.slane %v2387, 4
      %v2394 = vshrl.u32 %v2355, 16
      %v2396 = vrot.slane %v2394, 7
      %v2397 = vshll.u32 %v2355, 16
      %v2399 = vor.u32 %v2396, %v2397
      %v2400 = vrot.slane %v2396, 4
      %v2402 = vshrl.u32 %v2356, 16
      %v2404 = vrot.slane %v2402, 7
      %v2405 = vshll.u32 %v2356, 16
      %v2407 = vor.u32 %v2404, %v2405
      %v2408 = vsel %vm2375, %v2400, %v2407
      %v2409 = vrot.slane %v2404, 4
      %v2411 = vshrl.u32 %v2357, 16
      %v2413 = vrot.slane %v2411, 7
      %v2414 = vshll.u32 %v2357, 16
      %v2416 = vor.u32 %v2413, %v2414
      %v2417 = vrot.slane %v2413, 4
      %v2419 = vshrl.u32 %v2358, 16
      %v2421 = vrot.slane %v2419, 7
      %v2422 = vshll.u32 %v2358, 16
      %v2424 = vor.u32 %v2421, %v2422
      %v2425 = vsel %vm2375, %v2417, %v2424
      %v2426 = vrot.slane %v2421, 4
      %v2428 = vshrl.u32 %v2359, 16
      %v2430 = vrot.slane %v2428, 7
      %v2431 = vshll.u32 %v2359, 16
      %v2433 = vor.u32 %v2430, %v2431
      %v2434 = vrot.slane %v2430, 4
      %v2436 = vshrl.u32 %v2360, 16
      %v2438 = vrot.slane %v2436, 7
      %v2439 = vshll.u32 %v2360, 16
      %v2441 = vor.u32 %v2438, %v2439
      %v2442 = vsel %vm2375, %v2434, %v2441
      %v2443 = vrot.slane %v2438, 4
      %v2445 = vshrl.u32 %v2361, 16
      %v2447 = vrot.slane %v2445, 7
      %v2448 = vshll.u32 %v2361, 16
      %v2450 = vor.u32 %v2447, %v2448
      %v2451 = vrot.slane %v2447, 4
      %v2453 = vshrl.u32 %v2362, 16
      %v2455 = vrot.slane %v2453, 7
      %v2456 = vshll.u32 %v2362, 16
      %v2458 = vor.u32 %v2455, %v2456
      %v2459 = vsel %vm2375, %v2451, %v2458
      %v2460 = vrot.slane %v2455, 4
      %v2462 = vshrl.u32 %v2363, 16
      %v2464 = vrot.slane %v2462, 7
      %v2465 = vshll.u32 %v2363, 16
      %v2467 = vor.u32 %v2464, %v2465
      %v2468 = vrot.slane %v2464, 4
      %v2470 = vshrl.u32 %v2364, 16
      %v2472 = vrot.slane %v2470, 7
      %v2473 = vshll.u32 %v2364, 16
      %v2475 = vor.u32 %v2472, %v2473
      %v2476 = vsel %vm2375, %v2468, %v2475
      %v2477 = vrot.slane %v2472, 4
      %v2479 = vshrl.u32 %v2365, 16
      %v2481 = vrot.slane %v2479, 7
      %v2482 = vshll.u32 %v2365, 16
      %v2484 = vor.u32 %v2481, %v2482
      %v2485 = vrot.slane %v2481, 4
      %v2487 = vshrl.u32 %v2366, 16
      %v2489 = vrot.slane %v2487, 7
      %v2490 = vshll.u32 %v2366, 16
      %v2492 = vor.u32 %v2489, %v2490
      %v2493 = vsel %vm2375, %v2485, %v2492
      %v2494 = vrot.slane %v2489, 4
      %v2496 = vshrl.u32 %v2367, 16
      %v2498 = vrot.slane %v2496, 7
      %v2499 = vshll.u32 %v2367, 16
      %v2501 = vor.u32 %v2498, %v2499
      %v2502 = vrot.slane %v2498, 4
      %v2504 = vshrl.u32 %v2368, 16
      %v2506 = vrot.slane %v2504, 7
      %v2507 = vshll.u32 %v2368, 16
      %v2509 = vor.u32 %v2506, %v2507
      %v2510 = vsel %vm2375, %v2502, %v2509
      %v2511 = vrot.slane %v2506, 4
      %v2513 = vshrl.u32 %v2369, 16
      %v2515 = vrot.slane %v2513, 7
      %v2516 = vshll.u32 %v2369, 16
      %v2518 = vor.u32 %v2515, %v2516
      %v2519 = vrot.slane %v2515, 4
      %v2521 = vshrl.u32 %v2370, 16
      %v2523 = vrot.slane %v2521, 7
      %v2524 = vshll.u32 %v2370, 16
      %v2526 = vor.u32 %v2523, %v2524
      %v2527 = vsel %vm2375, %v2519, %v2526
      %v2528 = vrot.slane %v2523, 4
      %v2530 = vshrl.u32 %v2371, 16
      %v2532 = vrot.slane %v2530, 7
      %v2533 = vshll.u32 %v2371, 16
      %v2535 = vor.u32 %v2532, %v2533
      %v2536 = vrot.slane %v2532, 4
      %v2538 = vshrl.u32 %v2372, 16
      %v2540 = vrot.slane %v2538, 7
      %v2541 = vshll.u32 %v2372, 16
      %v2543 = vor.u32 %v2540, %v2541
      %v2544 = vsel %vm2375, %v2536, %v2543
      %v2545 = vrot.slane %v2540, 4
      %vm2576 = vcmask 60416
      %vm2577 = vsmask.f32 7938
      %vm2578 = vmand %vm2576, %vm2577
      %v2579 = vld [vmem:[#allocation3] sm:$0xf]
      %v2580 = vsel %vm2578, %v2382, %v2579
      %2581 = vst [vmem:[#allocation3] sm:$0xf] %v2580
      %vm2582 = vcmask 60416
      %2583 = vst.msk [vmem:[#allocation3 + $0x4] sm:$0xf] %vm2582, %v2391
      %vm2584 = vcmask 57344
      %vm2585 = vmand %vm2584, %vm2373
      %v2586 = vld [vmem:[#allocation3 + $0x8] sm:$0x1]
      %v2587 = vsel %vm2585, %v2392, %v2586
      %2588 = vst [vmem:[#allocation3 + $0x8] sm:$0x1] %v2587
      %v2589 = vld [vmem:[#allocation3 + $0xc] sm:$0xf]
      %v2590 = vsel %vm2578, %v2399, %v2589
      %2591 = vst [vmem:[#allocation3 + $0xc] sm:$0xf] %v2590
      %2592 = vst.msk [vmem:[#allocation3 + $0x10] sm:$0xf] %vm2582, %v2408
      %v2593 = vld [vmem:[#allocation3 + $0x14] sm:$0x1]
      %v2594 = vsel %vm2585, %v2409, %v2593
      %2595 = vst [vmem:[#allocation3 + $0x14] sm:$0x1] %v2594
      %v2596 = vld [vmem:[#allocation3 + $0x18] sm:$0xf]
      %v2597 = vsel %vm2578, %v2416, %v2596
      %2598 = vst [vmem:[#allocation3 + $0x18] sm:$0xf] %v2597
      %2599 = vst.msk [vmem:[#allocation3 + $0x1c] sm:$0xf] %vm2582, %v2425
      %v2600 = vld [vmem:[#allocation3 + $0x20] sm:$0x1]
      %v2601 = vsel %vm2585, %v2426, %v2600
      %2602 = vst [vmem:[#allocation3 + $0x20] sm:$0x1] %v2601
      %v2603 = vld [vmem:[#allocation3 + $0x24] sm:$0xf]
      %v2604 = vsel %vm2578, %v2433, %v2603
      %2605 = vst [vmem:[#allocation3 + $0x24] sm:$0xf] %v2604
      %2606 = vst.msk [vmem:[#allocation3 + $0x28] sm:$0xf] %vm2582, %v2442
      %v2607 = vld [vmem:[#allocation3 + $0x2c] sm:$0x1]
      %v2608 = vsel %vm2585, %v2443, %v2607
      %2609 = vst [vmem:[#allocation3 + $0x2c] sm:$0x1] %v2608
      %v2610 = vld [vmem:[#allocation3 + $0x30] sm:$0xf]
      %v2611 = vsel %vm2578, %v2450, %v2610
      %2612 = vst [vmem:[#allocation3 + $0x30] sm:$0xf] %v2611
      %2613 = vst.msk [vmem:[#allocation3 + $0x34] sm:$0xf] %vm2582, %v2459
      %v2614 = vld [vmem:[#allocation3 + $0x38] sm:$0x1]
      %v2615 = vsel %vm2585, %v2460, %v2614
      %2616 = vst [vmem:[#allocation3 + $0x38] sm:$0x1] %v2615
      %v2617 = vld [vmem:[#allocation3 + $0x3c] sm:$0xf]
      %v2618 = vsel %vm2578, %v2467, %v2617
      %2619 = vst [vmem:[#allocation3 + $0x3c] sm:$0xf] %v2618
      %2620 = vst.msk [vmem:[#allocation3 + $0x40] sm:$0xf] %vm2582, %v2476
      %v2621 = vld [vmem:[#allocation3 + $0x44] sm:$0x1]
      %v2622 = vsel %vm2585, %v2477, %v2621
      %2623 = vst [vmem:[#allocation3 + $0x44] sm:$0x1] %v2622
      %v2624 = vld [vmem:[#allocation3 + $0x48] sm:$0xf]
      %v2625 = vsel %vm2578, %v2484, %v2624
      %2626 = vst [vmem:[#allocation3 + $0x48] sm:$0xf] %v2625
      %2627 = vst.msk [vmem:[#allocation3 + $0x4c] sm:$0xf] %vm2582, %v2493
      %v2628 = vld [vmem:[#allocation3 + $0x50] sm:$0x1]
      %v2629 = vsel %vm2585, %v2494, %v2628
      %2630 = vst [vmem:[#allocation3 + $0x50] sm:$0x1] %v2629
      %v2631 = vld [vmem:[#allocation3 + $0x54] sm:$0xf]
      %v2632 = vsel %vm2578, %v2501, %v2631
      %2633 = vst [vmem:[#allocation3 + $0x54] sm:$0xf] %v2632
      %2634 = vst.msk [vmem:[#allocation3 + $0x58] sm:$0xf] %vm2582, %v2510
      %v2635 = vld [vmem:[#allocation3 + $0x5c] sm:$0x1]
      %v2636 = vsel %vm2585, %v2511, %v2635
      %2637 = vst [vmem:[#allocation3 + $0x5c] sm:$0x1] %v2636
      %v2638 = vld [vmem:[#allocation3 + $0x60] sm:$0xf]
      %v2639 = vsel %vm2578, %v2518, %v2638
      %2640 = vst [vmem:[#allocation3 + $0x60] sm:$0xf] %v2639
      %2641 = vst.msk [vmem:[#allocation3 + $0x64] sm:$0xf] %vm2582, %v2527
      %v2642 = vld [vmem:[#allocation3 + $0x68] sm:$0x1]
      %v2643 = vsel %vm2585, %v2528, %v2642
      %2644 = vst [vmem:[#allocation3 + $0x68] sm:$0x1] %v2643
      %v2645 = vld [vmem:[#allocation3 + $0x6c] sm:$0xf]
      %v2646 = vsel %vm2578, %v2535, %v2645
      %2647 = vst [vmem:[#allocation3 + $0x6c] sm:$0xf] %v2646
      %2648 = vst.msk [vmem:[#allocation3 + $0x70] sm:$0xf] %vm2582, %v2544
      %v2649 = vld [vmem:[#allocation3 + $0x74] sm:$0x1]
      %v2650 = vsel %vm2585, %v2545, %v2649
      %2651 = vst [vmem:[#allocation3 + $0x74] sm:$0x1] %v2650
      %v2652 = vld [vmem:[#allocation3] sm:$0x1]
      %v2653 = vsel %vm2585, 0, %v2652
      %2654 = vst [vmem:[#allocation3] sm:$0x1] %v2653
      %v2655 = vld [vmem:[#allocation3 + $0xc] sm:$0x1]
      %v2656 = vsel %vm2585, 0, %v2655
      %2657 = vst [vmem:[#allocation3 + $0xc] sm:$0x1] %v2656
      %v2658 = vld [vmem:[#allocation3 + $0x18] sm:$0x1]
      %v2659 = vsel %vm2585, 0, %v2658
      %2660 = vst [vmem:[#allocation3 + $0x18] sm:$0x1] %v2659
      %v2661 = vld [vmem:[#allocation3 + $0x24] sm:$0x1]
      %v2662 = vsel %vm2585, 0, %v2661
      %2663 = vst [vmem:[#allocation3 + $0x24] sm:$0x1] %v2662
      %v2664 = vld [vmem:[#allocation3 + $0x30] sm:$0x1]
      %v2665 = vsel %vm2585, 0, %v2664
      %2666 = vst [vmem:[#allocation3 + $0x30] sm:$0x1] %v2665
      %v2667 = vld [vmem:[#allocation3 + $0x3c] sm:$0x1]
      %v2668 = vsel %vm2585, 0, %v2667
      %2669 = vst [vmem:[#allocation3 + $0x3c] sm:$0x1] %v2668
      %v2670 = vld [vmem:[#allocation3 + $0x48] sm:$0x1]
      %v2671 = vsel %vm2585, 0, %v2670
      %2672 = vst [vmem:[#allocation3 + $0x48] sm:$0x1] %v2671
      %v2673 = vld [vmem:[#allocation3 + $0x54] sm:$0x1]
      %v2674 = vsel %vm2585, 0, %v2673
      %2675 = vst [vmem:[#allocation3 + $0x54] sm:$0x1] %v2674
      %v2676 = vld [vmem:[#allocation3 + $0x60] sm:$0x1]
      %v2677 = vsel %vm2585, 0, %v2676
      %2678 = vst [vmem:[#allocation3 + $0x60] sm:$0x1] %v2677
      %v2679 = vld [vmem:[#allocation3 + $0x6c] sm:$0x1]
      %v2680 = vsel %vm2585, 0, %v2679
      %2681 = vst [vmem:[#allocation3 + $0x6c] sm:$0x1] %v2680
      %vm2682 = vmand %vm2584, %vm2577
      %v2683 = vld [vmem:[#allocation3 + $0x8] sm:$0x1]
      %v2684 = vsel %vm2682, 0, %v2683
      %2685 = vst [vmem:[#allocation3 + $0x8] sm:$0x1] %v2684
      %v2686 = vld [vmem:[#allocation3 + $0x14] sm:$0x1]
      %v2687 = vsel %vm2682, 0, %v2686
      %2688 = vst [vmem:[#allocation3 + $0x14] sm:$0x1] %v2687
      %v2689 = vld [vmem:[#allocation3 + $0x20] sm:$0x1]
      %v2690 = vsel %vm2682, 0, %v2689
      %2691 = vst [vmem:[#allocation3 + $0x20] sm:$0x1] %v2690
      %v2692 = vld [vmem:[#allocation3 + $0x2c] sm:$0x1]
      %v2693 = vsel %vm2682, 0, %v2692
      %2694 = vst [vmem:[#allocation3 + $0x2c] sm:$0x1] %v2693
      %v2695 = vld [vmem:[#allocation3 + $0x38] sm:$0x1]
      %v2696 = vsel %vm2682, 0, %v2695
      %2697 = vst [vmem:[#allocation3 + $0x38] sm:$0x1] %v2696
      %v2698 = vld [vmem:[#allocation3 + $0x44] sm:$0x1]
      %v2699 = vsel %vm2682, 0, %v2698
      %2700 = vst [vmem:[#allocation3 + $0x44] sm:$0x1] %v2699
      %v2701 = vld [vmem:[#allocation3 + $0x50] sm:$0x1]
      %v2702 = vsel %vm2682, 0, %v2701
      %2703 = vst [vmem:[#allocation3 + $0x50] sm:$0x1] %v2702
      %v2704 = vld [vmem:[#allocation3 + $0x5c] sm:$0x1]
      %v2705 = vsel %vm2682, 0, %v2704
      %2706 = vst [vmem:[#allocation3 + $0x5c] sm:$0x1] %v2705
      %v2707 = vld [vmem:[#allocation3 + $0x68] sm:$0x1]
      %v2708 = vsel %vm2682, 0, %v2707
      %2709 = vst [vmem:[#allocation3 + $0x68] sm:$0x1] %v2708
      %v2710 = vld [vmem:[#allocation3 + $0x74] sm:$0x1]
      %v2711 = vsel %vm2682, 0, %v2710
      %2712 = vst [vmem:[#allocation3 + $0x74] sm:$0x1] %v2711
      %p2713 = scmp.eq.s32.totalorder %s21, 0
      // Predicated region
      $region41: #{tpu_custom_call.1} parent=39 // pred_check
        %p2714 = pneg %p2713
      $region42: #{tpu_custom_call.1} parent=39 // pred_check_branch
        %2716 = sbr.rel (%p2714) target = $region44
      $region43: #{tpu_custom_call.1} parent=39 // pred_region
        %2717 = vst.msk [vmem:[#allocation3] sm:$0xf] %vm2582, 0
        %2718 = vst.msk [vmem:[#allocation3 + $0x4] sm:$0xf] %vm2582, 0
        %vm2719 = vcmask 57344
        %2720 = vst.msk [vmem:[#allocation3 + $0x8] sm:$0x1] %vm2719, 0
      $region44: #{tpu_custom_call.1} parent=39 // pred_fallthru
        _
      %p2721 = scmp.eq.s32.totalorder %s21, 1
      // Predicated region
      $region45: #{tpu_custom_call.1} parent=39 // pred_check
        %p2722 = pneg %p2721
      $region46: #{tpu_custom_call.1} parent=39 // pred_check_branch
        %2724 = sbr.rel (%p2722) target = $region48
      $region47: #{tpu_custom_call.1} parent=39 // pred_region
        %s2725 = scalar_lea.vmem [#allocation3], 108
        %2726 = vst.msk [vmem:[%s2725] sm:$0xf] %vm2582, 0
        %2727 = vst.msk [vmem:[%s2725 + $0x4] sm:$0xf] %vm2582, 0
        %vm2728 = vcmask 57344
        %2729 = vst.msk [vmem:[%s2725 + $0x8] sm:$0x1] %vm2728, 0
      $region48: #{tpu_custom_call.1} parent=39 // pred_fallthru
        _
      %v2730 = vld [vmem:[#allocation3] sm:$0xf]
      %v2731 = vld [vmem:[#allocation3 + $0x4] sm:$0xf]
      %v2732 = vld [vmem:[#allocation3 + $0x8] sm:$0x1]
      %v2733 = vld [vmem:[#allocation3 + $0xc] sm:$0xf]
      %v2734 = vld [vmem:[#allocation3 + $0x10] sm:$0xf]
      %v2735 = vld [vmem:[#allocation3 + $0x14] sm:$0x1]
      %v2736 = vld [vmem:[#allocation3 + $0x18] sm:$0xf]
      %v2737 = vld [vmem:[#allocation3 + $0x1c] sm:$0xf]
      %v2738 = vld [vmem:[#allocation3 + $0x20] sm:$0x1]
      %v2739 = vld [vmem:[#allocation3 + $0x24] sm:$0xf]
      %v2740 = vld [vmem:[#allocation3 + $0x28] sm:$0xf]
      %v2741 = vld [vmem:[#allocation3 + $0x2c] sm:$0x1]
      %v2742 = vld [vmem:[#allocation3 + $0x30] sm:$0xf]
      %v2743 = vld [vmem:[#allocation3 + $0x34] sm:$0xf]
      %v2744 = vld [vmem:[#allocation3 + $0x38] sm:$0x1]
      %v2745 = vld [vmem:[#allocation3 + $0x3c] sm:$0xf]
      %v2746 = vld [vmem:[#allocation3 + $0x40] sm:$0xf]
      %v2747 = vld [vmem:[#allocation3 + $0x44] sm:$0x1]
      %v2748 = vld [vmem:[#allocation3 + $0x48] sm:$0xf]
      %v2749 = vld [vmem:[#allocation3 + $0x4c] sm:$0xf]
      %v2750 = vld [vmem:[#allocation3 + $0x50] sm:$0x1]
      %v2751 = vld [vmem:[#allocation3 + $0x54] sm:$0xf]
      %v2752 = vld [vmem:[#allocation3 + $0x58] sm:$0xf]
      %v2753 = vld [vmem:[#allocation3 + $0x5c] sm:$0x1]
      %2754 = vst.msk [vmem:[#allocation4] sm:$0xf] %vm2582, %v2730
      %2755 = vst.msk [vmem:[#allocation4 + $0x4] sm:$0xf] %vm2582, %v2731
      %2756 = vst.msk [vmem:[#allocation4 + $0x8] sm:$0xf] %vm2582, %v2733
      %2757 = vst.msk [vmem:[#allocation4 + $0xc] sm:$0xf] %vm2582, %v2734
      %2758 = vst.msk [vmem:[#allocation4 + $0x10] sm:$0xf] %vm2582, %v2736
      %2759 = vst.msk [vmem:[#allocation4 + $0x14] sm:$0xf] %vm2582, %v2737
      %2760 = vst.msk [vmem:[#allocation4 + $0x18] sm:$0xf] %vm2582, %v2739
      %2761 = vst.msk [vmem:[#allocation4 + $0x1c] sm:$0xf] %vm2582, %v2740
      %2762 = vst.msk [vmem:[#allocation4 + $0x20] sm:$0xf] %vm2582, %v2742
      %2763 = vst.msk [vmem:[#allocation4 + $0x24] sm:$0xf] %vm2582, %v2743
      %2764 = vst.msk [vmem:[#allocation4 + $0x28] sm:$0xf] %vm2582, %v2745
      %2765 = vst.msk [vmem:[#allocation4 + $0x2c] sm:$0xf] %vm2582, %v2746
      %2766 = vst.msk [vmem:[#allocation4 + $0x30] sm:$0xf] %vm2582, %v2748
      %2767 = vst.msk [vmem:[#allocation4 + $0x34] sm:$0xf] %vm2582, %v2749
      %2768 = vst.msk [vmem:[#allocation4 + $0x38] sm:$0xf] %vm2582, %v2751
      %2769 = vst.msk [vmem:[#allocation4 + $0x3c] sm:$0xf] %vm2582, %v2752
      %v2771 = vshrl.u32 %v2730, 16
      %v2773 = vrot.slane %v2771, 4
      %v2774 = vshll.u32 %v2730, 16
      %v2776 = vrot.slane %v2774, 5
      %v2777 = vor.u32 %v2773, %v2776
      %v2778 = vrot.slane %v2777, 4
      %v2780 = vshll.u32 %v2731, 16
      %v2782 = vrot.slane %v2780, 5
      %v2783 = vsel %vm308, %v2778, %v2782
      %v2784 = vshrl.u32 %v2731, 16
      %v2786 = vrot.slane %v2784, 4
      %v2787 = vor.u32 %v2786, %v2782
      %v2788 = vrot.slane %v2787, 4
      %v2790 = vshll.u32 %v2732, 16
      %v2792 = vrot.slane %v2790, 5
      %v2793 = vsel %vm308, %v2788, %v2792
      %v2795 = vshrl.u32 %v2733, 16
      %v2797 = vrot.slane %v2795, 4
      %v2798 = vshll.u32 %v2733, 16
      %v2800 = vrot.slane %v2798, 5
      %v2801 = vor.u32 %v2797, %v2800
      %v2802 = vrot.slane %v2801, 4
      %v2804 = vshll.u32 %v2734, 16
      %v2806 = vrot.slane %v2804, 5
      %v2807 = vsel %vm308, %v2802, %v2806
      %v2808 = vshrl.u32 %v2734, 16
      %v2810 = vrot.slane %v2808, 4
      %v2811 = vor.u32 %v2810, %v2806
      %v2812 = vrot.slane %v2811, 4
      %v2814 = vshll.u32 %v2735, 16
      %v2816 = vrot.slane %v2814, 5
      %v2817 = vsel %vm308, %v2812, %v2816
      %v2819 = vshrl.u32 %v2736, 16
      %v2821 = vrot.slane %v2819, 4
      %v2822 = vshll.u32 %v2736, 16
      %v2824 = vrot.slane %v2822, 5
      %v2825 = vor.u32 %v2821, %v2824
      %v2826 = vrot.slane %v2825, 4
      %v2828 = vshll.u32 %v2737, 16
      %v2830 = vrot.slane %v2828, 5
      %v2831 = vsel %vm308, %v2826, %v2830
      %v2832 = vshrl.u32 %v2737, 16
      %v2834 = vrot.slane %v2832, 4
      %v2835 = vor.u32 %v2834, %v2830
      %v2836 = vrot.slane %v2835, 4
      %v2838 = vshll.u32 %v2738, 16
      %v2840 = vrot.slane %v2838, 5
      %v2841 = vsel %vm308, %v2836, %v2840
      %v2843 = vshrl.u32 %v2739, 16
      %v2845 = vrot.slane %v2843, 4
      %v2846 = vshll.u32 %v2739, 16
      %v2848 = vrot.slane %v2846, 5
      %v2849 = vor.u32 %v2845, %v2848
      %v2850 = vrot.slane %v2849, 4
      %v2852 = vshll.u32 %v2740, 16
      %v2854 = vrot.slane %v2852, 5
      %v2855 = vsel %vm308, %v2850, %v2854
      %v2856 = vshrl.u32 %v2740, 16
      %v2858 = vrot.slane %v2856, 4
      %v2859 = vor.u32 %v2858, %v2854
      %v2860 = vrot.slane %v2859, 4
      %v2862 = vshll.u32 %v2741, 16
      %v2864 = vrot.slane %v2862, 5
      %v2865 = vsel %vm308, %v2860, %v2864
      %v2867 = vshrl.u32 %v2742, 16
      %v2869 = vrot.slane %v2867, 4
      %v2870 = vshll.u32 %v2742, 16
      %v2872 = vrot.slane %v2870, 5
      %v2873 = vor.u32 %v2869, %v2872
      %v2874 = vrot.slane %v2873, 4
      %v2876 = vshll.u32 %v2743, 16
      %v2878 = vrot.slane %v2876, 5
      %v2879 = vsel %vm308, %v2874, %v2878
      %v2880 = vshrl.u32 %v2743, 16
      %v2882 = vrot.slane %v2880, 4
      %v2883 = vor.u32 %v2882, %v2878
      %v2884 = vrot.slane %v2883, 4
      %v2886 = vshll.u32 %v2744, 16
      %v2888 = vrot.slane %v2886, 5
      %v2889 = vsel %vm308, %v2884, %v2888
      %v2891 = vshrl.u32 %v2745, 16
      %v2893 = vrot.slane %v2891, 4
      %v2894 = vshll.u32 %v2745, 16
      %v2896 = vrot.slane %v2894, 5
      %v2897 = vor.u32 %v2893, %v2896
      %v2898 = vrot.slane %v2897, 4
      %v2900 = vshll.u32 %v2746, 16
      %v2902 = vrot.slane %v2900, 5
      %v2903 = vsel %vm308, %v2898, %v2902
      %v2904 = vshrl.u32 %v2746, 16
      %v2906 = vrot.slane %v2904, 4
      %v2907 = vor.u32 %v2906, %v2902
      %v2908 = vrot.slane %v2907, 4
      %v2910 = vshll.u32 %v2747, 16
      %v2912 = vrot.slane %v2910, 5
      %v2913 = vsel %vm308, %v2908, %v2912
      %v2915 = vshrl.u32 %v2748, 16
      %v2917 = vrot.slane %v2915, 4
      %v2918 = vshll.u32 %v2748, 16
      %v2920 = vrot.slane %v2918, 5
      %v2921 = vor.u32 %v2917, %v2920
      %v2922 = vrot.slane %v2921, 4
      %v2924 = vshll.u32 %v2749, 16
      %v2926 = vrot.slane %v2924, 5
      %v2927 = vsel %vm308, %v2922, %v2926
      %v2928 = vshrl.u32 %v2749, 16
      %v2930 = vrot.slane %v2928, 4
      %v2931 = vor.u32 %v2930, %v2926
      %v2932 = vrot.slane %v2931, 4
      %v2934 = vshll.u32 %v2750, 16
      %v2936 = vrot.slane %v2934, 5
      %v2937 = vsel %vm308, %v2932, %v2936
      %v2939 = vshrl.u32 %v2751, 16
      %v2941 = vrot.slane %v2939, 4
      %v2942 = vshll.u32 %v2751, 16
      %v2944 = vrot.slane %v2942, 5
      %v2945 = vor.u32 %v2941, %v2944
      %v2946 = vrot.slane %v2945, 4
      %v2948 = vshll.u32 %v2752, 16
      %v2950 = vrot.slane %v2948, 5
      %v2951 = vsel %vm308, %v2946, %v2950
      %v2952 = vshrl.u32 %v2752, 16
      %v2954 = vrot.slane %v2952, 4
      %v2955 = vor.u32 %v2954, %v2950
      %v2956 = vrot.slane %v2955, 4
      %v2958 = vshll.u32 %v2753, 16
      %v2960 = vrot.slane %v2958, 5
      %v2961 = vsel %vm308, %v2956, %v2960
      %2962 = vrot.lane.b32.xlu0 %v2783, 8
      %v2963 = vpop.permute.xlu0 %2962
      %2964 = vrot.lane.b32.xlu0 %v2793, 8
      %v2965 = vpop.permute.xlu0 %2964
      %2966 = vrot.lane.b32.xlu0 %v2807, 8
      %v2967 = vpop.permute.xlu0 %2966
      %2968 = vrot.lane.b32.xlu0 %v2817, 8
      %v2969 = vpop.permute.xlu0 %2968
      %2970 = vrot.lane.b32.xlu0 %v2831, 8
      %v2971 = vpop.permute.xlu0 %2970
      %2972 = vrot.lane.b32.xlu0 %v2841, 8
      %v2973 = vpop.permute.xlu0 %2972
      %2974 = vrot.lane.b32.xlu0 %v2855, 8
      %v2975 = vpop.permute.xlu0 %2974
      %2976 = vrot.lane.b32.xlu0 %v2865, 8
      %v2977 = vpop.permute.xlu0 %2976
      %2978 = vrot.lane.b32.xlu0 %v2879, 8
      %v2979 = vpop.permute.xlu0 %2978
      %2980 = vrot.lane.b32.xlu0 %v2889, 8
      %v2981 = vpop.permute.xlu0 %2980
      %2982 = vrot.lane.b32.xlu0 %v2903, 8
      %v2983 = vpop.permute.xlu0 %2982
      %2984 = vrot.lane.b32.xlu0 %v2913, 8
      %v2985 = vpop.permute.xlu0 %2984
      %2986 = vrot.lane.b32.xlu0 %v2927, 8
      %v2987 = vpop.permute.xlu0 %2986
      %2988 = vrot.lane.b32.xlu0 %v2937, 8
      %v2989 = vpop.permute.xlu0 %2988
      %2990 = vrot.lane.b32.xlu0 %v2951, 8
      %v2991 = vpop.permute.xlu0 %2990
      %2992 = vrot.lane.b32.xlu0 %v2961, 8
      %v2993 = vpop.permute.xlu0 %2992
      %vm3010 = vcmask 126016
      %3011 = vst.msk [vmem:[#allocation4] sm:$0xf] %vm3010, %v2963
      %3012 = vst.msk [vmem:[#allocation4 + $0x4] sm:$0xf] %vm3010, %v2965
      %3013 = vst.msk [vmem:[#allocation4 + $0x8] sm:$0xf] %vm3010, %v2967
      %3014 = vst.msk [vmem:[#allocation4 + $0xc] sm:$0xf] %vm3010, %v2969
      %3015 = vst.msk [vmem:[#allocation4 + $0x10] sm:$0xf] %vm3010, %v2971
      %3016 = vst.msk [vmem:[#allocation4 + $0x14] sm:$0xf] %vm3010, %v2973
      %3017 = vst.msk [vmem:[#allocation4 + $0x18] sm:$0xf] %vm3010, %v2975
      %3018 = vst.msk [vmem:[#allocation4 + $0x1c] sm:$0xf] %vm3010, %v2977
      %3019 = vst.msk [vmem:[#allocation4 + $0x20] sm:$0xf] %vm3010, %v2979
      %3020 = vst.msk [vmem:[#allocation4 + $0x24] sm:$0xf] %vm3010, %v2981
      %3021 = vst.msk [vmem:[#allocation4 + $0x28] sm:$0xf] %vm3010, %v2983
      %3022 = vst.msk [vmem:[#allocation4 + $0x2c] sm:$0xf] %vm3010, %v2985
      %3023 = vst.msk [vmem:[#allocation4 + $0x30] sm:$0xf] %vm3010, %v2987
      %3024 = vst.msk [vmem:[#allocation4 + $0x34] sm:$0xf] %vm3010, %v2989
      %3025 = vst.msk [vmem:[#allocation4 + $0x38] sm:$0xf] %vm3010, %v2991
      %3026 = vst.msk [vmem:[#allocation4 + $0x3c] sm:$0xf] %vm3010, %v2993
      %v3051 = vrot.slane %v2730, 5
      %v3052 = vrot.slane %v3051, 4
      %v3053 = vrot.slane %v2731, 5
      %v3054 = vsel %vm662, %v3052, %v3053
      %v3055 = vrot.slane %v3053, 4
      %v3056 = vrot.slane %v2732, 5
      %v3057 = vsel %vm662, %v3055, %v3056
      %v3058 = vrot.slane %v2733, 5
      %v3059 = vrot.slane %v3058, 4
      %v3060 = vrot.slane %v2734, 5
      %v3061 = vsel %vm662, %v3059, %v3060
      %v3062 = vrot.slane %v3060, 4
      %v3063 = vrot.slane %v2735, 5
      %v3064 = vsel %vm662, %v3062, %v3063
      %v3065 = vrot.slane %v2736, 5
      %v3066 = vrot.slane %v3065, 4
      %v3067 = vrot.slane %v2737, 5
      %v3068 = vsel %vm662, %v3066, %v3067
      %v3069 = vrot.slane %v3067, 4
      %v3070 = vrot.slane %v2738, 5
      %v3071 = vsel %vm662, %v3069, %v3070
      %v3072 = vrot.slane %v2739, 5
      %v3073 = vrot.slane %v3072, 4
      %v3074 = vrot.slane %v2740, 5
      %v3075 = vsel %vm662, %v3073, %v3074
      %v3076 = vrot.slane %v3074, 4
      %v3077 = vrot.slane %v2741, 5
      %v3078 = vsel %vm662, %v3076, %v3077
      %v3079 = vrot.slane %v2742, 5
      %v3080 = vrot.slane %v3079, 4
      %v3081 = vrot.slane %v2743, 5
      %v3082 = vsel %vm662, %v3080, %v3081
      %v3083 = vrot.slane %v3081, 4
      %v3084 = vrot.slane %v2744, 5
      %v3085 = vsel %vm662, %v3083, %v3084
      %v3086 = vrot.slane %v2745, 5
      %v3087 = vrot.slane %v3086, 4
      %v3088 = vrot.slane %v2746, 5
      %v3089 = vsel %vm662, %v3087, %v3088
      %v3090 = vrot.slane %v3088, 4
      %v3091 = vrot.slane %v2747, 5
      %v3092 = vsel %vm662, %v3090, %v3091
      %v3093 = vrot.slane %v2748, 5
      %v3094 = vrot.slane %v3093, 4
      %v3095 = vrot.slane %v2749, 5
      %v3096 = vsel %vm662, %v3094, %v3095
      %v3097 = vrot.slane %v3095, 4
      %v3098 = vrot.slane %v2750, 5
      %v3099 = vsel %vm662, %v3097, %v3098
      %v3100 = vrot.slane %v2751, 5
      %v3101 = vrot.slane %v3100, 4
      %v3102 = vrot.slane %v2752, 5
      %v3103 = vsel %vm662, %v3101, %v3102
      %v3104 = vrot.slane %v3102, 4
      %v3105 = vrot.slane %v2753, 5
      %v3106 = vsel %vm662, %v3104, %v3105
      %3107 = vrot.lane.b32.xlu0 %v3054, 16
      %v3108 = vpop.permute.xlu0 %3107
      %3109 = vrot.lane.b32.xlu0 %v3057, 16
      %v3110 = vpop.permute.xlu0 %3109
      %3111 = vrot.lane.b32.xlu0 %v3061, 16
      %v3112 = vpop.permute.xlu0 %3111
      %3113 = vrot.lane.b32.xlu0 %v3064, 16
      %v3114 = vpop.permute.xlu0 %3113
      %3115 = vrot.lane.b32.xlu0 %v3068, 16
      %v3116 = vpop.permute.xlu0 %3115
      %3117 = vrot.lane.b32.xlu0 %v3071, 16
      %v3118 = vpop.permute.xlu0 %3117
      %3119 = vrot.lane.b32.xlu0 %v3075, 16
      %v3120 = vpop.permute.xlu0 %3119
      %3121 = vrot.lane.b32.xlu0 %v3078, 16
      %v3122 = vpop.permute.xlu0 %3121
      %3123 = vrot.lane.b32.xlu0 %v3082, 16
      %v3124 = vpop.permute.xlu0 %3123
      %3125 = vrot.lane.b32.xlu0 %v3085, 16
      %v3126 = vpop.permute.xlu0 %3125
      %3127 = vrot.lane.b32.xlu0 %v3089, 16
      %v3128 = vpop.permute.xlu0 %3127
      %3129 = vrot.lane.b32.xlu0 %v3092, 16
      %v3130 = vpop.permute.xlu0 %3129
      %3131 = vrot.lane.b32.xlu0 %v3096, 16
      %v3132 = vpop.permute.xlu0 %3131
      %3133 = vrot.lane.b32.xlu0 %v3099, 16
      %v3134 = vpop.permute.xlu0 %3133
      %3135 = vrot.lane.b32.xlu0 %v3103, 16
      %v3136 = vpop.permute.xlu0 %3135
      %3137 = vrot.lane.b32.xlu0 %v3106, 16
      %v3138 = vpop.permute.xlu0 %3137
      %vm3155 = vcmask 191616
      %3156 = vst.msk [vmem:[#allocation4] sm:$0xf] %vm3155, %v3108
      %3157 = vst.msk [vmem:[#allocation4 + $0x4] sm:$0xf] %vm3155, %v3110
      %3158 = vst.msk [vmem:[#allocation4 + $0x8] sm:$0xf] %vm3155, %v3112
      %3159 = vst.msk [vmem:[#allocation4 + $0xc] sm:$0xf] %vm3155, %v3114
      %3160 = vst.msk [vmem:[#allocation4 + $0x10] sm:$0xf] %vm3155, %v3116
      %3161 = vst.msk [vmem:[#allocation4 + $0x14] sm:$0xf] %vm3155, %v3118
      %3162 = vst.msk [vmem:[#allocation4 + $0x18] sm:$0xf] %vm3155, %v3120
      %3163 = vst.msk [vmem:[#allocation4 + $0x1c] sm:$0xf] %vm3155, %v3122
      %3164 = vst.msk [vmem:[#allocation4 + $0x20] sm:$0xf] %vm3155, %v3124
      %3165 = vst.msk [vmem:[#allocation4 + $0x24] sm:$0xf] %vm3155, %v3126
      %3166 = vst.msk [vmem:[#allocation4 + $0x28] sm:$0xf] %vm3155, %v3128
      %3167 = vst.msk [vmem:[#allocation4 + $0x2c] sm:$0xf] %vm3155, %v3130
      %3168 = vst.msk [vmem:[#allocation4 + $0x30] sm:$0xf] %vm3155, %v3132
      %3169 = vst.msk [vmem:[#allocation4 + $0x34] sm:$0xf] %vm3155, %v3134
      %3170 = vst.msk [vmem:[#allocation4 + $0x38] sm:$0xf] %vm3155, %v3136
      %3171 = vst.msk [vmem:[#allocation4 + $0x3c] sm:$0xf] %vm3155, %v3138
      %s3172 = scalar_lea.vmem [#allocation3], 12
      %v3173 = vld [vmem:[%s3172] sm:$0xf]
      %v3174 = vld [vmem:[%s3172 + $0x4] sm:$0xf]
      %v3175 = vld [vmem:[%s3172 + $0x8] sm:$0x1]
      %v3176 = vld [vmem:[%s3172 + $0xc] sm:$0xf]
      %v3177 = vld [vmem:[%s3172 + $0x10] sm:$0xf]
      %v3178 = vld [vmem:[%s3172 + $0x14] sm:$0x1]
      %v3179 = vld [vmem:[%s3172 + $0x18] sm:$0xf]
      %v3180 = vld [vmem:[%s3172 + $0x1c] sm:$0xf]
      %v3181 = vld [vmem:[%s3172 + $0x20] sm:$0x1]
      %v3182 = vld [vmem:[%s3172 + $0x24] sm:$0xf]
      %v3183 = vld [vmem:[%s3172 + $0x28] sm:$0xf]
      %v3184 = vld [vmem:[%s3172 + $0x2c] sm:$0x1]
      %v3185 = vld [vmem:[%s3172 + $0x30] sm:$0xf]
      %v3186 = vld [vmem:[%s3172 + $0x34] sm:$0xf]
      %v3187 = vld [vmem:[%s3172 + $0x38] sm:$0x1]
      %v3188 = vld [vmem:[%s3172 + $0x3c] sm:$0xf]
      %v3189 = vld [vmem:[%s3172 + $0x40] sm:$0xf]
      %v3190 = vld [vmem:[%s3172 + $0x44] sm:$0x1]
      %v3191 = vld [vmem:[%s3172 + $0x48] sm:$0xf]
      %v3192 = vld [vmem:[%s3172 + $0x4c] sm:$0xf]
      %v3193 = vld [vmem:[%s3172 + $0x50] sm:$0x1]
      %v3194 = vld [vmem:[%s3172 + $0x54] sm:$0xf]
      %v3195 = vld [vmem:[%s3172 + $0x58] sm:$0xf]
      %v3196 = vld [vmem:[%s3172 + $0x5c] sm:$0x1]
      %3213 = vrot.lane.b32.xlu0 %v3173, 24
      %v3214 = vpop.permute.xlu0 %3213
      %3215 = vrot.lane.b32.xlu0 %v3174, 24
      %v3216 = vpop.permute.xlu0 %3215
      %3217 = vrot.lane.b32.xlu0 %v3176, 24
      %v3218 = vpop.permute.xlu0 %3217
      %3219 = vrot.lane.b32.xlu0 %v3177, 24
      %v3220 = vpop.permute.xlu0 %3219
      %3221 = vrot.lane.b32.xlu0 %v3179, 24
      %v3222 = vpop.permute.xlu0 %3221
      %3223 = vrot.lane.b32.xlu0 %v3180, 24
      %v3224 = vpop.permute.xlu0 %3223
      %3225 = vrot.lane.b32.xlu0 %v3182, 24
      %v3226 = vpop.permute.xlu0 %3225
      %3227 = vrot.lane.b32.xlu0 %v3183, 24
      %v3228 = vpop.permute.xlu0 %3227
      %3229 = vrot.lane.b32.xlu0 %v3185, 24
      %v3230 = vpop.permute.xlu0 %3229
      %3231 = vrot.lane.b32.xlu0 %v3186, 24
      %v3232 = vpop.permute.xlu0 %3231
      %3233 = vrot.lane.b32.xlu0 %v3188, 24
      %v3234 = vpop.permute.xlu0 %3233
      %3235 = vrot.lane.b32.xlu0 %v3189, 24
      %v3236 = vpop.permute.xlu0 %3235
      %3237 = vrot.lane.b32.xlu0 %v3191, 24
      %v3238 = vpop.permute.xlu0 %3237
      %3239 = vrot.lane.b32.xlu0 %v3192, 24
      %v3240 = vpop.permute.xlu0 %3239
      %3241 = vrot.lane.b32.xlu0 %v3194, 24
      %v3242 = vpop.permute.xlu0 %3241
      %3243 = vrot.lane.b32.xlu0 %v3195, 24
      %v3244 = vpop.permute.xlu0 %3243
      %vm3261 = vcmask 257216
      %3262 = vst.msk [vmem:[#allocation4] sm:$0xf] %vm3261, %v3214
      %3263 = vst.msk [vmem:[#allocation4 + $0x4] sm:$0xf] %vm3261, %v3216
      %3264 = vst.msk [vmem:[#allocation4 + $0x8] sm:$0xf] %vm3261, %v3218
      %3265 = vst.msk [vmem:[#allocation4 + $0xc] sm:$0xf] %vm3261, %v3220
      %3266 = vst.msk [vmem:[#allocation4 + $0x10] sm:$0xf] %vm3261, %v3222
      %3267 = vst.msk [vmem:[#allocation4 + $0x14] sm:$0xf] %vm3261, %v3224
      %3268 = vst.msk [vmem:[#allocation4 + $0x18] sm:$0xf] %vm3261, %v3226
      %3269 = vst.msk [vmem:[#allocation4 + $0x1c] sm:$0xf] %vm3261, %v3228
      %3270 = vst.msk [vmem:[#allocation4 + $0x20] sm:$0xf] %vm3261, %v3230
      %3271 = vst.msk [vmem:[#allocation4 + $0x24] sm:$0xf] %vm3261, %v3232
      %3272 = vst.msk [vmem:[#allocation4 + $0x28] sm:$0xf] %vm3261, %v3234
      %3273 = vst.msk [vmem:[#allocation4 + $0x2c] sm:$0xf] %vm3261, %v3236
      %3274 = vst.msk [vmem:[#allocation4 + $0x30] sm:$0xf] %vm3261, %v3238
      %3275 = vst.msk [vmem:[#allocation4 + $0x34] sm:$0xf] %vm3261, %v3240
      %3276 = vst.msk [vmem:[#allocation4 + $0x38] sm:$0xf] %vm3261, %v3242
      %3277 = vst.msk [vmem:[#allocation4 + $0x3c] sm:$0xf] %vm3261, %v3244
      %v3279 = vshrl.u32 %v3173, 16
      %v3281 = vrot.slane %v3279, 4
      %v3282 = vshll.u32 %v3173, 16
      %v3284 = vrot.slane %v3282, 5
      %v3285 = vor.u32 %v3281, %v3284
      %v3286 = vrot.slane %v3285, 4
      %v3288 = vshll.u32 %v3174, 16
      %v3290 = vrot.slane %v3288, 5
      %v3291 = vsel %vm308, %v3286, %v3290
      %v3292 = vshrl.u32 %v3174, 16
      %v3294 = vrot.slane %v3292, 4
      %v3295 = vor.u32 %v3294, %v3290
      %v3296 = vrot.slane %v3295, 4
      %v3298 = vshll.u32 %v3175, 16
      %v3300 = vrot.slane %v3298, 5
      %v3301 = vsel %vm308, %v3296, %v3300
      %v3303 = vshrl.u32 %v3176, 16
      %v3305 = vrot.slane %v3303, 4
      %v3306 = vshll.u32 %v3176, 16
      %v3308 = vrot.slane %v3306, 5
      %v3309 = vor.u32 %v3305, %v3308
      %v3310 = vrot.slane %v3309, 4
      %v3312 = vshll.u32 %v3177, 16
      %v3314 = vrot.slane %v3312, 5
      %v3315 = vsel %vm308, %v3310, %v3314
      %v3316 = vshrl.u32 %v3177, 16
      %v3318 = vrot.slane %v3316, 4
      %v3319 = vor.u32 %v3318, %v3314
      %v3320 = vrot.slane %v3319, 4
      %v3322 = vshll.u32 %v3178, 16
      %v3324 = vrot.slane %v3322, 5
      %v3325 = vsel %vm308, %v3320, %v3324
      %v3327 = vshrl.u32 %v3179, 16
      %v3329 = vrot.slane %v3327, 4
      %v3330 = vshll.u32 %v3179, 16
      %v3332 = vrot.slane %v3330, 5
      %v3333 = vor.u32 %v3329, %v3332
      %v3334 = vrot.slane %v3333, 4
      %v3336 = vshll.u32 %v3180, 16
      %v3338 = vrot.slane %v3336, 5
      %v3339 = vsel %vm308, %v3334, %v3338
      %v3340 = vshrl.u32 %v3180, 16
      %v3342 = vrot.slane %v3340, 4
      %v3343 = vor.u32 %v3342, %v3338
      %v3344 = vrot.slane %v3343, 4
      %v3346 = vshll.u32 %v3181, 16
      %v3348 = vrot.slane %v3346, 5
      %v3349 = vsel %vm308, %v3344, %v3348
      %v3351 = vshrl.u32 %v3182, 16
      %v3353 = vrot.slane %v3351, 4
      %v3354 = vshll.u32 %v3182, 16
      %v3356 = vrot.slane %v3354, 5
      %v3357 = vor.u32 %v3353, %v3356
      %v3358 = vrot.slane %v3357, 4
      %v3360 = vshll.u32 %v3183, 16
      %v3362 = vrot.slane %v3360, 5
      %v3363 = vsel %vm308, %v3358, %v3362
      %v3364 = vshrl.u32 %v3183, 16
      %v3366 = vrot.slane %v3364, 4
      %v3367 = vor.u32 %v3366, %v3362
      %v3368 = vrot.slane %v3367, 4
      %v3370 = vshll.u32 %v3184, 16
      %v3372 = vrot.slane %v3370, 5
      %v3373 = vsel %vm308, %v3368, %v3372
      %v3375 = vshrl.u32 %v3185, 16
      %v3377 = vrot.slane %v3375, 4
      %v3378 = vshll.u32 %v3185, 16
      %v3380 = vrot.slane %v3378, 5
      %v3381 = vor.u32 %v3377, %v3380
      %v3382 = vrot.slane %v3381, 4
      %v3384 = vshll.u32 %v3186, 16
      %v3386 = vrot.slane %v3384, 5
      %v3387 = vsel %vm308, %v3382, %v3386
      %v3388 = vshrl.u32 %v3186, 16
      %v3390 = vrot.slane %v3388, 4
      %v3391 = vor.u32 %v3390, %v3386
      %v3392 = vrot.slane %v3391, 4
      %v3394 = vshll.u32 %v3187, 16
      %v3396 = vrot.slane %v3394, 5
      %v3397 = vsel %vm308, %v3392, %v3396
      %v3399 = vshrl.u32 %v3188, 16
      %v3401 = vrot.slane %v3399, 4
      %v3402 = vshll.u32 %v3188, 16
      %v3404 = vrot.slane %v3402, 5
      %v3405 = vor.u32 %v3401, %v3404
      %v3406 = vrot.slane %v3405, 4
      %v3408 = vshll.u32 %v3189, 16
      %v3410 = vrot.slane %v3408, 5
      %v3411 = vsel %vm308, %v3406, %v3410
      %v3412 = vshrl.u32 %v3189, 16
      %v3414 = vrot.slane %v3412, 4
      %v3415 = vor.u32 %v3414, %v3410
      %v3416 = vrot.slane %v3415, 4
      %v3418 = vshll.u32 %v3190, 16
      %v3420 = vrot.slane %v3418, 5
      %v3421 = vsel %vm308, %v3416, %v3420
      %v3423 = vshrl.u32 %v3191, 16
      %v3425 = vrot.slane %v3423, 4
      %v3426 = vshll.u32 %v3191, 16
      %v3428 = vrot.slane %v3426, 5
      %v3429 = vor.u32 %v3425, %v3428
      %v3430 = vrot.slane %v3429, 4
      %v3432 = vshll.u32 %v3192, 16
      %v3434 = vrot.slane %v3432, 5
      %v3435 = vsel %vm308, %v3430, %v3434
      %v3436 = vshrl.u32 %v3192, 16
      %v3438 = vrot.slane %v3436, 4
      %v3439 = vor.u32 %v3438, %v3434
      %v3440 = vrot.slane %v3439, 4
      %v3442 = vshll.u32 %v3193, 16
      %v3444 = vrot.slane %v3442, 5
      %v3445 = vsel %vm308, %v3440, %v3444
      %v3447 = vshrl.u32 %v3194, 16
      %v3449 = vrot.slane %v3447, 4
      %v3450 = vshll.u32 %v3194, 16
      %v3452 = vrot.slane %v3450, 5
      %v3453 = vor.u32 %v3449, %v3452
      %v3454 = vrot.slane %v3453, 4
      %v3456 = vshll.u32 %v3195, 16
      %v3458 = vrot.slane %v3456, 5
      %v3459 = vsel %vm308, %v3454, %v3458
      %v3460 = vshrl.u32 %v3195, 16
      %v3462 = vrot.slane %v3460, 4
      %v3463 = vor.u32 %v3462, %v3458
      %v3464 = vrot.slane %v3463, 4
      %v3466 = vshll.u32 %v3196, 16
      %v3468 = vrot.slane %v3466, 5
      %v3469 = vsel %vm308, %v3464, %v3468
      %3470 = vrot.lane.b32.xlu0 %v3291, 32
      %v3471 = vpop.permute.xlu0 %3470
      %3472 = vrot.lane.b32.xlu0 %v3301, 32
      %v3473 = vpop.permute.xlu0 %3472
      %3474 = vrot.lane.b32.xlu0 %v3315, 32
      %v3475 = vpop.permute.xlu0 %3474
      %3476 = vrot.lane.b32.xlu0 %v3325, 32
      %v3477 = vpop.permute.xlu0 %3476
      %3478 = vrot.lane.b32.xlu0 %v3339, 32
      %v3479 = vpop.permute.xlu0 %3478
      %3480 = vrot.lane.b32.xlu0 %v3349, 32
      %v3481 = vpop.permute.xlu0 %3480
      %3482 = vrot.lane.b32.xlu0 %v3363, 32
      %v3483 = vpop.permute.xlu0 %3482
      %3484 = vrot.lane.b32.xlu0 %v3373, 32
      %v3485 = vpop.permute.xlu0 %3484
      %3486 = vrot.lane.b32.xlu0 %v3387, 32
      %v3487 = vpop.permute.xlu0 %3486
      %3488 = vrot.lane.b32.xlu0 %v3397, 32
      %v3489 = vpop.permute.xlu0 %3488
      %3490 = vrot.lane.b32.xlu0 %v3411, 32
      %v3491 = vpop.permute.xlu0 %3490
      %3492 = vrot.lane.b32.xlu0 %v3421, 32
      %v3493 = vpop.permute.xlu0 %3492
      %3494 = vrot.lane.b32.xlu0 %v3435, 32
      %v3495 = vpop.permute.xlu0 %3494
      %3496 = vrot.lane.b32.xlu0 %v3445, 32
      %v3497 = vpop.permute.xlu0 %3496
      %3498 = vrot.lane.b32.xlu0 %v3459, 32
      %v3499 = vpop.permute.xlu0 %3498
      %3500 = vrot.lane.b32.xlu0 %v3469, 32
      %v3501 = vpop.permute.xlu0 %3500
      %vm3518 = vcmask 322816
      %3519 = vst.msk [vmem:[#allocation4] sm:$0xf] %vm3518, %v3471
      %3520 = vst.msk [vmem:[#allocation4 + $0x4] sm:$0xf] %vm3518, %v3473
      %3521 = vst.msk [vmem:[#allocation4 + $0x8] sm:$0xf] %vm3518, %v3475
      %3522 = vst.msk [vmem:[#allocation4 + $0xc] sm:$0xf] %vm3518, %v3477
      %3523 = vst.msk [vmem:[#allocation4 + $0x10] sm:$0xf] %vm3518, %v3479
      %3524 = vst.msk [vmem:[#allocation4 + $0x14] sm:$0xf] %vm3518, %v3481
      %3525 = vst.msk [vmem:[#allocation4 + $0x18] sm:$0xf] %vm3518, %v3483
      %3526 = vst.msk [vmem:[#allocation4 + $0x1c] sm:$0xf] %vm3518, %v3485
      %3527 = vst.msk [vmem:[#allocation4 + $0x20] sm:$0xf] %vm3518, %v3487
      %3528 = vst.msk [vmem:[#allocation4 + $0x24] sm:$0xf] %vm3518, %v3489
      %3529 = vst.msk [vmem:[#allocation4 + $0x28] sm:$0xf] %vm3518, %v3491
      %3530 = vst.msk [vmem:[#allocation4 + $0x2c] sm:$0xf] %vm3518, %v3493
      %3531 = vst.msk [vmem:[#allocation4 + $0x30] sm:$0xf] %vm3518, %v3495
      %3532 = vst.msk [vmem:[#allocation4 + $0x34] sm:$0xf] %vm3518, %v3497
      %3533 = vst.msk [vmem:[#allocation4 + $0x38] sm:$0xf] %vm3518, %v3499
      %3534 = vst.msk [vmem:[#allocation4 + $0x3c] sm:$0xf] %vm3518, %v3501
      %v3543 = vrot.slane %v3173, 5
      %v3544 = vrot.slane %v3543, 4
      %v3545 = vrot.slane %v3174, 5
      %v3546 = vsel %vm662, %v3544, %v3545
      %v3547 = vrot.slane %v3545, 4
      %v3548 = vrot.slane %v3175, 5
      %v3549 = vsel %vm662, %v3547, %v3548
      %v3550 = vrot.slane %v3176, 5
      %v3551 = vrot.slane %v3550, 4
      %v3552 = vrot.slane %v3177, 5
      %v3553 = vsel %vm662, %v3551, %v3552
      %v3554 = vrot.slane %v3552, 4
      %v3555 = vrot.slane %v3178, 5
      %v3556 = vsel %vm662, %v3554, %v3555
      %v3557 = vrot.slane %v3179, 5
      %v3558 = vrot.slane %v3557, 4
      %v3559 = vrot.slane %v3180, 5
      %v3560 = vsel %vm662, %v3558, %v3559
      %v3561 = vrot.slane %v3559, 4
      %v3562 = vrot.slane %v3181, 5
      %v3563 = vsel %vm662, %v3561, %v3562
      %v3564 = vrot.slane %v3182, 5
      %v3565 = vrot.slane %v3564, 4
      %v3566 = vrot.slane %v3183, 5
      %v3567 = vsel %vm662, %v3565, %v3566
      %v3568 = vrot.slane %v3566, 4
      %v3569 = vrot.slane %v3184, 5
      %v3570 = vsel %vm662, %v3568, %v3569
      %v3571 = vrot.slane %v3185, 5
      %v3572 = vrot.slane %v3571, 4
      %v3573 = vrot.slane %v3186, 5
      %v3574 = vsel %vm662, %v3572, %v3573
      %v3575 = vrot.slane %v3573, 4
      %v3576 = vrot.slane %v3187, 5
      %v3577 = vsel %vm662, %v3575, %v3576
      %v3578 = vrot.slane %v3188, 5
      %v3579 = vrot.slane %v3578, 4
      %v3580 = vrot.slane %v3189, 5
      %v3581 = vsel %vm662, %v3579, %v3580
      %v3582 = vrot.slane %v3580, 4
      %v3583 = vrot.slane %v3190, 5
      %v3584 = vsel %vm662, %v3582, %v3583
      %v3585 = vrot.slane %v3191, 5
      %v3586 = vrot.slane %v3585, 4
      %v3587 = vrot.slane %v3192, 5
      %v3588 = vsel %vm662, %v3586, %v3587
      %v3589 = vrot.slane %v3587, 4
      %v3590 = vrot.slane %v3193, 5
      %v3591 = vsel %vm662, %v3589, %v3590
      %v3592 = vrot.slane %v3194, 5
      %v3593 = vrot.slane %v3592, 4
      %v3594 = vrot.slane %v3195, 5
      %v3595 = vsel %vm662, %v3593, %v3594
      %v3596 = vrot.slane %v3594, 4
      %v3597 = vrot.slane %v3196, 5
      %v3598 = vsel %vm662, %v3596, %v3597
      %3599 = vrot.lane.b32.xlu0 %v3546, 40
      %v3600 = vpop.permute.xlu0 %3599
      %3601 = vrot.lane.b32.xlu0 %v3549, 40
      %v3602 = vpop.permute.xlu0 %3601
      %3603 = vrot.lane.b32.xlu0 %v3553, 40
      %v3604 = vpop.permute.xlu0 %3603
      %3605 = vrot.lane.b32.xlu0 %v3556, 40
      %v3606 = vpop.permute.xlu0 %3605
      %3607 = vrot.lane.b32.xlu0 %v3560, 40
      %v3608 = vpop.permute.xlu0 %3607
      %3609 = vrot.lane.b32.xlu0 %v3563, 40
      %v3610 = vpop.permute.xlu0 %3609
      %3611 = vrot.lane.b32.xlu0 %v3567, 40
      %v3612 = vpop.permute.xlu0 %3611
      %3613 = vrot.lane.b32.xlu0 %v3570, 40
      %v3614 = vpop.permute.xlu0 %3613
      %3615 = vrot.lane.b32.xlu0 %v3574, 40
      %v3616 = vpop.permute.xlu0 %3615
      %3617 = vrot.lane.b32.xlu0 %v3577, 40
      %v3618 = vpop.permute.xlu0 %3617
      %3619 = vrot.lane.b32.xlu0 %v3581, 40
      %v3620 = vpop.permute.xlu0 %3619
      %3621 = vrot.lane.b32.xlu0 %v3584, 40
      %v3622 = vpop.permute.xlu0 %3621
      %3623 = vrot.lane.b32.xlu0 %v3588, 40
      %v3624 = vpop.permute.xlu0 %3623
      %3625 = vrot.lane.b32.xlu0 %v3591, 40
      %v3626 = vpop.permute.xlu0 %3625
      %3627 = vrot.lane.b32.xlu0 %v3595, 40
      %v3628 = vpop.permute.xlu0 %3627
      %3629 = vrot.lane.b32.xlu0 %v3598, 40
      %v3630 = vpop.permute.xlu0 %3629
      %vm3647 = vcmask 388416
      %3648 = vst.msk [vmem:[#allocation4] sm:$0xf] %vm3647, %v3600
      %3649 = vst.msk [vmem:[#allocation4 + $0x4] sm:$0xf] %vm3647, %v3602
      %3650 = vst.msk [vmem:[#allocation4 + $0x8] sm:$0xf] %vm3647, %v3604
      %3651 = vst.msk [vmem:[#allocation4 + $0xc] sm:$0xf] %vm3647, %v3606
      %3652 = vst.msk [vmem:[#allocation4 + $0x10] sm:$0xf] %vm3647, %v3608
      %3653 = vst.msk [vmem:[#allocation4 + $0x14] sm:$0xf] %vm3647, %v3610
      %3654 = vst.msk [vmem:[#allocation4 + $0x18] sm:$0xf] %vm3647, %v3612
      %3655 = vst.msk [vmem:[#allocation4 + $0x1c] sm:$0xf] %vm3647, %v3614
      %3656 = vst.msk [vmem:[#allocation4 + $0x20] sm:$0xf] %vm3647, %v3616
      %3657 = vst.msk [vmem:[#allocation4 + $0x24] sm:$0xf] %vm3647, %v3618
      %3658 = vst.msk [vmem:[#allocation4 + $0x28] sm:$0xf] %vm3647, %v3620
      %3659 = vst.msk [vmem:[#allocation4 + $0x2c] sm:$0xf] %vm3647, %v3622
      %3660 = vst.msk [vmem:[#allocation4 + $0x30] sm:$0xf] %vm3647, %v3624
      %3661 = vst.msk [vmem:[#allocation4 + $0x34] sm:$0xf] %vm3647, %v3626
      %3662 = vst.msk [vmem:[#allocation4 + $0x38] sm:$0xf] %vm3647, %v3628
      %3663 = vst.msk [vmem:[#allocation4 + $0x3c] sm:$0xf] %vm3647, %v3630
      %s3664 = scalar_lea.vmem [#allocation3], 24
      %v3665 = vld [vmem:[%s3664] sm:$0xf]
      %v3666 = vld [vmem:[%s3664 + $0x4] sm:$0xf]
      %v3667 = vld [vmem:[%s3664 + $0x8] sm:$0x1]
      %v3668 = vld [vmem:[%s3664 + $0xc] sm:$0xf]
      %v3669 = vld [vmem:[%s3664 + $0x10] sm:$0xf]
      %v3670 = vld [vmem:[%s3664 + $0x14] sm:$0x1]
      %v3671 = vld [vmem:[%s3664 + $0x18] sm:$0xf]
      %v3672 = vld [vmem:[%s3664 + $0x1c] sm:$0xf]
      %v3673 = vld [vmem:[%s3664 + $0x20] sm:$0x1]
      %v3674 = vld [vmem:[%s3664 + $0x24] sm:$0xf]
      %v3675 = vld [vmem:[%s3664 + $0x28] sm:$0xf]
      %v3676 = vld [vmem:[%s3664 + $0x2c] sm:$0x1]
      %v3677 = vld [vmem:[%s3664 + $0x30] sm:$0xf]
      %v3678 = vld [vmem:[%s3664 + $0x34] sm:$0xf]
      %v3679 = vld [vmem:[%s3664 + $0x38] sm:$0x1]
      %v3680 = vld [vmem:[%s3664 + $0x3c] sm:$0xf]
      %v3681 = vld [vmem:[%s3664 + $0x40] sm:$0xf]
      %v3682 = vld [vmem:[%s3664 + $0x44] sm:$0x1]
      %v3683 = vld [vmem:[%s3664 + $0x48] sm:$0xf]
      %v3684 = vld [vmem:[%s3664 + $0x4c] sm:$0xf]
      %v3685 = vld [vmem:[%s3664 + $0x50] sm:$0x1]
      %v3686 = vld [vmem:[%s3664 + $0x54] sm:$0xf]
      %v3687 = vld [vmem:[%s3664 + $0x58] sm:$0xf]
      %v3688 = vld [vmem:[%s3664 + $0x5c] sm:$0x1]
      %3705 = vrot.lane.b32.xlu0 %v3665, 48
      %v3706 = vpop.permute.xlu0 %3705
      %3707 = vrot.lane.b32.xlu0 %v3666, 48
      %v3708 = vpop.permute.xlu0 %3707
      %3709 = vrot.lane.b32.xlu0 %v3668, 48
      %v3710 = vpop.permute.xlu0 %3709
      %3711 = vrot.lane.b32.xlu0 %v3669, 48
      %v3712 = vpop.permute.xlu0 %3711
      %3713 = vrot.lane.b32.xlu0 %v3671, 48
      %v3714 = vpop.permute.xlu0 %3713
      %3715 = vrot.lane.b32.xlu0 %v3672, 48
      %v3716 = vpop.permute.xlu0 %3715
      %3717 = vrot.lane.b32.xlu0 %v3674, 48
      %v3718 = vpop.permute.xlu0 %3717
      %3719 = vrot.lane.b32.xlu0 %v3675, 48
      %v3720 = vpop.permute.xlu0 %3719
      %3721 = vrot.lane.b32.xlu0 %v3677, 48
      %v3722 = vpop.permute.xlu0 %3721
      %3723 = vrot.lane.b32.xlu0 %v3678, 48
      %v3724 = vpop.permute.xlu0 %3723
      %3725 = vrot.lane.b32.xlu0 %v3680, 48
      %v3726 = vpop.permute.xlu0 %3725
      %3727 = vrot.lane.b32.xlu0 %v3681, 48
      %v3728 = vpop.permute.xlu0 %3727
      %3729 = vrot.lane.b32.xlu0 %v3683, 48
      %v3730 = vpop.permute.xlu0 %3729
      %3731 = vrot.lane.b32.xlu0 %v3684, 48
      %v3732 = vpop.permute.xlu0 %3731
      %3733 = vrot.lane.b32.xlu0 %v3686, 48
      %v3734 = vpop.permute.xlu0 %3733
      %3735 = vrot.lane.b32.xlu0 %v3687, 48
      %v3736 = vpop.permute.xlu0 %3735
      %vm3753 = vcmask 454016
      %3754 = vst.msk [vmem:[#allocation4] sm:$0xf] %vm3753, %v3706
      %3755 = vst.msk [vmem:[#allocation4 + $0x4] sm:$0xf] %vm3753, %v3708
      %3756 = vst.msk [vmem:[#allocation4 + $0x8] sm:$0xf] %vm3753, %v3710
      %3757 = vst.msk [vmem:[#allocation4 + $0xc] sm:$0xf] %vm3753, %v3712
      %3758 = vst.msk [vmem:[#allocation4 + $0x10] sm:$0xf] %vm3753, %v3714
      %3759 = vst.msk [vmem:[#allocation4 + $0x14] sm:$0xf] %vm3753, %v3716
      %3760 = vst.msk [vmem:[#allocation4 + $0x18] sm:$0xf] %vm3753, %v3718
      %3761 = vst.msk [vmem:[#allocation4 + $0x1c] sm:$0xf] %vm3753, %v3720
      %3762 = vst.msk [vmem:[#allocation4 + $0x20] sm:$0xf] %vm3753, %v3722
      %3763 = vst.msk [vmem:[#allocation4 + $0x24] sm:$0xf] %vm3753, %v3724
      %3764 = vst.msk [vmem:[#allocation4 + $0x28] sm:$0xf] %vm3753, %v3726
      %3765 = vst.msk [vmem:[#allocation4 + $0x2c] sm:$0xf] %vm3753, %v3728
      %3766 = vst.msk [vmem:[#allocation4 + $0x30] sm:$0xf] %vm3753, %v3730
      %3767 = vst.msk [vmem:[#allocation4 + $0x34] sm:$0xf] %vm3753, %v3732
      %3768 = vst.msk [vmem:[#allocation4 + $0x38] sm:$0xf] %vm3753, %v3734
      %3769 = vst.msk [vmem:[#allocation4 + $0x3c] sm:$0xf] %vm3753, %v3736
      %v3771 = vshrl.u32 %v3665, 16
      %v3773 = vrot.slane %v3771, 4
      %v3774 = vshll.u32 %v3665, 16
      %v3776 = vrot.slane %v3774, 5
      %v3777 = vor.u32 %v3773, %v3776
      %v3778 = vrot.slane %v3777, 4
      %v3780 = vshll.u32 %v3666, 16
      %v3782 = vrot.slane %v3780, 5
      %v3783 = vsel %vm308, %v3778, %v3782
      %v3784 = vshrl.u32 %v3666, 16
      %v3786 = vrot.slane %v3784, 4
      %v3787 = vor.u32 %v3786, %v3782
      %v3788 = vrot.slane %v3787, 4
      %v3790 = vshll.u32 %v3667, 16
      %v3792 = vrot.slane %v3790, 5
      %v3793 = vsel %vm308, %v3788, %v3792
      %v3795 = vshrl.u32 %v3668, 16
      %v3797 = vrot.slane %v3795, 4
      %v3798 = vshll.u32 %v3668, 16
      %v3800 = vrot.slane %v3798, 5
      %v3801 = vor.u32 %v3797, %v3800
      %v3802 = vrot.slane %v3801, 4
      %v3804 = vshll.u32 %v3669, 16
      %v3806 = vrot.slane %v3804, 5
      %v3807 = vsel %vm308, %v3802, %v3806
      %v3808 = vshrl.u32 %v3669, 16
      %v3810 = vrot.slane %v3808, 4
      %v3811 = vor.u32 %v3810, %v3806
      %v3812 = vrot.slane %v3811, 4
      %v3814 = vshll.u32 %v3670, 16
      %v3816 = vrot.slane %v3814, 5
      %v3817 = vsel %vm308, %v3812, %v3816
      %v3819 = vshrl.u32 %v3671, 16
      %v3821 = vrot.slane %v3819, 4
      %v3822 = vshll.u32 %v3671, 16
      %v3824 = vrot.slane %v3822, 5
      %v3825 = vor.u32 %v3821, %v3824
      %v3826 = vrot.slane %v3825, 4
      %v3828 = vshll.u32 %v3672, 16
      %v3830 = vrot.slane %v3828, 5
      %v3831 = vsel %vm308, %v3826, %v3830
      %v3832 = vshrl.u32 %v3672, 16
      %v3834 = vrot.slane %v3832, 4
      %v3835 = vor.u32 %v3834, %v3830
      %v3836 = vrot.slane %v3835, 4
      %v3838 = vshll.u32 %v3673, 16
      %v3840 = vrot.slane %v3838, 5
      %v3841 = vsel %vm308, %v3836, %v3840
      %v3843 = vshrl.u32 %v3674, 16
      %v3845 = vrot.slane %v3843, 4
      %v3846 = vshll.u32 %v3674, 16
      %v3848 = vrot.slane %v3846, 5
      %v3849 = vor.u32 %v3845, %v3848
      %v3850 = vrot.slane %v3849, 4
      %v3852 = vshll.u32 %v3675, 16
      %v3854 = vrot.slane %v3852, 5
      %v3855 = vsel %vm308, %v3850, %v3854
      %v3856 = vshrl.u32 %v3675, 16
      %v3858 = vrot.slane %v3856, 4
      %v3859 = vor.u32 %v3858, %v3854
      %v3860 = vrot.slane %v3859, 4
      %v3862 = vshll.u32 %v3676, 16
      %v3864 = vrot.slane %v3862, 5
      %v3865 = vsel %vm308, %v3860, %v3864
      %v3867 = vshrl.u32 %v3677, 16
      %v3869 = vrot.slane %v3867, 4
      %v3870 = vshll.u32 %v3677, 16
      %v3872 = vrot.slane %v3870, 5
      %v3873 = vor.u32 %v3869, %v3872
      %v3874 = vrot.slane %v3873, 4
      %v3876 = vshll.u32 %v3678, 16
      %v3878 = vrot.slane %v3876, 5
      %v3879 = vsel %vm308, %v3874, %v3878
      %v3880 = vshrl.u32 %v3678, 16
      %v3882 = vrot.slane %v3880, 4
      %v3883 = vor.u32 %v3882, %v3878
      %v3884 = vrot.slane %v3883, 4
      %v3886 = vshll.u32 %v3679, 16
      %v3888 = vrot.slane %v3886, 5
      %v3889 = vsel %vm308, %v3884, %v3888
      %v3891 = vshrl.u32 %v3680, 16
      %v3893 = vrot.slane %v3891, 4
      %v3894 = vshll.u32 %v3680, 16
      %v3896 = vrot.slane %v3894, 5
      %v3897 = vor.u32 %v3893, %v3896
      %v3898 = vrot.slane %v3897, 4
      %v3900 = vshll.u32 %v3681, 16
      %v3902 = vrot.slane %v3900, 5
      %v3903 = vsel %vm308, %v3898, %v3902
      %v3904 = vshrl.u32 %v3681, 16
      %v3906 = vrot.slane %v3904, 4
      %v3907 = vor.u32 %v3906, %v3902
      %v3908 = vrot.slane %v3907, 4
      %v3910 = vshll.u32 %v3682, 16
      %v3912 = vrot.slane %v3910, 5
      %v3913 = vsel %vm308, %v3908, %v3912
      %v3915 = vshrl.u32 %v3683, 16
      %v3917 = vrot.slane %v3915, 4
      %v3918 = vshll.u32 %v3683, 16
      %v3920 = vrot.slane %v3918, 5
      %v3921 = vor.u32 %v3917, %v3920
      %v3922 = vrot.slane %v3921, 4
      %v3924 = vshll.u32 %v3684, 16
      %v3926 = vrot.slane %v3924, 5
      %v3927 = vsel %vm308, %v3922, %v3926
      %v3928 = vshrl.u32 %v3684, 16
      %v3930 = vrot.slane %v3928, 4
      %v3931 = vor.u32 %v3930, %v3926
      %v3932 = vrot.slane %v3931, 4
      %v3934 = vshll.u32 %v3685, 16
      %v3936 = vrot.slane %v3934, 5
      %v3937 = vsel %vm308, %v3932, %v3936
      %v3939 = vshrl.u32 %v3686, 16
      %v3941 = vrot.slane %v3939, 4
      %v3942 = vshll.u32 %v3686, 16
      %v3944 = vrot.slane %v3942, 5
      %v3945 = vor.u32 %v3941, %v3944
      %v3946 = vrot.slane %v3945, 4
      %v3948 = vshll.u32 %v3687, 16
      %v3950 = vrot.slane %v3948, 5
      %v3951 = vsel %vm308, %v3946, %v3950
      %v3952 = vshrl.u32 %v3687, 16
      %v3954 = vrot.slane %v3952, 4
      %v3955 = vor.u32 %v3954, %v3950
      %v3956 = vrot.slane %v3955, 4
      %v3958 = vshll.u32 %v3688, 16
      %v3960 = vrot.slane %v3958, 5
      %v3961 = vsel %vm308, %v3956, %v3960
      %3962 = vrot.lane.b32.xlu0 %v3783, 56
      %v3963 = vpop.permute.xlu0 %3962
      %3964 = vrot.lane.b32.xlu0 %v3793, 56
      %v3965 = vpop.permute.xlu0 %3964
      %3966 = vrot.lane.b32.xlu0 %v3807, 56
      %v3967 = vpop.permute.xlu0 %3966
      %3968 = vrot.lane.b32.xlu0 %v3817, 56
      %v3969 = vpop.permute.xlu0 %3968
      %3970 = vrot.lane.b32.xlu0 %v3831, 56
      %v3971 = vpop.permute.xlu0 %3970
      %3972 = vrot.lane.b32.xlu0 %v3841, 56
      %v3973 = vpop.permute.xlu0 %3972
      %3974 = vrot.lane.b32.xlu0 %v3855, 56
      %v3975 = vpop.permute.xlu0 %3974
      %3976 = vrot.lane.b32.xlu0 %v3865, 56
      %v3977 = vpop.permute.xlu0 %3976
      %3978 = vrot.lane.b32.xlu0 %v3879, 56
      %v3979 = vpop.permute.xlu0 %3978
      %3980 = vrot.lane.b32.xlu0 %v3889, 56
      %v3981 = vpop.permute.xlu0 %3980
      %3982 = vrot.lane.b32.xlu0 %v3903, 56
      %v3983 = vpop.permute.xlu0 %3982
      %3984 = vrot.lane.b32.xlu0 %v3913, 56
      %v3985 = vpop.permute.xlu0 %3984
      %3986 = vrot.lane.b32.xlu0 %v3927, 56
      %v3987 = vpop.permute.xlu0 %3986
      %3988 = vrot.lane.b32.xlu0 %v3937, 56
      %v3989 = vpop.permute.xlu0 %3988
      %3990 = vrot.lane.b32.xlu0 %v3951, 56
      %v3991 = vpop.permute.xlu0 %3990
      %3992 = vrot.lane.b32.xlu0 %v3961, 56
      %v3993 = vpop.permute.xlu0 %3992
      %vm4010 = vcmask 519616
      %4011 = vst.msk [vmem:[#allocation4] sm:$0xf] %vm4010, %v3963
      %4012 = vst.msk [vmem:[#allocation4 + $0x4] sm:$0xf] %vm4010, %v3965
      %4013 = vst.msk [vmem:[#allocation4 + $0x8] sm:$0xf] %vm4010, %v3967
      %4014 = vst.msk [vmem:[#allocation4 + $0xc] sm:$0xf] %vm4010, %v3969
      %4015 = vst.msk [vmem:[#allocation4 + $0x10] sm:$0xf] %vm4010, %v3971
      %4016 = vst.msk [vmem:[#allocation4 + $0x14] sm:$0xf] %vm4010, %v3973
      %4017 = vst.msk [vmem:[#allocation4 + $0x18] sm:$0xf] %vm4010, %v3975
      %4018 = vst.msk [vmem:[#allocation4 + $0x1c] sm:$0xf] %vm4010, %v3977
      %4019 = vst.msk [vmem:[#allocation4 + $0x20] sm:$0xf] %vm4010, %v3979
      %4020 = vst.msk [vmem:[#allocation4 + $0x24] sm:$0xf] %vm4010, %v3981
      %4021 = vst.msk [vmem:[#allocation4 + $0x28] sm:$0xf] %vm4010, %v3983
      %4022 = vst.msk [vmem:[#allocation4 + $0x2c] sm:$0xf] %vm4010, %v3985
      %4023 = vst.msk [vmem:[#allocation4 + $0x30] sm:$0xf] %vm4010, %v3987
      %4024 = vst.msk [vmem:[#allocation4 + $0x34] sm:$0xf] %vm4010, %v3989
      %4025 = vst.msk [vmem:[#allocation4 + $0x38] sm:$0xf] %vm4010, %v3991
      %4026 = vst.msk [vmem:[#allocation4 + $0x3c] sm:$0xf] %vm4010, %v3993
      %v4035 = vrot.slane %v3665, 5
      %v4036 = vrot.slane %v4035, 4
      %v4037 = vrot.slane %v3666, 5
      %v4038 = vsel %vm662, %v4036, %v4037
      %v4039 = vrot.slane %v4037, 4
      %v4040 = vrot.slane %v3667, 5
      %v4041 = vsel %vm662, %v4039, %v4040
      %v4042 = vrot.slane %v3668, 5
      %v4043 = vrot.slane %v4042, 4
      %v4044 = vrot.slane %v3669, 5
      %v4045 = vsel %vm662, %v4043, %v4044
      %v4046 = vrot.slane %v4044, 4
      %v4047 = vrot.slane %v3670, 5
      %v4048 = vsel %vm662, %v4046, %v4047
      %v4049 = vrot.slane %v3671, 5
      %v4050 = vrot.slane %v4049, 4
      %v4051 = vrot.slane %v3672, 5
      %v4052 = vsel %vm662, %v4050, %v4051
      %v4053 = vrot.slane %v4051, 4
      %v4054 = vrot.slane %v3673, 5
      %v4055 = vsel %vm662, %v4053, %v4054
      %v4056 = vrot.slane %v3674, 5
      %v4057 = vrot.slane %v4056, 4
      %v4058 = vrot.slane %v3675, 5
      %v4059 = vsel %vm662, %v4057, %v4058
      %v4060 = vrot.slane %v4058, 4
      %v4061 = vrot.slane %v3676, 5
      %v4062 = vsel %vm662, %v4060, %v4061
      %v4063 = vrot.slane %v3677, 5
      %v4064 = vrot.slane %v4063, 4
      %v4065 = vrot.slane %v3678, 5
      %v4066 = vsel %vm662, %v4064, %v4065
      %v4067 = vrot.slane %v4065, 4
      %v4068 = vrot.slane %v3679, 5
      %v4069 = vsel %vm662, %v4067, %v4068
      %v4070 = vrot.slane %v3680, 5
      %v4071 = vrot.slane %v4070, 4
      %v4072 = vrot.slane %v3681, 5
      %v4073 = vsel %vm662, %v4071, %v4072
      %v4074 = vrot.slane %v4072, 4
      %v4075 = vrot.slane %v3682, 5
      %v4076 = vsel %vm662, %v4074, %v4075
      %v4077 = vrot.slane %v3683, 5
      %v4078 = vrot.slane %v4077, 4
      %v4079 = vrot.slane %v3684, 5
      %v4080 = vsel %vm662, %v4078, %v4079
      %v4081 = vrot.slane %v4079, 4
      %v4082 = vrot.slane %v3685, 5
      %v4083 = vsel %vm662, %v4081, %v4082
      %v4084 = vrot.slane %v3686, 5
      %v4085 = vrot.slane %v4084, 4
      %v4086 = vrot.slane %v3687, 5
      %v4087 = vsel %vm662, %v4085, %v4086
      %v4088 = vrot.slane %v4086, 4
      %v4089 = vrot.slane %v3688, 5
      %v4090 = vsel %vm662, %v4088, %v4089
      %4091 = vrot.lane.b32.xlu0 %v4038, 64
      %v4092 = vpop.permute.xlu0 %4091
      %4093 = vrot.lane.b32.xlu0 %v4041, 64
      %v4094 = vpop.permute.xlu0 %4093
      %4095 = vrot.lane.b32.xlu0 %v4045, 64
      %v4096 = vpop.permute.xlu0 %4095
      %4097 = vrot.lane.b32.xlu0 %v4048, 64
      %v4098 = vpop.permute.xlu0 %4097
      %4099 = vrot.lane.b32.xlu0 %v4052, 64
      %v4100 = vpop.permute.xlu0 %4099
      %4101 = vrot.lane.b32.xlu0 %v4055, 64
      %v4102 = vpop.permute.xlu0 %4101
      %4103 = vrot.lane.b32.xlu0 %v4059, 64
      %v4104 = vpop.permute.xlu0 %4103
      %4105 = vrot.lane.b32.xlu0 %v4062, 64
      %v4106 = vpop.permute.xlu0 %4105
      %4107 = vrot.lane.b32.xlu0 %v4066, 64
      %v4108 = vpop.permute.xlu0 %4107
      %4109 = vrot.lane.b32.xlu0 %v4069, 64
      %v4110 = vpop.permute.xlu0 %4109
      %4111 = vrot.lane.b32.xlu0 %v4073, 64
      %v4112 = vpop.permute.xlu0 %4111
      %4113 = vrot.lane.b32.xlu0 %v4076, 64
      %v4114 = vpop.permute.xlu0 %4113
      %4115 = vrot.lane.b32.xlu0 %v4080, 64
      %v4116 = vpop.permute.xlu0 %4115
      %4117 = vrot.lane.b32.xlu0 %v4083, 64
      %v4118 = vpop.permute.xlu0 %4117
      %4119 = vrot.lane.b32.xlu0 %v4087, 64
      %v4120 = vpop.permute.xlu0 %4119
      %4121 = vrot.lane.b32.xlu0 %v4090, 64
      %v4122 = vpop.permute.xlu0 %4121
      %vm4139 = vcmask 585216
      %4140 = vst.msk [vmem:[#allocation4] sm:$0xf] %vm4139, %v4092
      %4141 = vst.msk [vmem:[#allocation4 + $0x4] sm:$0xf] %vm4139, %v4094
      %4142 = vst.msk [vmem:[#allocation4 + $0x8] sm:$0xf] %vm4139, %v4096
      %4143 = vst.msk [vmem:[#allocation4 + $0xc] sm:$0xf] %vm4139, %v4098
      %4144 = vst.msk [vmem:[#allocation4 + $0x10] sm:$0xf] %vm4139, %v4100
      %4145 = vst.msk [vmem:[#allocation4 + $0x14] sm:$0xf] %vm4139, %v4102
      %4146 = vst.msk [vmem:[#allocation4 + $0x18] sm:$0xf] %vm4139, %v4104
      %4147 = vst.msk [vmem:[#allocation4 + $0x1c] sm:$0xf] %vm4139, %v4106
      %4148 = vst.msk [vmem:[#allocation4 + $0x20] sm:$0xf] %vm4139, %v4108
      %4149 = vst.msk [vmem:[#allocation4 + $0x24] sm:$0xf] %vm4139, %v4110
      %4150 = vst.msk [vmem:[#allocation4 + $0x28] sm:$0xf] %vm4139, %v4112
      %4151 = vst.msk [vmem:[#allocation4 + $0x2c] sm:$0xf] %vm4139, %v4114
      %4152 = vst.msk [vmem:[#allocation4 + $0x30] sm:$0xf] %vm4139, %v4116
      %4153 = vst.msk [vmem:[#allocation4 + $0x34] sm:$0xf] %vm4139, %v4118
      %4154 = vst.msk [vmem:[#allocation4 + $0x38] sm:$0xf] %vm4139, %v4120
      %4155 = vst.msk [vmem:[#allocation4 + $0x3c] sm:$0xf] %vm4139, %v4122
      %v4156 = vld [vmem:[#allocation4] sm:$0xf]
      %v4157 = vld [vmem:[#allocation4 + $0x4] sm:$0xf]
      %v4158 = vld [vmem:[#allocation4 + $0x8] sm:$0xf]
      %v4159 = vld [vmem:[#allocation4 + $0xc] sm:$0xf]
      %v4160 = vld [vmem:[#allocation4 + $0x10] sm:$0xf]
      %v4161 = vld [vmem:[#allocation4 + $0x14] sm:$0xf]
      %v4162 = vld [vmem:[#allocation4 + $0x18] sm:$0xf]
      %v4163 = vld [vmem:[#allocation4 + $0x1c] sm:$0xf]
      %v4164 = vld [vmem:[#allocation4 + $0x20] sm:$0xf]
      %v4165 = vld [vmem:[#allocation4 + $0x24] sm:$0xf]
      %v4166 = vld [vmem:[#allocation4 + $0x28] sm:$0xf]
      %v4167 = vld [vmem:[#allocation4 + $0x2c] sm:$0xf]
      %v4168 = vld [vmem:[#allocation4 + $0x30] sm:$0xf]
      %v4169 = vld [vmem:[#allocation4 + $0x34] sm:$0xf]
      %v4170 = vld [vmem:[#allocation4 + $0x38] sm:$0xf]
      %v4171 = vld [vmem:[#allocation4 + $0x3c] sm:$0xf]
      %v4172 = vld [vmem:[%s3] sm:$0xf]
      %v4173 = vld [vmem:[%s3 + $0x4] sm:$0xf]
      %v4174 = vld [vmem:[%s3 + $0x8] sm:$0xf]
      %v4175 = vld [vmem:[%s3 + $0xc] sm:$0xf]
      %v4176 = vld [vmem:[%s3 + $0x10] sm:$0xf]
      %v4177 = vld [vmem:[%s3 + $0x14] sm:$0xf]
      %v4178 = vld [vmem:[%s3 + $0x18] sm:$0xf]
      %v4179 = vld [vmem:[%s3 + $0x1c] sm:$0xf]
      %v4180 = vld [vmem:[%s3 + $0x20] sm:$0xf]
      %v4181 = vld [vmem:[%s4] sm:$0x1]
      %v4183 = vlaneseq
      %v4184 = vshrl.u32 %v4183, 7
      %v4185 = vsub.s32 0, %v4184
      %v4186 = vrot.slane %v4181, %v4185
      %v4204 = vunpack.c.l.b16 %v4156
      %v4205 = vunpack.c.l.b16 %v4157
      %v4206 = vunpack.c.l.b16 %v4158
      %v4207 = vunpack.c.l.b16 %v4159
      %v4208 = vunpack.c.l.b16 %v4160
      %v4209 = vunpack.c.l.b16 %v4161
      %v4210 = vunpack.c.l.b16 %v4162
      %v4211 = vunpack.c.l.b16 %v4163
      %v4212 = vunpack.c.l.b16 %v4164
      %v4213 = vunpack.c.l.b16 %v4165
      %v4214 = vunpack.c.l.b16 %v4166
      %v4215 = vunpack.c.l.b16 %v4167
      %v4216 = vunpack.c.l.b16 %v4168
      %v4217 = vunpack.c.l.b16 %v4169
      %v4218 = vunpack.c.l.b16 %v4170
      %v4219 = vunpack.c.l.b16 %v4171
      %v4220 = vpack.c.b16 %v4205, %v4204
      %v4221 = vpack.c.b16 %v4207, %v4206
      %v4222 = vpack.c.b16 %v4209, %v4208
      %v4223 = vpack.c.b16 %v4211, %v4210
      %v4224 = vpack.c.b16 %v4213, %v4212
      %v4225 = vpack.c.b16 %v4215, %v4214
      %v4226 = vpack.c.b16 %v4217, %v4216
      %v4227 = vpack.c.b16 %v4219, %v4218
      %v4237 = vunpack.c.l.b16 %v4172
      %v4238 = vunpack.c.l.b16 %v4173
      %v4239 = vunpack.c.l.b16 %v4174
      %v4240 = vunpack.c.l.b16 %v4175
      %v4241 = vunpack.c.l.b16 %v4176
      %v4242 = vunpack.c.l.b16 %v4177
      %v4243 = vunpack.c.l.b16 %v4178
      %v4244 = vunpack.c.l.b16 %v4179
      %v4245 = vunpack.c.l.b16 %v4180
      %v4246 = vpack.c.b16 %v4238, %v4237
      %v4247 = vpack.c.b16 %v4240, %v4239
      %v4248 = vpack.c.b16 %v4242, %v4241
      %v4249 = vpack.c.b16 %v4244, %v4243
      %v4250 = vpack.c.b16 %v4245, %v4245
      %vm4255 = vcmask 588800
      %v4257 = vsel %vm4255, %v4220, 0
      %v4260 = vsel %vm4255, %v4221, 0
      %v4263 = vsel %vm4255, %v4222, 0
      %v4266 = vsel %vm4255, %v4223, 0
      %v4269 = vsel %vm4255, %v4224, 0
      %v4272 = vsel %vm4255, %v4225, 0
      %v4275 = vsel %vm4255, %v4226, 0
      %v4278 = vsel %vm4255, %v4227, 0
      %vm4280 = vcmask 1043456
      %v4282 = vsel %vm4280, %v4250, 0
      %4284 = vmatprep.subr.bf16.mxu0 0
      %4285 = vmatpush1.bf16.msra.mxu0 0
      %4286 = vmatprep.subr.bf16.mxu0 0
      %4287 = vmatpush1.bf16.msra.mxu0 0
      %4288 = vmatprep.subr.bf16.mxu0 0
      %4289 = vmatpush1.bf16.msra.mxu0 0
      %4290 = vmatprep.subr.bf16.mxu0 0
      %4291 = vmatpush1.bf16.msra.mxu0 %v4282
      %4292 = vmatprep.subr.bf16.mxu0 0
      %4293 = vmatpush1.bf16.msra.mxu0 %v4249
      %4294 = vmatprep.subr.bf16.mxu0 0
      %4295 = vmatpush1.bf16.msra.mxu0 %v4248
      %4296 = vmatprep.subr.bf16.mxu0 0
      %4297 = vmatpush1.bf16.msra.mxu0 %v4247
      %4298 = vmatprep.subr.bf16.mxu0 0
      %4299 = vmatpush1.bf16.msra.mxu0 %v4246
      %4300 = vmatprep.subr.bf16.mxu0 0
      %4301 = vmatpush2.bf16.msra.mxu0 0
      %4302 = vmatprep.subr.bf16.mxu0 0
      %4303 = vmatpush2.bf16.msra.mxu0 0
      %4304 = vmatprep.subr.bf16.mxu0 0
      %4305 = vmatpush2.bf16.msra.mxu0 0
      %4306 = vmatprep.subr.bf16.mxu0 0
      %4307 = vmatpush2.bf16.msra.mxu0 0
      %4308 = vmatprep.subr.bf16.mxu0 0
      %4309 = vmatpush2.bf16.msra.mxu0 0
      %4310 = vmatprep.subr.bf16.mxu0 0
      %4311 = vmatpush2.bf16.msra.mxu0 0
      %4312 = vmatprep.subr.bf16.mxu0 0
      %4313 = vmatpush2.bf16.msra.mxu0 0
      %4314 = vmatprep.subr.bf16.mxu0 0
      %4315 = vmatpush2.bf16.msra.mxu0 0
      %4316 = vmatprep.mubr.bf16.mxu0 0
      %4317 = vmatmul.mubr.bf16.gmra.mxu0 %v4257
      %v4318 = vpop.f32.mrf.mxu0
      %v4319 = vadd.f32 %v4186, %v4318
      %v4320 = vpop.f32.mrf.mxu0
      %v4321 = vpop.f32.mrf.mxu0
      %v4322 = vadd.f32 %v4186, %v4321
      %v4323 = vpop.f32.mrf.mxu0
      %4324 = vmatprep.mubr.bf16.mxu0 0
      %4325 = vmatmul.mubr.bf16.gmra.mxu0 %v4260
      %v4326 = vpop.f32.mrf.mxu0
      %v4327 = vadd.f32 %v4186, %v4326
      %v4328 = vpop.f32.mrf.mxu0
      %v4329 = vpop.f32.mrf.mxu0
      %v4330 = vadd.f32 %v4186, %v4329
      %v4331 = vpop.f32.mrf.mxu0
      %4332 = vmatprep.mubr.bf16.mxu0 0
      %4333 = vmatmul.mubr.bf16.gmra.mxu0 %v4263
      %v4334 = vpop.f32.mrf.mxu0
      %v4335 = vadd.f32 %v4186, %v4334
      %v4336 = vpop.f32.mrf.mxu0
      %v4337 = vpop.f32.mrf.mxu0
      %v4338 = vadd.f32 %v4186, %v4337
      %v4339 = vpop.f32.mrf.mxu0
      %4340 = vmatprep.mubr.bf16.mxu0 0
      %4341 = vmatmul.mubr.bf16.gmra.mxu0 %v4266
      %v4342 = vpop.f32.mrf.mxu0
      %v4343 = vadd.f32 %v4186, %v4342
      %v4344 = vpop.f32.mrf.mxu0
      %v4345 = vpop.f32.mrf.mxu0
      %v4346 = vadd.f32 %v4186, %v4345
      %v4347 = vpop.f32.mrf.mxu0
      %4348 = vmatprep.mubr.bf16.mxu0 0
      %4349 = vmatmul.mubr.bf16.gmra.mxu0 %v4269
      %v4350 = vpop.f32.mrf.mxu0
      %v4351 = vadd.f32 %v4186, %v4350
      %v4352 = vpop.f32.mrf.mxu0
      %v4353 = vpop.f32.mrf.mxu0
      %v4354 = vadd.f32 %v4186, %v4353
      %v4355 = vpop.f32.mrf.mxu0
      %4356 = vmatprep.mubr.bf16.mxu0 0
      %4357 = vmatmul.mubr.bf16.gmra.mxu0 %v4272
      %v4358 = vpop.f32.mrf.mxu0
      %v4359 = vadd.f32 %v4186, %v4358
      %v4360 = vpop.f32.mrf.mxu0
      %v4361 = vpop.f32.mrf.mxu0
      %v4362 = vadd.f32 %v4186, %v4361
      %v4363 = vpop.f32.mrf.mxu0
      %4364 = vmatprep.mubr.bf16.mxu0 0
      %4365 = vmatmul.mubr.bf16.gmra.mxu0 %v4275
      %v4366 = vpop.f32.mrf.mxu0
      %v4367 = vadd.f32 %v4186, %v4366
      %v4368 = vpop.f32.mrf.mxu0
      %v4369 = vpop.f32.mrf.mxu0
      %v4370 = vadd.f32 %v4186, %v4369
      %v4371 = vpop.f32.mrf.mxu0
      %4372 = vmatprep.mubr.bf16.mxu0 0
      %4373 = vmatmul.mubr.bf16.gmra.mxu0 %v4278
      %v4374 = vpop.f32.mrf.mxu0
      %v4375 = vadd.f32 %v4186, %v4374
      %v4376 = vpop.f32.mrf.mxu0
      %v4377 = vpop.f32.mrf.mxu0
      %v4378 = vadd.f32 %v4186, %v4377
      %v4379 = vpop.f32.mrf.mxu0
      %4380 = vdwg.mxu0
      %v4381 = vmax.f32 %v4319, 0.0
      %v4382 = vmax.f32 %v4322, 0.0
      %v4383 = vmax.f32 %v4327, 0.0
      %v4384 = vmax.f32 %v4330, 0.0
      %v4385 = vmax.f32 %v4335, 0.0
      %v4386 = vmax.f32 %v4338, 0.0
      %v4387 = vmax.f32 %v4343, 0.0
      %v4388 = vmax.f32 %v4346, 0.0
      %v4389 = vmax.f32 %v4351, 0.0
      %v4390 = vmax.f32 %v4354, 0.0
      %v4391 = vmax.f32 %v4359, 0.0
      %v4392 = vmax.f32 %v4362, 0.0
      %v4393 = vmax.f32 %v4367, 0.0
      %v4394 = vmax.f32 %v4370, 0.0
      %v4395 = vmax.f32 %v4375, 0.0
      %v4396 = vmax.f32 %v4378, 0.0
      %vm4397 = vcmask 64512
      %4398 = vst.msk [vmem:[%s248] sm:$0xff] %vm4397, %v4381
      %4399 = vst.msk [vmem:[%s248 + $0x8] sm:$0xff] %vm4397, %v4382
      %4400 = vst.msk [vmem:[%s248 + $0x10] sm:$0xff] %vm4397, %v4383
      %4401 = vst.msk [vmem:[%s248 + $0x18] sm:$0xff] %vm4397, %v4384
      %4402 = vst.msk [vmem:[%s248 + $0x20] sm:$0xff] %vm4397, %v4385
      %4403 = vst.msk [vmem:[%s248 + $0x28] sm:$0xff] %vm4397, %v4386
      %4404 = vst.msk [vmem:[%s248 + $0x30] sm:$0xff] %vm4397, %v4387
      %4405 = vst.msk [vmem:[%s248 + $0x38] sm:$0xff] %vm4397, %v4388
      %4406 = vst.msk [vmem:[%s248 + $0x40] sm:$0xff] %vm4397, %v4389
      %4407 = vst.msk [vmem:[%s248 + $0x48] sm:$0xff] %vm4397, %v4390
      %4408 = vst.msk [vmem:[%s248 + $0x50] sm:$0xff] %vm4397, %v4391
      %4409 = vst.msk [vmem:[%s248 + $0x58] sm:$0xff] %vm4397, %v4392
      %4410 = vst.msk [vmem:[%s248 + $0x60] sm:$0xff] %vm4397, %v4393
      %4411 = vst.msk [vmem:[%s248 + $0x68] sm:$0xff] %vm4397, %v4394
      %4412 = vst.msk [vmem:[%s248 + $0x70] sm:$0xff] %vm4397, %v4395
      %4413 = vst.msk [vmem:[%s248 + $0x78] sm:$0xff] %vm4397, %v4396
      %s4414 = smul.u32 8, %s21
      %p4415 = scmp.lt.s32.totalorder %s20, 1
      %s4416 = scalar_select %p4415, %s20, 1
      %p4417 = scmp.lt.s32.totalorder %s4414, 15
      %s4418 = scalar_select %p4417, %s4414, 15
      %s4419 = smul.addr %s4418, 2
      %s4420 = smul.addr %s4416, 32
      %s4421 = sadd.s32 %s4419, %s4420
      %s4422 = smul.addr %s4421, 8
      %s4423 = scalar_lea.vmem %s5, %s4422
      // Predicated region
      $region49: #{tpu_custom_call.1} parent=39 // pred_check
        %p4424 = pneg %p158
      $region50: #{tpu_custom_call.1} parent=39 // pred_check_branch
        %4426 = sbr.rel (%p4424) target = $region52
      $region51: #{tpu_custom_call.1} parent=39 // pred_region
        %s4427 = smul.u32 8, %s21
      $region52: #{tpu_custom_call.1} parent=39 // pred_fallthru
        _
    $region40: #{tpu_custom_call.1} parent=5 // pred_fallthru
      _
    %p4428 = scmp.le.s32.totalorder 2, %s11
    // Predicated region
    $region53: #{tpu_custom_call.1} parent=5 // pred_check
      %p4429 = pneg %p4428
    $region54: #{tpu_custom_call.1} parent=5 // pred_check_branch
      %4431 = sbr.rel (%p4429) target = $region56
    $region55: #{tpu_custom_call.1} parent=5 // pred_region
      %s4432 = ssub.s32 %s11, 2
      // Predicated region
      $region57: #{tpu_custom_call.1} parent=55 // pred_check
        %p4433 = pneg %p164
      $region58: #{tpu_custom_call.1} parent=55 // pred_check_branch
        %4435 = sbr.rel (%p4433) target = $region60
      $region59: #{tpu_custom_call.1} parent=55 // pred_region
        %s4436 = smul.u32 8, %s23
        %p4437 = scmp.lt.s32.totalorder %s22, 1
        %s4438 = scalar_select %p4437, %s22, 1
        %p4439 = scmp.lt.s32.totalorder %s4436, 15
        %s4440 = scalar_select %p4439, %s4436, 15
        %s4441 = smul.addr %s4440, 2
        %s4442 = smul.addr %s4438, 32
        %s4443 = sadd.s32 %s4441, %s4442
        %s4444 = smul.addr %s4443, 8
        %s4445 = scalar_lea.vmem %s5, %s4444
      $region60: #{tpu_custom_call.1} parent=55 // pred_fallthru
        _
    $region56: #{tpu_custom_call.1} parent=5 // pred_fallthru
      _
  $region6: #{tpu_custom_call.1} parent=0 // loop_footer
    %s15 = sadd.s32 1, %s11
  $region7: #{tpu_custom_call.1} parent=0 // loop_footer_branch
    %10 = sbr.rel target = $region3
  $region8: #{tpu_custom_call.1} parent=0 // loop_exit
    _

</llo_original>
